<compile_context>
chip_gen: v7x
topology: tpu7x:2x2x1
jax: 0.10.0
libtpu: 0.0.40
codegen_flags: <defaults>
</compile_context>

<pallas_src>
import functools

import jax
import jax.numpy as jnp
from jax.experimental import pallas as pl
from jax.experimental.pallas import tpu as pltpu

_LN_EPS = 1e-5
_VMEM_LIMIT = 48 * 1024 * 1024


def _gelu(x):
    # tanh-approx GELU (deviation from exact erf GELU ~1e-3).
    c = jnp.float32(0.7978845608028654)  # sqrt(2/pi)
    return 0.5 * x * (1.0 + jnp.tanh(c * (x + 0.044715 * (x * x * x))))


def _layernorm(t, g, b, eps):
    mu = jnp.mean(t, axis=-1, keepdims=True)
    tc = t - mu
    var = jnp.mean(tc * tc, axis=-1, keepdims=True)
    return tc * jax.lax.rsqrt(var + eps) * g + b


# -----------------------------------------------------------------------------
# Kernel 1: fused ConvMLPStage block
#   LN1 -> MLP1 -> +res -> connect_norm -> depthwise 3x3 conv -> LN2 -> MLP2 -> +res
# One batch image per grid step; everything stays in VMEM between the stages.
# -----------------------------------------------------------------------------
def _convmlp_block_kernel(x_ref,
                          n1g_ref, n1b_ref, w11_ref, b11_ref, w12_ref, b12_ref,
                          cng_ref, cnb_ref, dww_ref,
                          n2g_ref, n2b_ref, w21_ref, b21_ref, w22_ref, b22_ref,
                          o_ref, pad_ref, *, eps):
    H, W, C = o_ref.shape[1], o_ref.shape[2], o_ref.shape[3]
    M = H * W

    def mlp(t, w1_ref, b1_ref, w2_ref, b2_ref):
        h = jnp.dot(t, w1_ref[...], preferred_element_type=jnp.float32) + b1_ref[...]
        h = _gelu(h)
        return jnp.dot(h, w2_ref[...], preferred_element_type=jnp.float32) + b2_ref[...]

    # ---- channel MLP 1 + residual (tokens flattened to (H*W, C)) -------------
    x = x_ref[0].reshape(M, C).astype(jnp.float32)
    x = x + mlp(_layernorm(x, n1g_ref[...], n1b_ref[...], eps),
                w11_ref, b11_ref, w12_ref, b12_ref)

    # ---- connect_norm + depthwise 3x3 conv (stride 1, pad 1, no bias) --------
    t = _layernorm(x, cng_ref[...], cnb_ref[...], eps).reshape(H, W, C)

    # Zero only the halo border of the padded scratch (the interior is fully
    # overwritten every step, so no full-buffer zero fill).
    zrow = jnp.zeros((1, W + 2, C), jnp.float32)
    zcol = jnp.zeros((H, 1, C), jnp.float32)
    pad_ref[pl.ds(0, 1), :, :] = zrow
    pad_ref[pl.ds(H + 1, 1), :, :] = zrow
    pad_ref[pl.ds(1, H), pl.ds(0, 1), :] = zcol
    pad_ref[pl.ds(1, H), pl.ds(W + 1, 1), :] = zcol
    pad_ref[pl.ds(1, H), pl.ds(1, W), :] = t

    acc = jnp.zeros((H, W, C), jnp.float32)
    for kh in range(3):
        # One (H, W+2, C) strip load per kh; the 3 kw taps reuse it as value
        # slices instead of 3 separate unaligned ref reads.
        strip = pad_ref[pl.ds(kh, H), :, :]
        for kw in range(3):
            tap = dww_ref[pl.ds(kh * 3 + kw, 1), :].reshape(1, 1, C)
            acc = acc + strip[:, kw:kw + W, :] * tap
    x = acc.reshape(M, C)

    # ---- channel MLP 2 + residual ---------------------------------------------
    x = x + mlp(_layernorm(x, n2g_ref[...], n2b_ref[...], eps),
                w21_ref, b21_ref, w22_ref, b22_ref)

    o_ref[0] = x.reshape(H, W, C).astype(o_ref.dtype)


def convmlp_block(x, blk, *, eps=_LN_EPS):
    """One fused ConvMLPStage block.  x: [B,H,W,C]."""
    B, H, W, C = x.shape
    Hd = blk["m1_w1"].shape[1]
    kernel = functools.partial(_convmlp_block_kernel, eps=eps)
    vec = lambda b: (0, 0)          # broadcast 2-D param blocks
    return pl.pallas_call(
        kernel,
        out_shape=jax.ShapeDtypeStruct((B, H, W, C), x.dtype),
        grid_spec=pltpu.PrefetchScalarGridSpec(
            num_scalar_prefetch=0,
            grid=(B,),
            in_specs=[
                pl.BlockSpec((1, H, W, C), lambda b: (b, 0, 0, 0)),
                pl.BlockSpec((1, C), vec), pl.BlockSpec((1, C), vec),     # norm1
                pl.BlockSpec((C, Hd), vec), pl.BlockSpec((1, Hd), vec),   # mlp1 fc1
                pl.BlockSpec((Hd, C), vec), pl.BlockSpec((1, C), vec),    # mlp1 fc2
                pl.BlockSpec((1, C), vec), pl.BlockSpec((1, C), vec),     # connect_norm
                pl.BlockSpec((9, C), vec),                                # dw weights
                pl.BlockSpec((1, C), vec), pl.BlockSpec((1, C), vec),     # norm2
                pl.BlockSpec((C, Hd), vec), pl.BlockSpec((1, Hd), vec),   # mlp2 fc1
                pl.BlockSpec((Hd, C), vec), pl.BlockSpec((1, C), vec),    # mlp2 fc2
            ],
            out_specs=pl.BlockSpec((1, H, W, C), lambda b: (b, 0, 0, 0)),
            scratch_shapes=[pltpu.VMEM((H + 2, W + 2, C), jnp.float32)],
        ),
        input_output_aliases={0: 0},     # x + f(x): write back in place
        compiler_params=pltpu.CompilerParams(
            dimension_semantics=("parallel",),
            vmem_limit_bytes=_VMEM_LIMIT),
    )(x,
      blk["n1_g"].reshape(1, C), blk["n1_b"].reshape(1, C),
      blk["m1_w1"], blk["m1_b1"].reshape(1, Hd),
      blk["m1_w2"], blk["m1_b2"].reshape(1, C),
      blk["cn_g"].reshape(1, C), blk["cn_b"].reshape(1, C),
      blk["dw_w"].reshape(9, C),
      blk["n2_g"].reshape(1, C), blk["n2_b"].reshape(1, C),
      blk["m2_w1"], blk["m2_b1"].reshape(1, Hd),
      blk["m2_w2"], blk["m2_b2"].reshape(1, C))


# -----------------------------------------------------------------------------
# Kernel 2: ConvDownsample (3x3, stride 2, pad 1) with in-kernel im2col.
# The 9 taps are gathered from a zero-haloed VMEM scratch with strided pl.ds
# reads and accumulated as per-tap (Ho*Wo, Cin) x (Cin, Cout) matmuls.
# -----------------------------------------------------------------------------
def _downsample_kernel(x_ref, w_ref, b_ref, o_ref, pad_ref):
    H, W, Cin = x_ref.shape[1], x_ref.shape[2], x_ref.shape[3]
    Ho, Wo, Cout = o_ref.shape[1], o_ref.shape[2], o_ref.shape[3]

    zrow = jnp.zeros((1, W + 2, Cin), jnp.float32)
    zcol = jnp.zeros((H, 1, Cin), jnp.float32)
    pad_ref[pl.ds(0, 1), :, :] = zrow
    pad_ref[pl.ds(H + 1, 1), :, :] = zrow
    pad_ref[pl.ds(1, H), pl.ds(0, 1), :] = zcol
    pad_ref[pl.ds(1, H), pl.ds(W + 1, 1), :] = zcol
    pad_ref[pl.ds(1, H), pl.ds(1, W), :] = x_ref[0].astype(jnp.float32)

    acc = jnp.zeros((Ho * Wo, Cout), jnp.float32)
    for kh in range(3):
        for kw in range(3):
            # Strided (stride 2) gather of tap (kh, kw): rows 2*ho+kh, cols 2*wo+kw.
            tap = pad_ref[pl.ds(kh, Ho, 2), pl.ds(kw, Wo, 2), :]
            acc = acc + jnp.dot(tap.reshape(Ho * Wo, Cin), w_ref[kh * 3 + kw],
                                preferred_element_type=jnp.float32)
    acc = acc + b_ref[...]
    o_ref[0] = acc.reshape(Ho, Wo, Cout).astype(o_ref.dtype)


def conv_downsample(x, weight, bias):
    """x: [B,H,W,C_in]; weight: [3,3,C_in,C_out] (HWIO); bias: [C_out]."""
    B, H, W, Cin = x.shape
    Cout = weight.shape[-1]
    Ho = (H + 2 - 3) // 2 + 1
    Wo = (W + 2 - 3) // 2 + 1
    return pl.pallas_call(
        _downsample_kernel,
        out_shape=jax.ShapeDtypeStruct((B, Ho, Wo, Cout), x.dtype),
        grid_spec=pltpu.PrefetchScalarGridSpec(
            num_scalar_prefetch=0,
            grid=(B,),
            in_specs=[
                pl.BlockSpec((1, H, W, Cin), lambda b: (b, 0, 0, 0)),
                pl.BlockSpec((9, Cin, Cout), lambda b: (0, 0, 0)),
                pl.BlockSpec((1, Cout), lambda b: (0, 0)),
            ],
            out_specs=pl.BlockSpec((1, Ho, Wo, Cout), lambda b: (b, 0, 0, 0)),
            scratch_shapes=[pltpu.VMEM((H + 2, W + 2, Cin), jnp.float32)],
        ),
        compiler_params=pltpu.CompilerParams(
            dimension_semantics=("parallel",),
            vmem_limit_bytes=_VMEM_LIMIT),
    )(x, weight.reshape(9, Cin, Cout), bias.reshape(1, Cout))


# -----------------------------------------------------------------------------
# BasicStage forward (inference: DropPath == identity).
# -----------------------------------------------------------------------------
def basic_stage_forward(x, params):
    for blk in params["blocks"]:
        x = convmlp_block(x, blk)
    return conv_downsample(x, params["ds_w"], params["ds_b"])


# -----------------------------------------------------------------------------
# Pure-JAX reference
# -----------------------------------------------------------------------------
def _reference(x, params, eps=_LN_EPS):
    hi = jax.lax.Precision.HIGHEST

    def ln(t, g, b):
        mu = t.mean(-1, keepdims=True)
        var = ((t - mu) ** 2).mean(-1, keepdims=True)
        return (t - mu) / jnp.sqrt(var + eps) * g + b

    def mlp(t, w1, b1, w2, b2):
        h = _gelu(jnp.dot(t, w1, precision=hi) + b1)
        return jnp.dot(h, w2, precision=hi) + b2

    for blk in params["blocks"]:
        x = x + mlp(ln(x, blk["n1_g"], blk["n1_b"]),
                    blk["m1_w1"], blk["m1_b1"], blk["m1_w2"], blk["m1_b2"])
        t = ln(x, blk["cn_g"], blk["cn_b"])
        C = x.shape[-1]
        x = jax.lax.conv_general_dilated(
            t, blk["dw_w"].reshape(3, 3, 1, C),
            window_strides=(1, 1), padding=((1, 1), (1, 1)),
            dimension_numbers=("NHWC", "HWIO", "NHWC"),
            feature_group_count=C, precision=hi)
        x = x + mlp(ln(x, blk["n2_g"], blk["n2_b"]),
                    blk["m2_w1"], blk["m2_b1"], blk["m2_w2"], blk["m2_b2"])
    y = jax.lax.conv_general_dilated(
        x, params["ds_w"], window_strides=(2, 2), padding=((1, 1), (1, 1)),
        dimension_numbers=("NHWC", "HWIO", "NHWC"), precision=hi)
    return y + params["ds_b"][None, None, None, :]


if __name__ == "__main__":
    key = jax.random.PRNGKey(0)
    B, H, W = 2, 16, 16
    C, C_out = 32, 64          # embedding_dims = (32, 64)
    num_blocks = 2
    mlp_ratio = 1
    Hd = int(C * mlp_ratio)

    keys = iter(jax.random.split(key, 64))

    def nrm(shape, scale=0.1):
        return scale * jax.random.normal(next(keys), shape, dtype=jnp.float32)

    blocks = []
    for _ in range(num_blocks):
        blocks.append(dict(
            n1_g=1.0 + nrm((C,)), n1_b=nrm((C,)),
            m1_w1=nrm((C, Hd)), m1_b1=nrm((Hd,)),
            m1_w2=nrm((Hd, C)), m1_b2=nrm((C,)),
            cn_g=1.0 + nrm((C,)), cn_b=nrm((C,)),
            dw_w=nrm((3, 3, C)),                      # depthwise weight, tap-major
            n2_g=1.0 + nrm((C,)), n2_b=nrm((C,)),
            m2_w1=nrm((C, Hd)), m2_b1=nrm((Hd,)),
            m2_w2=nrm((Hd, C)), m2_b2=nrm((C,)),
        ))
    params = dict(blocks=blocks,
                  ds_w=nrm((3, 3, C, C_out)),         # HWIO downsample weight
                  ds_b=nrm((C_out,)))

    x = jax.random.normal(next(keys), (B, H, W, C), dtype=jnp.float32)

    fwd = jax.jit(basic_stage_forward)
    y = jax.block_until_ready(fwd(x, params))

    y_ref = _reference(x, params)
    assert y.shape == (B, H // 2, W // 2, C_out), y.shape
    err = float(jnp.max(jnp.abs(y - y_ref)))
    assert err < 1e-2, err

    print("KERNEL_OK")
</pallas_src>

<mosaic_0001>
module attributes {stable_mosaic.version = 11 : i64} {
  func.func @_downsample_kernel(%arg0: i32, %arg1: memref<1x16x16x32xf32, #tpu.memory_space<vmem>>, %arg2: memref<9x32x64xf32, #tpu.memory_space<vmem>>, %arg3: memref<1x64xf32, #tpu.memory_space<vmem>>, %arg4: memref<1x8x8x64xf32, #tpu.memory_space<vmem>>, %arg5: memref<18x18x32xf32, #tpu.memory_space<vmem>>) attributes {dimension_semantics = [#tpu.dimension_semantics<parallel>], iteration_bounds = array<i64: 2>, scalar_prefetch = 0 : i64, scratch_operands = 1 : i64, tpu.core_type = #tpu.core_type<tc>, window_params = [{transform_indices = @transform_0, window_bounds = array<i64: 1, 16, 16, 32>}, {pipeline_mode = #tpu.pipeline_mode<synchronous>, transform_indices = @transform_1, window_bounds = array<i64: 9, 32, 64>}, {pipeline_mode = #tpu.pipeline_mode<synchronous>, transform_indices = @transform_2, window_bounds = array<i64: 1, 64>}, {transform_indices = @transform_3, window_bounds = array<i64: 1, 8, 8, 64>}]} {
    %cst = arith.constant 0.000000e+00 : f32
    %0 = vector.broadcast %cst : f32 to vector<1x18x32xf32>
    %cst_0 = arith.constant 0.000000e+00 : f32
    %1 = vector.broadcast %cst_0 : f32 to vector<16x1x32xf32>
    %c0 = arith.constant 0 : index
    %c0_1 = arith.constant 0 : index
    %c0_2 = arith.constant 0 : index
    %2 = vector.load %arg5[%c0, %c0_1, %c0_2] : memref<18x18x32xf32, #tpu.memory_space<vmem>>, vector<1x18x32xf32>
    tpu.vector_store %arg5[%c0, %c0_1, %c0_2], %0 {strides = array<i32>} : memref<18x18x32xf32, #tpu.memory_space<vmem>>, vector<1x18x32xf32>,
    %c17 = arith.constant 17 : index
    %c0_3 = arith.constant 0 : index
    %c0_4 = arith.constant 0 : index
    %3 = vector.load %arg5[%c17, %c0_3, %c0_4] : memref<18x18x32xf32, #tpu.memory_space<vmem>>, vector<1x18x32xf32>
    tpu.vector_store %arg5[%c17, %c0_3, %c0_4], %0 {strides = array<i32>} : memref<18x18x32xf32, #tpu.memory_space<vmem>>, vector<1x18x32xf32>,
    %c1 = arith.constant 1 : index
    %c0_5 = arith.constant 0 : index
    %c0_6 = arith.constant 0 : index
    %4 = vector.load %arg5[%c1, %c0_5, %c0_6] : memref<18x18x32xf32, #tpu.memory_space<vmem>>, vector<16x1x32xf32>
    tpu.vector_store %arg5[%c1, %c0_5, %c0_6], %1 {strides = array<i32>} : memref<18x18x32xf32, #tpu.memory_space<vmem>>, vector<16x1x32xf32>,
    %c1_7 = arith.constant 1 : index
    %c17_8 = arith.constant 17 : index
    %c0_9 = arith.constant 0 : index
    %5 = vector.load %arg5[%c1_7, %c17_8, %c0_9] : memref<18x18x32xf32, #tpu.memory_space<vmem>>, vector<16x1x32xf32>
    tpu.vector_store %arg5[%c1_7, %c17_8, %c0_9], %1 {strides = array<i32>} : memref<18x18x32xf32, #tpu.memory_space<vmem>>, vector<16x1x32xf32>,
    %c0_10 = arith.constant 0 : index
    %c0_11 = arith.constant 0 : index
    %c0_12 = arith.constant 0 : index
    %c0_13 = arith.constant 0 : index
    %6 = vector.load %arg1[%c0_10, %c0_11, %c0_12, %c0_13] : memref<1x16x16x32xf32, #tpu.memory_space<vmem>>, vector<1x16x16x32xf32>
    %7 = vector.shape_cast %6 : vector<1x16x16x32xf32> to vector<16x16x32xf32>
    %c1_14 = arith.constant 1 : index
    %c1_15 = arith.constant 1 : index
    %c0_16 = arith.constant 0 : index
    %8 = vector.load %arg5[%c1_14, %c1_15, %c0_16] : memref<18x18x32xf32, #tpu.memory_space<vmem>>, vector<16x16x32xf32>
    tpu.vector_store %arg5[%c1_14, %c1_15, %c0_16], %7 {strides = array<i32>} : memref<18x18x32xf32, #tpu.memory_space<vmem>>, vector<16x16x32xf32>,
    %cst_17 = arith.constant 0.000000e+00 : f32
    %9 = vector.broadcast %cst_17 : f32 to vector<64x64xf32>
    %c0_18 = arith.constant 0 : index
    %c0_19 = arith.constant 0 : index
    %c0_20 = arith.constant 0 : index
    %10 = tpu.strided_load %arg5[%c0_18, %c0_19, %c0_20] {strides = array<i32: 2, 2, 1>} : memref<18x18x32xf32, #tpu.memory_space<vmem>>, vector<8x8x32xf32>
    %11 = vector.shape_cast %10 : vector<8x8x32xf32> to vector<64x32xf32>
    %c0_21 = arith.constant 0 : index
    %c0_22 = arith.constant 0 : index
    %c0_23 = arith.constant 0 : index
    %12 = vector.load %arg2[%c0_21, %c0_22, %c0_23] : memref<9x32x64xf32, #tpu.memory_space<vmem>>, vector<1x32x64xf32>
    %13 = vector.shape_cast %12 : vector<1x32x64xf32> to vector<32x64xf32>
    %cst_24 = arith.constant dense<0.000000e+00> : vector<64x64xf32>
    %14 = tpu.matmul %11, %13, %cst_24 {dimension_numbers = #tpu.dot_dimension_numbers<[1], [0], [0], [1], [0, 0, 1, 1], [], []>} : vector<64x32xf32>, vector<32x64xf32>, vector<64x64xf32> -> vector<64x64xf32>
    %15 = arith.addf %9, %14 : vector<64x64xf32>
    %c0_25 = arith.constant 0 : index
    %c1_26 = arith.constant 1 : index
    %c0_27 = arith.constant 0 : index
    %16 = tpu.strided_load %arg5[%c0_25, %c1_26, %c0_27] {strides = array<i32: 2, 2, 1>} : memref<18x18x32xf32, #tpu.memory_space<vmem>>, vector<8x8x32xf32>
    %17 = vector.shape_cast %16 : vector<8x8x32xf32> to vector<64x32xf32>
    %c1_28 = arith.constant 1 : index
    %c0_29 = arith.constant 0 : index
    %c0_30 = arith.constant 0 : index
    %18 = vector.load %arg2[%c1_28, %c0_29, %c0_30] : memref<9x32x64xf32, #tpu.memory_space<vmem>>, vector<1x32x64xf32>
    %19 = vector.shape_cast %18 : vector<1x32x64xf32> to vector<32x64xf32>
    %cst_31 = arith.constant dense<0.000000e+00> : vector<64x64xf32>
    %20 = tpu.matmul %17, %19, %cst_31 {dimension_numbers = #tpu.dot_dimension_numbers<[1], [0], [0], [1], [0, 0, 1, 1], [], []>} : vector<64x32xf32>, vector<32x64xf32>, vector<64x64xf32> -> vector<64x64xf32>
    %21 = arith.addf %15, %20 : vector<64x64xf32>
    %c0_32 = arith.constant 0 : index
    %c2 = arith.constant 2 : index
    %c0_33 = arith.constant 0 : index
    %22 = tpu.strided_load %arg5[%c0_32, %c2, %c0_33] {strides = array<i32: 2, 2, 1>} : memref<18x18x32xf32, #tpu.memory_space<vmem>>, vector<8x8x32xf32>
    %23 = vector.shape_cast %22 : vector<8x8x32xf32> to vector<64x32xf32>
    %c2_34 = arith.constant 2 : index
    %c0_35 = arith.constant 0 : index
    %c0_36 = arith.constant 0 : index
    %24 = vector.load %arg2[%c2_34, %c0_35, %c0_36] : memref<9x32x64xf32, #tpu.memory_space<vmem>>, vector<1x32x64xf32>
    %25 = vector.shape_cast %24 : vector<1x32x64xf32> to vector<32x64xf32>
    %cst_37 = arith.constant dense<0.000000e+00> : vector<64x64xf32>
    %26 = tpu.matmul %23, %25, %cst_37 {dimension_numbers = #tpu.dot_dimension_numbers<[1], [0], [0], [1], [0, 0, 1, 1], [], []>} : vector<64x32xf32>, vector<32x64xf32>, vector<64x64xf32> -> vector<64x64xf32>
    %27 = arith.addf %21, %26 : vector<64x64xf32>
    %c1_38 = arith.constant 1 : index
    %c0_39 = arith.constant 0 : index
    %c0_40 = arith.constant 0 : index
    %28 = tpu.strided_load %arg5[%c1_38, %c0_39, %c0_40] {strides = array<i32: 2, 2, 1>} : memref<18x18x32xf32, #tpu.memory_space<vmem>>, vector<8x8x32xf32>
    %29 = vector.shape_cast %28 : vector<8x8x32xf32> to vector<64x32xf32>
    %c3 = arith.constant 3 : index
    %c0_41 = arith.constant 0 : index
    %c0_42 = arith.constant 0 : index
    %30 = vector.load %arg2[%c3, %c0_41, %c0_42] : memref<9x32x64xf32, #tpu.memory_space<vmem>>, vector<1x32x64xf32>
    %31 = vector.shape_cast %30 : vector<1x32x64xf32> to vector<32x64xf32>
    %cst_43 = arith.constant dense<0.000000e+00> : vector<64x64xf32>
    %32 = tpu.matmul %29, %31, %cst_43 {dimension_numbers = #tpu.dot_dimension_numbers<[1], [0], [0], [1], [0, 0, 1, 1], [], []>} : vector<64x32xf32>, vector<32x64xf32>, vector<64x64xf32> -> vector<64x64xf32>
    %33 = arith.addf %27, %32 : vector<64x64xf32>
    %c1_44 = arith.constant 1 : index
    %c1_45 = arith.constant 1 : index
    %c0_46 = arith.constant 0 : index
    %34 = tpu.strided_load %arg5[%c1_44, %c1_45, %c0_46] {strides = array<i32: 2, 2, 1>} : memref<18x18x32xf32, #tpu.memory_space<vmem>>, vector<8x8x32xf32>
    %35 = vector.shape_cast %34 : vector<8x8x32xf32> to vector<64x32xf32>
    %c4 = arith.constant 4 : index
    %c0_47 = arith.constant 0 : index
    %c0_48 = arith.constant 0 : index
    %36 = vector.load %arg2[%c4, %c0_47, %c0_48] : memref<9x32x64xf32, #tpu.memory_space<vmem>>, vector<1x32x64xf32>
    %37 = vector.shape_cast %36 : vector<1x32x64xf32> to vector<32x64xf32>
    %cst_49 = arith.constant dense<0.000000e+00> : vector<64x64xf32>
    %38 = tpu.matmul %35, %37, %cst_49 {dimension_numbers = #tpu.dot_dimension_numbers<[1], [0], [0], [1], [0, 0, 1, 1], [], []>} : vector<64x32xf32>, vector<32x64xf32>, vector<64x64xf32> -> vector<64x64xf32>
    %39 = arith.addf %33, %38 : vector<64x64xf32>
    %c1_50 = arith.constant 1 : index
    %c2_51 = arith.constant 2 : index
    %c0_52 = arith.constant 0 : index
    %40 = tpu.strided_load %arg5[%c1_50, %c2_51, %c0_52] {strides = array<i32: 2, 2, 1>} : memref<18x18x32xf32, #tpu.memory_space<vmem>>, vector<8x8x32xf32>
    %41 = vector.shape_cast %40 : vector<8x8x32xf32> to vector<64x32xf32>
    %c5 = arith.constant 5 : index
    %c0_53 = arith.constant 0 : index
    %c0_54 = arith.constant 0 : index
    %42 = vector.load %arg2[%c5, %c0_53, %c0_54] : memref<9x32x64xf32, #tpu.memory_space<vmem>>, vector<1x32x64xf32>
    %43 = vector.shape_cast %42 : vector<1x32x64xf32> to vector<32x64xf32>
    %cst_55 = arith.constant dense<0.000000e+00> : vector<64x64xf32>
    %44 = tpu.matmul %41, %43, %cst_55 {dimension_numbers = #tpu.dot_dimension_numbers<[1], [0], [0], [1], [0, 0, 1, 1], [], []>} : vector<64x32xf32>, vector<32x64xf32>, vector<64x64xf32> -> vector<64x64xf32>
    %45 = arith.addf %39, %44 : vector<64x64xf32>
    %c2_56 = arith.constant 2 : index
    %c0_57 = arith.constant 0 : index
    %c0_58 = arith.constant 0 : index
    %46 = tpu.strided_load %arg5[%c2_56, %c0_57, %c0_58] {strides = array<i32: 2, 2, 1>} : memref<18x18x32xf32, #tpu.memory_space<vmem>>, vector<8x8x32xf32>
    %47 = vector.shape_cast %46 : vector<8x8x32xf32> to vector<64x32xf32>
    %c6 = arith.constant 6 : index
    %c0_59 = arith.constant 0 : index
    %c0_60 = arith.constant 0 : index
    %48 = vector.load %arg2[%c6, %c0_59, %c0_60] : memref<9x32x64xf32, #tpu.memory_space<vmem>>, vector<1x32x64xf32>
    %49 = vector.shape_cast %48 : vector<1x32x64xf32> to vector<32x64xf32>
    %cst_61 = arith.constant dense<0.000000e+00> : vector<64x64xf32>
    %50 = tpu.matmul %47, %49, %cst_61 {dimension_numbers = #tpu.dot_dimension_numbers<[1], [0], [0], [1], [0, 0, 1, 1], [], []>} : vector<64x32xf32>, vector<32x64xf32>, vector<64x64xf32> -> vector<64x64xf32>
    %51 = arith.addf %45, %50 : vector<64x64xf32>
    %c2_62 = arith.constant 2 : index
    %c1_63 = arith.constant 1 : index
    %c0_64 = arith.constant 0 : index
    %52 = tpu.strided_load %arg5[%c2_62, %c1_63, %c0_64] {strides = array<i32: 2, 2, 1>} : memref<18x18x32xf32, #tpu.memory_space<vmem>>, vector<8x8x32xf32>
    %53 = vector.shape_cast %52 : vector<8x8x32xf32> to vector<64x32xf32>
    %c7 = arith.constant 7 : index
    %c0_65 = arith.constant 0 : index
    %c0_66 = arith.constant 0 : index
    %54 = vector.load %arg2[%c7, %c0_65, %c0_66] : memref<9x32x64xf32, #tpu.memory_space<vmem>>, vector<1x32x64xf32>
    %55 = vector.shape_cast %54 : vector<1x32x64xf32> to vector<32x64xf32>
    %cst_67 = arith.constant dense<0.000000e+00> : vector<64x64xf32>
    %56 = tpu.matmul %53, %55, %cst_67 {dimension_numbers = #tpu.dot_dimension_numbers<[1], [0], [0], [1], [0, 0, 1, 1], [], []>} : vector<64x32xf32>, vector<32x64xf32>, vector<64x64xf32> -> vector<64x64xf32>
    %57 = arith.addf %51, %56 : vector<64x64xf32>
    %c2_68 = arith.constant 2 : index
    %c2_69 = arith.constant 2 : index
    %c0_70 = arith.constant 0 : index
    %58 = tpu.strided_load %arg5[%c2_68, %c2_69, %c0_70] {strides = array<i32: 2, 2, 1>} : memref<18x18x32xf32, #tpu.memory_space<vmem>>, vector<8x8x32xf32>
    %59 = vector.shape_cast %58 : vector<8x8x32xf32> to vector<64x32xf32>
    %c8 = arith.constant 8 : index
    %c0_71 = arith.constant 0 : index
    %c0_72 = arith.constant 0 : index
    %60 = vector.load %arg2[%c8, %c0_71, %c0_72] : memref<9x32x64xf32, #tpu.memory_space<vmem>>, vector<1x32x64xf32>
    %61 = vector.shape_cast %60 : vector<1x32x64xf32> to vector<32x64xf32>
    %cst_73 = arith.constant dense<0.000000e+00> : vector<64x64xf32>
    %62 = tpu.matmul %59, %61, %cst_73 {dimension_numbers = #tpu.dot_dimension_numbers<[1], [0], [0], [1], [0, 0, 1, 1], [], []>} : vector<64x32xf32>, vector<32x64xf32>, vector<64x64xf32> -> vector<64x64xf32>
    %63 = arith.addf %57, %62 : vector<64x64xf32>
    %c0_74 = arith.constant 0 : index
    %c0_75 = arith.constant 0 : index
    %64 = vector.load %arg3[%c0_74, %c0_75] : memref<1x64xf32, #tpu.memory_space<vmem>>, vector<1x64xf32>
    %65 = vector.broadcast %64 : vector<1x64xf32> to vector<64x64xf32>
    %66 = arith.addf %63, %65 : vector<64x64xf32>
    %67 = vector.shape_cast %66 : vector<64x64xf32> to vector<8x8x64xf32>
    %c0_76 = arith.constant 0 : index
    %c0_77 = arith.constant 0 : index
    %c0_78 = arith.constant 0 : index
    %c0_79 = arith.constant 0 : index
    %68 = vector.load %arg4[%c0_76, %c0_77, %c0_78, %c0_79] : memref<1x8x8x64xf32, #tpu.memory_space<vmem>>, vector<1x8x8x64xf32>
    %69 = vector.shape_cast %68 : vector<1x8x8x64xf32> to vector<8x8x64xf32>
    %70 = vector.shape_cast %67 : vector<8x8x64xf32> to vector<1x8x8x64xf32>
    tpu.vector_store %arg4[%c0_76, %c0_77, %c0_78, %c0_79], %70 {strides = array<i32>} : memref<1x8x8x64xf32, #tpu.memory_space<vmem>>, vector<1x8x8x64xf32>,
    return
  }
  func.func @transform_0(%arg0: i32) -> (i32, i32, i32, i32) {
    %c0_i32 = arith.constant 0 : i32
    %c0_i32_0 = arith.constant 0 : i32
    %c0_i32_1 = arith.constant 0 : i32
    %c0_i32_2 = arith.constant 0 : i32
    return %arg0, %c0_i32, %c0_i32_0, %c0_i32_1 : i32, i32, i32, i32
  }
  func.func @transform_1(%arg0: i32) -> (i32, i32, i32) {
    %c0_i32 = arith.constant 0 : i32
    %c0_i32_0 = arith.constant 0 : i32
    %c0_i32_1 = arith.constant 0 : i32
    %c0_i32_2 = arith.constant 0 : i32
    return %c0_i32, %c0_i32_0, %c0_i32_1 : i32, i32, i32
  }
  func.func @transform_2(%arg0: i32) -> (i32, i32) {
    %c0_i32 = arith.constant 0 : i32
    %c0_i32_0 = arith.constant 0 : i32
    %c0_i32_1 = arith.constant 0 : i32
    return %c0_i32, %c0_i32_0 : i32, i32
  }
  func.func @transform_3(%arg0: i32) -> (i32, i32, i32, i32) {
    %c0_i32 = arith.constant 0 : i32
    %c0_i32_0 = arith.constant 0 : i32
    %c0_i32_1 = arith.constant 0 : i32
    %c0_i32_2 = arith.constant 0 : i32
    return %arg0, %c0_i32, %c0_i32_0, %c0_i32_1 : i32, i32, i32, i32
  }
}

module attributes {stable_mosaic.version = 11 : i64} {
  func.func @_convmlp_block_kernel(%arg0: i32, %arg1: memref<1x16x16x32xf32, #tpu.memory_space<vmem>>, %arg2: memref<1x32xf32, #tpu.memory_space<vmem>>, %arg3: memref<1x32xf32, #tpu.memory_space<vmem>>, %arg4: memref<32x32xf32, #tpu.memory_space<vmem>>, %arg5: memref<1x32xf32, #tpu.memory_space<vmem>>, %arg6: memref<32x32xf32, #tpu.memory_space<vmem>>, %arg7: memref<1x32xf32, #tpu.memory_space<vmem>>, %arg8: memref<1x32xf32, #tpu.memory_space<vmem>>, %arg9: memref<1x32xf32, #tpu.memory_space<vmem>>, %arg10: memref<9x32xf32, #tpu.memory_space<vmem>>, %arg11: memref<1x32xf32, #tpu.memory_space<vmem>>, %arg12: memref<1x32xf32, #tpu.memory_space<vmem>>, %arg13: memref<32x32xf32, #tpu.memory_space<vmem>>, %arg14: memref<1x32xf32, #tpu.memory_space<vmem>>, %arg15: memref<32x32xf32, #tpu.memory_space<vmem>>, %arg16: memref<1x32xf32, #tpu.memory_space<vmem>>, %arg17: memref<1x16x16x32xf32, #tpu.memory_space<vmem>>, %arg18: memref<18x18x32xf32, #tpu.memory_space<vmem>>) attributes {dimension_semantics = [#tpu.dimension_semantics<parallel>], iteration_bounds = array<i64: 2>, scalar_prefetch = 0 : i64, scratch_operands = 1 : i64, tpu.core_type = #tpu.core_type<tc>, window_params = [{transform_indices = @transform_0, window_bounds = array<i64: 1, 16, 16, 32>}, {pipeline_mode = #tpu.pipeline_mode<synchronous>, transform_indices = @transform_1, window_bounds = array<i64: 1, 32>}, {pipeline_mode = #tpu.pipeline_mode<synchronous>, transform_indices = @transform_2, window_bounds = array<i64: 1, 32>}, {pipeline_mode = #tpu.pipeline_mode<synchronous>, transform_indices = @transform_3, window_bounds = array<i64: 32, 32>}, {pipeline_mode = #tpu.pipeline_mode<synchronous>, transform_indices = @transform_4, window_bounds = array<i64: 1, 32>}, {pipeline_mode = #tpu.pipeline_mode<synchronous>, transform_indices = @transform_5, window_bounds = array<i64: 32, 32>}, {pipeline_mode = #tpu.pipeline_mode<synchronous>, transform_indices = @transform_6, window_bounds = array<i64: 1, 32>}, {pipeline_mode = #tpu.pipeline_mode<synchronous>, transform_indices = @transform_7, window_bounds = array<i64: 1, 32>}, {pipeline_mode = #tpu.pipeline_mode<synchronous>, transform_indices = @transform_8, window_bounds = array<i64: 1, 32>}, {pipeline_mode = #tpu.pipeline_mode<synchronous>, transform_indices = @transform_9, window_bounds = array<i64: 9, 32>}, {pipeline_mode = #tpu.pipeline_mode<synchronous>, transform_indices = @transform_10, window_bounds = array<i64: 1, 32>}, {pipeline_mode = #tpu.pipeline_mode<synchronous>, transform_indices = @transform_11, window_bounds = array<i64: 1, 32>}, {pipeline_mode = #tpu.pipeline_mode<synchronous>, transform_indices = @transform_12, window_bounds = array<i64: 32, 32>}, {pipeline_mode = #tpu.pipeline_mode<synchronous>, transform_indices = @transform_13, window_bounds = array<i64: 1, 32>}, {pipeline_mode = #tpu.pipeline_mode<synchronous>, transform_indices = @transform_14, window_bounds = array<i64: 32, 32>}, {pipeline_mode = #tpu.pipeline_mode<synchronous>, transform_indices = @transform_15, window_bounds = array<i64: 1, 32>}, {transform_indices = @transform_16, window_bounds = array<i64: 1, 16, 16, 32>}]} {
    %c0 = arith.constant 0 : index
    %c0_0 = arith.constant 0 : index
    %c0_1 = arith.constant 0 : index
    %c0_2 = arith.constant 0 : index
    %0 = vector.load %arg1[%c0, %c0_0, %c0_1, %c0_2] : memref<1x16x16x32xf32, #tpu.memory_space<vmem>>, vector<1x16x16x32xf32>
    %1 = vector.shape_cast %0 : vector<1x16x16x32xf32> to vector<16x16x32xf32>
    %2 = vector.shape_cast %1 : vector<16x16x32xf32> to vector<256x32xf32>
    %c0_3 = arith.constant 0 : index
    %c0_4 = arith.constant 0 : index
    %3 = vector.load %arg2[%c0_3, %c0_4] : memref<1x32xf32, #tpu.memory_space<vmem>>, vector<1x32xf32>
    %c0_5 = arith.constant 0 : index
    %c0_6 = arith.constant 0 : index
    %4 = vector.load %arg3[%c0_5, %c0_6] : memref<1x32xf32, #tpu.memory_space<vmem>>, vector<1x32xf32>
    %cst = arith.constant dense<0.000000e+00> : vector<256xf32>
    %5 = vector.multi_reduction <add>, %2, %cst [1] : vector<256x32xf32> to vector<256xf32>
    %6 = vector.shape_cast %5 : vector<256xf32> to vector<256x1xf32>
    %cst_7 = arith.constant 3.200000e+01 : f32
    %7 = vector.broadcast %cst_7 : f32 to vector<256x1xf32>
    %8 = arith.divf %6, %7 : vector<256x1xf32>
    %9 = vector.broadcast %8 : vector<256x1xf32> to vector<256x32xf32>
    %10 = arith.subf %2, %9 : vector<256x32xf32>
    %11 = arith.mulf %10, %10 : vector<256x32xf32>
    %cst_8 = arith.constant dense<0.000000e+00> : vector<256xf32>
    %12 = vector.multi_reduction <add>, %11, %cst_8 [1] : vector<256x32xf32> to vector<256xf32>
    %13 = vector.shape_cast %12 : vector<256xf32> to vector<256x1xf32>
    %cst_9 = arith.constant 3.200000e+01 : f32
    %14 = vector.broadcast %cst_9 : f32 to vector<256x1xf32>
    %15 = arith.divf %13, %14 : vector<256x1xf32>
    %cst_10 = arith.constant 9.99999974E-6 : f32
    %16 = vector.broadcast %cst_10 : f32 to vector<256x1xf32>
    %17 = arith.addf %15, %16 : vector<256x1xf32>
    %18 = math.rsqrt %17 : vector<256x1xf32>
    %19 = vector.broadcast %18 : vector<256x1xf32> to vector<256x32xf32>
    %20 = arith.mulf %10, %19 : vector<256x32xf32>
    %21 = vector.broadcast %3 : vector<1x32xf32> to vector<256x32xf32>
    %22 = arith.mulf %20, %21 : vector<256x32xf32>
    %23 = vector.broadcast %4 : vector<1x32xf32> to vector<256x32xf32>
    %24 = arith.addf %22, %23 : vector<256x32xf32>
    %c0_11 = arith.constant 0 : index
    %c0_12 = arith.constant 0 : index
    %25 = vector.load %arg4[%c0_11, %c0_12] : memref<32x32xf32, #tpu.memory_space<vmem>>, vector<32x32xf32>
    %cst_13 = arith.constant dense<0.000000e+00> : vector<256x32xf32>
    %26 = tpu.matmul %24, %25, %cst_13 {dimension_numbers = #tpu.dot_dimension_numbers<[1], [0], [0], [1], [0, 0, 1, 1], [], []>} : vector<256x32xf32>, vector<32x32xf32>, vector<256x32xf32> -> vector<256x32xf32>
    %c0_14 = arith.constant 0 : index
    %c0_15 = arith.constant 0 : index
    %27 = vector.load %arg5[%c0_14, %c0_15] : memref<1x32xf32, #tpu.memory_space<vmem>>, vector<1x32xf32>
    %28 = vector.broadcast %27 : vector<1x32xf32> to vector<256x32xf32>
    %29 = arith.addf %26, %28 : vector<256x32xf32>
    %cst_16 = arith.constant 5.000000e-01 : f32
    %30 = vector.broadcast %cst_16 : f32 to vector<256x32xf32>
    %31 = arith.mulf %30, %29 : vector<256x32xf32>
    %32 = arith.mulf %29, %29 : vector<256x32xf32>
    %33 = arith.mulf %32, %29 : vector<256x32xf32>
    %cst_17 = arith.constant 4.471500e-02 : f32
    %34 = vector.broadcast %cst_17 : f32 to vector<256x32xf32>
    %35 = arith.mulf %34, %33 : vector<256x32xf32>
    %36 = arith.addf %29, %35 : vector<256x32xf32>
    %cst_18 = arith.constant 0.797884583 : f32
    %37 = vector.broadcast %cst_18 : f32 to vector<256x32xf32>
    %38 = arith.mulf %37, %36 : vector<256x32xf32>
    %39 = math.tanh %38 : vector<256x32xf32>
    %cst_19 = arith.constant 1.000000e+00 : f32
    %40 = vector.broadcast %cst_19 : f32 to vector<256x32xf32>
    %41 = arith.addf %40, %39 : vector<256x32xf32>
    %42 = arith.mulf %31, %41 : vector<256x32xf32>
    %c0_20 = arith.constant 0 : index
    %c0_21 = arith.constant 0 : index
    %43 = vector.load %arg6[%c0_20, %c0_21] : memref<32x32xf32, #tpu.memory_space<vmem>>, vector<32x32xf32>
    %cst_22 = arith.constant dense<0.000000e+00> : vector<256x32xf32>
    %44 = tpu.matmul %42, %43, %cst_22 {dimension_numbers = #tpu.dot_dimension_numbers<[1], [0], [0], [1], [0, 0, 1, 1], [], []>} : vector<256x32xf32>, vector<32x32xf32>, vector<256x32xf32> -> vector<256x32xf32>
    %c0_23 = arith.constant 0 : index
    %c0_24 = arith.constant 0 : index
    %45 = vector.load %arg7[%c0_23, %c0_24] : memref<1x32xf32, #tpu.memory_space<vmem>>, vector<1x32xf32>
    %46 = vector.broadcast %45 : vector<1x32xf32> to vector<256x32xf32>
    %47 = arith.addf %44, %46 : vector<256x32xf32>
    %48 = arith.addf %2, %47 : vector<256x32xf32>
    %c0_25 = arith.constant 0 : index
    %c0_26 = arith.constant 0 : index
    %49 = vector.load %arg8[%c0_25, %c0_26] : memref<1x32xf32, #tpu.memory_space<vmem>>, vector<1x32xf32>
    %c0_27 = arith.constant 0 : index
    %c0_28 = arith.constant 0 : index
    %50 = vector.load %arg9[%c0_27, %c0_28] : memref<1x32xf32, #tpu.memory_space<vmem>>, vector<1x32xf32>
    %cst_29 = arith.constant dense<0.000000e+00> : vector<256xf32>
    %51 = vector.multi_reduction <add>, %48, %cst_29 [1] : vector<256x32xf32> to vector<256xf32>
    %52 = vector.shape_cast %51 : vector<256xf32> to vector<256x1xf32>
    %cst_30 = arith.constant 3.200000e+01 : f32
    %53 = vector.broadcast %cst_30 : f32 to vector<256x1xf32>
    %54 = arith.divf %52, %53 : vector<256x1xf32>
    %55 = vector.broadcast %54 : vector<256x1xf32> to vector<256x32xf32>
    %56 = arith.subf %48, %55 : vector<256x32xf32>
    %57 = arith.mulf %56, %56 : vector<256x32xf32>
    %cst_31 = arith.constant dense<0.000000e+00> : vector<256xf32>
    %58 = vector.multi_reduction <add>, %57, %cst_31 [1] : vector<256x32xf32> to vector<256xf32>
    %59 = vector.shape_cast %58 : vector<256xf32> to vector<256x1xf32>
    %cst_32 = arith.constant 3.200000e+01 : f32
    %60 = vector.broadcast %cst_32 : f32 to vector<256x1xf32>
    %61 = arith.divf %59, %60 : vector<256x1xf32>
    %cst_33 = arith.constant 9.99999974E-6 : f32
    %62 = vector.broadcast %cst_33 : f32 to vector<256x1xf32>
    %63 = arith.addf %61, %62 : vector<256x1xf32>
    %64 = math.rsqrt %63 : vector<256x1xf32>
    %65 = vector.broadcast %64 : vector<256x1xf32> to vector<256x32xf32>
    %66 = arith.mulf %56, %65 : vector<256x32xf32>
    %67 = vector.broadcast %49 : vector<1x32xf32> to vector<256x32xf32>
    %68 = arith.mulf %66, %67 : vector<256x32xf32>
    %69 = vector.broadcast %50 : vector<1x32xf32> to vector<256x32xf32>
    %70 = arith.addf %68, %69 : vector<256x32xf32>
    %71 = vector.shape_cast %70 : vector<256x32xf32> to vector<16x16x32xf32>
    %cst_34 = arith.constant 0.000000e+00 : f32
    %72 = vector.broadcast %cst_34 : f32 to vector<1x18x32xf32>
    %cst_35 = arith.constant 0.000000e+00 : f32
    %73 = vector.broadcast %cst_35 : f32 to vector<16x1x32xf32>
    %c0_36 = arith.constant 0 : index
    %c0_37 = arith.constant 0 : index
    %c0_38 = arith.constant 0 : index
    %74 = vector.load %arg18[%c0_36, %c0_37, %c0_38] : memref<18x18x32xf32, #tpu.memory_space<vmem>>, vector<1x18x32xf32>
    tpu.vector_store %arg18[%c0_36, %c0_37, %c0_38], %72 {strides = array<i32>} : memref<18x18x32xf32, #tpu.memory_space<vmem>>, vector<1x18x32xf32>,
    %c17 = arith.constant 17 : index
    %c0_39 = arith.constant 0 : index
    %c0_40 = arith.constant 0 : index
    %75 = vector.load %arg18[%c17, %c0_39, %c0_40] : memref<18x18x32xf32, #tpu.memory_space<vmem>>, vector<1x18x32xf32>
    tpu.vector_store %arg18[%c17, %c0_39, %c0_40], %72 {strides = array<i32>} : memref<18x18x32xf32, #tpu.memory_space<vmem>>, vector<1x18x32xf32>,
    %c1 = arith.constant 1 : index
    %c0_41 = arith.constant 0 : index
    %c0_42 = arith.constant 0 : index
    %76 = vector.load %arg18[%c1, %c0_41, %c0_42] : memref<18x18x32xf32, #tpu.memory_space<vmem>>, vector<16x1x32xf32>
    tpu.vector_store %arg18[%c1, %c0_41, %c0_42], %73 {strides = array<i32>} : memref<18x18x32xf32, #tpu.memory_space<vmem>>, vector<16x1x32xf32>,
    %c1_43 = arith.constant 1 : index
    %c17_44 = arith.constant 17 : index
    %c0_45 = arith.constant 0 : index
    %77 = vector.load %arg18[%c1_43, %c17_44, %c0_45] : memref<18x18x32xf32, #tpu.memory_space<vmem>>, vector<16x1x32xf32>
    tpu.vector_store %arg18[%c1_43, %c17_44, %c0_45], %73 {strides = array<i32>} : memref<18x18x32xf32, #tpu.memory_space<vmem>>, vector<16x1x32xf32>,
    %c1_46 = arith.constant 1 : index
    %c1_47 = arith.constant 1 : index
    %c0_48 = arith.constant 0 : index
    %78 = vector.load %arg18[%c1_46, %c1_47, %c0_48] : memref<18x18x32xf32, #tpu.memory_space<vmem>>, vector<16x16x32xf32>
    tpu.vector_store %arg18[%c1_46, %c1_47, %c0_48], %71 {strides = array<i32>} : memref<18x18x32xf32, #tpu.memory_space<vmem>>, vector<16x16x32xf32>,
    %cst_49 = arith.constant 0.000000e+00 : f32
    %79 = vector.broadcast %cst_49 : f32 to vector<16x16x32xf32>
    %c0_50 = arith.constant 0 : index
    %c0_51 = arith.constant 0 : index
    %c0_52 = arith.constant 0 : index
    %80 = vector.load %arg18[%c0_50, %c0_51, %c0_52] : memref<18x18x32xf32, #tpu.memory_space<vmem>>, vector<16x18x32xf32>
    %c0_53 = arith.constant 0 : index
    %c0_54 = arith.constant 0 : index
    %81 = vector.load %arg10[%c0_53, %c0_54] : memref<9x32xf32, #tpu.memory_space<vmem>>, vector<1x32xf32>
    %82 = vector.shape_cast %81 : vector<1x32xf32> to vector<1x1x32xf32>
    %83 = vector.extract_strided_slice %80 {offsets = [0, 0, 0], sizes = [16, 16, 32], strides = [1, 1, 1]} : vector<16x18x32xf32> to vector<16x16x32xf32>
    %84 = vector.broadcast %82 : vector<1x1x32xf32> to vector<16x16x32xf32>
    %85 = arith.mulf %83, %84 : vector<16x16x32xf32>
    %86 = arith.addf %79, %85 : vector<16x16x32xf32>
    %c1_55 = arith.constant 1 : index
    %c0_56 = arith.constant 0 : index
    %87 = vector.load %arg10[%c1_55, %c0_56] : memref<9x32xf32, #tpu.memory_space<vmem>>, vector<1x32xf32>
    %88 = vector.shape_cast %87 : vector<1x32xf32> to vector<1x1x32xf32>
    %89 = vector.extract_strided_slice %80 {offsets = [0, 1, 0], sizes = [16, 16, 32], strides = [1, 1, 1]} : vector<16x18x32xf32> to vector<16x16x32xf32>
    %90 = vector.broadcast %88 : vector<1x1x32xf32> to vector<16x16x32xf32>
    %91 = arith.mulf %89, %90 : vector<16x16x32xf32>
    %92 = arith.addf %86, %91 : vector<16x16x32xf32>
    %c2 = arith.constant 2 : index
    %c0_57 = arith.constant 0 : index
    %93 = vector.load %arg10[%c2, %c0_57] : memref<9x32xf32, #tpu.memory_space<vmem>>, vector<1x32xf32>
    %94 = vector.shape_cast %93 : vector<1x32xf32> to vector<1x1x32xf32>
    %95 = vector.extract_strided_slice %80 {offsets = [0, 2, 0], sizes = [16, 16, 32], strides = [1, 1, 1]} : vector<16x18x32xf32> to vector<16x16x32xf32>
    %96 = vector.broadcast %94 : vector<1x1x32xf32> to vector<16x16x32xf32>
    %97 = arith.mulf %95, %96 : vector<16x16x32xf32>
    %98 = arith.addf %92, %97 : vector<16x16x32xf32>
    %c1_58 = arith.constant 1 : index
    %c0_59 = arith.constant 0 : index
    %c0_60 = arith.constant 0 : index
    %99 = vector.load %arg18[%c1_58, %c0_59, %c0_60] : memref<18x18x32xf32, #tpu.memory_space<vmem>>, vector<16x18x32xf32>
    %c3 = arith.constant 3 : index
    %c0_61 = arith.constant 0 : index
    %100 = vector.load %arg10[%c3, %c0_61] : memref<9x32xf32, #tpu.memory_space<vmem>>, vector<1x32xf32>
    %101 = vector.shape_cast %100 : vector<1x32xf32> to vector<1x1x32xf32>
    %102 = vector.extract_strided_slice %99 {offsets = [0, 0, 0], sizes = [16, 16, 32], strides = [1, 1, 1]} : vector<16x18x32xf32> to vector<16x16x32xf32>
    %103 = vector.broadcast %101 : vector<1x1x32xf32> to vector<16x16x32xf32>
    %104 = arith.mulf %102, %103 : vector<16x16x32xf32>
    %105 = arith.addf %98, %104 : vector<16x16x32xf32>
    %c4 = arith.constant 4 : index
    %c0_62 = arith.constant 0 : index
    %106 = vector.load %arg10[%c4, %c0_62] : memref<9x32xf32, #tpu.memory_space<vmem>>, vector<1x32xf32>
    %107 = vector.shape_cast %106 : vector<1x32xf32> to vector<1x1x32xf32>
    %108 = vector.extract_strided_slice %99 {offsets = [0, 1, 0], sizes = [16, 16, 32], strides = [1, 1, 1]} : vector<16x18x32xf32> to vector<16x16x32xf32>
    %109 = vector.broadcast %107 : vector<1x1x32xf32> to vector<16x16x32xf32>
    %110 = arith.mulf %108, %109 : vector<16x16x32xf32>
    %111 = arith.addf %105, %110 : vector<16x16x32xf32>
    %c5 = arith.constant 5 : index
    %c0_63 = arith.constant 0 : index
    %112 = vector.load %arg10[%c5, %c0_63] : memref<9x32xf32, #tpu.memory_space<vmem>>, vector<1x32xf32>
    %113 = vector.shape_cast %112 : vector<1x32xf32> to vector<1x1x32xf32>
    %114 = vector.extract_strided_slice %99 {offsets = [0, 2, 0], sizes = [16, 16, 32], strides = [1, 1, 1]} : vector<16x18x32xf32> to vector<16x16x32xf32>
    %115 = vector.broadcast %113 : vector<1x1x32xf32> to vector<16x16x32xf32>
    %116 = arith.mulf %114, %115 : vector<16x16x32xf32>
    %117 = arith.addf %111, %116 : vector<16x16x32xf32>
    %c2_64 = arith.constant 2 : index
    %c0_65 = arith.constant 0 : index
    %c0_66 = arith.constant 0 : index
    %118 = vector.load %arg18[%c2_64, %c0_65, %c0_66] : memref<18x18x32xf32, #tpu.memory_space<vmem>>, vector<16x18x32xf32>
    %c6 = arith.constant 6 : index
    %c0_67 = arith.constant 0 : index
    %119 = vector.load %arg10[%c6, %c0_67] : memref<9x32xf32, #tpu.memory_space<vmem>>, vector<1x32xf32>
    %120 = vector.shape_cast %119 : vector<1x32xf32> to vector<1x1x32xf32>
    %121 = vector.extract_strided_slice %118 {offsets = [0, 0, 0], sizes = [16, 16, 32], strides = [1, 1, 1]} : vector<16x18x32xf32> to vector<16x16x32xf32>
    %122 = vector.broadcast %120 : vector<1x1x32xf32> to vector<16x16x32xf32>
    %123 = arith.mulf %121, %122 : vector<16x16x32xf32>
    %124 = arith.addf %117, %123 : vector<16x16x32xf32>
    %c7 = arith.constant 7 : index
    %c0_68 = arith.constant 0 : index
    %125 = vector.load %arg10[%c7, %c0_68] : memref<9x32xf32, #tpu.memory_space<vmem>>, vector<1x32xf32>
    %126 = vector.shape_cast %125 : vector<1x32xf32> to vector<1x1x32xf32>
    %127 = vector.extract_strided_slice %118 {offsets = [0, 1, 0], sizes = [16, 16, 32], strides = [1, 1, 1]} : vector<16x18x32xf32> to vector<16x16x32xf32>
    %128 = vector.broadcast %126 : vector<1x1x32xf32> to vector<16x16x32xf32>
    %129 = arith.mulf %127, %128 : vector<16x16x32xf32>
    %130 = arith.addf %124, %129 : vector<16x16x32xf32>
    %c8 = arith.constant 8 : index
    %c0_69 = arith.constant 0 : index
    %131 = vector.load %arg10[%c8, %c0_69] : memref<9x32xf32, #tpu.memory_space<vmem>>, vector<1x32xf32>
    %132 = vector.shape_cast %131 : vector<1x32xf32> to vector<1x1x32xf32>
    %133 = vector.extract_strided_slice %118 {offsets = [0, 2, 0], sizes = [16, 16, 32], strides = [1, 1, 1]} : vector<16x18x32xf32> to vector<16x16x32xf32>
    %134 = vector.broadcast %132 : vector<1x1x32xf32> to vector<16x16x32xf32>
    %135 = arith.mulf %133, %134 : vector<16x16x32xf32>
    %136 = arith.addf %130, %135 : vector<16x16x32xf32>
    %137 = vector.shape_cast %136 : vector<16x16x32xf32> to vector<256x32xf32>
    %c0_70 = arith.constant 0 : index
    %c0_71 = arith.constant 0 : index
    %138 = vector.load %arg11[%c0_70, %c0_71] : memref<1x32xf32, #tpu.memory_space<vmem>>, vector<1x32xf32>
    %c0_72 = arith.constant 0 : index
    %c0_73 = arith.constant 0 : index
    %139 = vector.load %arg12[%c0_72, %c0_73] : memref<1x32xf32, #tpu.memory_space<vmem>>, vector<1x32xf32>
    %cst_74 = arith.constant dense<0.000000e+00> : vector<256xf32>
    %140 = vector.multi_reduction <add>, %137, %cst_74 [1] : vector<256x32xf32> to vector<256xf32>
    %141 = vector.shape_cast %140 : vector<256xf32> to vector<256x1xf32>
    %cst_75 = arith.constant 3.200000e+01 : f32
    %142 = vector.broadcast %cst_75 : f32 to vector<256x1xf32>
    %143 = arith.divf %141, %142 : vector<256x1xf32>
    %144 = vector.broadcast %143 : vector<256x1xf32> to vector<256x32xf32>
    %145 = arith.subf %137, %144 : vector<256x32xf32>
    %146 = arith.mulf %145, %145 : vector<256x32xf32>
    %cst_76 = arith.constant dense<0.000000e+00> : vector<256xf32>
    %147 = vector.multi_reduction <add>, %146, %cst_76 [1] : vector<256x32xf32> to vector<256xf32>
    %148 = vector.shape_cast %147 : vector<256xf32> to vector<256x1xf32>
    %cst_77 = arith.constant 3.200000e+01 : f32
    %149 = vector.broadcast %cst_77 : f32 to vector<256x1xf32>
    %150 = arith.divf %148, %149 : vector<256x1xf32>
    %cst_78 = arith.constant 9.99999974E-6 : f32
    %151 = vector.broadcast %cst_78 : f32 to vector<256x1xf32>
    %152 = arith.addf %150, %151 : vector<256x1xf32>
    %153 = math.rsqrt %152 : vector<256x1xf32>
    %154 = vector.broadcast %153 : vector<256x1xf32> to vector<256x32xf32>
    %155 = arith.mulf %145, %154 : vector<256x32xf32>
    %156 = vector.broadcast %138 : vector<1x32xf32> to vector<256x32xf32>
    %157 = arith.mulf %155, %156 : vector<256x32xf32>
    %158 = vector.broadcast %139 : vector<1x32xf32> to vector<256x32xf32>
    %159 = arith.addf %157, %158 : vector<256x32xf32>
    %c0_79 = arith.constant 0 : index
    %c0_80 = arith.constant 0 : index
    %160 = vector.load %arg13[%c0_79, %c0_80] : memref<32x32xf32, #tpu.memory_space<vmem>>, vector<32x32xf32>
    %cst_81 = arith.constant dense<0.000000e+00> : vector<256x32xf32>
    %161 = tpu.matmul %159, %160, %cst_81 {dimension_numbers = #tpu.dot_dimension_numbers<[1], [0], [0], [1], [0, 0, 1, 1], [], []>} : vector<256x32xf32>, vector<32x32xf32>, vector<256x32xf32> -> vector<256x32xf32>
    %c0_82 = arith.constant 0 : index
    %c0_83 = arith.constant 0 : index
    %162 = vector.load %arg14[%c0_82, %c0_83] : memref<1x32xf32, #tpu.memory_space<vmem>>, vector<1x32xf32>
    %163 = vector.broadcast %162 : vector<1x32xf32> to vector<256x32xf32>
    %164 = arith.addf %161, %163 : vector<256x32xf32>
    %cst_84 = arith.constant 5.000000e-01 : f32
    %165 = vector.broadcast %cst_84 : f32 to vector<256x32xf32>
    %166 = arith.mulf %165, %164 : vector<256x32xf32>
    %167 = arith.mulf %164, %164 : vector<256x32xf32>
    %168 = arith.mulf %167, %164 : vector<256x32xf32>
    %cst_85 = arith.constant 4.471500e-02 : f32
    %169 = vector.broadcast %cst_85 : f32 to vector<256x32xf32>
    %170 = arith.mulf %169, %168 : vector<256x32xf32>
    %171 = arith.addf %164, %170 : vector<256x32xf32>
    %cst_86 = arith.constant 0.797884583 : f32
    %172 = vector.broadcast %cst_86 : f32 to vector<256x32xf32>
    %173 = arith.mulf %172, %171 : vector<256x32xf32>
    %174 = math.tanh %173 : vector<256x32xf32>
    %cst_87 = arith.constant 1.000000e+00 : f32
    %175 = vector.broadcast %cst_87 : f32 to vector<256x32xf32>
    %176 = arith.addf %175, %174 : vector<256x32xf32>
    %177 = arith.mulf %166, %176 : vector<256x32xf32>
    %c0_88 = arith.constant 0 : index
    %c0_89 = arith.constant 0 : index
    %178 = vector.load %arg15[%c0_88, %c0_89] : memref<32x32xf32, #tpu.memory_space<vmem>>, vector<32x32xf32>
    %cst_90 = arith.constant dense<0.000000e+00> : vector<256x32xf32>
    %179 = tpu.matmul %177, %178, %cst_90 {dimension_numbers = #tpu.dot_dimension_numbers<[1], [0], [0], [1], [0, 0, 1, 1], [], []>} : vector<256x32xf32>, vector<32x32xf32>, vector<256x32xf32> -> vector<256x32xf32>
    %c0_91 = arith.constant 0 : index
    %c0_92 = arith.constant 0 : index
    %180 = vector.load %arg16[%c0_91, %c0_92] : memref<1x32xf32, #tpu.memory_space<vmem>>, vector<1x32xf32>
    %181 = vector.broadcast %180 : vector<1x32xf32> to vector<256x32xf32>
    %182 = arith.addf %179, %181 : vector<256x32xf32>
    %183 = arith.addf %137, %182 : vector<256x32xf32>
    %184 = vector.shape_cast %183 : vector<256x32xf32> to vector<16x16x32xf32>
    %c0_93 = arith.constant 0 : index
    %c0_94 = arith.constant 0 : index
    %c0_95 = arith.constant 0 : index
    %c0_96 = arith.constant 0 : index
    %185 = vector.load %arg17[%c0_93, %c0_94, %c0_95, %c0_96] : memref<1x16x16x32xf32, #tpu.memory_space<vmem>>, vector<1x16x16x32xf32>
    %186 = vector.shape_cast %185 : vector<1x16x16x32xf32> to vector<16x16x32xf32>
    %187 = vector.shape_cast %184 : vector<16x16x32xf32> to vector<1x16x16x32xf32>
    tpu.vector_store %arg17[%c0_93, %c0_94, %c0_95, %c0_96], %187 {strides = array<i32>} : memref<1x16x16x32xf32, #tpu.memory_space<vmem>>, vector<1x16x16x32xf32>,
    return
  }
  func.func @transform_0(%arg0: i32) -> (i32, i32, i32, i32) {
    %c0_i32 = arith.constant 0 : i32
    %c0_i32_0 = arith.constant 0 : i32
    %c0_i32_1 = arith.constant 0 : i32
    %c0_i32_2 = arith.constant 0 : i32
    return %arg0, %c0_i32, %c0_i32_0, %c0_i32_1 : i32, i32, i32, i32
  }
  func.func @transform_1(%arg0: i32) -> (i32, i32) {
    %c0_i32 = arith.constant 0 : i32
    %c0_i32_0 = arith.constant 0 : i32
    %c0_i32_1 = arith.constant 0 : i32
    return %c0_i32, %c0_i32_0 : i32, i32
  }
  func.func @transform_2(%arg0: i32) -> (i32, i32) {
    %c0_i32 = arith.constant 0 : i32
    %c0_i32_0 = arith.constant 0 : i32
    %c0_i32_1 = arith.constant 0 : i32
    return %c0_i32, %c0_i32_0 : i32, i32
  }
  func.func @transform_3(%arg0: i32) -> (i32, i32) {
    %c0_i32 = arith.constant 0 : i32
    %c0_i32_0 = arith.constant 0 : i32
    %c0_i32_1 = arith.constant 0 : i32
    return %c0_i32, %c0_i32_0 : i32, i32
  }
  func.func @transform_4(%arg0: i32) -> (i32, i32) {
    %c0_i32 = arith.constant 0 : i32
    %c0_i32_0 = arith.constant 0 : i32
    %c0_i32_1 = arith.constant 0 : i32
    return %c0_i32, %c0_i32_0 : i32, i32
  }
  func.func @transform_5(%arg0: i32) -> (i32, i32) {
    %c0_i32 = arith.constant 0 : i32
    %c0_i32_0 = arith.constant 0 : i32
    %c0_i32_1 = arith.constant 0 : i32
    return %c0_i32, %c0_i32_0 : i32, i32
  }
  func.func @transform_6(%arg0: i32) -> (i32, i32) {
    %c0_i32 = arith.constant 0 : i32
    %c0_i32_0 = arith.constant 0 : i32
    %c0_i32_1 = arith.constant 0 : i32
    return %c0_i32, %c0_i32_0 : i32, i32
  }
  func.func @transform_7(%arg0: i32) -> (i32, i32) {
    %c0_i32 = arith.constant 0 : i32
    %c0_i32_0 = arith.constant 0 : i32
    %c0_i32_1 = arith.constant 0 : i32
    return %c0_i32, %c0_i32_0 : i32, i32
  }
  func.func @transform_8(%arg0: i32) -> (i32, i32) {
    %c0_i32 = arith.constant 0 : i32
    %c0_i32_0 = arith.constant 0 : i32
    %c0_i32_1 = arith.constant 0 : i32
    return %c0_i32, %c0_i32_0 : i32, i32
  }
  func.func @transform_9(%arg0: i32) -> (i32, i32) {
    %c0_i32 = arith.constant 0 : i32
    %c0_i32_0 = arith.constant 0 : i32
    %c0_i32_1 = arith.constant 0 : i32
    return %c0_i32, %c0_i32_0 : i32, i32
  }
  func.func @transform_10(%arg0: i32) -> (i32, i32) {
    %c0_i32 = arith.constant 0 : i32
    %c0_i32_0 = arith.constant 0 : i32
    %c0_i32_1 = arith.constant 0 : i32
    return %c0_i32, %c0_i32_0 : i32, i32
  }
  func.func @transform_11(%arg0: i32) -> (i32, i32) {
    %c0_i32 = arith.constant 0 : i32
    %c0_i32_0 = arith.constant 0 : i32
    %c0_i32_1 = arith.constant 0 : i32
    return %c0_i32, %c0_i32_0 : i32, i32
  }
  func.func @transform_12(%arg0: i32) -> (i32, i32) {
    %c0_i32 = arith.constant 0 : i32
    %c0_i32_0 = arith.constant 0 : i32
    %c0_i32_1 = arith.constant 0 : i32
    return %c0_i32, %c0_i32_0 : i32, i32
  }
  func.func @transform_13(%arg0: i32) -> (i32, i32) {
    %c0_i32 = arith.constant 0 : i32
    %c0_i32_0 = arith.constant 0 : i32
    %c0_i32_1 = arith.constant 0 : i32
    return %c0_i32, %c0_i32_0 : i32, i32
  }
  func.func @transform_14(%arg0: i32) -> (i32, i32) {
    %c0_i32 = arith.constant 0 : i32
    %c0_i32_0 = arith.constant 0 : i32
    %c0_i32_1 = arith.constant 0 : i32
    return %c0_i32, %c0_i32_0 : i32, i32
  }
  func.func @transform_15(%arg0: i32) -> (i32, i32) {
    %c0_i32 = arith.constant 0 : i32
    %c0_i32_0 = arith.constant 0 : i32
    %c0_i32_1 = arith.constant 0 : i32
    return %c0_i32, %c0_i32_0 : i32, i32
  }
  func.func @transform_16(%arg0: i32) -> (i32, i32, i32, i32) {
    %c0_i32 = arith.constant 0 : i32
    %c0_i32_0 = arith.constant 0 : i32
    %c0_i32_1 = arith.constant 0 : i32
    %c0_i32_2 = arith.constant 0 : i32
    return %arg0, %c0_i32, %c0_i32_0, %c0_i32_1 : i32, i32, i32, i32
  }
}

</mosaic_0001>

<llo_original>
// kernel: basic_stage_forward.5
$region0: #{basic_stage_forward.5}
  #allocation0 [shape = 'u32[]', space=smem, size = 0x4, offset = 0x4, fixed_abs, tag = 'smem constant byte address 0x4 - core index']
  #allocation1 [shape = 'u32[144,128]{1,0:T(1,128)}', space=vmem, size = 0x12000, scoped, tag = 'internal scratch']
  #allocation2 [shape = 'f32[18,18,32]{2,1,0:T(8,128)}', space=vmem, size = 0x36000, scoped, tag = 'scratch operand']
  %s0 = inlined_call_operand.vmem [shape: f32[2,16,16,32], index: 0, kind: input, shape index: {}]
  %s1 = inlined_call_operand.vmem [shape: f32[9,32,64], index: 1, kind: input, shape index: {}]
  %s2 = inlined_call_operand.vmem [shape: f32[1,64], index: 2, kind: input, shape index: {}]
  %s3 = inlined_call_operand.hbm [shape: f32[2,8,8,64], index: 3, kind: output, shape index: {}]
  %s4 = sld [smem:[#allocation0]]
  $region45: #{basic_stage_forward.5} parent=0
    _
  %s6 = ssub.s32 1, %s4
  %s7 = scalar_select 0, %s6, %s4
  $region1: #{basic_stage_forward.5} parent=0
    #allocation3 [shape = 'u8[65536]{0}', space=vmem, size = 0x10000, scoped, tag = 'output window, operand 0']
    #allocation4 [shape = 's32[2]{0}', space=sflag, size = 0x8, scoped, tag = 'scoped memory for basic_stage_forward.5']
    %8 = vsyncpa [#allocation4], 0
    %s9 = scalar_lea.sflag [#allocation4], 1
    %10 = vsyncpa %s9, 0
    loop: start=0, step=1, limit=4
    $region2: #{basic_stage_forward.5} parent=1 // loop_pre_header
      _
    $region3: #{basic_stage_forward.5} parent=1 // loop_header
      %s12 = sphi 0, %s16
      %p13 = scmp.ge.s32.totalorder %s12, 4
      %s22 = sphi 0, %s24
      %s25 = sphi 0, %s22
      %s26 = sphi 0, %s25
      %s42 = sphi 0, %s26
      %s46 = sphi 0, %s46
      %s48 = sphi 0, %s46
      %s49 = sphi 0, %s48
      %s63 = sphi 0, %s49
      %s67 = sphi 0, %s67
      %s69 = sphi 0, %s67
      %s70 = sphi 0, %s69
      %s84 = sphi 0, %s70
      %s90 = sphi 0, %s92
      %s93 = sphi 0, %s90
      %s94 = sphi 0, %s93
      %s110 = sphi 0, %s94
    $region4: #{basic_stage_forward.5} parent=1 // loop_header_branch
      %15 = sbr.rel (%p13) target = $region8
    $region5: #{basic_stage_forward.5} parent=1 // loop_body
      %s17 = ssub.s32 %s12, 1
      %s18 = ssub.s32 %s12, 2
      %s19 = sadd.s32 %s12, 1
      %s20 = ssub.s32 %s12, %s19
      %p21 = scmp.eq.s32.totalorder %s20, 0
      %s23 = sadd.s32 %s22, 1
      %s24 = scalar_select %p21, %s22, %s23
      %p27 = pneg %p21
      %p28 = scmp.eq.s32.totalorder %s12, 1
      %p29 = por %p27, %p28
      %p30 = scmp.ne.s32.totalorder %s22, %s25
      %p31 = scmp.eq.s32.totalorder %s12, 0
      %p32 = por %p30, %p31
      %p33 = scmp.ne.s32.totalorder %s22, %s25
      %p34 = scmp.eq.s32.totalorder %s17, 1
      %p35 = por %p33, %p34
      %p36 = scmp.ne.s32.totalorder %s25, %s26
      %p37 = scmp.eq.s32.totalorder %s17, 0
      %p38 = por %p36, %p37
      %p39 = scmp.ne.s32.totalorder %s25, %s26
      %p40 = scmp.eq.s32.totalorder %s18, 1
      %p41 = por %p39, %p40
      %p43 = scmp.ne.s32.totalorder %s26, %s42
      %p44 = scmp.eq.s32.totalorder %s18, 0
      %p45 = por %p43, %p44
      %s47 = sadd.s32 %s46, 1
      %p50 = scmp.eq.s32.totalorder %s12, 1
      %p51 = scmp.ne.s32.totalorder %s46, %s48
      %p52 = scmp.eq.s32.totalorder %s12, 0
      %p53 = por %p51, %p52
      %p54 = scmp.ne.s32.totalorder %s46, %s48
      %p55 = scmp.eq.s32.totalorder %s17, 1
      %p56 = por %p54, %p55
      %p57 = scmp.ne.s32.totalorder %s48, %s49
      %p58 = scmp.eq.s32.totalorder %s17, 0
      %p59 = por %p57, %p58
      %p60 = scmp.ne.s32.totalorder %s48, %s49
      %p61 = scmp.eq.s32.totalorder %s18, 1
      %p62 = por %p60, %p61
      %p64 = scmp.ne.s32.totalorder %s49, %s63
      %p65 = scmp.eq.s32.totalorder %s18, 0
      %p66 = por %p64, %p65
      %s68 = sadd.s32 %s67, 1
      %p71 = scmp.eq.s32.totalorder %s12, 1
      %p72 = scmp.ne.s32.totalorder %s67, %s69
      %p73 = scmp.eq.s32.totalorder %s12, 0
      %p74 = por %p72, %p73
      %p75 = scmp.ne.s32.totalorder %s67, %s69
      %p76 = scmp.eq.s32.totalorder %s17, 1
      %p77 = por %p75, %p76
      %p78 = scmp.ne.s32.totalorder %s69, %s70
      %p79 = scmp.eq.s32.totalorder %s17, 0
      %p80 = por %p78, %p79
      %p81 = scmp.ne.s32.totalorder %s69, %s70
      %p82 = scmp.eq.s32.totalorder %s18, 1
      %p83 = por %p81, %p82
      %p85 = scmp.ne.s32.totalorder %s70, %s84
      %p86 = scmp.eq.s32.totalorder %s18, 0
      %p87 = por %p85, %p86
      %s88 = ssub.s32 %s12, %s19
      %p89 = scmp.eq.s32.totalorder %s88, 0
      %s91 = sadd.s32 %s90, 1
      %s92 = scalar_select %p89, %s90, %s91
      %p95 = pneg %p89
      %p96 = scmp.eq.s32.totalorder %s12, 1
      %p97 = por %p95, %p96
      %p98 = scmp.ne.s32.totalorder %s90, %s93
      %p99 = scmp.eq.s32.totalorder %s12, 0
      %p100 = por %p98, %p99
      %p101 = scmp.ne.s32.totalorder %s90, %s93
      %p102 = scmp.eq.s32.totalorder %s17, 1
      %p103 = por %p101, %p102
      %p104 = scmp.ne.s32.totalorder %s93, %s94
      %p105 = scmp.eq.s32.totalorder %s17, 0
      %p106 = por %p104, %p105
      %p107 = scmp.ne.s32.totalorder %s93, %s94
      %p108 = scmp.eq.s32.totalorder %s18, 1
      %p109 = por %p107, %p108
      %p111 = scmp.ne.s32.totalorder %s94, %s110
      %p112 = scmp.eq.s32.totalorder %s18, 0
      %p113 = por %p111, %p112
      %p114 = scmp.le.s32.totalorder 1, %s12
      %p115 = scmp.lt.s32.totalorder %s12, 3
      %p116 = pnand %p114, %p115
      %p117 = pneg %p116
      // Predicated region
      $region9: #{basic_stage_forward.5} parent=5 // pred_check
        _
      $region10: #{basic_stage_forward.5} parent=5 // pred_check_branch
        %119 = sbr.rel (%p116) target = $region12
      $region11: #{basic_stage_forward.5} parent=5 // pred_region
        %s120 = ssub.s32 %s12, 1
        // Predicated region
        $region13: #{basic_stage_forward.5} parent=11 // pred_check
          %p121 = pneg %p59
        $region14: #{basic_stage_forward.5} parent=11 // pred_check_branch
          %123 = sbr.rel (%p121) target = $region16
        $region15: #{basic_stage_forward.5} parent=11 // pred_region
          _
        $region16: #{basic_stage_forward.5} parent=11 // pred_fallthru
          _
        // Predicated region
        $region17: #{basic_stage_forward.5} parent=11 // pred_check
          %p124 = pneg %p80
        $region18: #{basic_stage_forward.5} parent=11 // pred_check_branch
          %126 = sbr.rel (%p124) target = $region20
        $region19: #{basic_stage_forward.5} parent=11 // pred_region
          _
        $region20: #{basic_stage_forward.5} parent=11 // pred_fallthru
          _
      $region12: #{basic_stage_forward.5} parent=5 // pred_fallthru
        _
      %p127 = scmp.lt.s32.totalorder %s12, 2
      // Predicated region
      $region21: #{basic_stage_forward.5} parent=5 // pred_check
        %p128 = pneg %p127
      $region22: #{basic_stage_forward.5} parent=5 // pred_check_branch
        %130 = sbr.rel (%p128) target = $region24
      $region23: #{basic_stage_forward.5} parent=5 // pred_region
        // Predicated region
        $region25: #{basic_stage_forward.5} parent=23 // pred_check
          %p131 = pneg %p32
        $region26: #{basic_stage_forward.5} parent=23 // pred_check_branch
          %133 = sbr.rel (%p131) target = $region28
        $region27: #{basic_stage_forward.5} parent=23 // pred_region
          %p134 = scmp.lt.s32.totalorder %s12, 1
          %s135 = scalar_select %p134, %s12, 1
          %s136 = smul.addr %s135, 32
          %s137 = smul.addr %s136, 8
          %s138 = scalar_lea.vmem %s0, %s137
        $region28: #{basic_stage_forward.5} parent=23 // pred_fallthru
          _
      $region24: #{basic_stage_forward.5} parent=5 // pred_fallthru
        _
      %p139 = scmp.le.s32.totalorder 1, %s12
      %p140 = scmp.lt.s32.totalorder %s12, 3
      %p141 = pnand %p139, %p140
      %p142 = pneg %p141
      // Predicated region
      $region29: #{basic_stage_forward.5} parent=5 // pred_check
        _
      $region30: #{basic_stage_forward.5} parent=5 // pred_check_branch
        %144 = sbr.rel (%p141) target = $region32
      $region31: #{basic_stage_forward.5} parent=5 // pred_region
        %s145 = ssub.s32 %s12, 1
        %p146 = scmp.lt.s32.totalorder %s17, 1
        %s147 = scalar_select %p146, %s17, 1
        %s148 = smul.addr %s147, 32
        %s149 = smul.addr %s148, 8
        %s150 = scalar_lea.vmem %s0, %s149
        %p151 = pneg %p38
        %p152 = pneg %p35
        %p153 = pneg %p59
        %p154 = pneg %p56
        %p155 = pneg %p80
        %p156 = pneg %p77
        %p157 = pneg %p106
        %p158 = pneg %p103
        %s159 = sand.u32 %s93, 1
        %s160 = scalar_lea.sflag [#allocation4], %s159
        %s161 = sand.u32 %s93, 1
        %s162 = smul.addr %s161, 64
        %s163 = scalar_lea.vmem [#allocation3], %s162
        %p164 = scmp.lt.s32.totalorder %s17, 1
        %s165 = scalar_select %p164, %s17, 1
        %s166 = smul.addr %s165, 32
        %s167 = smul.addr %s166, 8
        %s168 = scalar_lea.vmem %s0, %s167
        %vm169 = vcmask 261120
        %170 = vst.msk [vmem:[#allocation2] sm:$0xff] %vm169, 0.0
        %171 = vst.msk [vmem:[#allocation2 + $0x8] sm:$0xff] %vm169, 0.0
        %vm172 = vcmask 254976
        %173 = vst.msk [vmem:[#allocation2 + $0x10] sm:$0x3] %vm172, 0.0
        %s174 = scalar_lea.vmem [#allocation2], 408
        %175 = vst.msk [vmem:[%s174] sm:$0xff] %vm169, 0.0
        %176 = vst.msk [vmem:[%s174 + $0x8] sm:$0xff] %vm169, 0.0
        %177 = vst.msk [vmem:[%s174 + $0x10] sm:$0x3] %vm172, 0.0
        %s178 = scalar_lea.vmem [#allocation2], 24
        %vm179 = vcmask 253952
        %180 = vst.msk [vmem:[%s178] sm:$0x1] %vm179, 0.0
        %181 = vst.msk [vmem:[%s178 + $0x18] sm:$0x1] %vm179, 0.0
        %182 = vst.msk [vmem:[%s178 + $0x30] sm:$0x1] %vm179, 0.0
        %183 = vst.msk [vmem:[%s178 + $0x48] sm:$0x1] %vm179, 0.0
        %184 = vst.msk [vmem:[%s178 + $0x60] sm:$0x1] %vm179, 0.0
        %185 = vst.msk [vmem:[%s178 + $0x78] sm:$0x1] %vm179, 0.0
        %186 = vst.msk [vmem:[%s178 + $0x90] sm:$0x1] %vm179, 0.0
        %187 = vst.msk [vmem:[%s178 + $0xa8] sm:$0x1] %vm179, 0.0
        %188 = vst.msk [vmem:[%s178 + $0xc0] sm:$0x1] %vm179, 0.0
        %189 = vst.msk [vmem:[%s178 + $0xd8] sm:$0x1] %vm179, 0.0
        %190 = vst.msk [vmem:[%s178 + $0xf0] sm:$0x1] %vm179, 0.0
        %191 = vst.msk [vmem:[%s178 + $0x108] sm:$0x1] %vm179, 0.0
        %192 = vst.msk [vmem:[%s178 + $0x120] sm:$0x1] %vm179, 0.0
        %193 = vst.msk [vmem:[%s178 + $0x138] sm:$0x1] %vm179, 0.0
        %194 = vst.msk [vmem:[%s178 + $0x150] sm:$0x1] %vm179, 0.0
        %195 = vst.msk [vmem:[%s178 + $0x168] sm:$0x1] %vm179, 0.0
        %196 = vst.msk [vmem:[%s178 + $0x11] sm:$0x1] %vm179, 0.0
        %197 = vst.msk [vmem:[%s178 + $0x29] sm:$0x1] %vm179, 0.0
        %198 = vst.msk [vmem:[%s178 + $0x41] sm:$0x1] %vm179, 0.0
        %199 = vst.msk [vmem:[%s178 + $0x59] sm:$0x1] %vm179, 0.0
        %200 = vst.msk [vmem:[%s178 + $0x71] sm:$0x1] %vm179, 0.0
        %201 = vst.msk [vmem:[%s178 + $0x89] sm:$0x1] %vm179, 0.0
        %202 = vst.msk [vmem:[%s178 + $0xa1] sm:$0x1] %vm179, 0.0
        %203 = vst.msk [vmem:[%s178 + $0xb9] sm:$0x1] %vm179, 0.0
        %204 = vst.msk [vmem:[%s178 + $0xd1] sm:$0x1] %vm179, 0.0
        %205 = vst.msk [vmem:[%s178 + $0xe9] sm:$0x1] %vm179, 0.0
        %206 = vst.msk [vmem:[%s178 + $0x101] sm:$0x1] %vm179, 0.0
        %207 = vst.msk [vmem:[%s178 + $0x119] sm:$0x1] %vm179, 0.0
        %208 = vst.msk [vmem:[%s178 + $0x131] sm:$0x1] %vm179, 0.0
        %209 = vst.msk [vmem:[%s178 + $0x149] sm:$0x1] %vm179, 0.0
        %210 = vst.msk [vmem:[%s178 + $0x161] sm:$0x1] %vm179, 0.0
        %211 = vst.msk [vmem:[%s178 + $0x179] sm:$0x1] %vm179, 0.0
        %v212 = vld [vmem:[%s168] sm:$0xff]
        %v213 = vld [vmem:[%s168 + $0x8] sm:$0xff]
        %v214 = vld [vmem:[%s168 + $0x10] sm:$0xff]
        %v215 = vld [vmem:[%s168 + $0x18] sm:$0xff]
        %v216 = vld [vmem:[%s168 + $0x20] sm:$0xff]
        %v217 = vld [vmem:[%s168 + $0x28] sm:$0xff]
        %v218 = vld [vmem:[%s168 + $0x30] sm:$0xff]
        %v219 = vld [vmem:[%s168 + $0x38] sm:$0xff]
        %v220 = vld [vmem:[%s168 + $0x40] sm:$0xff]
        %v221 = vld [vmem:[%s168 + $0x48] sm:$0xff]
        %v222 = vld [vmem:[%s168 + $0x50] sm:$0xff]
        %v223 = vld [vmem:[%s168 + $0x58] sm:$0xff]
        %v224 = vld [vmem:[%s168 + $0x60] sm:$0xff]
        %v225 = vld [vmem:[%s168 + $0x68] sm:$0xff]
        %v226 = vld [vmem:[%s168 + $0x70] sm:$0xff]
        %v227 = vld [vmem:[%s168 + $0x78] sm:$0xff]
        %v228 = vld [vmem:[%s168 + $0x80] sm:$0xff]
        %v229 = vld [vmem:[%s168 + $0x88] sm:$0xff]
        %v230 = vld [vmem:[%s168 + $0x90] sm:$0xff]
        %v231 = vld [vmem:[%s168 + $0x98] sm:$0xff]
        %v232 = vld [vmem:[%s168 + $0xa0] sm:$0xff]
        %v233 = vld [vmem:[%s168 + $0xa8] sm:$0xff]
        %v234 = vld [vmem:[%s168 + $0xb0] sm:$0xff]
        %v235 = vld [vmem:[%s168 + $0xb8] sm:$0xff]
        %v236 = vld [vmem:[%s168 + $0xc0] sm:$0xff]
        %v237 = vld [vmem:[%s168 + $0xc8] sm:$0xff]
        %v238 = vld [vmem:[%s168 + $0xd0] sm:$0xff]
        %v239 = vld [vmem:[%s168 + $0xd8] sm:$0xff]
        %v240 = vld [vmem:[%s168 + $0xe0] sm:$0xff]
        %v241 = vld [vmem:[%s168 + $0xe8] sm:$0xff]
        %v242 = vld [vmem:[%s168 + $0xf0] sm:$0xff]
        %v243 = vld [vmem:[%s168 + $0xf8] sm:$0xff]
        %244 = vst.msk [vmem:[%s178 + $0x1] sm:$0xff] %vm169, %v212
        %245 = vst.msk [vmem:[%s178 + $0x9] sm:$0xff] %vm169, %v213
        %246 = vst.msk [vmem:[%s178 + $0x19] sm:$0xff] %vm169, %v214
        %247 = vst.msk [vmem:[%s178 + $0x21] sm:$0xff] %vm169, %v215
        %248 = vst.msk [vmem:[%s178 + $0x31] sm:$0xff] %vm169, %v216
        %249 = vst.msk [vmem:[%s178 + $0x39] sm:$0xff] %vm169, %v217
        %250 = vst.msk [vmem:[%s178 + $0x49] sm:$0xff] %vm169, %v218
        %251 = vst.msk [vmem:[%s178 + $0x51] sm:$0xff] %vm169, %v219
        %252 = vst.msk [vmem:[%s178 + $0x61] sm:$0xff] %vm169, %v220
        %253 = vst.msk [vmem:[%s178 + $0x69] sm:$0xff] %vm169, %v221
        %254 = vst.msk [vmem:[%s178 + $0x79] sm:$0xff] %vm169, %v222
        %255 = vst.msk [vmem:[%s178 + $0x81] sm:$0xff] %vm169, %v223
        %256 = vst.msk [vmem:[%s178 + $0x91] sm:$0xff] %vm169, %v224
        %257 = vst.msk [vmem:[%s178 + $0x99] sm:$0xff] %vm169, %v225
        %258 = vst.msk [vmem:[%s178 + $0xa9] sm:$0xff] %vm169, %v226
        %259 = vst.msk [vmem:[%s178 + $0xb1] sm:$0xff] %vm169, %v227
        %260 = vst.msk [vmem:[%s178 + $0xc1] sm:$0xff] %vm169, %v228
        %261 = vst.msk [vmem:[%s178 + $0xc9] sm:$0xff] %vm169, %v229
        %262 = vst.msk [vmem:[%s178 + $0xd9] sm:$0xff] %vm169, %v230
        %263 = vst.msk [vmem:[%s178 + $0xe1] sm:$0xff] %vm169, %v231
        %264 = vst.msk [vmem:[%s178 + $0xf1] sm:$0xff] %vm169, %v232
        %265 = vst.msk [vmem:[%s178 + $0xf9] sm:$0xff] %vm169, %v233
        %266 = vst.msk [vmem:[%s178 + $0x109] sm:$0xff] %vm169, %v234
        %267 = vst.msk [vmem:[%s178 + $0x111] sm:$0xff] %vm169, %v235
        %268 = vst.msk [vmem:[%s178 + $0x121] sm:$0xff] %vm169, %v236
        %269 = vst.msk [vmem:[%s178 + $0x129] sm:$0xff] %vm169, %v237
        %270 = vst.msk [vmem:[%s178 + $0x139] sm:$0xff] %vm169, %v238
        %271 = vst.msk [vmem:[%s178 + $0x141] sm:$0xff] %vm169, %v239
        %272 = vst.msk [vmem:[%s178 + $0x151] sm:$0xff] %vm169, %v240
        %273 = vst.msk [vmem:[%s178 + $0x159] sm:$0xff] %vm169, %v241
        %274 = vst.msk [vmem:[%s178 + $0x169] sm:$0xff] %vm169, %v242
        %275 = vst.msk [vmem:[%s178 + $0x171] sm:$0xff] %vm169, %v243
        %v276 = vld [vmem:[#allocation2] ss:$2 sm:$0xff]
        %s277 = scalar_lea.vmem [#allocation2], 48
        %v278 = vld [vmem:[%s277] ss:$2 sm:$0xff]
        %s279 = scalar_lea.vmem [#allocation2], 96
        %v280 = vld [vmem:[%s279] ss:$2 sm:$0xff]
        %s281 = scalar_lea.vmem [#allocation2], 144
        %v282 = vld [vmem:[%s281] ss:$2 sm:$0xff]
        %s283 = scalar_lea.vmem [#allocation2], 192
        %v284 = vld [vmem:[%s283] ss:$2 sm:$0xff]
        %s285 = scalar_lea.vmem [#allocation2], 240
        %v286 = vld [vmem:[%s285] ss:$2 sm:$0xff]
        %s287 = scalar_lea.vmem [#allocation2], 288
        %v288 = vld [vmem:[%s287] ss:$2 sm:$0xff]
        %s289 = scalar_lea.vmem [#allocation2], 336
        %v290 = vld [vmem:[%s289] ss:$2 sm:$0xff]
        %v291 = vld [vmem:[%s1] sm:$0xff]
        %v292 = vld [vmem:[%s1 + $0x8] sm:$0xff]
        %v293 = vld [vmem:[%s1 + $0x10] sm:$0xff]
        %v294 = vld [vmem:[%s1 + $0x18] sm:$0xff]
        %s295 = scalar_lea.vmem [#allocation2], 1
        %v296 = vld [vmem:[%s295] ss:$2 sm:$0xff]
        %s297 = scalar_lea.vmem [#allocation2], 49
        %v298 = vld [vmem:[%s297] ss:$2 sm:$0xff]
        %s299 = scalar_lea.vmem [#allocation2], 97
        %v300 = vld [vmem:[%s299] ss:$2 sm:$0xff]
        %s301 = scalar_lea.vmem [#allocation2], 145
        %v302 = vld [vmem:[%s301] ss:$2 sm:$0xff]
        %s303 = scalar_lea.vmem [#allocation2], 193
        %v304 = vld [vmem:[%s303] ss:$2 sm:$0xff]
        %s305 = scalar_lea.vmem [#allocation2], 241
        %v306 = vld [vmem:[%s305] ss:$2 sm:$0xff]
        %s307 = scalar_lea.vmem [#allocation2], 289
        %v308 = vld [vmem:[%s307] ss:$2 sm:$0xff]
        %s309 = scalar_lea.vmem [#allocation2], 337
        %v310 = vld [vmem:[%s309] ss:$2 sm:$0xff]
        %s311 = scalar_lea.vmem %s1, 32
        %v312 = vld [vmem:[%s311] sm:$0xff]
        %v313 = vld [vmem:[%s311 + $0x8] sm:$0xff]
        %v314 = vld [vmem:[%s311 + $0x10] sm:$0xff]
        %v315 = vld [vmem:[%s311 + $0x18] sm:$0xff]
        %v317 = vsel %vm169, %v296, 0
        %v320 = vsel %vm169, %v298, 0
        %v323 = vsel %vm169, %v300, 0
        %v326 = vsel %vm169, %v302, 0
        %v329 = vsel %vm169, %v304, 0
        %v332 = vsel %vm169, %v306, 0
        %v335 = vsel %vm169, %v308, 0
        %v338 = vsel %vm169, %v310, 0
        %340 = vmatprep.subr.mxu0 0.0
        %341 = vmatpush1.msra.mxu0 %v312
        %342 = vmatprep.subr.mxu0 0.0
        %343 = vmatpush1.msra.mxu0 %v313
        %344 = vmatprep.subr.mxu0 0.0
        %345 = vmatpush1.msra.mxu0 %v314
        %346 = vmatprep.subr.mxu0 0.0
        %347 = vmatpush1.msra.mxu0 %v315
        %348 = vmatprep.subr.mxu0 0.0
        %349 = vmatpush1.msra.mxu0 0.0
        %350 = vmatprep.subr.mxu0 0.0
        %351 = vmatpush1.msra.mxu0 0.0
        %352 = vmatprep.subr.mxu0 0.0
        %353 = vmatpush1.msra.mxu0 0.0
        %354 = vmatprep.subr.mxu0 0.0
        %355 = vmatpush1.msra.mxu0 0.0
        %356 = vmatprep.subr.mxu0 0.0
        %357 = vmatpush1.msra.mxu0 0.0
        %358 = vmatprep.subr.mxu0 0.0
        %359 = vmatpush1.msra.mxu0 0.0
        %360 = vmatprep.subr.mxu0 0.0
        %361 = vmatpush1.msra.mxu0 0.0
        %362 = vmatprep.subr.mxu0 0.0
        %363 = vmatpush1.msra.mxu0 0.0
        %364 = vmatprep.subr.mxu0 0.0
        %365 = vmatpush1.msra.mxu0 0.0
        %366 = vmatprep.subr.mxu0 0.0
        %367 = vmatpush1.msra.mxu0 0.0
        %368 = vmatprep.subr.mxu0 0.0
        %369 = vmatpush1.msra.mxu0 0.0
        %370 = vmatprep.subr.mxu0 0.0
        %371 = vmatpush1.msra.mxu0 0.0
        %372 = vmatprep.subr.mxu0 0.0
        %373 = vmatpush1.msra.mxu0 0.0
        %374 = vmatprep.subr.mxu0 0.0
        %375 = vmatpush1.msra.mxu0 0.0
        %376 = vmatprep.subr.mxu0 0.0
        %377 = vmatpush1.msra.mxu0 0.0
        %378 = vmatprep.subr.mxu0 0.0
        %379 = vmatpush1.msra.mxu0 0.0
        %380 = vmatprep.subr.mxu0 0.0
        %381 = vmatpush1.msra.mxu0 0.0
        %382 = vmatprep.subr.mxu0 0.0
        %383 = vmatpush1.msra.mxu0 0.0
        %384 = vmatprep.subr.mxu0 0.0
        %385 = vmatpush1.msra.mxu0 0.0
        %386 = vmatprep.subr.mxu0 0.0
        %387 = vmatpush1.msra.mxu0 0.0
        %388 = vmatprep.subr.mxu0 0.0
        %389 = vmatpush1.msra.mxu0 0.0
        %390 = vmatprep.subr.mxu0 0.0
        %391 = vmatpush1.msra.mxu0 0.0
        %392 = vmatprep.subr.mxu0 0.0
        %393 = vmatpush1.msra.mxu0 0.0
        %394 = vmatprep.subr.mxu0 0.0
        %395 = vmatpush1.msra.mxu0 0.0
        %396 = vmatprep.subr.mxu0 0.0
        %397 = vmatpush1.msra.mxu0 0.0
        %398 = vmatprep.subr.mxu0 0.0
        %399 = vmatpush1.msra.mxu0 0.0
        %400 = vmatprep.subr.mxu0 0.0
        %401 = vmatpush1.msra.mxu0 0.0
        %402 = vmatprep.subr.mxu0 0.0
        %403 = vmatpush1.msra.mxu0 0.0
        %404 = vmatprep.mubr.f32.mxu0 0.0
        %405 = vmatmul.mubr.f32.gmra.mrb[0].mxu0 %v317
        %v406 = vpop.f32.mrb[0].mxu0
        %v407 = vadd.f32 0.0, %v406
        %v408 = vpop.f32.mrb[0].mxu0
        %409 = vmatprep.mubr.f32.mxu0 0.0
        %410 = vmatmul.mubr.f32.gmra.mrb[0].mxu0 %v320
        %v411 = vpop.f32.mrb[0].mxu0
        %v412 = vadd.f32 0.0, %v411
        %v413 = vpop.f32.mrb[0].mxu0
        %414 = vmatprep.mubr.f32.mxu0 0.0
        %415 = vmatmul.mubr.f32.gmra.mrb[0].mxu0 %v323
        %v416 = vpop.f32.mrb[0].mxu0
        %v417 = vadd.f32 0.0, %v416
        %v418 = vpop.f32.mrb[0].mxu0
        %419 = vmatprep.mubr.f32.mxu0 0.0
        %420 = vmatmul.mubr.f32.gmra.mrb[0].mxu0 %v326
        %v421 = vpop.f32.mrb[0].mxu0
        %v422 = vadd.f32 0.0, %v421
        %v423 = vpop.f32.mrb[0].mxu0
        %424 = vmatprep.mubr.f32.mxu0 0.0
        %425 = vmatmul.mubr.f32.gmra.mrb[0].mxu0 %v329
        %v426 = vpop.f32.mrb[0].mxu0
        %v427 = vadd.f32 0.0, %v426
        %v428 = vpop.f32.mrb[0].mxu0
        %429 = vmatprep.mubr.f32.mxu0 0.0
        %430 = vmatmul.mubr.f32.gmra.mrb[0].mxu0 %v332
        %v431 = vpop.f32.mrb[0].mxu0
        %v432 = vadd.f32 0.0, %v431
        %v433 = vpop.f32.mrb[0].mxu0
        %434 = vmatprep.mubr.f32.mxu0 0.0
        %435 = vmatmul.mubr.f32.gmra.mrb[0].mxu0 %v335
        %v436 = vpop.f32.mrb[0].mxu0
        %v437 = vadd.f32 0.0, %v436
        %v438 = vpop.f32.mrb[0].mxu0
        %439 = vmatprep.mubr.f32.mxu0 0.0
        %440 = vmatmul.mubr.f32.gmra.mrb[0].mxu0 %v338
        %v441 = vpop.f32.mrb[0].mxu0
        %v442 = vadd.f32 0.0, %v441
        %v443 = vpop.f32.mrb[0].mxu0
        %444 = vdwg.mxu0
        %v446 = vsel %vm169, %v276, 0
        %v449 = vsel %vm169, %v278, 0
        %v452 = vsel %vm169, %v280, 0
        %v455 = vsel %vm169, %v282, 0
        %v458 = vsel %vm169, %v284, 0
        %v461 = vsel %vm169, %v286, 0
        %v464 = vsel %vm169, %v288, 0
        %v467 = vsel %vm169, %v290, 0
        %469 = vmatprep.subr.mxu0 0.0
        %470 = vmatpush1.msra.mxu0 %v291
        %471 = vmatprep.subr.mxu0 0.0
        %472 = vmatpush1.msra.mxu0 %v292
        %473 = vmatprep.subr.mxu0 0.0
        %474 = vmatpush1.msra.mxu0 %v293
        %475 = vmatprep.subr.mxu0 0.0
        %476 = vmatpush1.msra.mxu0 %v294
        %477 = vmatprep.subr.mxu0 0.0
        %478 = vmatpush1.msra.mxu0 0.0
        %479 = vmatprep.subr.mxu0 0.0
        %480 = vmatpush1.msra.mxu0 0.0
        %481 = vmatprep.subr.mxu0 0.0
        %482 = vmatpush1.msra.mxu0 0.0
        %483 = vmatprep.subr.mxu0 0.0
        %484 = vmatpush1.msra.mxu0 0.0
        %485 = vmatprep.subr.mxu0 0.0
        %486 = vmatpush1.msra.mxu0 0.0
        %487 = vmatprep.subr.mxu0 0.0
        %488 = vmatpush1.msra.mxu0 0.0
        %489 = vmatprep.subr.mxu0 0.0
        %490 = vmatpush1.msra.mxu0 0.0
        %491 = vmatprep.subr.mxu0 0.0
        %492 = vmatpush1.msra.mxu0 0.0
        %493 = vmatprep.subr.mxu0 0.0
        %494 = vmatpush1.msra.mxu0 0.0
        %495 = vmatprep.subr.mxu0 0.0
        %496 = vmatpush1.msra.mxu0 0.0
        %497 = vmatprep.subr.mxu0 0.0
        %498 = vmatpush1.msra.mxu0 0.0
        %499 = vmatprep.subr.mxu0 0.0
        %500 = vmatpush1.msra.mxu0 0.0
        %501 = vmatprep.subr.mxu0 0.0
        %502 = vmatpush1.msra.mxu0 0.0
        %503 = vmatprep.subr.mxu0 0.0
        %504 = vmatpush1.msra.mxu0 0.0
        %505 = vmatprep.subr.mxu0 0.0
        %506 = vmatpush1.msra.mxu0 0.0
        %507 = vmatprep.subr.mxu0 0.0
        %508 = vmatpush1.msra.mxu0 0.0
        %509 = vmatprep.subr.mxu0 0.0
        %510 = vmatpush1.msra.mxu0 0.0
        %511 = vmatprep.subr.mxu0 0.0
        %512 = vmatpush1.msra.mxu0 0.0
        %513 = vmatprep.subr.mxu0 0.0
        %514 = vmatpush1.msra.mxu0 0.0
        %515 = vmatprep.subr.mxu0 0.0
        %516 = vmatpush1.msra.mxu0 0.0
        %517 = vmatprep.subr.mxu0 0.0
        %518 = vmatpush1.msra.mxu0 0.0
        %519 = vmatprep.subr.mxu0 0.0
        %520 = vmatpush1.msra.mxu0 0.0
        %521 = vmatprep.subr.mxu0 0.0
        %522 = vmatpush1.msra.mxu0 0.0
        %523 = vmatprep.subr.mxu0 0.0
        %524 = vmatpush1.msra.mxu0 0.0
        %525 = vmatprep.subr.mxu0 0.0
        %526 = vmatpush1.msra.mxu0 0.0
        %527 = vmatprep.subr.mxu0 0.0
        %528 = vmatpush1.msra.mxu0 0.0
        %529 = vmatprep.subr.mxu0 0.0
        %530 = vmatpush1.msra.mxu0 0.0
        %531 = vmatprep.subr.mxu0 0.0
        %532 = vmatpush1.msra.mxu0 0.0
        %533 = vmatprep.mubr.f32.mxu0 0.0
        %534 = vmatmul.mubr.f32.gmra.mrb[0].mxu0 %v446
        %v535 = vpop.f32.mrb[0].mxu0
        %v536 = vadd.f32 %v407, %v535
        %v537 = vpop.f32.mrb[0].mxu0
        %538 = vmatprep.mubr.f32.mxu0 0.0
        %539 = vmatmul.mubr.f32.gmra.mrb[0].mxu0 %v449
        %v540 = vpop.f32.mrb[0].mxu0
        %v541 = vadd.f32 %v412, %v540
        %v542 = vpop.f32.mrb[0].mxu0
        %543 = vmatprep.mubr.f32.mxu0 0.0
        %544 = vmatmul.mubr.f32.gmra.mrb[0].mxu0 %v452
        %v545 = vpop.f32.mrb[0].mxu0
        %v546 = vadd.f32 %v417, %v545
        %v547 = vpop.f32.mrb[0].mxu0
        %548 = vmatprep.mubr.f32.mxu0 0.0
        %549 = vmatmul.mubr.f32.gmra.mrb[0].mxu0 %v455
        %v550 = vpop.f32.mrb[0].mxu0
        %v551 = vadd.f32 %v422, %v550
        %v552 = vpop.f32.mrb[0].mxu0
        %553 = vmatprep.mubr.f32.mxu0 0.0
        %554 = vmatmul.mubr.f32.gmra.mrb[0].mxu0 %v458
        %v555 = vpop.f32.mrb[0].mxu0
        %v556 = vadd.f32 %v427, %v555
        %v557 = vpop.f32.mrb[0].mxu0
        %558 = vmatprep.mubr.f32.mxu0 0.0
        %559 = vmatmul.mubr.f32.gmra.mrb[0].mxu0 %v461
        %v560 = vpop.f32.mrb[0].mxu0
        %v561 = vadd.f32 %v432, %v560
        %v562 = vpop.f32.mrb[0].mxu0
        %563 = vmatprep.mubr.f32.mxu0 0.0
        %564 = vmatmul.mubr.f32.gmra.mrb[0].mxu0 %v464
        %v565 = vpop.f32.mrb[0].mxu0
        %v566 = vadd.f32 %v437, %v565
        %v567 = vpop.f32.mrb[0].mxu0
        %568 = vmatprep.mubr.f32.mxu0 0.0
        %569 = vmatmul.mubr.f32.gmra.mrb[0].mxu0 %v467
        %v570 = vpop.f32.mrb[0].mxu0
        %v571 = vadd.f32 %v442, %v570
        %v572 = vpop.f32.mrb[0].mxu0
        %573 = vdwg.mxu0
        %s574 = scalar_lea.vmem [#allocation2], 2
        %v575 = vld [vmem:[%s574] ss:$2 sm:$0xff]
        %s576 = scalar_lea.vmem [#allocation2], 50
        %v577 = vld [vmem:[%s576] ss:$2 sm:$0xff]
        %s578 = scalar_lea.vmem [#allocation2], 98
        %v579 = vld [vmem:[%s578] ss:$2 sm:$0xff]
        %s580 = scalar_lea.vmem [#allocation2], 146
        %v581 = vld [vmem:[%s580] ss:$2 sm:$0xff]
        %s582 = scalar_lea.vmem [#allocation2], 194
        %v583 = vld [vmem:[%s582] ss:$2 sm:$0xff]
        %s584 = scalar_lea.vmem [#allocation2], 242
        %v585 = vld [vmem:[%s584] ss:$2 sm:$0xff]
        %s586 = scalar_lea.vmem [#allocation2], 290
        %v587 = vld [vmem:[%s586] ss:$2 sm:$0xff]
        %s588 = scalar_lea.vmem [#allocation2], 338
        %v589 = vld [vmem:[%s588] ss:$2 sm:$0xff]
        %s590 = scalar_lea.vmem %s1, 64
        %v591 = vld [vmem:[%s590] sm:$0xff]
        %v592 = vld [vmem:[%s590 + $0x8] sm:$0xff]
        %v593 = vld [vmem:[%s590 + $0x10] sm:$0xff]
        %v594 = vld [vmem:[%s590 + $0x18] sm:$0xff]
        %v596 = vsel %vm169, %v575, 0
        %v599 = vsel %vm169, %v577, 0
        %v602 = vsel %vm169, %v579, 0
        %v605 = vsel %vm169, %v581, 0
        %v608 = vsel %vm169, %v583, 0
        %v611 = vsel %vm169, %v585, 0
        %v614 = vsel %vm169, %v587, 0
        %v617 = vsel %vm169, %v589, 0
        %619 = vmatprep.subr.mxu0 0.0
        %620 = vmatpush1.msra.mxu0 %v591
        %621 = vmatprep.subr.mxu0 0.0
        %622 = vmatpush1.msra.mxu0 %v592
        %623 = vmatprep.subr.mxu0 0.0
        %624 = vmatpush1.msra.mxu0 %v593
        %625 = vmatprep.subr.mxu0 0.0
        %626 = vmatpush1.msra.mxu0 %v594
        %627 = vmatprep.subr.mxu0 0.0
        %628 = vmatpush1.msra.mxu0 0.0
        %629 = vmatprep.subr.mxu0 0.0
        %630 = vmatpush1.msra.mxu0 0.0
        %631 = vmatprep.subr.mxu0 0.0
        %632 = vmatpush1.msra.mxu0 0.0
        %633 = vmatprep.subr.mxu0 0.0
        %634 = vmatpush1.msra.mxu0 0.0
        %635 = vmatprep.subr.mxu0 0.0
        %636 = vmatpush1.msra.mxu0 0.0
        %637 = vmatprep.subr.mxu0 0.0
        %638 = vmatpush1.msra.mxu0 0.0
        %639 = vmatprep.subr.mxu0 0.0
        %640 = vmatpush1.msra.mxu0 0.0
        %641 = vmatprep.subr.mxu0 0.0
        %642 = vmatpush1.msra.mxu0 0.0
        %643 = vmatprep.subr.mxu0 0.0
        %644 = vmatpush1.msra.mxu0 0.0
        %645 = vmatprep.subr.mxu0 0.0
        %646 = vmatpush1.msra.mxu0 0.0
        %647 = vmatprep.subr.mxu0 0.0
        %648 = vmatpush1.msra.mxu0 0.0
        %649 = vmatprep.subr.mxu0 0.0
        %650 = vmatpush1.msra.mxu0 0.0
        %651 = vmatprep.subr.mxu0 0.0
        %652 = vmatpush1.msra.mxu0 0.0
        %653 = vmatprep.subr.mxu0 0.0
        %654 = vmatpush1.msra.mxu0 0.0
        %655 = vmatprep.subr.mxu0 0.0
        %656 = vmatpush1.msra.mxu0 0.0
        %657 = vmatprep.subr.mxu0 0.0
        %658 = vmatpush1.msra.mxu0 0.0
        %659 = vmatprep.subr.mxu0 0.0
        %660 = vmatpush1.msra.mxu0 0.0
        %661 = vmatprep.subr.mxu0 0.0
        %662 = vmatpush1.msra.mxu0 0.0
        %663 = vmatprep.subr.mxu0 0.0
        %664 = vmatpush1.msra.mxu0 0.0
        %665 = vmatprep.subr.mxu0 0.0
        %666 = vmatpush1.msra.mxu0 0.0
        %667 = vmatprep.subr.mxu0 0.0
        %668 = vmatpush1.msra.mxu0 0.0
        %669 = vmatprep.subr.mxu0 0.0
        %670 = vmatpush1.msra.mxu0 0.0
        %671 = vmatprep.subr.mxu0 0.0
        %672 = vmatpush1.msra.mxu0 0.0
        %673 = vmatprep.subr.mxu0 0.0
        %674 = vmatpush1.msra.mxu0 0.0
        %675 = vmatprep.subr.mxu0 0.0
        %676 = vmatpush1.msra.mxu0 0.0
        %677 = vmatprep.subr.mxu0 0.0
        %678 = vmatpush1.msra.mxu0 0.0
        %679 = vmatprep.subr.mxu0 0.0
        %680 = vmatpush1.msra.mxu0 0.0
        %681 = vmatprep.subr.mxu0 0.0
        %682 = vmatpush1.msra.mxu0 0.0
        %683 = vmatprep.mubr.f32.mxu0 0.0
        %684 = vmatmul.mubr.f32.gmra.mrb[0].mxu0 %v596
        %v685 = vpop.f32.mrb[0].mxu0
        %v686 = vadd.f32 0.0, %v685
        %v687 = vpop.f32.mrb[0].mxu0
        %688 = vmatprep.mubr.f32.mxu0 0.0
        %689 = vmatmul.mubr.f32.gmra.mrb[0].mxu0 %v599
        %v690 = vpop.f32.mrb[0].mxu0
        %v691 = vadd.f32 0.0, %v690
        %v692 = vpop.f32.mrb[0].mxu0
        %693 = vmatprep.mubr.f32.mxu0 0.0
        %694 = vmatmul.mubr.f32.gmra.mrb[0].mxu0 %v602
        %v695 = vpop.f32.mrb[0].mxu0
        %v696 = vadd.f32 0.0, %v695
        %v697 = vpop.f32.mrb[0].mxu0
        %698 = vmatprep.mubr.f32.mxu0 0.0
        %699 = vmatmul.mubr.f32.gmra.mrb[0].mxu0 %v605
        %v700 = vpop.f32.mrb[0].mxu0
        %v701 = vadd.f32 0.0, %v700
        %v702 = vpop.f32.mrb[0].mxu0
        %703 = vmatprep.mubr.f32.mxu0 0.0
        %704 = vmatmul.mubr.f32.gmra.mrb[0].mxu0 %v608
        %v705 = vpop.f32.mrb[0].mxu0
        %v706 = vadd.f32 0.0, %v705
        %v707 = vpop.f32.mrb[0].mxu0
        %708 = vmatprep.mubr.f32.mxu0 0.0
        %709 = vmatmul.mubr.f32.gmra.mrb[0].mxu0 %v611
        %v710 = vpop.f32.mrb[0].mxu0
        %v711 = vadd.f32 0.0, %v710
        %v712 = vpop.f32.mrb[0].mxu0
        %713 = vmatprep.mubr.f32.mxu0 0.0
        %714 = vmatmul.mubr.f32.gmra.mrb[0].mxu0 %v614
        %v715 = vpop.f32.mrb[0].mxu0
        %v716 = vadd.f32 0.0, %v715
        %v717 = vpop.f32.mrb[0].mxu0
        %718 = vmatprep.mubr.f32.mxu0 0.0
        %719 = vmatmul.mubr.f32.gmra.mrb[0].mxu0 %v617
        %v720 = vpop.f32.mrb[0].mxu0
        %v721 = vadd.f32 0.0, %v720
        %v722 = vpop.f32.mrb[0].mxu0
        %723 = vdwg.mxu0
        %v724 = vadd.f32 %v536, %v686
        %v725 = vadd.f32 %v541, %v691
        %v726 = vadd.f32 %v546, %v696
        %v727 = vadd.f32 %v551, %v701
        %v728 = vadd.f32 %v556, %v706
        %v729 = vadd.f32 %v561, %v711
        %v730 = vadd.f32 %v566, %v716
        %v731 = vadd.f32 %v571, %v721
        %v732 = vld [vmem:[%s178] ss:$2 sm:$0xff]
        %s733 = scalar_lea.vmem %s178, 48 [#allocation2]
        %v734 = vld [vmem:[%s733] ss:$2 sm:$0xff]
        %s735 = scalar_lea.vmem %s178, 96 [#allocation2]
        %v736 = vld [vmem:[%s735] ss:$2 sm:$0xff]
        %s737 = scalar_lea.vmem %s178, 144 [#allocation2]
        %v738 = vld [vmem:[%s737] ss:$2 sm:$0xff]
        %s739 = scalar_lea.vmem %s178, 192 [#allocation2]
        %v740 = vld [vmem:[%s739] ss:$2 sm:$0xff]
        %s741 = scalar_lea.vmem %s178, 240 [#allocation2]
        %v742 = vld [vmem:[%s741] ss:$2 sm:$0xff]
        %s743 = scalar_lea.vmem %s178, 288 [#allocation2]
        %v744 = vld [vmem:[%s743] ss:$2 sm:$0xff]
        %s745 = scalar_lea.vmem %s178, 336 [#allocation2]
        %v746 = vld [vmem:[%s745] ss:$2 sm:$0xff]
        %s747 = scalar_lea.vmem %s1, 96
        %v748 = vld [vmem:[%s747] sm:$0xff]
        %v749 = vld [vmem:[%s747 + $0x8] sm:$0xff]
        %v750 = vld [vmem:[%s747 + $0x10] sm:$0xff]
        %v751 = vld [vmem:[%s747 + $0x18] sm:$0xff]
        %v753 = vsel %vm169, %v732, 0
        %v756 = vsel %vm169, %v734, 0
        %v759 = vsel %vm169, %v736, 0
        %v762 = vsel %vm169, %v738, 0
        %v765 = vsel %vm169, %v740, 0
        %v768 = vsel %vm169, %v742, 0
        %v771 = vsel %vm169, %v744, 0
        %v774 = vsel %vm169, %v746, 0
        %776 = vmatprep.subr.mxu0 0.0
        %777 = vmatpush1.msra.mxu0 %v748
        %778 = vmatprep.subr.mxu0 0.0
        %779 = vmatpush1.msra.mxu0 %v749
        %780 = vmatprep.subr.mxu0 0.0
        %781 = vmatpush1.msra.mxu0 %v750
        %782 = vmatprep.subr.mxu0 0.0
        %783 = vmatpush1.msra.mxu0 %v751
        %784 = vmatprep.subr.mxu0 0.0
        %785 = vmatpush1.msra.mxu0 0.0
        %786 = vmatprep.subr.mxu0 0.0
        %787 = vmatpush1.msra.mxu0 0.0
        %788 = vmatprep.subr.mxu0 0.0
        %789 = vmatpush1.msra.mxu0 0.0
        %790 = vmatprep.subr.mxu0 0.0
        %791 = vmatpush1.msra.mxu0 0.0
        %792 = vmatprep.subr.mxu0 0.0
        %793 = vmatpush1.msra.mxu0 0.0
        %794 = vmatprep.subr.mxu0 0.0
        %795 = vmatpush1.msra.mxu0 0.0
        %796 = vmatprep.subr.mxu0 0.0
        %797 = vmatpush1.msra.mxu0 0.0
        %798 = vmatprep.subr.mxu0 0.0
        %799 = vmatpush1.msra.mxu0 0.0
        %800 = vmatprep.subr.mxu0 0.0
        %801 = vmatpush1.msra.mxu0 0.0
        %802 = vmatprep.subr.mxu0 0.0
        %803 = vmatpush1.msra.mxu0 0.0
        %804 = vmatprep.subr.mxu0 0.0
        %805 = vmatpush1.msra.mxu0 0.0
        %806 = vmatprep.subr.mxu0 0.0
        %807 = vmatpush1.msra.mxu0 0.0
        %808 = vmatprep.subr.mxu0 0.0
        %809 = vmatpush1.msra.mxu0 0.0
        %810 = vmatprep.subr.mxu0 0.0
        %811 = vmatpush1.msra.mxu0 0.0
        %812 = vmatprep.subr.mxu0 0.0
        %813 = vmatpush1.msra.mxu0 0.0
        %814 = vmatprep.subr.mxu0 0.0
        %815 = vmatpush1.msra.mxu0 0.0
        %816 = vmatprep.subr.mxu0 0.0
        %817 = vmatpush1.msra.mxu0 0.0
        %818 = vmatprep.subr.mxu0 0.0
        %819 = vmatpush1.msra.mxu0 0.0
        %820 = vmatprep.subr.mxu0 0.0
        %821 = vmatpush1.msra.mxu0 0.0
        %822 = vmatprep.subr.mxu0 0.0
        %823 = vmatpush1.msra.mxu0 0.0
        %824 = vmatprep.subr.mxu0 0.0
        %825 = vmatpush1.msra.mxu0 0.0
        %826 = vmatprep.subr.mxu0 0.0
        %827 = vmatpush1.msra.mxu0 0.0
        %828 = vmatprep.subr.mxu0 0.0
        %829 = vmatpush1.msra.mxu0 0.0
        %830 = vmatprep.subr.mxu0 0.0
        %831 = vmatpush1.msra.mxu0 0.0
        %832 = vmatprep.subr.mxu0 0.0
        %833 = vmatpush1.msra.mxu0 0.0
        %834 = vmatprep.subr.mxu0 0.0
        %835 = vmatpush1.msra.mxu0 0.0
        %836 = vmatprep.subr.mxu0 0.0
        %837 = vmatpush1.msra.mxu0 0.0
        %838 = vmatprep.subr.mxu0 0.0
        %839 = vmatpush1.msra.mxu0 0.0
        %840 = vmatprep.mubr.f32.mxu0 0.0
        %841 = vmatmul.mubr.f32.gmra.mrb[0].mxu0 %v753
        %v842 = vpop.f32.mrb[0].mxu0
        %v843 = vadd.f32 0.0, %v842
        %v844 = vpop.f32.mrb[0].mxu0
        %845 = vmatprep.mubr.f32.mxu0 0.0
        %846 = vmatmul.mubr.f32.gmra.mrb[0].mxu0 %v756
        %v847 = vpop.f32.mrb[0].mxu0
        %v848 = vadd.f32 0.0, %v847
        %v849 = vpop.f32.mrb[0].mxu0
        %850 = vmatprep.mubr.f32.mxu0 0.0
        %851 = vmatmul.mubr.f32.gmra.mrb[0].mxu0 %v759
        %v852 = vpop.f32.mrb[0].mxu0
        %v853 = vadd.f32 0.0, %v852
        %v854 = vpop.f32.mrb[0].mxu0
        %855 = vmatprep.mubr.f32.mxu0 0.0
        %856 = vmatmul.mubr.f32.gmra.mrb[0].mxu0 %v762
        %v857 = vpop.f32.mrb[0].mxu0
        %v858 = vadd.f32 0.0, %v857
        %v859 = vpop.f32.mrb[0].mxu0
        %860 = vmatprep.mubr.f32.mxu0 0.0
        %861 = vmatmul.mubr.f32.gmra.mrb[0].mxu0 %v765
        %v862 = vpop.f32.mrb[0].mxu0
        %v863 = vadd.f32 0.0, %v862
        %v864 = vpop.f32.mrb[0].mxu0
        %865 = vmatprep.mubr.f32.mxu0 0.0
        %866 = vmatmul.mubr.f32.gmra.mrb[0].mxu0 %v768
        %v867 = vpop.f32.mrb[0].mxu0
        %v868 = vadd.f32 0.0, %v867
        %v869 = vpop.f32.mrb[0].mxu0
        %870 = vmatprep.mubr.f32.mxu0 0.0
        %871 = vmatmul.mubr.f32.gmra.mrb[0].mxu0 %v771
        %v872 = vpop.f32.mrb[0].mxu0
        %v873 = vadd.f32 0.0, %v872
        %v874 = vpop.f32.mrb[0].mxu0
        %875 = vmatprep.mubr.f32.mxu0 0.0
        %876 = vmatmul.mubr.f32.gmra.mrb[0].mxu0 %v774
        %v877 = vpop.f32.mrb[0].mxu0
        %v878 = vadd.f32 0.0, %v877
        %v879 = vpop.f32.mrb[0].mxu0
        %880 = vdwg.mxu0
        %v881 = vadd.f32 %v724, %v843
        %v882 = vadd.f32 %v725, %v848
        %v883 = vadd.f32 %v726, %v853
        %v884 = vadd.f32 %v727, %v858
        %v885 = vadd.f32 %v728, %v863
        %v886 = vadd.f32 %v729, %v868
        %v887 = vadd.f32 %v730, %v873
        %v888 = vadd.f32 %v731, %v878
        %s889 = scalar_lea.vmem %s178, 1 [#allocation2]
        %v890 = vld [vmem:[%s889] ss:$2 sm:$0xff]
        %s891 = scalar_lea.vmem %s178, 49 [#allocation2]
        %v892 = vld [vmem:[%s891] ss:$2 sm:$0xff]
        %s893 = scalar_lea.vmem %s178, 97 [#allocation2]
        %v894 = vld [vmem:[%s893] ss:$2 sm:$0xff]
        %s895 = scalar_lea.vmem %s178, 145 [#allocation2]
        %v896 = vld [vmem:[%s895] ss:$2 sm:$0xff]
        %s897 = scalar_lea.vmem %s178, 193 [#allocation2]
        %v898 = vld [vmem:[%s897] ss:$2 sm:$0xff]
        %s899 = scalar_lea.vmem %s178, 241 [#allocation2]
        %v900 = vld [vmem:[%s899] ss:$2 sm:$0xff]
        %s901 = scalar_lea.vmem %s178, 289 [#allocation2]
        %v902 = vld [vmem:[%s901] ss:$2 sm:$0xff]
        %s903 = scalar_lea.vmem %s178, 337 [#allocation2]
        %v904 = vld [vmem:[%s903] ss:$2 sm:$0xff]
        %s905 = scalar_lea.vmem %s1, 128
        %v906 = vld [vmem:[%s905] sm:$0xff]
        %v907 = vld [vmem:[%s905 + $0x8] sm:$0xff]
        %v908 = vld [vmem:[%s905 + $0x10] sm:$0xff]
        %v909 = vld [vmem:[%s905 + $0x18] sm:$0xff]
        %v911 = vsel %vm169, %v890, 0
        %v914 = vsel %vm169, %v892, 0
        %v917 = vsel %vm169, %v894, 0
        %v920 = vsel %vm169, %v896, 0
        %v923 = vsel %vm169, %v898, 0
        %v926 = vsel %vm169, %v900, 0
        %v929 = vsel %vm169, %v902, 0
        %v932 = vsel %vm169, %v904, 0
        %934 = vmatprep.subr.mxu0 0.0
        %935 = vmatpush1.msra.mxu0 %v906
        %936 = vmatprep.subr.mxu0 0.0
        %937 = vmatpush1.msra.mxu0 %v907
        %938 = vmatprep.subr.mxu0 0.0
        %939 = vmatpush1.msra.mxu0 %v908
        %940 = vmatprep.subr.mxu0 0.0
        %941 = vmatpush1.msra.mxu0 %v909
        %942 = vmatprep.subr.mxu0 0.0
        %943 = vmatpush1.msra.mxu0 0.0
        %944 = vmatprep.subr.mxu0 0.0
        %945 = vmatpush1.msra.mxu0 0.0
        %946 = vmatprep.subr.mxu0 0.0
        %947 = vmatpush1.msra.mxu0 0.0
        %948 = vmatprep.subr.mxu0 0.0
        %949 = vmatpush1.msra.mxu0 0.0
        %950 = vmatprep.subr.mxu0 0.0
        %951 = vmatpush1.msra.mxu0 0.0
        %952 = vmatprep.subr.mxu0 0.0
        %953 = vmatpush1.msra.mxu0 0.0
        %954 = vmatprep.subr.mxu0 0.0
        %955 = vmatpush1.msra.mxu0 0.0
        %956 = vmatprep.subr.mxu0 0.0
        %957 = vmatpush1.msra.mxu0 0.0
        %958 = vmatprep.subr.mxu0 0.0
        %959 = vmatpush1.msra.mxu0 0.0
        %960 = vmatprep.subr.mxu0 0.0
        %961 = vmatpush1.msra.mxu0 0.0
        %962 = vmatprep.subr.mxu0 0.0
        %963 = vmatpush1.msra.mxu0 0.0
        %964 = vmatprep.subr.mxu0 0.0
        %965 = vmatpush1.msra.mxu0 0.0
        %966 = vmatprep.subr.mxu0 0.0
        %967 = vmatpush1.msra.mxu0 0.0
        %968 = vmatprep.subr.mxu0 0.0
        %969 = vmatpush1.msra.mxu0 0.0
        %970 = vmatprep.subr.mxu0 0.0
        %971 = vmatpush1.msra.mxu0 0.0
        %972 = vmatprep.subr.mxu0 0.0
        %973 = vmatpush1.msra.mxu0 0.0
        %974 = vmatprep.subr.mxu0 0.0
        %975 = vmatpush1.msra.mxu0 0.0
        %976 = vmatprep.subr.mxu0 0.0
        %977 = vmatpush1.msra.mxu0 0.0
        %978 = vmatprep.subr.mxu0 0.0
        %979 = vmatpush1.msra.mxu0 0.0
        %980 = vmatprep.subr.mxu0 0.0
        %981 = vmatpush1.msra.mxu0 0.0
        %982 = vmatprep.subr.mxu0 0.0
        %983 = vmatpush1.msra.mxu0 0.0
        %984 = vmatprep.subr.mxu0 0.0
        %985 = vmatpush1.msra.mxu0 0.0
        %986 = vmatprep.subr.mxu0 0.0
        %987 = vmatpush1.msra.mxu0 0.0
        %988 = vmatprep.subr.mxu0 0.0
        %989 = vmatpush1.msra.mxu0 0.0
        %990 = vmatprep.subr.mxu0 0.0
        %991 = vmatpush1.msra.mxu0 0.0
        %992 = vmatprep.subr.mxu0 0.0
        %993 = vmatpush1.msra.mxu0 0.0
        %994 = vmatprep.subr.mxu0 0.0
        %995 = vmatpush1.msra.mxu0 0.0
        %996 = vmatprep.subr.mxu0 0.0
        %997 = vmatpush1.msra.mxu0 0.0
        %998 = vmatprep.mubr.f32.mxu0 0.0
        %999 = vmatmul.mubr.f32.gmra.mrb[0].mxu0 %v911
        %v1000 = vpop.f32.mrb[0].mxu0
        %v1001 = vadd.f32 0.0, %v1000
        %v1002 = vpop.f32.mrb[0].mxu0
        %1003 = vmatprep.mubr.f32.mxu0 0.0
        %1004 = vmatmul.mubr.f32.gmra.mrb[0].mxu0 %v914
        %v1005 = vpop.f32.mrb[0].mxu0
        %v1006 = vadd.f32 0.0, %v1005
        %v1007 = vpop.f32.mrb[0].mxu0
        %1008 = vmatprep.mubr.f32.mxu0 0.0
        %1009 = vmatmul.mubr.f32.gmra.mrb[0].mxu0 %v917
        %v1010 = vpop.f32.mrb[0].mxu0
        %v1011 = vadd.f32 0.0, %v1010
        %v1012 = vpop.f32.mrb[0].mxu0
        %1013 = vmatprep.mubr.f32.mxu0 0.0
        %1014 = vmatmul.mubr.f32.gmra.mrb[0].mxu0 %v920
        %v1015 = vpop.f32.mrb[0].mxu0
        %v1016 = vadd.f32 0.0, %v1015
        %v1017 = vpop.f32.mrb[0].mxu0
        %1018 = vmatprep.mubr.f32.mxu0 0.0
        %1019 = vmatmul.mubr.f32.gmra.mrb[0].mxu0 %v923
        %v1020 = vpop.f32.mrb[0].mxu0
        %v1021 = vadd.f32 0.0, %v1020
        %v1022 = vpop.f32.mrb[0].mxu0
        %1023 = vmatprep.mubr.f32.mxu0 0.0
        %1024 = vmatmul.mubr.f32.gmra.mrb[0].mxu0 %v926
        %v1025 = vpop.f32.mrb[0].mxu0
        %v1026 = vadd.f32 0.0, %v1025
        %v1027 = vpop.f32.mrb[0].mxu0
        %1028 = vmatprep.mubr.f32.mxu0 0.0
        %1029 = vmatmul.mubr.f32.gmra.mrb[0].mxu0 %v929
        %v1030 = vpop.f32.mrb[0].mxu0
        %v1031 = vadd.f32 0.0, %v1030
        %v1032 = vpop.f32.mrb[0].mxu0
        %1033 = vmatprep.mubr.f32.mxu0 0.0
        %1034 = vmatmul.mubr.f32.gmra.mrb[0].mxu0 %v932
        %v1035 = vpop.f32.mrb[0].mxu0
        %v1036 = vadd.f32 0.0, %v1035
        %v1037 = vpop.f32.mrb[0].mxu0
        %1038 = vdwg.mxu0
        %v1039 = vadd.f32 %v881, %v1001
        %v1040 = vadd.f32 %v882, %v1006
        %v1041 = vadd.f32 %v883, %v1011
        %v1042 = vadd.f32 %v884, %v1016
        %v1043 = vadd.f32 %v885, %v1021
        %v1044 = vadd.f32 %v886, %v1026
        %v1045 = vadd.f32 %v887, %v1031
        %v1046 = vadd.f32 %v888, %v1036
        %s1047 = scalar_lea.vmem %s178, 2 [#allocation2]
        %v1048 = vld [vmem:[%s1047] ss:$2 sm:$0xff]
        %s1049 = scalar_lea.vmem %s178, 50 [#allocation2]
        %v1050 = vld [vmem:[%s1049] ss:$2 sm:$0xff]
        %s1051 = scalar_lea.vmem %s178, 98 [#allocation2]
        %v1052 = vld [vmem:[%s1051] ss:$2 sm:$0xff]
        %s1053 = scalar_lea.vmem %s178, 146 [#allocation2]
        %v1054 = vld [vmem:[%s1053] ss:$2 sm:$0xff]
        %s1055 = scalar_lea.vmem %s178, 194 [#allocation2]
        %v1056 = vld [vmem:[%s1055] ss:$2 sm:$0xff]
        %s1057 = scalar_lea.vmem %s178, 242 [#allocation2]
        %v1058 = vld [vmem:[%s1057] ss:$2 sm:$0xff]
        %s1059 = scalar_lea.vmem %s178, 290 [#allocation2]
        %v1060 = vld [vmem:[%s1059] ss:$2 sm:$0xff]
        %s1061 = scalar_lea.vmem %s178, 338 [#allocation2]
        %v1062 = vld [vmem:[%s1061] ss:$2 sm:$0xff]
        %s1063 = scalar_lea.vmem %s1, 160
        %v1064 = vld [vmem:[%s1063] sm:$0xff]
        %v1065 = vld [vmem:[%s1063 + $0x8] sm:$0xff]
        %v1066 = vld [vmem:[%s1063 + $0x10] sm:$0xff]
        %v1067 = vld [vmem:[%s1063 + $0x18] sm:$0xff]
        %v1069 = vsel %vm169, %v1048, 0
        %v1072 = vsel %vm169, %v1050, 0
        %v1075 = vsel %vm169, %v1052, 0
        %v1078 = vsel %vm169, %v1054, 0
        %v1081 = vsel %vm169, %v1056, 0
        %v1084 = vsel %vm169, %v1058, 0
        %v1087 = vsel %vm169, %v1060, 0
        %v1090 = vsel %vm169, %v1062, 0
        %1092 = vmatprep.subr.mxu0 0.0
        %1093 = vmatpush1.msra.mxu0 %v1064
        %1094 = vmatprep.subr.mxu0 0.0
        %1095 = vmatpush1.msra.mxu0 %v1065
        %1096 = vmatprep.subr.mxu0 0.0
        %1097 = vmatpush1.msra.mxu0 %v1066
        %1098 = vmatprep.subr.mxu0 0.0
        %1099 = vmatpush1.msra.mxu0 %v1067
        %1100 = vmatprep.subr.mxu0 0.0
        %1101 = vmatpush1.msra.mxu0 0.0
        %1102 = vmatprep.subr.mxu0 0.0
        %1103 = vmatpush1.msra.mxu0 0.0
        %1104 = vmatprep.subr.mxu0 0.0
        %1105 = vmatpush1.msra.mxu0 0.0
        %1106 = vmatprep.subr.mxu0 0.0
        %1107 = vmatpush1.msra.mxu0 0.0
        %1108 = vmatprep.subr.mxu0 0.0
        %1109 = vmatpush1.msra.mxu0 0.0
        %1110 = vmatprep.subr.mxu0 0.0
        %1111 = vmatpush1.msra.mxu0 0.0
        %1112 = vmatprep.subr.mxu0 0.0
        %1113 = vmatpush1.msra.mxu0 0.0
        %1114 = vmatprep.subr.mxu0 0.0
        %1115 = vmatpush1.msra.mxu0 0.0
        %1116 = vmatprep.subr.mxu0 0.0
        %1117 = vmatpush1.msra.mxu0 0.0
        %1118 = vmatprep.subr.mxu0 0.0
        %1119 = vmatpush1.msra.mxu0 0.0
        %1120 = vmatprep.subr.mxu0 0.0
        %1121 = vmatpush1.msra.mxu0 0.0
        %1122 = vmatprep.subr.mxu0 0.0
        %1123 = vmatpush1.msra.mxu0 0.0
        %1124 = vmatprep.subr.mxu0 0.0
        %1125 = vmatpush1.msra.mxu0 0.0
        %1126 = vmatprep.subr.mxu0 0.0
        %1127 = vmatpush1.msra.mxu0 0.0
        %1128 = vmatprep.subr.mxu0 0.0
        %1129 = vmatpush1.msra.mxu0 0.0
        %1130 = vmatprep.subr.mxu0 0.0
        %1131 = vmatpush1.msra.mxu0 0.0
        %1132 = vmatprep.subr.mxu0 0.0
        %1133 = vmatpush1.msra.mxu0 0.0
        %1134 = vmatprep.subr.mxu0 0.0
        %1135 = vmatpush1.msra.mxu0 0.0
        %1136 = vmatprep.subr.mxu0 0.0
        %1137 = vmatpush1.msra.mxu0 0.0
        %1138 = vmatprep.subr.mxu0 0.0
        %1139 = vmatpush1.msra.mxu0 0.0
        %1140 = vmatprep.subr.mxu0 0.0
        %1141 = vmatpush1.msra.mxu0 0.0
        %1142 = vmatprep.subr.mxu0 0.0
        %1143 = vmatpush1.msra.mxu0 0.0
        %1144 = vmatprep.subr.mxu0 0.0
        %1145 = vmatpush1.msra.mxu0 0.0
        %1146 = vmatprep.subr.mxu0 0.0
        %1147 = vmatpush1.msra.mxu0 0.0
        %1148 = vmatprep.subr.mxu0 0.0
        %1149 = vmatpush1.msra.mxu0 0.0
        %1150 = vmatprep.subr.mxu0 0.0
        %1151 = vmatpush1.msra.mxu0 0.0
        %1152 = vmatprep.subr.mxu0 0.0
        %1153 = vmatpush1.msra.mxu0 0.0
        %1154 = vmatprep.subr.mxu0 0.0
        %1155 = vmatpush1.msra.mxu0 0.0
        %1156 = vmatprep.mubr.f32.mxu0 0.0
        %1157 = vmatmul.mubr.f32.gmra.mrb[0].mxu0 %v1069
        %v1158 = vpop.f32.mrb[0].mxu0
        %v1159 = vadd.f32 0.0, %v1158
        %v1160 = vpop.f32.mrb[0].mxu0
        %1161 = vmatprep.mubr.f32.mxu0 0.0
        %1162 = vmatmul.mubr.f32.gmra.mrb[0].mxu0 %v1072
        %v1163 = vpop.f32.mrb[0].mxu0
        %v1164 = vadd.f32 0.0, %v1163
        %v1165 = vpop.f32.mrb[0].mxu0
        %1166 = vmatprep.mubr.f32.mxu0 0.0
        %1167 = vmatmul.mubr.f32.gmra.mrb[0].mxu0 %v1075
        %v1168 = vpop.f32.mrb[0].mxu0
        %v1169 = vadd.f32 0.0, %v1168
        %v1170 = vpop.f32.mrb[0].mxu0
        %1171 = vmatprep.mubr.f32.mxu0 0.0
        %1172 = vmatmul.mubr.f32.gmra.mrb[0].mxu0 %v1078
        %v1173 = vpop.f32.mrb[0].mxu0
        %v1174 = vadd.f32 0.0, %v1173
        %v1175 = vpop.f32.mrb[0].mxu0
        %1176 = vmatprep.mubr.f32.mxu0 0.0
        %1177 = vmatmul.mubr.f32.gmra.mrb[0].mxu0 %v1081
        %v1178 = vpop.f32.mrb[0].mxu0
        %v1179 = vadd.f32 0.0, %v1178
        %v1180 = vpop.f32.mrb[0].mxu0
        %1181 = vmatprep.mubr.f32.mxu0 0.0
        %1182 = vmatmul.mubr.f32.gmra.mrb[0].mxu0 %v1084
        %v1183 = vpop.f32.mrb[0].mxu0
        %v1184 = vadd.f32 0.0, %v1183
        %v1185 = vpop.f32.mrb[0].mxu0
        %1186 = vmatprep.mubr.f32.mxu0 0.0
        %1187 = vmatmul.mubr.f32.gmra.mrb[0].mxu0 %v1087
        %v1188 = vpop.f32.mrb[0].mxu0
        %v1189 = vadd.f32 0.0, %v1188
        %v1190 = vpop.f32.mrb[0].mxu0
        %1191 = vmatprep.mubr.f32.mxu0 0.0
        %1192 = vmatmul.mubr.f32.gmra.mrb[0].mxu0 %v1090
        %v1193 = vpop.f32.mrb[0].mxu0
        %v1194 = vadd.f32 0.0, %v1193
        %v1195 = vpop.f32.mrb[0].mxu0
        %1196 = vdwg.mxu0
        %v1197 = vadd.f32 %v1039, %v1159
        %v1198 = vadd.f32 %v1040, %v1164
        %v1199 = vadd.f32 %v1041, %v1169
        %v1200 = vadd.f32 %v1042, %v1174
        %v1201 = vadd.f32 %v1043, %v1179
        %v1202 = vadd.f32 %v1044, %v1184
        %v1203 = vadd.f32 %v1045, %v1189
        %v1204 = vadd.f32 %v1046, %v1194
        %s1205 = scalar_lea.vmem [#allocation2], 48
        %v1206 = vld [vmem:[%s1205] ss:$2 sm:$0xff]
        %s1207 = scalar_lea.vmem %s1205, 48 [#allocation2]
        %v1208 = vld [vmem:[%s1207] ss:$2 sm:$0xff]
        %s1209 = scalar_lea.vmem %s1205, 96 [#allocation2]
        %v1210 = vld [vmem:[%s1209] ss:$2 sm:$0xff]
        %s1211 = scalar_lea.vmem %s1205, 144 [#allocation2]
        %v1212 = vld [vmem:[%s1211] ss:$2 sm:$0xff]
        %s1213 = scalar_lea.vmem %s1205, 192 [#allocation2]
        %v1214 = vld [vmem:[%s1213] ss:$2 sm:$0xff]
        %s1215 = scalar_lea.vmem %s1205, 240 [#allocation2]
        %v1216 = vld [vmem:[%s1215] ss:$2 sm:$0xff]
        %s1217 = scalar_lea.vmem %s1205, 288 [#allocation2]
        %v1218 = vld [vmem:[%s1217] ss:$2 sm:$0xff]
        %s1219 = scalar_lea.vmem %s1205, 336 [#allocation2]
        %v1220 = vld [vmem:[%s1219] ss:$2 sm:$0xff]
        %s1221 = scalar_lea.vmem %s1, 192
        %v1222 = vld [vmem:[%s1221] sm:$0xff]
        %v1223 = vld [vmem:[%s1221 + $0x8] sm:$0xff]
        %v1224 = vld [vmem:[%s1221 + $0x10] sm:$0xff]
        %v1225 = vld [vmem:[%s1221 + $0x18] sm:$0xff]
        %v1227 = vsel %vm169, %v1206, 0
        %v1230 = vsel %vm169, %v1208, 0
        %v1233 = vsel %vm169, %v1210, 0
        %v1236 = vsel %vm169, %v1212, 0
        %v1239 = vsel %vm169, %v1214, 0
        %v1242 = vsel %vm169, %v1216, 0
        %v1245 = vsel %vm169, %v1218, 0
        %v1248 = vsel %vm169, %v1220, 0
        %1250 = vmatprep.subr.mxu0 0.0
        %1251 = vmatpush1.msra.mxu0 %v1222
        %1252 = vmatprep.subr.mxu0 0.0
        %1253 = vmatpush1.msra.mxu0 %v1223
        %1254 = vmatprep.subr.mxu0 0.0
        %1255 = vmatpush1.msra.mxu0 %v1224
        %1256 = vmatprep.subr.mxu0 0.0
        %1257 = vmatpush1.msra.mxu0 %v1225
        %1258 = vmatprep.subr.mxu0 0.0
        %1259 = vmatpush1.msra.mxu0 0.0
        %1260 = vmatprep.subr.mxu0 0.0
        %1261 = vmatpush1.msra.mxu0 0.0
        %1262 = vmatprep.subr.mxu0 0.0
        %1263 = vmatpush1.msra.mxu0 0.0
        %1264 = vmatprep.subr.mxu0 0.0
        %1265 = vmatpush1.msra.mxu0 0.0
        %1266 = vmatprep.subr.mxu0 0.0
        %1267 = vmatpush1.msra.mxu0 0.0
        %1268 = vmatprep.subr.mxu0 0.0
        %1269 = vmatpush1.msra.mxu0 0.0
        %1270 = vmatprep.subr.mxu0 0.0
        %1271 = vmatpush1.msra.mxu0 0.0
        %1272 = vmatprep.subr.mxu0 0.0
        %1273 = vmatpush1.msra.mxu0 0.0
        %1274 = vmatprep.subr.mxu0 0.0
        %1275 = vmatpush1.msra.mxu0 0.0
        %1276 = vmatprep.subr.mxu0 0.0
        %1277 = vmatpush1.msra.mxu0 0.0
        %1278 = vmatprep.subr.mxu0 0.0
        %1279 = vmatpush1.msra.mxu0 0.0
        %1280 = vmatprep.subr.mxu0 0.0
        %1281 = vmatpush1.msra.mxu0 0.0
        %1282 = vmatprep.subr.mxu0 0.0
        %1283 = vmatpush1.msra.mxu0 0.0
        %1284 = vmatprep.subr.mxu0 0.0
        %1285 = vmatpush1.msra.mxu0 0.0
        %1286 = vmatprep.subr.mxu0 0.0
        %1287 = vmatpush1.msra.mxu0 0.0
        %1288 = vmatprep.subr.mxu0 0.0
        %1289 = vmatpush1.msra.mxu0 0.0
        %1290 = vmatprep.subr.mxu0 0.0
        %1291 = vmatpush1.msra.mxu0 0.0
        %1292 = vmatprep.subr.mxu0 0.0
        %1293 = vmatpush1.msra.mxu0 0.0
        %1294 = vmatprep.subr.mxu0 0.0
        %1295 = vmatpush1.msra.mxu0 0.0
        %1296 = vmatprep.subr.mxu0 0.0
        %1297 = vmatpush1.msra.mxu0 0.0
        %1298 = vmatprep.subr.mxu0 0.0
        %1299 = vmatpush1.msra.mxu0 0.0
        %1300 = vmatprep.subr.mxu0 0.0
        %1301 = vmatpush1.msra.mxu0 0.0
        %1302 = vmatprep.subr.mxu0 0.0
        %1303 = vmatpush1.msra.mxu0 0.0
        %1304 = vmatprep.subr.mxu0 0.0
        %1305 = vmatpush1.msra.mxu0 0.0
        %1306 = vmatprep.subr.mxu0 0.0
        %1307 = vmatpush1.msra.mxu0 0.0
        %1308 = vmatprep.subr.mxu0 0.0
        %1309 = vmatpush1.msra.mxu0 0.0
        %1310 = vmatprep.subr.mxu0 0.0
        %1311 = vmatpush1.msra.mxu0 0.0
        %1312 = vmatprep.subr.mxu0 0.0
        %1313 = vmatpush1.msra.mxu0 0.0
        %1314 = vmatprep.mubr.f32.mxu0 0.0
        %1315 = vmatmul.mubr.f32.gmra.mrb[0].mxu0 %v1227
        %v1316 = vpop.f32.mrb[0].mxu0
        %v1317 = vadd.f32 0.0, %v1316
        %v1318 = vpop.f32.mrb[0].mxu0
        %1319 = vmatprep.mubr.f32.mxu0 0.0
        %1320 = vmatmul.mubr.f32.gmra.mrb[0].mxu0 %v1230
        %v1321 = vpop.f32.mrb[0].mxu0
        %v1322 = vadd.f32 0.0, %v1321
        %v1323 = vpop.f32.mrb[0].mxu0
        %1324 = vmatprep.mubr.f32.mxu0 0.0
        %1325 = vmatmul.mubr.f32.gmra.mrb[0].mxu0 %v1233
        %v1326 = vpop.f32.mrb[0].mxu0
        %v1327 = vadd.f32 0.0, %v1326
        %v1328 = vpop.f32.mrb[0].mxu0
        %1329 = vmatprep.mubr.f32.mxu0 0.0
        %1330 = vmatmul.mubr.f32.gmra.mrb[0].mxu0 %v1236
        %v1331 = vpop.f32.mrb[0].mxu0
        %v1332 = vadd.f32 0.0, %v1331
        %v1333 = vpop.f32.mrb[0].mxu0
        %1334 = vmatprep.mubr.f32.mxu0 0.0
        %1335 = vmatmul.mubr.f32.gmra.mrb[0].mxu0 %v1239
        %v1336 = vpop.f32.mrb[0].mxu0
        %v1337 = vadd.f32 0.0, %v1336
        %v1338 = vpop.f32.mrb[0].mxu0
        %1339 = vmatprep.mubr.f32.mxu0 0.0
        %1340 = vmatmul.mubr.f32.gmra.mrb[0].mxu0 %v1242
        %v1341 = vpop.f32.mrb[0].mxu0
        %v1342 = vadd.f32 0.0, %v1341
        %v1343 = vpop.f32.mrb[0].mxu0
        %1344 = vmatprep.mubr.f32.mxu0 0.0
        %1345 = vmatmul.mubr.f32.gmra.mrb[0].mxu0 %v1245
        %v1346 = vpop.f32.mrb[0].mxu0
        %v1347 = vadd.f32 0.0, %v1346
        %v1348 = vpop.f32.mrb[0].mxu0
        %1349 = vmatprep.mubr.f32.mxu0 0.0
        %1350 = vmatmul.mubr.f32.gmra.mrb[0].mxu0 %v1248
        %v1351 = vpop.f32.mrb[0].mxu0
        %v1352 = vadd.f32 0.0, %v1351
        %v1353 = vpop.f32.mrb[0].mxu0
        %1354 = vdwg.mxu0
        %v1355 = vadd.f32 %v1197, %v1317
        %v1356 = vadd.f32 %v1198, %v1322
        %v1357 = vadd.f32 %v1199, %v1327
        %v1358 = vadd.f32 %v1200, %v1332
        %v1359 = vadd.f32 %v1201, %v1337
        %v1360 = vadd.f32 %v1202, %v1342
        %v1361 = vadd.f32 %v1203, %v1347
        %v1362 = vadd.f32 %v1204, %v1352
        %s1363 = scalar_lea.vmem %s1205, 1 [#allocation2]
        %v1364 = vld [vmem:[%s1363] ss:$2 sm:$0xff]
        %s1365 = scalar_lea.vmem %s1205, 49 [#allocation2]
        %v1366 = vld [vmem:[%s1365] ss:$2 sm:$0xff]
        %s1367 = scalar_lea.vmem %s1205, 97 [#allocation2]
        %v1368 = vld [vmem:[%s1367] ss:$2 sm:$0xff]
        %s1369 = scalar_lea.vmem %s1205, 145 [#allocation2]
        %v1370 = vld [vmem:[%s1369] ss:$2 sm:$0xff]
        %s1371 = scalar_lea.vmem %s1205, 193 [#allocation2]
        %v1372 = vld [vmem:[%s1371] ss:$2 sm:$0xff]
        %s1373 = scalar_lea.vmem %s1205, 241 [#allocation2]
        %v1374 = vld [vmem:[%s1373] ss:$2 sm:$0xff]
        %s1375 = scalar_lea.vmem %s1205, 289 [#allocation2]
        %v1376 = vld [vmem:[%s1375] ss:$2 sm:$0xff]
        %s1377 = scalar_lea.vmem %s1205, 337 [#allocation2]
        %v1378 = vld [vmem:[%s1377] ss:$2 sm:$0xff]
        %s1379 = scalar_lea.vmem %s1, 224
        %v1380 = vld [vmem:[%s1379] sm:$0xff]
        %v1381 = vld [vmem:[%s1379 + $0x8] sm:$0xff]
        %v1382 = vld [vmem:[%s1379 + $0x10] sm:$0xff]
        %v1383 = vld [vmem:[%s1379 + $0x18] sm:$0xff]
        %v1385 = vsel %vm169, %v1364, 0
        %v1388 = vsel %vm169, %v1366, 0
        %v1391 = vsel %vm169, %v1368, 0
        %v1394 = vsel %vm169, %v1370, 0
        %v1397 = vsel %vm169, %v1372, 0
        %v1400 = vsel %vm169, %v1374, 0
        %v1403 = vsel %vm169, %v1376, 0
        %v1406 = vsel %vm169, %v1378, 0
        %1408 = vmatprep.subr.mxu0 0.0
        %1409 = vmatpush1.msra.mxu0 %v1380
        %1410 = vmatprep.subr.mxu0 0.0
        %1411 = vmatpush1.msra.mxu0 %v1381
        %1412 = vmatprep.subr.mxu0 0.0
        %1413 = vmatpush1.msra.mxu0 %v1382
        %1414 = vmatprep.subr.mxu0 0.0
        %1415 = vmatpush1.msra.mxu0 %v1383
        %1416 = vmatprep.subr.mxu0 0.0
        %1417 = vmatpush1.msra.mxu0 0.0
        %1418 = vmatprep.subr.mxu0 0.0
        %1419 = vmatpush1.msra.mxu0 0.0
        %1420 = vmatprep.subr.mxu0 0.0
        %1421 = vmatpush1.msra.mxu0 0.0
        %1422 = vmatprep.subr.mxu0 0.0
        %1423 = vmatpush1.msra.mxu0 0.0
        %1424 = vmatprep.subr.mxu0 0.0
        %1425 = vmatpush1.msra.mxu0 0.0
        %1426 = vmatprep.subr.mxu0 0.0
        %1427 = vmatpush1.msra.mxu0 0.0
        %1428 = vmatprep.subr.mxu0 0.0
        %1429 = vmatpush1.msra.mxu0 0.0
        %1430 = vmatprep.subr.mxu0 0.0
        %1431 = vmatpush1.msra.mxu0 0.0
        %1432 = vmatprep.subr.mxu0 0.0
        %1433 = vmatpush1.msra.mxu0 0.0
        %1434 = vmatprep.subr.mxu0 0.0
        %1435 = vmatpush1.msra.mxu0 0.0
        %1436 = vmatprep.subr.mxu0 0.0
        %1437 = vmatpush1.msra.mxu0 0.0
        %1438 = vmatprep.subr.mxu0 0.0
        %1439 = vmatpush1.msra.mxu0 0.0
        %1440 = vmatprep.subr.mxu0 0.0
        %1441 = vmatpush1.msra.mxu0 0.0
        %1442 = vmatprep.subr.mxu0 0.0
        %1443 = vmatpush1.msra.mxu0 0.0
        %1444 = vmatprep.subr.mxu0 0.0
        %1445 = vmatpush1.msra.mxu0 0.0
        %1446 = vmatprep.subr.mxu0 0.0
        %1447 = vmatpush1.msra.mxu0 0.0
        %1448 = vmatprep.subr.mxu0 0.0
        %1449 = vmatpush1.msra.mxu0 0.0
        %1450 = vmatprep.subr.mxu0 0.0
        %1451 = vmatpush1.msra.mxu0 0.0
        %1452 = vmatprep.subr.mxu0 0.0
        %1453 = vmatpush1.msra.mxu0 0.0
        %1454 = vmatprep.subr.mxu0 0.0
        %1455 = vmatpush1.msra.mxu0 0.0
        %1456 = vmatprep.subr.mxu0 0.0
        %1457 = vmatpush1.msra.mxu0 0.0
        %1458 = vmatprep.subr.mxu0 0.0
        %1459 = vmatpush1.msra.mxu0 0.0
        %1460 = vmatprep.subr.mxu0 0.0
        %1461 = vmatpush1.msra.mxu0 0.0
        %1462 = vmatprep.subr.mxu0 0.0
        %1463 = vmatpush1.msra.mxu0 0.0
        %1464 = vmatprep.subr.mxu0 0.0
        %1465 = vmatpush1.msra.mxu0 0.0
        %1466 = vmatprep.subr.mxu0 0.0
        %1467 = vmatpush1.msra.mxu0 0.0
        %1468 = vmatprep.subr.mxu0 0.0
        %1469 = vmatpush1.msra.mxu0 0.0
        %1470 = vmatprep.subr.mxu0 0.0
        %1471 = vmatpush1.msra.mxu0 0.0
        %1472 = vmatprep.mubr.f32.mxu0 0.0
        %1473 = vmatmul.mubr.f32.gmra.mrb[0].mxu0 %v1385
        %v1474 = vpop.f32.mrb[0].mxu0
        %v1475 = vadd.f32 0.0, %v1474
        %v1476 = vpop.f32.mrb[0].mxu0
        %1477 = vmatprep.mubr.f32.mxu0 0.0
        %1478 = vmatmul.mubr.f32.gmra.mrb[0].mxu0 %v1388
        %v1479 = vpop.f32.mrb[0].mxu0
        %v1480 = vadd.f32 0.0, %v1479
        %v1481 = vpop.f32.mrb[0].mxu0
        %1482 = vmatprep.mubr.f32.mxu0 0.0
        %1483 = vmatmul.mubr.f32.gmra.mrb[0].mxu0 %v1391
        %v1484 = vpop.f32.mrb[0].mxu0
        %v1485 = vadd.f32 0.0, %v1484
        %v1486 = vpop.f32.mrb[0].mxu0
        %1487 = vmatprep.mubr.f32.mxu0 0.0
        %1488 = vmatmul.mubr.f32.gmra.mrb[0].mxu0 %v1394
        %v1489 = vpop.f32.mrb[0].mxu0
        %v1490 = vadd.f32 0.0, %v1489
        %v1491 = vpop.f32.mrb[0].mxu0
        %1492 = vmatprep.mubr.f32.mxu0 0.0
        %1493 = vmatmul.mubr.f32.gmra.mrb[0].mxu0 %v1397
        %v1494 = vpop.f32.mrb[0].mxu0
        %v1495 = vadd.f32 0.0, %v1494
        %v1496 = vpop.f32.mrb[0].mxu0
        %1497 = vmatprep.mubr.f32.mxu0 0.0
        %1498 = vmatmul.mubr.f32.gmra.mrb[0].mxu0 %v1400
        %v1499 = vpop.f32.mrb[0].mxu0
        %v1500 = vadd.f32 0.0, %v1499
        %v1501 = vpop.f32.mrb[0].mxu0
        %1502 = vmatprep.mubr.f32.mxu0 0.0
        %1503 = vmatmul.mubr.f32.gmra.mrb[0].mxu0 %v1403
        %v1504 = vpop.f32.mrb[0].mxu0
        %v1505 = vadd.f32 0.0, %v1504
        %v1506 = vpop.f32.mrb[0].mxu0
        %1507 = vmatprep.mubr.f32.mxu0 0.0
        %1508 = vmatmul.mubr.f32.gmra.mrb[0].mxu0 %v1406
        %v1509 = vpop.f32.mrb[0].mxu0
        %v1510 = vadd.f32 0.0, %v1509
        %v1511 = vpop.f32.mrb[0].mxu0
        %1512 = vdwg.mxu0
        %v1513 = vadd.f32 %v1355, %v1475
        %v1514 = vadd.f32 %v1356, %v1480
        %v1515 = vadd.f32 %v1357, %v1485
        %v1516 = vadd.f32 %v1358, %v1490
        %v1517 = vadd.f32 %v1359, %v1495
        %v1518 = vadd.f32 %v1360, %v1500
        %v1519 = vadd.f32 %v1361, %v1505
        %v1520 = vadd.f32 %v1362, %v1510
        %s1521 = scalar_lea.vmem %s1205, 2 [#allocation2]
        %v1522 = vld [vmem:[%s1521] ss:$2 sm:$0xff]
        %s1523 = scalar_lea.vmem %s1205, 50 [#allocation2]
        %v1524 = vld [vmem:[%s1523] ss:$2 sm:$0xff]
        %s1525 = scalar_lea.vmem %s1205, 98 [#allocation2]
        %v1526 = vld [vmem:[%s1525] ss:$2 sm:$0xff]
        %s1527 = scalar_lea.vmem %s1205, 146 [#allocation2]
        %v1528 = vld [vmem:[%s1527] ss:$2 sm:$0xff]
        %s1529 = scalar_lea.vmem %s1205, 194 [#allocation2]
        %v1530 = vld [vmem:[%s1529] ss:$2 sm:$0xff]
        %s1531 = scalar_lea.vmem %s1205, 242 [#allocation2]
        %v1532 = vld [vmem:[%s1531] ss:$2 sm:$0xff]
        %s1533 = scalar_lea.vmem %s1205, 290 [#allocation2]
        %v1534 = vld [vmem:[%s1533] ss:$2 sm:$0xff]
        %s1535 = scalar_lea.vmem %s1205, 338 [#allocation2]
        %v1536 = vld [vmem:[%s1535] ss:$2 sm:$0xff]
        %s1537 = scalar_lea.vmem %s1, 256
        %v1538 = vld [vmem:[%s1537] sm:$0xff]
        %v1539 = vld [vmem:[%s1537 + $0x8] sm:$0xff]
        %v1540 = vld [vmem:[%s1537 + $0x10] sm:$0xff]
        %v1541 = vld [vmem:[%s1537 + $0x18] sm:$0xff]
        %v1543 = vsel %vm169, %v1522, 0
        %v1546 = vsel %vm169, %v1524, 0
        %v1549 = vsel %vm169, %v1526, 0
        %v1552 = vsel %vm169, %v1528, 0
        %v1555 = vsel %vm169, %v1530, 0
        %v1558 = vsel %vm169, %v1532, 0
        %v1561 = vsel %vm169, %v1534, 0
        %v1564 = vsel %vm169, %v1536, 0
        %1566 = vmatprep.subr.mxu0 0.0
        %1567 = vmatpush1.msra.mxu0 %v1538
        %1568 = vmatprep.subr.mxu0 0.0
        %1569 = vmatpush1.msra.mxu0 %v1539
        %1570 = vmatprep.subr.mxu0 0.0
        %1571 = vmatpush1.msra.mxu0 %v1540
        %1572 = vmatprep.subr.mxu0 0.0
        %1573 = vmatpush1.msra.mxu0 %v1541
        %1574 = vmatprep.subr.mxu0 0.0
        %1575 = vmatpush1.msra.mxu0 0.0
        %1576 = vmatprep.subr.mxu0 0.0
        %1577 = vmatpush1.msra.mxu0 0.0
        %1578 = vmatprep.subr.mxu0 0.0
        %1579 = vmatpush1.msra.mxu0 0.0
        %1580 = vmatprep.subr.mxu0 0.0
        %1581 = vmatpush1.msra.mxu0 0.0
        %1582 = vmatprep.subr.mxu0 0.0
        %1583 = vmatpush1.msra.mxu0 0.0
        %1584 = vmatprep.subr.mxu0 0.0
        %1585 = vmatpush1.msra.mxu0 0.0
        %1586 = vmatprep.subr.mxu0 0.0
        %1587 = vmatpush1.msra.mxu0 0.0
        %1588 = vmatprep.subr.mxu0 0.0
        %1589 = vmatpush1.msra.mxu0 0.0
        %1590 = vmatprep.subr.mxu0 0.0
        %1591 = vmatpush1.msra.mxu0 0.0
        %1592 = vmatprep.subr.mxu0 0.0
        %1593 = vmatpush1.msra.mxu0 0.0
        %1594 = vmatprep.subr.mxu0 0.0
        %1595 = vmatpush1.msra.mxu0 0.0
        %1596 = vmatprep.subr.mxu0 0.0
        %1597 = vmatpush1.msra.mxu0 0.0
        %1598 = vmatprep.subr.mxu0 0.0
        %1599 = vmatpush1.msra.mxu0 0.0
        %1600 = vmatprep.subr.mxu0 0.0
        %1601 = vmatpush1.msra.mxu0 0.0
        %1602 = vmatprep.subr.mxu0 0.0
        %1603 = vmatpush1.msra.mxu0 0.0
        %1604 = vmatprep.subr.mxu0 0.0
        %1605 = vmatpush1.msra.mxu0 0.0
        %1606 = vmatprep.subr.mxu0 0.0
        %1607 = vmatpush1.msra.mxu0 0.0
        %1608 = vmatprep.subr.mxu0 0.0
        %1609 = vmatpush1.msra.mxu0 0.0
        %1610 = vmatprep.subr.mxu0 0.0
        %1611 = vmatpush1.msra.mxu0 0.0
        %1612 = vmatprep.subr.mxu0 0.0
        %1613 = vmatpush1.msra.mxu0 0.0
        %1614 = vmatprep.subr.mxu0 0.0
        %1615 = vmatpush1.msra.mxu0 0.0
        %1616 = vmatprep.subr.mxu0 0.0
        %1617 = vmatpush1.msra.mxu0 0.0
        %1618 = vmatprep.subr.mxu0 0.0
        %1619 = vmatpush1.msra.mxu0 0.0
        %1620 = vmatprep.subr.mxu0 0.0
        %1621 = vmatpush1.msra.mxu0 0.0
        %1622 = vmatprep.subr.mxu0 0.0
        %1623 = vmatpush1.msra.mxu0 0.0
        %1624 = vmatprep.subr.mxu0 0.0
        %1625 = vmatpush1.msra.mxu0 0.0
        %1626 = vmatprep.subr.mxu0 0.0
        %1627 = vmatpush1.msra.mxu0 0.0
        %1628 = vmatprep.subr.mxu0 0.0
        %1629 = vmatpush1.msra.mxu0 0.0
        %1630 = vmatprep.mubr.f32.mxu0 0.0
        %1631 = vmatmul.mubr.f32.gmra.mrb[0].mxu0 %v1543
        %v1632 = vpop.f32.mrb[0].mxu0
        %v1633 = vadd.f32 0.0, %v1632
        %v1634 = vpop.f32.mrb[0].mxu0
        %1635 = vmatprep.mubr.f32.mxu0 0.0
        %1636 = vmatmul.mubr.f32.gmra.mrb[0].mxu0 %v1546
        %v1637 = vpop.f32.mrb[0].mxu0
        %v1638 = vadd.f32 0.0, %v1637
        %v1639 = vpop.f32.mrb[0].mxu0
        %1640 = vmatprep.mubr.f32.mxu0 0.0
        %1641 = vmatmul.mubr.f32.gmra.mrb[0].mxu0 %v1549
        %v1642 = vpop.f32.mrb[0].mxu0
        %v1643 = vadd.f32 0.0, %v1642
        %v1644 = vpop.f32.mrb[0].mxu0
        %1645 = vmatprep.mubr.f32.mxu0 0.0
        %1646 = vmatmul.mubr.f32.gmra.mrb[0].mxu0 %v1552
        %v1647 = vpop.f32.mrb[0].mxu0
        %v1648 = vadd.f32 0.0, %v1647
        %v1649 = vpop.f32.mrb[0].mxu0
        %1650 = vmatprep.mubr.f32.mxu0 0.0
        %1651 = vmatmul.mubr.f32.gmra.mrb[0].mxu0 %v1555
        %v1652 = vpop.f32.mrb[0].mxu0
        %v1653 = vadd.f32 0.0, %v1652
        %v1654 = vpop.f32.mrb[0].mxu0
        %1655 = vmatprep.mubr.f32.mxu0 0.0
        %1656 = vmatmul.mubr.f32.gmra.mrb[0].mxu0 %v1558
        %v1657 = vpop.f32.mrb[0].mxu0
        %v1658 = vadd.f32 0.0, %v1657
        %v1659 = vpop.f32.mrb[0].mxu0
        %1660 = vmatprep.mubr.f32.mxu0 0.0
        %1661 = vmatmul.mubr.f32.gmra.mrb[0].mxu0 %v1561
        %v1662 = vpop.f32.mrb[0].mxu0
        %v1663 = vadd.f32 0.0, %v1662
        %v1664 = vpop.f32.mrb[0].mxu0
        %1665 = vmatprep.mubr.f32.mxu0 0.0
        %1666 = vmatmul.mubr.f32.gmra.mrb[0].mxu0 %v1564
        %v1667 = vpop.f32.mrb[0].mxu0
        %v1668 = vadd.f32 0.0, %v1667
        %v1669 = vpop.f32.mrb[0].mxu0
        %1670 = vdwg.mxu0
        %v1671 = vadd.f32 %v1513, %v1633
        %v1672 = vadd.f32 %v1514, %v1638
        %v1673 = vadd.f32 %v1515, %v1643
        %v1674 = vadd.f32 %v1516, %v1648
        %v1675 = vadd.f32 %v1517, %v1653
        %v1676 = vadd.f32 %v1518, %v1658
        %v1677 = vadd.f32 %v1519, %v1663
        %v1678 = vadd.f32 %v1520, %v1668
        %v1679 = vld [vmem:[%s2] sm:$0x1]
        %v1681 = vlaneseq
        %v1682 = vshrl.u32 %v1681, 7
        %v1683 = vsub.s32 0, %v1682
        %v1684 = vrot.slane %v1679, %v1683
        %v1686 = vadd.f32 %v1671, %v1684
        %v1687 = vadd.f32 %v1672, %v1684
        %v1688 = vadd.f32 %v1673, %v1684
        %v1689 = vadd.f32 %v1674, %v1684
        %v1690 = vadd.f32 %v1675, %v1684
        %v1691 = vadd.f32 %v1676, %v1684
        %v1692 = vadd.f32 %v1677, %v1684
        %v1693 = vadd.f32 %v1678, %v1684
        %vm1694 = vcmask 523264
        %1695 = vst.msk [vmem:[%s163] sm:$0xff] %vm1694, %v1686
        %1696 = vst.msk [vmem:[%s163 + $0x8] sm:$0xff] %vm1694, %v1687
        %1697 = vst.msk [vmem:[%s163 + $0x10] sm:$0xff] %vm1694, %v1688
        %1698 = vst.msk [vmem:[%s163 + $0x18] sm:$0xff] %vm1694, %v1689
        %1699 = vst.msk [vmem:[%s163 + $0x20] sm:$0xff] %vm1694, %v1690
        %1700 = vst.msk [vmem:[%s163 + $0x28] sm:$0xff] %vm1694, %v1691
        %1701 = vst.msk [vmem:[%s163 + $0x30] sm:$0xff] %vm1694, %v1692
        %1702 = vst.msk [vmem:[%s163 + $0x38] sm:$0xff] %vm1694, %v1693
        %s1703 = sand.u32 %s93, 1
        %s1704 = scalar_lea.sflag [#allocation4], %s1703
        %s1705 = sand.u32 %s93, 1
        %s1706 = smul.addr %s1705, 64
        %s1707 = scalar_lea.vmem [#allocation3], %s1706
        // Predicated region
        $region33: #{basic_stage_forward.5} parent=31 // pred_check
          %p1708 = pneg %p103
        $region34: #{basic_stage_forward.5} parent=31 // pred_check_branch
          %1710 = sbr.rel (%p1708) target = $region36
        $region35: #{basic_stage_forward.5} parent=31 // pred_region
          %s1712 = ssub.s32 1024, 1024
          %1713 = vsyncadd %s1704, %s1712
          %s1714 = smul.addr %s17, 8
          %s1715 = smul.addr %s1714, 128
          %s1716 = scalar_lea.hbm %s3, %s1715
          %s1717 = sshll.u32 %s1707, 4
          %s1718 = int_to_ptr.vmem [resolvable:$true] %s1717
          %1723 = dma.vmem_to_hbm [thread:$0]  %s1718, 1024, %s1716, %s1704, 128, 128, 8
        $region36: #{basic_stage_forward.5} parent=31 // pred_fallthru
          _
      $region32: #{basic_stage_forward.5} parent=5 // pred_fallthru
        _
      %p1724 = scmp.le.s32.totalorder 2, %s12
      // Predicated region
      $region37: #{basic_stage_forward.5} parent=5 // pred_check
        %p1725 = pneg %p1724
      $region38: #{basic_stage_forward.5} parent=5 // pred_check_branch
        %1727 = sbr.rel (%p1725) target = $region40
      $region39: #{basic_stage_forward.5} parent=5 // pred_region
        %s1728 = ssub.s32 %s12, 2
        // Predicated region
        $region41: #{basic_stage_forward.5} parent=39 // pred_check
          %p1729 = pneg %p109
        $region42: #{basic_stage_forward.5} parent=39 // pred_check_branch
          %1731 = sbr.rel (%p1729) target = $region44
        $region43: #{basic_stage_forward.5} parent=39 // pred_region
          %s1732 = sand.u32 %s94, 1
          %s1733 = scalar_lea.sflag [#allocation4], %s1732
          %s1734 = sand.u32 %s94, 1
          %s1735 = smul.addr %s1734, 64
          %s1736 = scalar_lea.vmem [#allocation3], %s1735
          %1737 = dma.done %s1733, 1024
        $region44: #{basic_stage_forward.5} parent=39 // pred_fallthru
          _
      $region40: #{basic_stage_forward.5} parent=5 // pred_fallthru
        _
    $region6: #{basic_stage_forward.5} parent=1 // loop_footer
      %s16 = sadd.s32 1, %s12
    $region7: #{basic_stage_forward.5} parent=1 // loop_footer_branch
      %11 = sbr.rel target = $region3
    $region8: #{basic_stage_forward.5} parent=1 // loop_exit
      _
    %1738 = vsyncpa [#allocation4], 1
    %s1739 = scalar_lea.sflag [#allocation4], 1
    %1740 = vsyncpa %s1739, 1

// kernel: basic_stage_forward.3
$region0: #{basic_stage_forward.3}
  #allocation0 [shape = 'u32[]', space=smem, size = 0x4, offset = 0x4, fixed_abs, tag = 'smem constant byte address 0x4 - core index']
  #allocation1 [shape = 'u32[144,128]{1,0:T(1,128)}', space=vmem, size = 0x12000, scoped, tag = 'internal scratch']
  #allocation2 [shape = 'f32[18,18,32]{2,1,0:T(8,128)}', space=vmem, size = 0x36000, scoped, tag = 'scratch operand']
  %s0 = inlined_call_operand.vmem [shape: f32[2,16,16,32], index: 0, kind: input, shape index: {}, may-alias: {0,16}]
  %s1 = inlined_call_operand.vmem [shape: f32[1,32], index: 1, kind: input, shape index: {}]
  %s2 = inlined_call_operand.vmem [shape: f32[1,32], index: 2, kind: input, shape index: {}]
  %s3 = inlined_call_operand.vmem [shape: f32[32,32], index: 3, kind: input, shape index: {}]
  %s4 = inlined_call_operand.vmem [shape: f32[1,32], index: 4, kind: input, shape index: {}]
  %s5 = inlined_call_operand.vmem [shape: f32[32,32], index: 5, kind: input, shape index: {}]
  %s6 = inlined_call_operand.vmem [shape: f32[1,32], index: 6, kind: input, shape index: {}]
  %s7 = inlined_call_operand.vmem [shape: f32[1,32], index: 7, kind: input, shape index: {}]
  %s8 = inlined_call_operand.vmem [shape: f32[1,32], index: 8, kind: input, shape index: {}]
  %s9 = inlined_call_operand.vmem [shape: f32[9,32], index: 9, kind: input, shape index: {}]
  %s10 = inlined_call_operand.vmem [shape: f32[1,32], index: 10, kind: input, shape index: {}]
  %s11 = inlined_call_operand.vmem [shape: f32[1,32], index: 11, kind: input, shape index: {}]
  %s12 = inlined_call_operand.vmem [shape: f32[32,32], index: 12, kind: input, shape index: {}]
  %s13 = inlined_call_operand.vmem [shape: f32[1,32], index: 13, kind: input, shape index: {}]
  %s14 = inlined_call_operand.vmem [shape: f32[32,32], index: 14, kind: input, shape index: {}]
  %s15 = inlined_call_operand.vmem [shape: f32[1,32], index: 15, kind: input, shape index: {}]
  %s16 = inlined_call_operand.vmem [shape: f32[2,16,16,32], index: 16, kind: output, shape index: {}, may-alias: {0,16}]
  %s17 = sld [smem:[#allocation0]]
  $region97: #{basic_stage_forward.3} parent=0
    _
  %s19 = ssub.s32 1, %s17
  %s20 = scalar_select 0, %s19, %s17
  loop: start=0, step=1, limit=4
  $region2: #{basic_stage_forward.3} parent=0 // loop_pre_header
    _
  $region3: #{basic_stage_forward.3} parent=0 // loop_header
    %s22 = sphi 0, %s26
    %p23 = scmp.ge.s32.totalorder %s22, 4
    %s32 = sphi 0, %s34
    %s35 = sphi 0, %s32
    %s36 = sphi 0, %s35
    %s52 = sphi 0, %s36
    %s56 = sphi 0, %s56
    %s58 = sphi 0, %s56
    %s59 = sphi 0, %s58
    %s73 = sphi 0, %s59
    %s77 = sphi 0, %s77
    %s79 = sphi 0, %s77
    %s80 = sphi 0, %s79
    %s94 = sphi 0, %s80
    %s98 = sphi 0, %s98
    %s100 = sphi 0, %s98
    %s101 = sphi 0, %s100
    %s115 = sphi 0, %s101
    %s119 = sphi 0, %s119
    %s121 = sphi 0, %s119
    %s122 = sphi 0, %s121
    %s136 = sphi 0, %s122
    %s140 = sphi 0, %s140
    %s142 = sphi 0, %s140
    %s143 = sphi 0, %s142
    %s157 = sphi 0, %s143
    %s161 = sphi 0, %s161
    %s163 = sphi 0, %s161
    %s164 = sphi 0, %s163
    %s178 = sphi 0, %s164
    %s182 = sphi 0, %s182
    %s184 = sphi 0, %s182
    %s185 = sphi 0, %s184
    %s199 = sphi 0, %s185
    %s203 = sphi 0, %s203
    %s205 = sphi 0, %s203
    %s206 = sphi 0, %s205
    %s220 = sphi 0, %s206
    %s224 = sphi 0, %s224
    %s226 = sphi 0, %s224
    %s227 = sphi 0, %s226
    %s241 = sphi 0, %s227
    %s245 = sphi 0, %s245
    %s247 = sphi 0, %s245
    %s248 = sphi 0, %s247
    %s262 = sphi 0, %s248
    %s266 = sphi 0, %s266
    %s268 = sphi 0, %s266
    %s269 = sphi 0, %s268
    %s283 = sphi 0, %s269
    %s287 = sphi 0, %s287
    %s289 = sphi 0, %s287
    %s290 = sphi 0, %s289
    %s304 = sphi 0, %s290
    %s308 = sphi 0, %s308
    %s310 = sphi 0, %s308
    %s311 = sphi 0, %s310
    %s325 = sphi 0, %s311
    %s329 = sphi 0, %s329
    %s331 = sphi 0, %s329
    %s332 = sphi 0, %s331
    %s346 = sphi 0, %s332
    %s350 = sphi 0, %s350
    %s352 = sphi 0, %s350
    %s353 = sphi 0, %s352
    %s367 = sphi 0, %s353
    %s373 = sphi 0, %s375
    %s376 = sphi 0, %s373
    %s377 = sphi 0, %s376
    %s393 = sphi 0, %s377
  $region4: #{basic_stage_forward.3} parent=0 // loop_header_branch
    %25 = sbr.rel (%p23) target = $region8
  $region5: #{basic_stage_forward.3} parent=0 // loop_body
    %s27 = ssub.s32 %s22, 1
    %s28 = ssub.s32 %s22, 2
    %s29 = sadd.s32 %s22, 1
    %s30 = ssub.s32 %s22, %s29
    %p31 = scmp.eq.s32.totalorder %s30, 0
    %s33 = sadd.s32 %s32, 1
    %s34 = scalar_select %p31, %s32, %s33
    %p37 = pneg %p31
    %p38 = scmp.eq.s32.totalorder %s22, 1
    %p39 = por %p37, %p38
    %p40 = scmp.ne.s32.totalorder %s32, %s35
    %p41 = scmp.eq.s32.totalorder %s22, 0
    %p42 = por %p40, %p41
    %p43 = scmp.ne.s32.totalorder %s32, %s35
    %p44 = scmp.eq.s32.totalorder %s27, 1
    %p45 = por %p43, %p44
    %p46 = scmp.ne.s32.totalorder %s35, %s36
    %p47 = scmp.eq.s32.totalorder %s27, 0
    %p48 = por %p46, %p47
    %p49 = scmp.ne.s32.totalorder %s35, %s36
    %p50 = scmp.eq.s32.totalorder %s28, 1
    %p51 = por %p49, %p50
    %p53 = scmp.ne.s32.totalorder %s36, %s52
    %p54 = scmp.eq.s32.totalorder %s28, 0
    %p55 = por %p53, %p54
    %s57 = sadd.s32 %s56, 1
    %p60 = scmp.eq.s32.totalorder %s22, 1
    %p61 = scmp.ne.s32.totalorder %s56, %s58
    %p62 = scmp.eq.s32.totalorder %s22, 0
    %p63 = por %p61, %p62
    %p64 = scmp.ne.s32.totalorder %s56, %s58
    %p65 = scmp.eq.s32.totalorder %s27, 1
    %p66 = por %p64, %p65
    %p67 = scmp.ne.s32.totalorder %s58, %s59
    %p68 = scmp.eq.s32.totalorder %s27, 0
    %p69 = por %p67, %p68
    %p70 = scmp.ne.s32.totalorder %s58, %s59
    %p71 = scmp.eq.s32.totalorder %s28, 1
    %p72 = por %p70, %p71
    %p74 = scmp.ne.s32.totalorder %s59, %s73
    %p75 = scmp.eq.s32.totalorder %s28, 0
    %p76 = por %p74, %p75
    %s78 = sadd.s32 %s77, 1
    %p81 = scmp.eq.s32.totalorder %s22, 1
    %p82 = scmp.ne.s32.totalorder %s77, %s79
    %p83 = scmp.eq.s32.totalorder %s22, 0
    %p84 = por %p82, %p83
    %p85 = scmp.ne.s32.totalorder %s77, %s79
    %p86 = scmp.eq.s32.totalorder %s27, 1
    %p87 = por %p85, %p86
    %p88 = scmp.ne.s32.totalorder %s79, %s80
    %p89 = scmp.eq.s32.totalorder %s27, 0
    %p90 = por %p88, %p89
    %p91 = scmp.ne.s32.totalorder %s79, %s80
    %p92 = scmp.eq.s32.totalorder %s28, 1
    %p93 = por %p91, %p92
    %p95 = scmp.ne.s32.totalorder %s80, %s94
    %p96 = scmp.eq.s32.totalorder %s28, 0
    %p97 = por %p95, %p96
    %s99 = sadd.s32 %s98, 1
    %p102 = scmp.eq.s32.totalorder %s22, 1
    %p103 = scmp.ne.s32.totalorder %s98, %s100
    %p104 = scmp.eq.s32.totalorder %s22, 0
    %p105 = por %p103, %p104
    %p106 = scmp.ne.s32.totalorder %s98, %s100
    %p107 = scmp.eq.s32.totalorder %s27, 1
    %p108 = por %p106, %p107
    %p109 = scmp.ne.s32.totalorder %s100, %s101
    %p110 = scmp.eq.s32.totalorder %s27, 0
    %p111 = por %p109, %p110
    %p112 = scmp.ne.s32.totalorder %s100, %s101
    %p113 = scmp.eq.s32.totalorder %s28, 1
    %p114 = por %p112, %p113
    %p116 = scmp.ne.s32.totalorder %s101, %s115
    %p117 = scmp.eq.s32.totalorder %s28, 0
    %p118 = por %p116, %p117
    %s120 = sadd.s32 %s119, 1
    %p123 = scmp.eq.s32.totalorder %s22, 1
    %p124 = scmp.ne.s32.totalorder %s119, %s121
    %p125 = scmp.eq.s32.totalorder %s22, 0
    %p126 = por %p124, %p125
    %p127 = scmp.ne.s32.totalorder %s119, %s121
    %p128 = scmp.eq.s32.totalorder %s27, 1
    %p129 = por %p127, %p128
    %p130 = scmp.ne.s32.totalorder %s121, %s122
    %p131 = scmp.eq.s32.totalorder %s27, 0
    %p132 = por %p130, %p131
    %p133 = scmp.ne.s32.totalorder %s121, %s122
    %p134 = scmp.eq.s32.totalorder %s28, 1
    %p135 = por %p133, %p134
    %p137 = scmp.ne.s32.totalorder %s122, %s136
    %p138 = scmp.eq.s32.totalorder %s28, 0
    %p139 = por %p137, %p138
    %s141 = sadd.s32 %s140, 1
    %p144 = scmp.eq.s32.totalorder %s22, 1
    %p145 = scmp.ne.s32.totalorder %s140, %s142
    %p146 = scmp.eq.s32.totalorder %s22, 0
    %p147 = por %p145, %p146
    %p148 = scmp.ne.s32.totalorder %s140, %s142
    %p149 = scmp.eq.s32.totalorder %s27, 1
    %p150 = por %p148, %p149
    %p151 = scmp.ne.s32.totalorder %s142, %s143
    %p152 = scmp.eq.s32.totalorder %s27, 0
    %p153 = por %p151, %p152
    %p154 = scmp.ne.s32.totalorder %s142, %s143
    %p155 = scmp.eq.s32.totalorder %s28, 1
    %p156 = por %p154, %p155
    %p158 = scmp.ne.s32.totalorder %s143, %s157
    %p159 = scmp.eq.s32.totalorder %s28, 0
    %p160 = por %p158, %p159
    %s162 = sadd.s32 %s161, 1
    %p165 = scmp.eq.s32.totalorder %s22, 1
    %p166 = scmp.ne.s32.totalorder %s161, %s163
    %p167 = scmp.eq.s32.totalorder %s22, 0
    %p168 = por %p166, %p167
    %p169 = scmp.ne.s32.totalorder %s161, %s163
    %p170 = scmp.eq.s32.totalorder %s27, 1
    %p171 = por %p169, %p170
    %p172 = scmp.ne.s32.totalorder %s163, %s164
    %p173 = scmp.eq.s32.totalorder %s27, 0
    %p174 = por %p172, %p173
    %p175 = scmp.ne.s32.totalorder %s163, %s164
    %p176 = scmp.eq.s32.totalorder %s28, 1
    %p177 = por %p175, %p176
    %p179 = scmp.ne.s32.totalorder %s164, %s178
    %p180 = scmp.eq.s32.totalorder %s28, 0
    %p181 = por %p179, %p180
    %s183 = sadd.s32 %s182, 1
    %p186 = scmp.eq.s32.totalorder %s22, 1
    %p187 = scmp.ne.s32.totalorder %s182, %s184
    %p188 = scmp.eq.s32.totalorder %s22, 0
    %p189 = por %p187, %p188
    %p190 = scmp.ne.s32.totalorder %s182, %s184
    %p191 = scmp.eq.s32.totalorder %s27, 1
    %p192 = por %p190, %p191
    %p193 = scmp.ne.s32.totalorder %s184, %s185
    %p194 = scmp.eq.s32.totalorder %s27, 0
    %p195 = por %p193, %p194
    %p196 = scmp.ne.s32.totalorder %s184, %s185
    %p197 = scmp.eq.s32.totalorder %s28, 1
    %p198 = por %p196, %p197
    %p200 = scmp.ne.s32.totalorder %s185, %s199
    %p201 = scmp.eq.s32.totalorder %s28, 0
    %p202 = por %p200, %p201
    %s204 = sadd.s32 %s203, 1
    %p207 = scmp.eq.s32.totalorder %s22, 1
    %p208 = scmp.ne.s32.totalorder %s203, %s205
    %p209 = scmp.eq.s32.totalorder %s22, 0
    %p210 = por %p208, %p209
    %p211 = scmp.ne.s32.totalorder %s203, %s205
    %p212 = scmp.eq.s32.totalorder %s27, 1
    %p213 = por %p211, %p212
    %p214 = scmp.ne.s32.totalorder %s205, %s206
    %p215 = scmp.eq.s32.totalorder %s27, 0
    %p216 = por %p214, %p215
    %p217 = scmp.ne.s32.totalorder %s205, %s206
    %p218 = scmp.eq.s32.totalorder %s28, 1
    %p219 = por %p217, %p218
    %p221 = scmp.ne.s32.totalorder %s206, %s220
    %p222 = scmp.eq.s32.totalorder %s28, 0
    %p223 = por %p221, %p222
    %s225 = sadd.s32 %s224, 1
    %p228 = scmp.eq.s32.totalorder %s22, 1
    %p229 = scmp.ne.s32.totalorder %s224, %s226
    %p230 = scmp.eq.s32.totalorder %s22, 0
    %p231 = por %p229, %p230
    %p232 = scmp.ne.s32.totalorder %s224, %s226
    %p233 = scmp.eq.s32.totalorder %s27, 1
    %p234 = por %p232, %p233
    %p235 = scmp.ne.s32.totalorder %s226, %s227
    %p236 = scmp.eq.s32.totalorder %s27, 0
    %p237 = por %p235, %p236
    %p238 = scmp.ne.s32.totalorder %s226, %s227
    %p239 = scmp.eq.s32.totalorder %s28, 1
    %p240 = por %p238, %p239
    %p242 = scmp.ne.s32.totalorder %s227, %s241
    %p243 = scmp.eq.s32.totalorder %s28, 0
    %p244 = por %p242, %p243
    %s246 = sadd.s32 %s245, 1
    %p249 = scmp.eq.s32.totalorder %s22, 1
    %p250 = scmp.ne.s32.totalorder %s245, %s247
    %p251 = scmp.eq.s32.totalorder %s22, 0
    %p252 = por %p250, %p251
    %p253 = scmp.ne.s32.totalorder %s245, %s247
    %p254 = scmp.eq.s32.totalorder %s27, 1
    %p255 = por %p253, %p254
    %p256 = scmp.ne.s32.totalorder %s247, %s248
    %p257 = scmp.eq.s32.totalorder %s27, 0
    %p258 = por %p256, %p257
    %p259 = scmp.ne.s32.totalorder %s247, %s248
    %p260 = scmp.eq.s32.totalorder %s28, 1
    %p261 = por %p259, %p260
    %p263 = scmp.ne.s32.totalorder %s248, %s262
    %p264 = scmp.eq.s32.totalorder %s28, 0
    %p265 = por %p263, %p264
    %s267 = sadd.s32 %s266, 1
    %p270 = scmp.eq.s32.totalorder %s22, 1
    %p271 = scmp.ne.s32.totalorder %s266, %s268
    %p272 = scmp.eq.s32.totalorder %s22, 0
    %p273 = por %p271, %p272
    %p274 = scmp.ne.s32.totalorder %s266, %s268
    %p275 = scmp.eq.s32.totalorder %s27, 1
    %p276 = por %p274, %p275
    %p277 = scmp.ne.s32.totalorder %s268, %s269
    %p278 = scmp.eq.s32.totalorder %s27, 0
    %p279 = por %p277, %p278
    %p280 = scmp.ne.s32.totalorder %s268, %s269
    %p281 = scmp.eq.s32.totalorder %s28, 1
    %p282 = por %p280, %p281
    %p284 = scmp.ne.s32.totalorder %s269, %s283
    %p285 = scmp.eq.s32.totalorder %s28, 0
    %p286 = por %p284, %p285
    %s288 = sadd.s32 %s287, 1
    %p291 = scmp.eq.s32.totalorder %s22, 1
    %p292 = scmp.ne.s32.totalorder %s287, %s289
    %p293 = scmp.eq.s32.totalorder %s22, 0
    %p294 = por %p292, %p293
    %p295 = scmp.ne.s32.totalorder %s287, %s289
    %p296 = scmp.eq.s32.totalorder %s27, 1
    %p297 = por %p295, %p296
    %p298 = scmp.ne.s32.totalorder %s289, %s290
    %p299 = scmp.eq.s32.totalorder %s27, 0
    %p300 = por %p298, %p299
    %p301 = scmp.ne.s32.totalorder %s289, %s290
    %p302 = scmp.eq.s32.totalorder %s28, 1
    %p303 = por %p301, %p302
    %p305 = scmp.ne.s32.totalorder %s290, %s304
    %p306 = scmp.eq.s32.totalorder %s28, 0
    %p307 = por %p305, %p306
    %s309 = sadd.s32 %s308, 1
    %p312 = scmp.eq.s32.totalorder %s22, 1
    %p313 = scmp.ne.s32.totalorder %s308, %s310
    %p314 = scmp.eq.s32.totalorder %s22, 0
    %p315 = por %p313, %p314
    %p316 = scmp.ne.s32.totalorder %s308, %s310
    %p317 = scmp.eq.s32.totalorder %s27, 1
    %p318 = por %p316, %p317
    %p319 = scmp.ne.s32.totalorder %s310, %s311
    %p320 = scmp.eq.s32.totalorder %s27, 0
    %p321 = por %p319, %p320
    %p322 = scmp.ne.s32.totalorder %s310, %s311
    %p323 = scmp.eq.s32.totalorder %s28, 1
    %p324 = por %p322, %p323
    %p326 = scmp.ne.s32.totalorder %s311, %s325
    %p327 = scmp.eq.s32.totalorder %s28, 0
    %p328 = por %p326, %p327
    %s330 = sadd.s32 %s329, 1
    %p333 = scmp.eq.s32.totalorder %s22, 1
    %p334 = scmp.ne.s32.totalorder %s329, %s331
    %p335 = scmp.eq.s32.totalorder %s22, 0
    %p336 = por %p334, %p335
    %p337 = scmp.ne.s32.totalorder %s329, %s331
    %p338 = scmp.eq.s32.totalorder %s27, 1
    %p339 = por %p337, %p338
    %p340 = scmp.ne.s32.totalorder %s331, %s332
    %p341 = scmp.eq.s32.totalorder %s27, 0
    %p342 = por %p340, %p341
    %p343 = scmp.ne.s32.totalorder %s331, %s332
    %p344 = scmp.eq.s32.totalorder %s28, 1
    %p345 = por %p343, %p344
    %p347 = scmp.ne.s32.totalorder %s332, %s346
    %p348 = scmp.eq.s32.totalorder %s28, 0
    %p349 = por %p347, %p348
    %s351 = sadd.s32 %s350, 1
    %p354 = scmp.eq.s32.totalorder %s22, 1
    %p355 = scmp.ne.s32.totalorder %s350, %s352
    %p356 = scmp.eq.s32.totalorder %s22, 0
    %p357 = por %p355, %p356
    %p358 = scmp.ne.s32.totalorder %s350, %s352
    %p359 = scmp.eq.s32.totalorder %s27, 1
    %p360 = por %p358, %p359
    %p361 = scmp.ne.s32.totalorder %s352, %s353
    %p362 = scmp.eq.s32.totalorder %s27, 0
    %p363 = por %p361, %p362
    %p364 = scmp.ne.s32.totalorder %s352, %s353
    %p365 = scmp.eq.s32.totalorder %s28, 1
    %p366 = por %p364, %p365
    %p368 = scmp.ne.s32.totalorder %s353, %s367
    %p369 = scmp.eq.s32.totalorder %s28, 0
    %p370 = por %p368, %p369
    %s371 = ssub.s32 %s22, %s29
    %p372 = scmp.eq.s32.totalorder %s371, 0
    %s374 = sadd.s32 %s373, 1
    %s375 = scalar_select %p372, %s373, %s374
    %p378 = pneg %p372
    %p379 = scmp.eq.s32.totalorder %s22, 1
    %p380 = por %p378, %p379
    %p381 = scmp.ne.s32.totalorder %s373, %s376
    %p382 = scmp.eq.s32.totalorder %s22, 0
    %p383 = por %p381, %p382
    %p384 = scmp.ne.s32.totalorder %s373, %s376
    %p385 = scmp.eq.s32.totalorder %s27, 1
    %p386 = por %p384, %p385
    %p387 = scmp.ne.s32.totalorder %s376, %s377
    %p388 = scmp.eq.s32.totalorder %s27, 0
    %p389 = por %p387, %p388
    %p390 = scmp.ne.s32.totalorder %s376, %s377
    %p391 = scmp.eq.s32.totalorder %s28, 1
    %p392 = por %p390, %p391
    %p394 = scmp.ne.s32.totalorder %s377, %s393
    %p395 = scmp.eq.s32.totalorder %s28, 0
    %p396 = por %p394, %p395
    %p397 = scmp.le.s32.totalorder 1, %s22
    %p398 = scmp.lt.s32.totalorder %s22, 3
    %p399 = pnand %p397, %p398
    %p400 = pneg %p399
    // Predicated region
    $region9: #{basic_stage_forward.3} parent=5 // pred_check
      _
    $region10: #{basic_stage_forward.3} parent=5 // pred_check_branch
      %402 = sbr.rel (%p399) target = $region12
    $region11: #{basic_stage_forward.3} parent=5 // pred_region
      %s403 = ssub.s32 %s22, 1
      // Predicated region
      $region13: #{basic_stage_forward.3} parent=11 // pred_check
        %p404 = pneg %p69
      $region14: #{basic_stage_forward.3} parent=11 // pred_check_branch
        %406 = sbr.rel (%p404) target = $region16
      $region15: #{basic_stage_forward.3} parent=11 // pred_region
        _
      $region16: #{basic_stage_forward.3} parent=11 // pred_fallthru
        _
      // Predicated region
      $region17: #{basic_stage_forward.3} parent=11 // pred_check
        %p407 = pneg %p90
      $region18: #{basic_stage_forward.3} parent=11 // pred_check_branch
        %409 = sbr.rel (%p407) target = $region20
      $region19: #{basic_stage_forward.3} parent=11 // pred_region
        _
      $region20: #{basic_stage_forward.3} parent=11 // pred_fallthru
        _
      // Predicated region
      $region21: #{basic_stage_forward.3} parent=11 // pred_check
        %p410 = pneg %p111
      $region22: #{basic_stage_forward.3} parent=11 // pred_check_branch
        %412 = sbr.rel (%p410) target = $region24
      $region23: #{basic_stage_forward.3} parent=11 // pred_region
        _
      $region24: #{basic_stage_forward.3} parent=11 // pred_fallthru
        _
      // Predicated region
      $region25: #{basic_stage_forward.3} parent=11 // pred_check
        %p413 = pneg %p132
      $region26: #{basic_stage_forward.3} parent=11 // pred_check_branch
        %415 = sbr.rel (%p413) target = $region28
      $region27: #{basic_stage_forward.3} parent=11 // pred_region
        _
      $region28: #{basic_stage_forward.3} parent=11 // pred_fallthru
        _
      // Predicated region
      $region29: #{basic_stage_forward.3} parent=11 // pred_check
        %p416 = pneg %p153
      $region30: #{basic_stage_forward.3} parent=11 // pred_check_branch
        %418 = sbr.rel (%p416) target = $region32
      $region31: #{basic_stage_forward.3} parent=11 // pred_region
        _
      $region32: #{basic_stage_forward.3} parent=11 // pred_fallthru
        _
      // Predicated region
      $region33: #{basic_stage_forward.3} parent=11 // pred_check
        %p419 = pneg %p174
      $region34: #{basic_stage_forward.3} parent=11 // pred_check_branch
        %421 = sbr.rel (%p419) target = $region36
      $region35: #{basic_stage_forward.3} parent=11 // pred_region
        _
      $region36: #{basic_stage_forward.3} parent=11 // pred_fallthru
        _
      // Predicated region
      $region37: #{basic_stage_forward.3} parent=11 // pred_check
        %p422 = pneg %p195
      $region38: #{basic_stage_forward.3} parent=11 // pred_check_branch
        %424 = sbr.rel (%p422) target = $region40
      $region39: #{basic_stage_forward.3} parent=11 // pred_region
        _
      $region40: #{basic_stage_forward.3} parent=11 // pred_fallthru
        _
      // Predicated region
      $region41: #{basic_stage_forward.3} parent=11 // pred_check
        %p425 = pneg %p216
      $region42: #{basic_stage_forward.3} parent=11 // pred_check_branch
        %427 = sbr.rel (%p425) target = $region44
      $region43: #{basic_stage_forward.3} parent=11 // pred_region
        _
      $region44: #{basic_stage_forward.3} parent=11 // pred_fallthru
        _
      // Predicated region
      $region45: #{basic_stage_forward.3} parent=11 // pred_check
        %p428 = pneg %p237
      $region46: #{basic_stage_forward.3} parent=11 // pred_check_branch
        %430 = sbr.rel (%p428) target = $region48
      $region47: #{basic_stage_forward.3} parent=11 // pred_region
        _
      $region48: #{basic_stage_forward.3} parent=11 // pred_fallthru
        _
      // Predicated region
      $region49: #{basic_stage_forward.3} parent=11 // pred_check
        %p431 = pneg %p258
      $region50: #{basic_stage_forward.3} parent=11 // pred_check_branch
        %433 = sbr.rel (%p431) target = $region52
      $region51: #{basic_stage_forward.3} parent=11 // pred_region
        _
      $region52: #{basic_stage_forward.3} parent=11 // pred_fallthru
        _
      // Predicated region
      $region53: #{basic_stage_forward.3} parent=11 // pred_check
        %p434 = pneg %p279
      $region54: #{basic_stage_forward.3} parent=11 // pred_check_branch
        %436 = sbr.rel (%p434) target = $region56
      $region55: #{basic_stage_forward.3} parent=11 // pred_region
        _
      $region56: #{basic_stage_forward.3} parent=11 // pred_fallthru
        _
      // Predicated region
      $region57: #{basic_stage_forward.3} parent=11 // pred_check
        %p437 = pneg %p300
      $region58: #{basic_stage_forward.3} parent=11 // pred_check_branch
        %439 = sbr.rel (%p437) target = $region60
      $region59: #{basic_stage_forward.3} parent=11 // pred_region
        _
      $region60: #{basic_stage_forward.3} parent=11 // pred_fallthru
        _
      // Predicated region
      $region61: #{basic_stage_forward.3} parent=11 // pred_check
        %p440 = pneg %p321
      $region62: #{basic_stage_forward.3} parent=11 // pred_check_branch
        %442 = sbr.rel (%p440) target = $region64
      $region63: #{basic_stage_forward.3} parent=11 // pred_region
        _
      $region64: #{basic_stage_forward.3} parent=11 // pred_fallthru
        _
      // Predicated region
      $region65: #{basic_stage_forward.3} parent=11 // pred_check
        %p443 = pneg %p342
      $region66: #{basic_stage_forward.3} parent=11 // pred_check_branch
        %445 = sbr.rel (%p443) target = $region68
      $region67: #{basic_stage_forward.3} parent=11 // pred_region
        _
      $region68: #{basic_stage_forward.3} parent=11 // pred_fallthru
        _
      // Predicated region
      $region69: #{basic_stage_forward.3} parent=11 // pred_check
        %p446 = pneg %p363
      $region70: #{basic_stage_forward.3} parent=11 // pred_check_branch
        %448 = sbr.rel (%p446) target = $region72
      $region71: #{basic_stage_forward.3} parent=11 // pred_region
        _
      $region72: #{basic_stage_forward.3} parent=11 // pred_fallthru
        _
    $region12: #{basic_stage_forward.3} parent=5 // pred_fallthru
      _
    %p449 = scmp.lt.s32.totalorder %s22, 2
    // Predicated region
    $region73: #{basic_stage_forward.3} parent=5 // pred_check
      %p450 = pneg %p449
    $region74: #{basic_stage_forward.3} parent=5 // pred_check_branch
      %452 = sbr.rel (%p450) target = $region76
    $region75: #{basic_stage_forward.3} parent=5 // pred_region
      // Predicated region
      $region77: #{basic_stage_forward.3} parent=75 // pred_check
        %p453 = pneg %p42
      $region78: #{basic_stage_forward.3} parent=75 // pred_check_branch
        %455 = sbr.rel (%p453) target = $region80
      $region79: #{basic_stage_forward.3} parent=75 // pred_region
        %p456 = scmp.lt.s32.totalorder %s22, 1
        %s457 = scalar_select %p456, %s22, 1
        %s458 = smul.addr %s457, 32
        %s459 = smul.addr %s458, 8
        %s460 = scalar_lea.vmem %s0, %s459
      $region80: #{basic_stage_forward.3} parent=75 // pred_fallthru
        _
    $region76: #{basic_stage_forward.3} parent=5 // pred_fallthru
      _
    %p461 = scmp.le.s32.totalorder 1, %s22
    %p462 = scmp.lt.s32.totalorder %s22, 3
    %p463 = pnand %p461, %p462
    %p464 = pneg %p463
    // Predicated region
    $region81: #{basic_stage_forward.3} parent=5 // pred_check
      _
    $region82: #{basic_stage_forward.3} parent=5 // pred_check_branch
      %466 = sbr.rel (%p463) target = $region84
    $region83: #{basic_stage_forward.3} parent=5 // pred_region
      %s467 = ssub.s32 %s22, 1
      %p468 = scmp.lt.s32.totalorder %s27, 1
      %s469 = scalar_select %p468, %s27, 1
      %s470 = smul.addr %s469, 32
      %s471 = smul.addr %s470, 8
      %s472 = scalar_lea.vmem %s0, %s471
      %p473 = pneg %p48
      %p474 = pneg %p45
      %p475 = pneg %p69
      %p476 = pneg %p66
      %p477 = pneg %p90
      %p478 = pneg %p87
      %p479 = pneg %p111
      %p480 = pneg %p108
      %p481 = pneg %p132
      %p482 = pneg %p129
      %p483 = pneg %p153
      %p484 = pneg %p150
      %p485 = pneg %p174
      %p486 = pneg %p171
      %p487 = pneg %p195
      %p488 = pneg %p192
      %p489 = pneg %p216
      %p490 = pneg %p213
      %p491 = pneg %p237
      %p492 = pneg %p234
      %p493 = pneg %p258
      %p494 = pneg %p255
      %p495 = pneg %p279
      %p496 = pneg %p276
      %p497 = pneg %p300
      %p498 = pneg %p297
      %p499 = pneg %p321
      %p500 = pneg %p318
      %p501 = pneg %p342
      %p502 = pneg %p339
      %p503 = pneg %p363
      %p504 = pneg %p360
      %p505 = pneg %p389
      %p506 = pneg %p386
      %p507 = scmp.lt.s32.totalorder %s27, 1
      %s508 = scalar_select %p507, %s27, 1
      %s509 = smul.addr %s508, 32
      %s510 = smul.addr %s509, 8
      %s511 = scalar_lea.vmem %s16, %s510
      %p512 = scmp.lt.s32.totalorder %s27, 1
      %s513 = scalar_select %p512, %s27, 1
      %s514 = smul.addr %s513, 32
      %s515 = smul.addr %s514, 8
      %s516 = scalar_lea.vmem %s0, %s515
      %p517 = scmp.lt.s32.totalorder %s27, 1
      %s518 = scalar_select %p517, %s27, 1
      %s519 = smul.addr %s518, 32
      %s520 = smul.addr %s519, 8
      %s521 = scalar_lea.vmem %s16, %s520
      %v522 = vld [vmem:[%s516] sm:$0xff]
      %v523 = vld [vmem:[%s516 + $0x8] sm:$0xff]
      %v524 = vld [vmem:[%s516 + $0x10] sm:$0xff]
      %v525 = vld [vmem:[%s516 + $0x18] sm:$0xff]
      %v526 = vld [vmem:[%s516 + $0x20] sm:$0xff]
      %v527 = vld [vmem:[%s516 + $0x28] sm:$0xff]
      %v528 = vld [vmem:[%s516 + $0x30] sm:$0xff]
      %v529 = vld [vmem:[%s516 + $0x38] sm:$0xff]
      %v530 = vld [vmem:[%s516 + $0x40] sm:$0xff]
      %v531 = vld [vmem:[%s516 + $0x48] sm:$0xff]
      %v532 = vld [vmem:[%s516 + $0x50] sm:$0xff]
      %v533 = vld [vmem:[%s516 + $0x58] sm:$0xff]
      %v534 = vld [vmem:[%s516 + $0x60] sm:$0xff]
      %v535 = vld [vmem:[%s516 + $0x68] sm:$0xff]
      %v536 = vld [vmem:[%s516 + $0x70] sm:$0xff]
      %v537 = vld [vmem:[%s516 + $0x78] sm:$0xff]
      %v538 = vld [vmem:[%s516 + $0x80] sm:$0xff]
      %v539 = vld [vmem:[%s516 + $0x88] sm:$0xff]
      %v540 = vld [vmem:[%s516 + $0x90] sm:$0xff]
      %v541 = vld [vmem:[%s516 + $0x98] sm:$0xff]
      %v542 = vld [vmem:[%s516 + $0xa0] sm:$0xff]
      %v543 = vld [vmem:[%s516 + $0xa8] sm:$0xff]
      %v544 = vld [vmem:[%s516 + $0xb0] sm:$0xff]
      %v545 = vld [vmem:[%s516 + $0xb8] sm:$0xff]
      %v546 = vld [vmem:[%s516 + $0xc0] sm:$0xff]
      %v547 = vld [vmem:[%s516 + $0xc8] sm:$0xff]
      %v548 = vld [vmem:[%s516 + $0xd0] sm:$0xff]
      %v549 = vld [vmem:[%s516 + $0xd8] sm:$0xff]
      %v550 = vld [vmem:[%s516 + $0xe0] sm:$0xff]
      %v551 = vld [vmem:[%s516 + $0xe8] sm:$0xff]
      %v552 = vld [vmem:[%s516 + $0xf0] sm:$0xff]
      %v553 = vld [vmem:[%s516 + $0xf8] sm:$0xff]
      %v554 = vld [vmem:[%s1] sm:$0x1]
      %v555 = vld [vmem:[%s2] sm:$0x1]
      %vm556 = vcmask 261120
      %v557 = vsel %vm556, %v522, 0.0
      %558 = vadd.xlane.f32.xlu0 %v557
      %v559 = vpop.xlane.xlu0 %558
      %v560 = vsel %vm556, %v523, 0.0
      %561 = vadd.xlane.f32.xlu0 %v560
      %v562 = vpop.xlane.xlu0 %561
      %v563 = vsel %vm556, %v524, 0.0
      %564 = vadd.xlane.f32.xlu0 %v563
      %v565 = vpop.xlane.xlu0 %564
      %v566 = vsel %vm556, %v525, 0.0
      %567 = vadd.xlane.f32.xlu0 %v566
      %v568 = vpop.xlane.xlu0 %567
      %v569 = vsel %vm556, %v526, 0.0
      %570 = vadd.xlane.f32.xlu0 %v569
      %v571 = vpop.xlane.xlu0 %570
      %v572 = vsel %vm556, %v527, 0.0
      %573 = vadd.xlane.f32.xlu0 %v572
      %v574 = vpop.xlane.xlu0 %573
      %v575 = vsel %vm556, %v528, 0.0
      %576 = vadd.xlane.f32.xlu0 %v575
      %v577 = vpop.xlane.xlu0 %576
      %v578 = vsel %vm556, %v529, 0.0
      %579 = vadd.xlane.f32.xlu0 %v578
      %v580 = vpop.xlane.xlu0 %579
      %v581 = vsel %vm556, %v530, 0.0
      %582 = vadd.xlane.f32.xlu0 %v581
      %v583 = vpop.xlane.xlu0 %582
      %v584 = vsel %vm556, %v531, 0.0
      %585 = vadd.xlane.f32.xlu0 %v584
      %v586 = vpop.xlane.xlu0 %585
      %v587 = vsel %vm556, %v532, 0.0
      %588 = vadd.xlane.f32.xlu0 %v587
      %v589 = vpop.xlane.xlu0 %588
      %v590 = vsel %vm556, %v533, 0.0
      %591 = vadd.xlane.f32.xlu0 %v590
      %v592 = vpop.xlane.xlu0 %591
      %v593 = vsel %vm556, %v534, 0.0
      %594 = vadd.xlane.f32.xlu0 %v593
      %v595 = vpop.xlane.xlu0 %594
      %v596 = vsel %vm556, %v535, 0.0
      %597 = vadd.xlane.f32.xlu0 %v596
      %v598 = vpop.xlane.xlu0 %597
      %v599 = vsel %vm556, %v536, 0.0
      %600 = vadd.xlane.f32.xlu0 %v599
      %v601 = vpop.xlane.xlu0 %600
      %v602 = vsel %vm556, %v537, 0.0
      %603 = vadd.xlane.f32.xlu0 %v602
      %v604 = vpop.xlane.xlu0 %603
      %v605 = vsel %vm556, %v538, 0.0
      %606 = vadd.xlane.f32.xlu0 %v605
      %v607 = vpop.xlane.xlu0 %606
      %v608 = vsel %vm556, %v539, 0.0
      %609 = vadd.xlane.f32.xlu0 %v608
      %v610 = vpop.xlane.xlu0 %609
      %v611 = vsel %vm556, %v540, 0.0
      %612 = vadd.xlane.f32.xlu0 %v611
      %v613 = vpop.xlane.xlu0 %612
      %v614 = vsel %vm556, %v541, 0.0
      %615 = vadd.xlane.f32.xlu0 %v614
      %v616 = vpop.xlane.xlu0 %615
      %v617 = vsel %vm556, %v542, 0.0
      %618 = vadd.xlane.f32.xlu0 %v617
      %v619 = vpop.xlane.xlu0 %618
      %v620 = vsel %vm556, %v543, 0.0
      %621 = vadd.xlane.f32.xlu0 %v620
      %v622 = vpop.xlane.xlu0 %621
      %v623 = vsel %vm556, %v544, 0.0
      %624 = vadd.xlane.f32.xlu0 %v623
      %v625 = vpop.xlane.xlu0 %624
      %v626 = vsel %vm556, %v545, 0.0
      %627 = vadd.xlane.f32.xlu0 %v626
      %v628 = vpop.xlane.xlu0 %627
      %v629 = vsel %vm556, %v546, 0.0
      %630 = vadd.xlane.f32.xlu0 %v629
      %v631 = vpop.xlane.xlu0 %630
      %v632 = vsel %vm556, %v547, 0.0
      %633 = vadd.xlane.f32.xlu0 %v632
      %v634 = vpop.xlane.xlu0 %633
      %v635 = vsel %vm556, %v548, 0.0
      %636 = vadd.xlane.f32.xlu0 %v635
      %v637 = vpop.xlane.xlu0 %636
      %v638 = vsel %vm556, %v549, 0.0
      %639 = vadd.xlane.f32.xlu0 %v638
      %v640 = vpop.xlane.xlu0 %639
      %v641 = vsel %vm556, %v550, 0.0
      %642 = vadd.xlane.f32.xlu0 %v641
      %v643 = vpop.xlane.xlu0 %642
      %v644 = vsel %vm556, %v551, 0.0
      %645 = vadd.xlane.f32.xlu0 %v644
      %v646 = vpop.xlane.xlu0 %645
      %v647 = vsel %vm556, %v552, 0.0
      %648 = vadd.xlane.f32.xlu0 %v647
      %v649 = vpop.xlane.xlu0 %648
      %v650 = vsel %vm556, %v553, 0.0
      %651 = vadd.xlane.f32.xlu0 %v650
      %v652 = vpop.xlane.xlu0 %651
      %v653 = vrcp.pop 32.0
      %v654 = vmul.f32 %v559, %v653
      %v655 = vmul.f32 %v562, %v653
      %v656 = vmul.f32 %v565, %v653
      %v657 = vmul.f32 %v568, %v653
      %v658 = vmul.f32 %v571, %v653
      %v659 = vmul.f32 %v574, %v653
      %v660 = vmul.f32 %v577, %v653
      %v661 = vmul.f32 %v580, %v653
      %v662 = vmul.f32 %v583, %v653
      %v663 = vmul.f32 %v586, %v653
      %v664 = vmul.f32 %v589, %v653
      %v665 = vmul.f32 %v592, %v653
      %v666 = vmul.f32 %v595, %v653
      %v667 = vmul.f32 %v598, %v653
      %v668 = vmul.f32 %v601, %v653
      %v669 = vmul.f32 %v604, %v653
      %v670 = vmul.f32 %v607, %v653
      %v671 = vmul.f32 %v610, %v653
      %v672 = vmul.f32 %v613, %v653
      %v673 = vmul.f32 %v616, %v653
      %v674 = vmul.f32 %v619, %v653
      %v675 = vmul.f32 %v622, %v653
      %v676 = vmul.f32 %v625, %v653
      %v677 = vmul.f32 %v628, %v653
      %v678 = vmul.f32 %v631, %v653
      %v679 = vmul.f32 %v634, %v653
      %v680 = vmul.f32 %v637, %v653
      %v681 = vmul.f32 %v640, %v653
      %v682 = vmul.f32 %v643, %v653
      %v683 = vmul.f32 %v646, %v653
      %v684 = vmul.f32 %v649, %v653
      %v685 = vmul.f32 %v652, %v653
      %v686 = vsub.f32 %v522, %v654
      %v687 = vsub.f32 %v523, %v655
      %v688 = vsub.f32 %v524, %v656
      %v689 = vsub.f32 %v525, %v657
      %v690 = vsub.f32 %v526, %v658
      %v691 = vsub.f32 %v527, %v659
      %v692 = vsub.f32 %v528, %v660
      %v693 = vsub.f32 %v529, %v661
      %v694 = vsub.f32 %v530, %v662
      %v695 = vsub.f32 %v531, %v663
      %v696 = vsub.f32 %v532, %v664
      %v697 = vsub.f32 %v533, %v665
      %v698 = vsub.f32 %v534, %v666
      %v699 = vsub.f32 %v535, %v667
      %v700 = vsub.f32 %v536, %v668
      %v701 = vsub.f32 %v537, %v669
      %v702 = vsub.f32 %v538, %v670
      %v703 = vsub.f32 %v539, %v671
      %v704 = vsub.f32 %v540, %v672
      %v705 = vsub.f32 %v541, %v673
      %v706 = vsub.f32 %v542, %v674
      %v707 = vsub.f32 %v543, %v675
      %v708 = vsub.f32 %v544, %v676
      %v709 = vsub.f32 %v545, %v677
      %v710 = vsub.f32 %v546, %v678
      %v711 = vsub.f32 %v547, %v679
      %v712 = vsub.f32 %v548, %v680
      %v713 = vsub.f32 %v549, %v681
      %v714 = vsub.f32 %v550, %v682
      %v715 = vsub.f32 %v551, %v683
      %v716 = vsub.f32 %v552, %v684
      %v717 = vsub.f32 %v553, %v685
      %v718 = vmul.f32 %v686, %v686
      %v719 = vmul.f32 %v687, %v687
      %v720 = vmul.f32 %v688, %v688
      %v721 = vmul.f32 %v689, %v689
      %v722 = vmul.f32 %v690, %v690
      %v723 = vmul.f32 %v691, %v691
      %v724 = vmul.f32 %v692, %v692
      %v725 = vmul.f32 %v693, %v693
      %v726 = vmul.f32 %v694, %v694
      %v727 = vmul.f32 %v695, %v695
      %v728 = vmul.f32 %v696, %v696
      %v729 = vmul.f32 %v697, %v697
      %v730 = vmul.f32 %v698, %v698
      %v731 = vmul.f32 %v699, %v699
      %v732 = vmul.f32 %v700, %v700
      %v733 = vmul.f32 %v701, %v701
      %v734 = vmul.f32 %v702, %v702
      %v735 = vmul.f32 %v703, %v703
      %v736 = vmul.f32 %v704, %v704
      %v737 = vmul.f32 %v705, %v705
      %v738 = vmul.f32 %v706, %v706
      %v739 = vmul.f32 %v707, %v707
      %v740 = vmul.f32 %v708, %v708
      %v741 = vmul.f32 %v709, %v709
      %v742 = vmul.f32 %v710, %v710
      %v743 = vmul.f32 %v711, %v711
      %v744 = vmul.f32 %v712, %v712
      %v745 = vmul.f32 %v713, %v713
      %v746 = vmul.f32 %v714, %v714
      %v747 = vmul.f32 %v715, %v715
      %v748 = vmul.f32 %v716, %v716
      %v749 = vmul.f32 %v717, %v717
      %v750 = vsel %vm556, %v718, 0.0
      %751 = vadd.xlane.f32.xlu0 %v750
      %v752 = vpop.xlane.xlu0 %751
      %v753 = vsel %vm556, %v719, 0.0
      %754 = vadd.xlane.f32.xlu0 %v753
      %v755 = vpop.xlane.xlu0 %754
      %v756 = vsel %vm556, %v720, 0.0
      %757 = vadd.xlane.f32.xlu0 %v756
      %v758 = vpop.xlane.xlu0 %757
      %v759 = vsel %vm556, %v721, 0.0
      %760 = vadd.xlane.f32.xlu0 %v759
      %v761 = vpop.xlane.xlu0 %760
      %v762 = vsel %vm556, %v722, 0.0
      %763 = vadd.xlane.f32.xlu0 %v762
      %v764 = vpop.xlane.xlu0 %763
      %v765 = vsel %vm556, %v723, 0.0
      %766 = vadd.xlane.f32.xlu0 %v765
      %v767 = vpop.xlane.xlu0 %766
      %v768 = vsel %vm556, %v724, 0.0
      %769 = vadd.xlane.f32.xlu0 %v768
      %v770 = vpop.xlane.xlu0 %769
      %v771 = vsel %vm556, %v725, 0.0
      %772 = vadd.xlane.f32.xlu0 %v771
      %v773 = vpop.xlane.xlu0 %772
      %v774 = vsel %vm556, %v726, 0.0
      %775 = vadd.xlane.f32.xlu0 %v774
      %v776 = vpop.xlane.xlu0 %775
      %v777 = vsel %vm556, %v727, 0.0
      %778 = vadd.xlane.f32.xlu0 %v777
      %v779 = vpop.xlane.xlu0 %778
      %v780 = vsel %vm556, %v728, 0.0
      %781 = vadd.xlane.f32.xlu0 %v780
      %v782 = vpop.xlane.xlu0 %781
      %v783 = vsel %vm556, %v729, 0.0
      %784 = vadd.xlane.f32.xlu0 %v783
      %v785 = vpop.xlane.xlu0 %784
      %v786 = vsel %vm556, %v730, 0.0
      %787 = vadd.xlane.f32.xlu0 %v786
      %v788 = vpop.xlane.xlu0 %787
      %v789 = vsel %vm556, %v731, 0.0
      %790 = vadd.xlane.f32.xlu0 %v789
      %v791 = vpop.xlane.xlu0 %790
      %v792 = vsel %vm556, %v732, 0.0
      %793 = vadd.xlane.f32.xlu0 %v792
      %v794 = vpop.xlane.xlu0 %793
      %v795 = vsel %vm556, %v733, 0.0
      %796 = vadd.xlane.f32.xlu0 %v795
      %v797 = vpop.xlane.xlu0 %796
      %v798 = vsel %vm556, %v734, 0.0
      %799 = vadd.xlane.f32.xlu0 %v798
      %v800 = vpop.xlane.xlu0 %799
      %v801 = vsel %vm556, %v735, 0.0
      %802 = vadd.xlane.f32.xlu0 %v801
      %v803 = vpop.xlane.xlu0 %802
      %v804 = vsel %vm556, %v736, 0.0
      %805 = vadd.xlane.f32.xlu0 %v804
      %v806 = vpop.xlane.xlu0 %805
      %v807 = vsel %vm556, %v737, 0.0
      %808 = vadd.xlane.f32.xlu0 %v807
      %v809 = vpop.xlane.xlu0 %808
      %v810 = vsel %vm556, %v738, 0.0
      %811 = vadd.xlane.f32.xlu0 %v810
      %v812 = vpop.xlane.xlu0 %811
      %v813 = vsel %vm556, %v739, 0.0
      %814 = vadd.xlane.f32.xlu0 %v813
      %v815 = vpop.xlane.xlu0 %814
      %v816 = vsel %vm556, %v740, 0.0
      %817 = vadd.xlane.f32.xlu0 %v816
      %v818 = vpop.xlane.xlu0 %817
      %v819 = vsel %vm556, %v741, 0.0
      %820 = vadd.xlane.f32.xlu0 %v819
      %v821 = vpop.xlane.xlu0 %820
      %v822 = vsel %vm556, %v742, 0.0
      %823 = vadd.xlane.f32.xlu0 %v822
      %v824 = vpop.xlane.xlu0 %823
      %v825 = vsel %vm556, %v743, 0.0
      %826 = vadd.xlane.f32.xlu0 %v825
      %v827 = vpop.xlane.xlu0 %826
      %v828 = vsel %vm556, %v744, 0.0
      %829 = vadd.xlane.f32.xlu0 %v828
      %v830 = vpop.xlane.xlu0 %829
      %v831 = vsel %vm556, %v745, 0.0
      %832 = vadd.xlane.f32.xlu0 %v831
      %v833 = vpop.xlane.xlu0 %832
      %v834 = vsel %vm556, %v746, 0.0
      %835 = vadd.xlane.f32.xlu0 %v834
      %v836 = vpop.xlane.xlu0 %835
      %v837 = vsel %vm556, %v747, 0.0
      %838 = vadd.xlane.f32.xlu0 %v837
      %v839 = vpop.xlane.xlu0 %838
      %v840 = vsel %vm556, %v748, 0.0
      %841 = vadd.xlane.f32.xlu0 %v840
      %v842 = vpop.xlane.xlu0 %841
      %v843 = vsel %vm556, %v749, 0.0
      %844 = vadd.xlane.f32.xlu0 %v843
      %v845 = vpop.xlane.xlu0 %844
      %v846 = vmul.f32 %v752, %v653
      %v847 = vmul.f32 %v755, %v653
      %v848 = vmul.f32 %v758, %v653
      %v849 = vmul.f32 %v761, %v653
      %v850 = vmul.f32 %v764, %v653
      %v851 = vmul.f32 %v767, %v653
      %v852 = vmul.f32 %v770, %v653
      %v853 = vmul.f32 %v773, %v653
      %v854 = vmul.f32 %v776, %v653
      %v855 = vmul.f32 %v779, %v653
      %v856 = vmul.f32 %v782, %v653
      %v857 = vmul.f32 %v785, %v653
      %v858 = vmul.f32 %v788, %v653
      %v859 = vmul.f32 %v791, %v653
      %v860 = vmul.f32 %v794, %v653
      %v861 = vmul.f32 %v797, %v653
      %v862 = vmul.f32 %v800, %v653
      %v863 = vmul.f32 %v803, %v653
      %v864 = vmul.f32 %v806, %v653
      %v865 = vmul.f32 %v809, %v653
      %v866 = vmul.f32 %v812, %v653
      %v867 = vmul.f32 %v815, %v653
      %v868 = vmul.f32 %v818, %v653
      %v869 = vmul.f32 %v821, %v653
      %v870 = vmul.f32 %v824, %v653
      %v871 = vmul.f32 %v827, %v653
      %v872 = vmul.f32 %v830, %v653
      %v873 = vmul.f32 %v833, %v653
      %v874 = vmul.f32 %v836, %v653
      %v875 = vmul.f32 %v839, %v653
      %v876 = vmul.f32 %v842, %v653
      %v877 = vmul.f32 %v845, %v653
      %v878 = vadd.f32 %v846, 1e-05
      %v879 = vadd.f32 %v847, 1e-05
      %v880 = vadd.f32 %v848, 1e-05
      %v881 = vadd.f32 %v849, 1e-05
      %v882 = vadd.f32 %v850, 1e-05
      %v883 = vadd.f32 %v851, 1e-05
      %v884 = vadd.f32 %v852, 1e-05
      %v885 = vadd.f32 %v853, 1e-05
      %v886 = vadd.f32 %v854, 1e-05
      %v887 = vadd.f32 %v855, 1e-05
      %v888 = vadd.f32 %v856, 1e-05
      %v889 = vadd.f32 %v857, 1e-05
      %v890 = vadd.f32 %v858, 1e-05
      %v891 = vadd.f32 %v859, 1e-05
      %v892 = vadd.f32 %v860, 1e-05
      %v893 = vadd.f32 %v861, 1e-05
      %v894 = vadd.f32 %v862, 1e-05
      %v895 = vadd.f32 %v863, 1e-05
      %v896 = vadd.f32 %v864, 1e-05
      %v897 = vadd.f32 %v865, 1e-05
      %v898 = vadd.f32 %v866, 1e-05
      %v899 = vadd.f32 %v867, 1e-05
      %v900 = vadd.f32 %v868, 1e-05
      %v901 = vadd.f32 %v869, 1e-05
      %v902 = vadd.f32 %v870, 1e-05
      %v903 = vadd.f32 %v871, 1e-05
      %v904 = vadd.f32 %v872, 1e-05
      %v905 = vadd.f32 %v873, 1e-05
      %v906 = vadd.f32 %v874, 1e-05
      %v907 = vadd.f32 %v875, 1e-05
      %v908 = vadd.f32 %v876, 1e-05
      %v909 = vadd.f32 %v877, 1e-05
      %v910 = vrsqrt.pop %v878
      %v911 = vrsqrt.pop %v879
      %v912 = vrsqrt.pop %v880
      %v913 = vrsqrt.pop %v881
      %v914 = vrsqrt.pop %v882
      %v915 = vrsqrt.pop %v883
      %v916 = vrsqrt.pop %v884
      %v917 = vrsqrt.pop %v885
      %v918 = vrsqrt.pop %v886
      %v919 = vrsqrt.pop %v887
      %v920 = vrsqrt.pop %v888
      %v921 = vrsqrt.pop %v889
      %v922 = vrsqrt.pop %v890
      %v923 = vrsqrt.pop %v891
      %v924 = vrsqrt.pop %v892
      %v925 = vrsqrt.pop %v893
      %v926 = vrsqrt.pop %v894
      %v927 = vrsqrt.pop %v895
      %v928 = vrsqrt.pop %v896
      %v929 = vrsqrt.pop %v897
      %v930 = vrsqrt.pop %v898
      %v931 = vrsqrt.pop %v899
      %v932 = vrsqrt.pop %v900
      %v933 = vrsqrt.pop %v901
      %v934 = vrsqrt.pop %v902
      %v935 = vrsqrt.pop %v903
      %v936 = vrsqrt.pop %v904
      %v937 = vrsqrt.pop %v905
      %v938 = vrsqrt.pop %v906
      %v939 = vrsqrt.pop %v907
      %v940 = vrsqrt.pop %v908
      %v941 = vrsqrt.pop %v909
      %v942 = vmul.f32 %v686, %v910
      %v943 = vmul.f32 %v687, %v911
      %v944 = vmul.f32 %v688, %v912
      %v945 = vmul.f32 %v689, %v913
      %v946 = vmul.f32 %v690, %v914
      %v947 = vmul.f32 %v691, %v915
      %v948 = vmul.f32 %v692, %v916
      %v949 = vmul.f32 %v693, %v917
      %v950 = vmul.f32 %v694, %v918
      %v951 = vmul.f32 %v695, %v919
      %v952 = vmul.f32 %v696, %v920
      %v953 = vmul.f32 %v697, %v921
      %v954 = vmul.f32 %v698, %v922
      %v955 = vmul.f32 %v699, %v923
      %v956 = vmul.f32 %v700, %v924
      %v957 = vmul.f32 %v701, %v925
      %v958 = vmul.f32 %v702, %v926
      %v959 = vmul.f32 %v703, %v927
      %v960 = vmul.f32 %v704, %v928
      %v961 = vmul.f32 %v705, %v929
      %v962 = vmul.f32 %v706, %v930
      %v963 = vmul.f32 %v707, %v931
      %v964 = vmul.f32 %v708, %v932
      %v965 = vmul.f32 %v709, %v933
      %v966 = vmul.f32 %v710, %v934
      %v967 = vmul.f32 %v711, %v935
      %v968 = vmul.f32 %v712, %v936
      %v969 = vmul.f32 %v713, %v937
      %v970 = vmul.f32 %v714, %v938
      %v971 = vmul.f32 %v715, %v939
      %v972 = vmul.f32 %v716, %v940
      %v973 = vmul.f32 %v717, %v941
      %v975 = vlaneseq
      %v976 = vshrl.u32 %v975, 7
      %v977 = vsub.s32 0, %v976
      %v978 = vrot.slane %v554, %v977
      %v980 = vmul.f32 %v942, %v978
      %v981 = vmul.f32 %v943, %v978
      %v982 = vmul.f32 %v944, %v978
      %v983 = vmul.f32 %v945, %v978
      %v984 = vmul.f32 %v946, %v978
      %v985 = vmul.f32 %v947, %v978
      %v986 = vmul.f32 %v948, %v978
      %v987 = vmul.f32 %v949, %v978
      %v988 = vmul.f32 %v950, %v978
      %v989 = vmul.f32 %v951, %v978
      %v990 = vmul.f32 %v952, %v978
      %v991 = vmul.f32 %v953, %v978
      %v992 = vmul.f32 %v954, %v978
      %v993 = vmul.f32 %v955, %v978
      %v994 = vmul.f32 %v956, %v978
      %v995 = vmul.f32 %v957, %v978
      %v996 = vmul.f32 %v958, %v978
      %v997 = vmul.f32 %v959, %v978
      %v998 = vmul.f32 %v960, %v978
      %v999 = vmul.f32 %v961, %v978
      %v1000 = vmul.f32 %v962, %v978
      %v1001 = vmul.f32 %v963, %v978
      %v1002 = vmul.f32 %v964, %v978
      %v1003 = vmul.f32 %v965, %v978
      %v1004 = vmul.f32 %v966, %v978
      %v1005 = vmul.f32 %v967, %v978
      %v1006 = vmul.f32 %v968, %v978
      %v1007 = vmul.f32 %v969, %v978
      %v1008 = vmul.f32 %v970, %v978
      %v1009 = vmul.f32 %v971, %v978
      %v1010 = vmul.f32 %v972, %v978
      %v1011 = vmul.f32 %v973, %v978
      %v1013 = vlaneseq
      %v1014 = vshrl.u32 %v1013, 7
      %v1015 = vsub.s32 0, %v1014
      %v1016 = vrot.slane %v555, %v1015
      %v1018 = vadd.f32 %v980, %v1016
      %v1019 = vadd.f32 %v981, %v1016
      %v1020 = vadd.f32 %v982, %v1016
      %v1021 = vadd.f32 %v983, %v1016
      %v1022 = vadd.f32 %v984, %v1016
      %v1023 = vadd.f32 %v985, %v1016
      %v1024 = vadd.f32 %v986, %v1016
      %v1025 = vadd.f32 %v987, %v1016
      %v1026 = vadd.f32 %v988, %v1016
      %v1027 = vadd.f32 %v989, %v1016
      %v1028 = vadd.f32 %v990, %v1016
      %v1029 = vadd.f32 %v991, %v1016
      %v1030 = vadd.f32 %v992, %v1016
      %v1031 = vadd.f32 %v993, %v1016
      %v1032 = vadd.f32 %v994, %v1016
      %v1033 = vadd.f32 %v995, %v1016
      %v1034 = vadd.f32 %v996, %v1016
      %v1035 = vadd.f32 %v997, %v1016
      %v1036 = vadd.f32 %v998, %v1016
      %v1037 = vadd.f32 %v999, %v1016
      %v1038 = vadd.f32 %v1000, %v1016
      %v1039 = vadd.f32 %v1001, %v1016
      %v1040 = vadd.f32 %v1002, %v1016
      %v1041 = vadd.f32 %v1003, %v1016
      %v1042 = vadd.f32 %v1004, %v1016
      %v1043 = vadd.f32 %v1005, %v1016
      %v1044 = vadd.f32 %v1006, %v1016
      %v1045 = vadd.f32 %v1007, %v1016
      %v1046 = vadd.f32 %v1008, %v1016
      %v1047 = vadd.f32 %v1009, %v1016
      %v1048 = vadd.f32 %v1010, %v1016
      %v1049 = vadd.f32 %v1011, %v1016
      %v1050 = vld [vmem:[%s3] sm:$0xff]
      %v1051 = vld [vmem:[%s3 + $0x8] sm:$0xff]
      %v1052 = vld [vmem:[%s3 + $0x10] sm:$0xff]
      %v1053 = vld [vmem:[%s3 + $0x18] sm:$0xff]
      %v1054 = vld [vmem:[%s4] sm:$0x1]
      %v1056 = vlaneseq
      %v1057 = vshrl.u32 %v1056, 7
      %v1058 = vsub.s32 0, %v1057
      %v1059 = vrot.slane %v1054, %v1058
      %v1062 = vsel %vm556, %v1018, 0
      %v1065 = vsel %vm556, %v1019, 0
      %v1068 = vsel %vm556, %v1020, 0
      %v1071 = vsel %vm556, %v1021, 0
      %v1074 = vsel %vm556, %v1022, 0
      %v1077 = vsel %vm556, %v1023, 0
      %v1080 = vsel %vm556, %v1024, 0
      %v1083 = vsel %vm556, %v1025, 0
      %v1086 = vsel %vm556, %v1026, 0
      %v1089 = vsel %vm556, %v1027, 0
      %v1092 = vsel %vm556, %v1028, 0
      %v1095 = vsel %vm556, %v1029, 0
      %v1098 = vsel %vm556, %v1030, 0
      %v1101 = vsel %vm556, %v1031, 0
      %v1104 = vsel %vm556, %v1032, 0
      %v1107 = vsel %vm556, %v1033, 0
      %v1110 = vsel %vm556, %v1034, 0
      %v1113 = vsel %vm556, %v1035, 0
      %v1116 = vsel %vm556, %v1036, 0
      %v1119 = vsel %vm556, %v1037, 0
      %v1122 = vsel %vm556, %v1038, 0
      %v1125 = vsel %vm556, %v1039, 0
      %v1128 = vsel %vm556, %v1040, 0
      %v1131 = vsel %vm556, %v1041, 0
      %v1134 = vsel %vm556, %v1042, 0
      %v1137 = vsel %vm556, %v1043, 0
      %v1140 = vsel %vm556, %v1044, 0
      %v1143 = vsel %vm556, %v1045, 0
      %v1146 = vsel %vm556, %v1046, 0
      %v1149 = vsel %vm556, %v1047, 0
      %v1152 = vsel %vm556, %v1048, 0
      %v1155 = vsel %vm556, %v1049, 0
      %1157 = vmatprep.subr.mxu0 0.0
      %1158 = vmatpush1.msra.mxu0 %v1050
      %1159 = vmatprep.subr.mxu0 0.0
      %1160 = vmatpush1.msra.mxu0 %v1051
      %1161 = vmatprep.subr.mxu0 0.0
      %1162 = vmatpush1.msra.mxu0 %v1052
      %1163 = vmatprep.subr.mxu0 0.0
      %1164 = vmatpush1.msra.mxu0 %v1053
      %1165 = vmatprep.subr.mxu0 0.0
      %1166 = vmatpush1.msra.mxu0 0.0
      %1167 = vmatprep.subr.mxu0 0.0
      %1168 = vmatpush1.msra.mxu0 0.0
      %1169 = vmatprep.subr.mxu0 0.0
      %1170 = vmatpush1.msra.mxu0 0.0
      %1171 = vmatprep.subr.mxu0 0.0
      %1172 = vmatpush1.msra.mxu0 0.0
      %1173 = vmatprep.subr.mxu0 0.0
      %1174 = vmatpush1.msra.mxu0 0.0
      %1175 = vmatprep.subr.mxu0 0.0
      %1176 = vmatpush1.msra.mxu0 0.0
      %1177 = vmatprep.subr.mxu0 0.0
      %1178 = vmatpush1.msra.mxu0 0.0
      %1179 = vmatprep.subr.mxu0 0.0
      %1180 = vmatpush1.msra.mxu0 0.0
      %1181 = vmatprep.subr.mxu0 0.0
      %1182 = vmatpush1.msra.mxu0 0.0
      %1183 = vmatprep.subr.mxu0 0.0
      %1184 = vmatpush1.msra.mxu0 0.0
      %1185 = vmatprep.subr.mxu0 0.0
      %1186 = vmatpush1.msra.mxu0 0.0
      %1187 = vmatprep.subr.mxu0 0.0
      %1188 = vmatpush1.msra.mxu0 0.0
      %1189 = vmatprep.subr.mxu0 0.0
      %1190 = vmatpush1.msra.mxu0 0.0
      %1191 = vmatprep.subr.mxu0 0.0
      %1192 = vmatpush1.msra.mxu0 0.0
      %1193 = vmatprep.subr.mxu0 0.0
      %1194 = vmatpush1.msra.mxu0 0.0
      %1195 = vmatprep.subr.mxu0 0.0
      %1196 = vmatpush1.msra.mxu0 0.0
      %1197 = vmatprep.subr.mxu0 0.0
      %1198 = vmatpush1.msra.mxu0 0.0
      %1199 = vmatprep.subr.mxu0 0.0
      %1200 = vmatpush1.msra.mxu0 0.0
      %1201 = vmatprep.subr.mxu0 0.0
      %1202 = vmatpush1.msra.mxu0 0.0
      %1203 = vmatprep.subr.mxu0 0.0
      %1204 = vmatpush1.msra.mxu0 0.0
      %1205 = vmatprep.subr.mxu0 0.0
      %1206 = vmatpush1.msra.mxu0 0.0
      %1207 = vmatprep.subr.mxu0 0.0
      %1208 = vmatpush1.msra.mxu0 0.0
      %1209 = vmatprep.subr.mxu0 0.0
      %1210 = vmatpush1.msra.mxu0 0.0
      %1211 = vmatprep.subr.mxu0 0.0
      %1212 = vmatpush1.msra.mxu0 0.0
      %1213 = vmatprep.subr.mxu0 0.0
      %1214 = vmatpush1.msra.mxu0 0.0
      %1215 = vmatprep.subr.mxu0 0.0
      %1216 = vmatpush1.msra.mxu0 0.0
      %1217 = vmatprep.subr.mxu0 0.0
      %1218 = vmatpush1.msra.mxu0 0.0
      %1219 = vmatprep.subr.mxu0 0.0
      %1220 = vmatpush1.msra.mxu0 0.0
      %1221 = vmatprep.mubr.f32.mxu0 0.0
      %1222 = vmatmul.mubr.f32.gmra.mrb[0].mxu0 %v1062
      %v1223 = vpop.f32.mrb[0].mxu0
      %v1224 = vadd.f32 %v1059, %v1223
      %v1225 = vpop.f32.mrb[0].mxu0
      %1226 = vmatprep.mubr.f32.mxu0 0.0
      %1227 = vmatmul.mubr.f32.gmra.mrb[0].mxu0 %v1065
      %v1228 = vpop.f32.mrb[0].mxu0
      %v1229 = vadd.f32 %v1059, %v1228
      %v1230 = vpop.f32.mrb[0].mxu0
      %1231 = vmatprep.mubr.f32.mxu0 0.0
      %1232 = vmatmul.mubr.f32.gmra.mrb[0].mxu0 %v1068
      %v1233 = vpop.f32.mrb[0].mxu0
      %v1234 = vadd.f32 %v1059, %v1233
      %v1235 = vpop.f32.mrb[0].mxu0
      %1236 = vmatprep.mubr.f32.mxu0 0.0
      %1237 = vmatmul.mubr.f32.gmra.mrb[0].mxu0 %v1071
      %v1238 = vpop.f32.mrb[0].mxu0
      %v1239 = vadd.f32 %v1059, %v1238
      %v1240 = vpop.f32.mrb[0].mxu0
      %1241 = vmatprep.mubr.f32.mxu0 0.0
      %1242 = vmatmul.mubr.f32.gmra.mrb[0].mxu0 %v1074
      %v1243 = vpop.f32.mrb[0].mxu0
      %v1244 = vadd.f32 %v1059, %v1243
      %v1245 = vpop.f32.mrb[0].mxu0
      %1246 = vmatprep.mubr.f32.mxu0 0.0
      %1247 = vmatmul.mubr.f32.gmra.mrb[0].mxu0 %v1077
      %v1248 = vpop.f32.mrb[0].mxu0
      %v1249 = vadd.f32 %v1059, %v1248
      %v1250 = vpop.f32.mrb[0].mxu0
      %1251 = vmatprep.mubr.f32.mxu0 0.0
      %1252 = vmatmul.mubr.f32.gmra.mrb[0].mxu0 %v1080
      %v1253 = vpop.f32.mrb[0].mxu0
      %v1254 = vadd.f32 %v1059, %v1253
      %v1255 = vpop.f32.mrb[0].mxu0
      %1256 = vmatprep.mubr.f32.mxu0 0.0
      %1257 = vmatmul.mubr.f32.gmra.mrb[0].mxu0 %v1083
      %v1258 = vpop.f32.mrb[0].mxu0
      %v1259 = vadd.f32 %v1059, %v1258
      %v1260 = vpop.f32.mrb[0].mxu0
      %1261 = vmatprep.mubr.f32.mxu0 0.0
      %1262 = vmatmul.mubr.f32.gmra.mrb[0].mxu0 %v1086
      %v1263 = vpop.f32.mrb[0].mxu0
      %v1264 = vadd.f32 %v1059, %v1263
      %v1265 = vpop.f32.mrb[0].mxu0
      %1266 = vmatprep.mubr.f32.mxu0 0.0
      %1267 = vmatmul.mubr.f32.gmra.mrb[0].mxu0 %v1089
      %v1268 = vpop.f32.mrb[0].mxu0
      %v1269 = vadd.f32 %v1059, %v1268
      %v1270 = vpop.f32.mrb[0].mxu0
      %1271 = vmatprep.mubr.f32.mxu0 0.0
      %1272 = vmatmul.mubr.f32.gmra.mrb[0].mxu0 %v1092
      %v1273 = vpop.f32.mrb[0].mxu0
      %v1274 = vadd.f32 %v1059, %v1273
      %v1275 = vpop.f32.mrb[0].mxu0
      %1276 = vmatprep.mubr.f32.mxu0 0.0
      %1277 = vmatmul.mubr.f32.gmra.mrb[0].mxu0 %v1095
      %v1278 = vpop.f32.mrb[0].mxu0
      %v1279 = vadd.f32 %v1059, %v1278
      %v1280 = vpop.f32.mrb[0].mxu0
      %1281 = vmatprep.mubr.f32.mxu0 0.0
      %1282 = vmatmul.mubr.f32.gmra.mrb[0].mxu0 %v1098
      %v1283 = vpop.f32.mrb[0].mxu0
      %v1284 = vadd.f32 %v1059, %v1283
      %v1285 = vpop.f32.mrb[0].mxu0
      %1286 = vmatprep.mubr.f32.mxu0 0.0
      %1287 = vmatmul.mubr.f32.gmra.mrb[0].mxu0 %v1101
      %v1288 = vpop.f32.mrb[0].mxu0
      %v1289 = vadd.f32 %v1059, %v1288
      %v1290 = vpop.f32.mrb[0].mxu0
      %1291 = vmatprep.mubr.f32.mxu0 0.0
      %1292 = vmatmul.mubr.f32.gmra.mrb[0].mxu0 %v1104
      %v1293 = vpop.f32.mrb[0].mxu0
      %v1294 = vadd.f32 %v1059, %v1293
      %v1295 = vpop.f32.mrb[0].mxu0
      %1296 = vmatprep.mubr.f32.mxu0 0.0
      %1297 = vmatmul.mubr.f32.gmra.mrb[0].mxu0 %v1107
      %v1298 = vpop.f32.mrb[0].mxu0
      %v1299 = vadd.f32 %v1059, %v1298
      %v1300 = vpop.f32.mrb[0].mxu0
      %1301 = vmatprep.mubr.f32.mxu0 0.0
      %1302 = vmatmul.mubr.f32.gmra.mrb[0].mxu0 %v1110
      %v1303 = vpop.f32.mrb[0].mxu0
      %v1304 = vadd.f32 %v1059, %v1303
      %v1305 = vpop.f32.mrb[0].mxu0
      %1306 = vmatprep.mubr.f32.mxu0 0.0
      %1307 = vmatmul.mubr.f32.gmra.mrb[0].mxu0 %v1113
      %v1308 = vpop.f32.mrb[0].mxu0
      %v1309 = vadd.f32 %v1059, %v1308
      %v1310 = vpop.f32.mrb[0].mxu0
      %1311 = vmatprep.mubr.f32.mxu0 0.0
      %1312 = vmatmul.mubr.f32.gmra.mrb[0].mxu0 %v1116
      %v1313 = vpop.f32.mrb[0].mxu0
      %v1314 = vadd.f32 %v1059, %v1313
      %v1315 = vpop.f32.mrb[0].mxu0
      %1316 = vmatprep.mubr.f32.mxu0 0.0
      %1317 = vmatmul.mubr.f32.gmra.mrb[0].mxu0 %v1119
      %v1318 = vpop.f32.mrb[0].mxu0
      %v1319 = vadd.f32 %v1059, %v1318
      %v1320 = vpop.f32.mrb[0].mxu0
      %1321 = vmatprep.mubr.f32.mxu0 0.0
      %1322 = vmatmul.mubr.f32.gmra.mrb[0].mxu0 %v1122
      %v1323 = vpop.f32.mrb[0].mxu0
      %v1324 = vadd.f32 %v1059, %v1323
      %v1325 = vpop.f32.mrb[0].mxu0
      %1326 = vmatprep.mubr.f32.mxu0 0.0
      %1327 = vmatmul.mubr.f32.gmra.mrb[0].mxu0 %v1125
      %v1328 = vpop.f32.mrb[0].mxu0
      %v1329 = vadd.f32 %v1059, %v1328
      %v1330 = vpop.f32.mrb[0].mxu0
      %1331 = vmatprep.mubr.f32.mxu0 0.0
      %1332 = vmatmul.mubr.f32.gmra.mrb[0].mxu0 %v1128
      %v1333 = vpop.f32.mrb[0].mxu0
      %v1334 = vadd.f32 %v1059, %v1333
      %v1335 = vpop.f32.mrb[0].mxu0
      %1336 = vmatprep.mubr.f32.mxu0 0.0
      %1337 = vmatmul.mubr.f32.gmra.mrb[0].mxu0 %v1131
      %v1338 = vpop.f32.mrb[0].mxu0
      %v1339 = vadd.f32 %v1059, %v1338
      %v1340 = vpop.f32.mrb[0].mxu0
      %1341 = vmatprep.mubr.f32.mxu0 0.0
      %1342 = vmatmul.mubr.f32.gmra.mrb[0].mxu0 %v1134
      %v1343 = vpop.f32.mrb[0].mxu0
      %v1344 = vadd.f32 %v1059, %v1343
      %v1345 = vpop.f32.mrb[0].mxu0
      %1346 = vmatprep.mubr.f32.mxu0 0.0
      %1347 = vmatmul.mubr.f32.gmra.mrb[0].mxu0 %v1137
      %v1348 = vpop.f32.mrb[0].mxu0
      %v1349 = vadd.f32 %v1059, %v1348
      %v1350 = vpop.f32.mrb[0].mxu0
      %1351 = vmatprep.mubr.f32.mxu0 0.0
      %1352 = vmatmul.mubr.f32.gmra.mrb[0].mxu0 %v1140
      %v1353 = vpop.f32.mrb[0].mxu0
      %v1354 = vadd.f32 %v1059, %v1353
      %v1355 = vpop.f32.mrb[0].mxu0
      %1356 = vmatprep.mubr.f32.mxu0 0.0
      %1357 = vmatmul.mubr.f32.gmra.mrb[0].mxu0 %v1143
      %v1358 = vpop.f32.mrb[0].mxu0
      %v1359 = vadd.f32 %v1059, %v1358
      %v1360 = vpop.f32.mrb[0].mxu0
      %1361 = vmatprep.mubr.f32.mxu0 0.0
      %1362 = vmatmul.mubr.f32.gmra.mrb[0].mxu0 %v1146
      %v1363 = vpop.f32.mrb[0].mxu0
      %v1364 = vadd.f32 %v1059, %v1363
      %v1365 = vpop.f32.mrb[0].mxu0
      %1366 = vmatprep.mubr.f32.mxu0 0.0
      %1367 = vmatmul.mubr.f32.gmra.mrb[0].mxu0 %v1149
      %v1368 = vpop.f32.mrb[0].mxu0
      %v1369 = vadd.f32 %v1059, %v1368
      %v1370 = vpop.f32.mrb[0].mxu0
      %1371 = vmatprep.mubr.f32.mxu0 0.0
      %1372 = vmatmul.mubr.f32.gmra.mrb[0].mxu0 %v1152
      %v1373 = vpop.f32.mrb[0].mxu0
      %v1374 = vadd.f32 %v1059, %v1373
      %v1375 = vpop.f32.mrb[0].mxu0
      %1376 = vmatprep.mubr.f32.mxu0 0.0
      %1377 = vmatmul.mubr.f32.gmra.mrb[0].mxu0 %v1155
      %v1378 = vpop.f32.mrb[0].mxu0
      %v1379 = vadd.f32 %v1059, %v1378
      %v1380 = vpop.f32.mrb[0].mxu0
      %1381 = vdwg.mxu0
      %v1382 = vmul.f32 %v1224, 0.5
      %v1383 = vmul.f32 %v1229, 0.5
      %v1384 = vmul.f32 %v1234, 0.5
      %v1385 = vmul.f32 %v1239, 0.5
      %v1386 = vmul.f32 %v1244, 0.5
      %v1387 = vmul.f32 %v1249, 0.5
      %v1388 = vmul.f32 %v1254, 0.5
      %v1389 = vmul.f32 %v1259, 0.5
      %v1390 = vmul.f32 %v1264, 0.5
      %v1391 = vmul.f32 %v1269, 0.5
      %v1392 = vmul.f32 %v1274, 0.5
      %v1393 = vmul.f32 %v1279, 0.5
      %v1394 = vmul.f32 %v1284, 0.5
      %v1395 = vmul.f32 %v1289, 0.5
      %v1396 = vmul.f32 %v1294, 0.5
      %v1397 = vmul.f32 %v1299, 0.5
      %v1398 = vmul.f32 %v1304, 0.5
      %v1399 = vmul.f32 %v1309, 0.5
      %v1400 = vmul.f32 %v1314, 0.5
      %v1401 = vmul.f32 %v1319, 0.5
      %v1402 = vmul.f32 %v1324, 0.5
      %v1403 = vmul.f32 %v1329, 0.5
      %v1404 = vmul.f32 %v1334, 0.5
      %v1405 = vmul.f32 %v1339, 0.5
      %v1406 = vmul.f32 %v1344, 0.5
      %v1407 = vmul.f32 %v1349, 0.5
      %v1408 = vmul.f32 %v1354, 0.5
      %v1409 = vmul.f32 %v1359, 0.5
      %v1410 = vmul.f32 %v1364, 0.5
      %v1411 = vmul.f32 %v1369, 0.5
      %v1412 = vmul.f32 %v1374, 0.5
      %v1413 = vmul.f32 %v1379, 0.5
      %v1414 = vmul.f32 %v1224, %v1224
      %v1415 = vmul.f32 %v1229, %v1229
      %v1416 = vmul.f32 %v1234, %v1234
      %v1417 = vmul.f32 %v1239, %v1239
      %v1418 = vmul.f32 %v1244, %v1244
      %v1419 = vmul.f32 %v1249, %v1249
      %v1420 = vmul.f32 %v1254, %v1254
      %v1421 = vmul.f32 %v1259, %v1259
      %v1422 = vmul.f32 %v1264, %v1264
      %v1423 = vmul.f32 %v1269, %v1269
      %v1424 = vmul.f32 %v1274, %v1274
      %v1425 = vmul.f32 %v1279, %v1279
      %v1426 = vmul.f32 %v1284, %v1284
      %v1427 = vmul.f32 %v1289, %v1289
      %v1428 = vmul.f32 %v1294, %v1294
      %v1429 = vmul.f32 %v1299, %v1299
      %v1430 = vmul.f32 %v1304, %v1304
      %v1431 = vmul.f32 %v1309, %v1309
      %v1432 = vmul.f32 %v1314, %v1314
      %v1433 = vmul.f32 %v1319, %v1319
      %v1434 = vmul.f32 %v1324, %v1324
      %v1435 = vmul.f32 %v1329, %v1329
      %v1436 = vmul.f32 %v1334, %v1334
      %v1437 = vmul.f32 %v1339, %v1339
      %v1438 = vmul.f32 %v1344, %v1344
      %v1439 = vmul.f32 %v1349, %v1349
      %v1440 = vmul.f32 %v1354, %v1354
      %v1441 = vmul.f32 %v1359, %v1359
      %v1442 = vmul.f32 %v1364, %v1364
      %v1443 = vmul.f32 %v1369, %v1369
      %v1444 = vmul.f32 %v1374, %v1374
      %v1445 = vmul.f32 %v1379, %v1379
      %v1446 = vmul.f32 %v1414, %v1224
      %v1447 = vmul.f32 %v1415, %v1229
      %v1448 = vmul.f32 %v1416, %v1234
      %v1449 = vmul.f32 %v1417, %v1239
      %v1450 = vmul.f32 %v1418, %v1244
      %v1451 = vmul.f32 %v1419, %v1249
      %v1452 = vmul.f32 %v1420, %v1254
      %v1453 = vmul.f32 %v1421, %v1259
      %v1454 = vmul.f32 %v1422, %v1264
      %v1455 = vmul.f32 %v1423, %v1269
      %v1456 = vmul.f32 %v1424, %v1274
      %v1457 = vmul.f32 %v1425, %v1279
      %v1458 = vmul.f32 %v1426, %v1284
      %v1459 = vmul.f32 %v1427, %v1289
      %v1460 = vmul.f32 %v1428, %v1294
      %v1461 = vmul.f32 %v1429, %v1299
      %v1462 = vmul.f32 %v1430, %v1304
      %v1463 = vmul.f32 %v1431, %v1309
      %v1464 = vmul.f32 %v1432, %v1314
      %v1465 = vmul.f32 %v1433, %v1319
      %v1466 = vmul.f32 %v1434, %v1324
      %v1467 = vmul.f32 %v1435, %v1329
      %v1468 = vmul.f32 %v1436, %v1334
      %v1469 = vmul.f32 %v1437, %v1339
      %v1470 = vmul.f32 %v1438, %v1344
      %v1471 = vmul.f32 %v1439, %v1349
      %v1472 = vmul.f32 %v1440, %v1354
      %v1473 = vmul.f32 %v1441, %v1359
      %v1474 = vmul.f32 %v1442, %v1364
      %v1475 = vmul.f32 %v1443, %v1369
      %v1476 = vmul.f32 %v1444, %v1374
      %v1477 = vmul.f32 %v1445, %v1379
      %v1478 = vmul.f32 %v1446, 0.044715
      %v1479 = vmul.f32 %v1447, 0.044715
      %v1480 = vmul.f32 %v1448, 0.044715
      %v1481 = vmul.f32 %v1449, 0.044715
      %v1482 = vmul.f32 %v1450, 0.044715
      %v1483 = vmul.f32 %v1451, 0.044715
      %v1484 = vmul.f32 %v1452, 0.044715
      %v1485 = vmul.f32 %v1453, 0.044715
      %v1486 = vmul.f32 %v1454, 0.044715
      %v1487 = vmul.f32 %v1455, 0.044715
      %v1488 = vmul.f32 %v1456, 0.044715
      %v1489 = vmul.f32 %v1457, 0.044715
      %v1490 = vmul.f32 %v1458, 0.044715
      %v1491 = vmul.f32 %v1459, 0.044715
      %v1492 = vmul.f32 %v1460, 0.044715
      %v1493 = vmul.f32 %v1461, 0.044715
      %v1494 = vmul.f32 %v1462, 0.044715
      %v1495 = vmul.f32 %v1463, 0.044715
      %v1496 = vmul.f32 %v1464, 0.044715
      %v1497 = vmul.f32 %v1465, 0.044715
      %v1498 = vmul.f32 %v1466, 0.044715
      %v1499 = vmul.f32 %v1467, 0.044715
      %v1500 = vmul.f32 %v1468, 0.044715
      %v1501 = vmul.f32 %v1469, 0.044715
      %v1502 = vmul.f32 %v1470, 0.044715
      %v1503 = vmul.f32 %v1471, 0.044715
      %v1504 = vmul.f32 %v1472, 0.044715
      %v1505 = vmul.f32 %v1473, 0.044715
      %v1506 = vmul.f32 %v1474, 0.044715
      %v1507 = vmul.f32 %v1475, 0.044715
      %v1508 = vmul.f32 %v1476, 0.044715
      %v1509 = vmul.f32 %v1477, 0.044715
      %v1510 = vadd.f32 %v1224, %v1478
      %v1511 = vadd.f32 %v1229, %v1479
      %v1512 = vadd.f32 %v1234, %v1480
      %v1513 = vadd.f32 %v1239, %v1481
      %v1514 = vadd.f32 %v1244, %v1482
      %v1515 = vadd.f32 %v1249, %v1483
      %v1516 = vadd.f32 %v1254, %v1484
      %v1517 = vadd.f32 %v1259, %v1485
      %v1518 = vadd.f32 %v1264, %v1486
      %v1519 = vadd.f32 %v1269, %v1487
      %v1520 = vadd.f32 %v1274, %v1488
      %v1521 = vadd.f32 %v1279, %v1489
      %v1522 = vadd.f32 %v1284, %v1490
      %v1523 = vadd.f32 %v1289, %v1491
      %v1524 = vadd.f32 %v1294, %v1492
      %v1525 = vadd.f32 %v1299, %v1493
      %v1526 = vadd.f32 %v1304, %v1494
      %v1527 = vadd.f32 %v1309, %v1495
      %v1528 = vadd.f32 %v1314, %v1496
      %v1529 = vadd.f32 %v1319, %v1497
      %v1530 = vadd.f32 %v1324, %v1498
      %v1531 = vadd.f32 %v1329, %v1499
      %v1532 = vadd.f32 %v1334, %v1500
      %v1533 = vadd.f32 %v1339, %v1501
      %v1534 = vadd.f32 %v1344, %v1502
      %v1535 = vadd.f32 %v1349, %v1503
      %v1536 = vadd.f32 %v1354, %v1504
      %v1537 = vadd.f32 %v1359, %v1505
      %v1538 = vadd.f32 %v1364, %v1506
      %v1539 = vadd.f32 %v1369, %v1507
      %v1540 = vadd.f32 %v1374, %v1508
      %v1541 = vadd.f32 %v1379, %v1509
      %v1542 = vmul.f32 %v1510, 0.7978846
      %v1543 = vmul.f32 %v1511, 0.7978846
      %v1544 = vmul.f32 %v1512, 0.7978846
      %v1545 = vmul.f32 %v1513, 0.7978846
      %v1546 = vmul.f32 %v1514, 0.7978846
      %v1547 = vmul.f32 %v1515, 0.7978846
      %v1548 = vmul.f32 %v1516, 0.7978846
      %v1549 = vmul.f32 %v1517, 0.7978846
      %v1550 = vmul.f32 %v1518, 0.7978846
      %v1551 = vmul.f32 %v1519, 0.7978846
      %v1552 = vmul.f32 %v1520, 0.7978846
      %v1553 = vmul.f32 %v1521, 0.7978846
      %v1554 = vmul.f32 %v1522, 0.7978846
      %v1555 = vmul.f32 %v1523, 0.7978846
      %v1556 = vmul.f32 %v1524, 0.7978846
      %v1557 = vmul.f32 %v1525, 0.7978846
      %v1558 = vmul.f32 %v1526, 0.7978846
      %v1559 = vmul.f32 %v1527, 0.7978846
      %v1560 = vmul.f32 %v1528, 0.7978846
      %v1561 = vmul.f32 %v1529, 0.7978846
      %v1562 = vmul.f32 %v1530, 0.7978846
      %v1563 = vmul.f32 %v1531, 0.7978846
      %v1564 = vmul.f32 %v1532, 0.7978846
      %v1565 = vmul.f32 %v1533, 0.7978846
      %v1566 = vmul.f32 %v1534, 0.7978846
      %v1567 = vmul.f32 %v1535, 0.7978846
      %v1568 = vmul.f32 %v1536, 0.7978846
      %v1569 = vmul.f32 %v1537, 0.7978846
      %v1570 = vmul.f32 %v1538, 0.7978846
      %v1571 = vmul.f32 %v1539, 0.7978846
      %v1572 = vmul.f32 %v1540, 0.7978846
      %v1573 = vmul.f32 %v1541, 0.7978846
      %v1574 = vtanh.pop %v1542
      %v1575 = vtanh.pop %v1543
      %v1576 = vtanh.pop %v1544
      %v1577 = vtanh.pop %v1545
      %v1578 = vtanh.pop %v1546
      %v1579 = vtanh.pop %v1547
      %v1580 = vtanh.pop %v1548
      %v1581 = vtanh.pop %v1549
      %v1582 = vtanh.pop %v1550
      %v1583 = vtanh.pop %v1551
      %v1584 = vtanh.pop %v1552
      %v1585 = vtanh.pop %v1553
      %v1586 = vtanh.pop %v1554
      %v1587 = vtanh.pop %v1555
      %v1588 = vtanh.pop %v1556
      %v1589 = vtanh.pop %v1557
      %v1590 = vtanh.pop %v1558
      %v1591 = vtanh.pop %v1559
      %v1592 = vtanh.pop %v1560
      %v1593 = vtanh.pop %v1561
      %v1594 = vtanh.pop %v1562
      %v1595 = vtanh.pop %v1563
      %v1596 = vtanh.pop %v1564
      %v1597 = vtanh.pop %v1565
      %v1598 = vtanh.pop %v1566
      %v1599 = vtanh.pop %v1567
      %v1600 = vtanh.pop %v1568
      %v1601 = vtanh.pop %v1569
      %v1602 = vtanh.pop %v1570
      %v1603 = vtanh.pop %v1571
      %v1604 = vtanh.pop %v1572
      %v1605 = vtanh.pop %v1573
      %v1606 = vadd.f32 %v1574, 1.0
      %v1607 = vadd.f32 %v1575, 1.0
      %v1608 = vadd.f32 %v1576, 1.0
      %v1609 = vadd.f32 %v1577, 1.0
      %v1610 = vadd.f32 %v1578, 1.0
      %v1611 = vadd.f32 %v1579, 1.0
      %v1612 = vadd.f32 %v1580, 1.0
      %v1613 = vadd.f32 %v1581, 1.0
      %v1614 = vadd.f32 %v1582, 1.0
      %v1615 = vadd.f32 %v1583, 1.0
      %v1616 = vadd.f32 %v1584, 1.0
      %v1617 = vadd.f32 %v1585, 1.0
      %v1618 = vadd.f32 %v1586, 1.0
      %v1619 = vadd.f32 %v1587, 1.0
      %v1620 = vadd.f32 %v1588, 1.0
      %v1621 = vadd.f32 %v1589, 1.0
      %v1622 = vadd.f32 %v1590, 1.0
      %v1623 = vadd.f32 %v1591, 1.0
      %v1624 = vadd.f32 %v1592, 1.0
      %v1625 = vadd.f32 %v1593, 1.0
      %v1626 = vadd.f32 %v1594, 1.0
      %v1627 = vadd.f32 %v1595, 1.0
      %v1628 = vadd.f32 %v1596, 1.0
      %v1629 = vadd.f32 %v1597, 1.0
      %v1630 = vadd.f32 %v1598, 1.0
      %v1631 = vadd.f32 %v1599, 1.0
      %v1632 = vadd.f32 %v1600, 1.0
      %v1633 = vadd.f32 %v1601, 1.0
      %v1634 = vadd.f32 %v1602, 1.0
      %v1635 = vadd.f32 %v1603, 1.0
      %v1636 = vadd.f32 %v1604, 1.0
      %v1637 = vadd.f32 %v1605, 1.0
      %v1638 = vmul.f32 %v1382, %v1606
      %v1639 = vmul.f32 %v1383, %v1607
      %v1640 = vmul.f32 %v1384, %v1608
      %v1641 = vmul.f32 %v1385, %v1609
      %v1642 = vmul.f32 %v1386, %v1610
      %v1643 = vmul.f32 %v1387, %v1611
      %v1644 = vmul.f32 %v1388, %v1612
      %v1645 = vmul.f32 %v1389, %v1613
      %v1646 = vmul.f32 %v1390, %v1614
      %v1647 = vmul.f32 %v1391, %v1615
      %v1648 = vmul.f32 %v1392, %v1616
      %v1649 = vmul.f32 %v1393, %v1617
      %v1650 = vmul.f32 %v1394, %v1618
      %v1651 = vmul.f32 %v1395, %v1619
      %v1652 = vmul.f32 %v1396, %v1620
      %v1653 = vmul.f32 %v1397, %v1621
      %v1654 = vmul.f32 %v1398, %v1622
      %v1655 = vmul.f32 %v1399, %v1623
      %v1656 = vmul.f32 %v1400, %v1624
      %v1657 = vmul.f32 %v1401, %v1625
      %v1658 = vmul.f32 %v1402, %v1626
      %v1659 = vmul.f32 %v1403, %v1627
      %v1660 = vmul.f32 %v1404, %v1628
      %v1661 = vmul.f32 %v1405, %v1629
      %v1662 = vmul.f32 %v1406, %v1630
      %v1663 = vmul.f32 %v1407, %v1631
      %v1664 = vmul.f32 %v1408, %v1632
      %v1665 = vmul.f32 %v1409, %v1633
      %v1666 = vmul.f32 %v1410, %v1634
      %v1667 = vmul.f32 %v1411, %v1635
      %v1668 = vmul.f32 %v1412, %v1636
      %v1669 = vmul.f32 %v1413, %v1637
      %v1670 = vld [vmem:[%s5] sm:$0xff]
      %v1671 = vld [vmem:[%s5 + $0x8] sm:$0xff]
      %v1672 = vld [vmem:[%s5 + $0x10] sm:$0xff]
      %v1673 = vld [vmem:[%s5 + $0x18] sm:$0xff]
      %v1674 = vld [vmem:[%s6] sm:$0x1]
      %v1676 = vlaneseq
      %v1677 = vshrl.u32 %v1676, 7
      %v1678 = vsub.s32 0, %v1677
      %v1679 = vrot.slane %v1674, %v1678
      %v1682 = vsel %vm556, %v1638, 0
      %v1685 = vsel %vm556, %v1639, 0
      %v1688 = vsel %vm556, %v1640, 0
      %v1691 = vsel %vm556, %v1641, 0
      %v1694 = vsel %vm556, %v1642, 0
      %v1697 = vsel %vm556, %v1643, 0
      %v1700 = vsel %vm556, %v1644, 0
      %v1703 = vsel %vm556, %v1645, 0
      %v1706 = vsel %vm556, %v1646, 0
      %v1709 = vsel %vm556, %v1647, 0
      %v1712 = vsel %vm556, %v1648, 0
      %v1715 = vsel %vm556, %v1649, 0
      %v1718 = vsel %vm556, %v1650, 0
      %v1721 = vsel %vm556, %v1651, 0
      %v1724 = vsel %vm556, %v1652, 0
      %v1727 = vsel %vm556, %v1653, 0
      %v1730 = vsel %vm556, %v1654, 0
      %v1733 = vsel %vm556, %v1655, 0
      %v1736 = vsel %vm556, %v1656, 0
      %v1739 = vsel %vm556, %v1657, 0
      %v1742 = vsel %vm556, %v1658, 0
      %v1745 = vsel %vm556, %v1659, 0
      %v1748 = vsel %vm556, %v1660, 0
      %v1751 = vsel %vm556, %v1661, 0
      %v1754 = vsel %vm556, %v1662, 0
      %v1757 = vsel %vm556, %v1663, 0
      %v1760 = vsel %vm556, %v1664, 0
      %v1763 = vsel %vm556, %v1665, 0
      %v1766 = vsel %vm556, %v1666, 0
      %v1769 = vsel %vm556, %v1667, 0
      %v1772 = vsel %vm556, %v1668, 0
      %v1775 = vsel %vm556, %v1669, 0
      %1777 = vmatprep.subr.mxu0 0.0
      %1778 = vmatpush1.msra.mxu0 %v1670
      %1779 = vmatprep.subr.mxu0 0.0
      %1780 = vmatpush1.msra.mxu0 %v1671
      %1781 = vmatprep.subr.mxu0 0.0
      %1782 = vmatpush1.msra.mxu0 %v1672
      %1783 = vmatprep.subr.mxu0 0.0
      %1784 = vmatpush1.msra.mxu0 %v1673
      %1785 = vmatprep.subr.mxu0 0.0
      %1786 = vmatpush1.msra.mxu0 0.0
      %1787 = vmatprep.subr.mxu0 0.0
      %1788 = vmatpush1.msra.mxu0 0.0
      %1789 = vmatprep.subr.mxu0 0.0
      %1790 = vmatpush1.msra.mxu0 0.0
      %1791 = vmatprep.subr.mxu0 0.0
      %1792 = vmatpush1.msra.mxu0 0.0
      %1793 = vmatprep.subr.mxu0 0.0
      %1794 = vmatpush1.msra.mxu0 0.0
      %1795 = vmatprep.subr.mxu0 0.0
      %1796 = vmatpush1.msra.mxu0 0.0
      %1797 = vmatprep.subr.mxu0 0.0
      %1798 = vmatpush1.msra.mxu0 0.0
      %1799 = vmatprep.subr.mxu0 0.0
      %1800 = vmatpush1.msra.mxu0 0.0
      %1801 = vmatprep.subr.mxu0 0.0
      %1802 = vmatpush1.msra.mxu0 0.0
      %1803 = vmatprep.subr.mxu0 0.0
      %1804 = vmatpush1.msra.mxu0 0.0
      %1805 = vmatprep.subr.mxu0 0.0
      %1806 = vmatpush1.msra.mxu0 0.0
      %1807 = vmatprep.subr.mxu0 0.0
      %1808 = vmatpush1.msra.mxu0 0.0
      %1809 = vmatprep.subr.mxu0 0.0
      %1810 = vmatpush1.msra.mxu0 0.0
      %1811 = vmatprep.subr.mxu0 0.0
      %1812 = vmatpush1.msra.mxu0 0.0
      %1813 = vmatprep.subr.mxu0 0.0
      %1814 = vmatpush1.msra.mxu0 0.0
      %1815 = vmatprep.subr.mxu0 0.0
      %1816 = vmatpush1.msra.mxu0 0.0
      %1817 = vmatprep.subr.mxu0 0.0
      %1818 = vmatpush1.msra.mxu0 0.0
      %1819 = vmatprep.subr.mxu0 0.0
      %1820 = vmatpush1.msra.mxu0 0.0
      %1821 = vmatprep.subr.mxu0 0.0
      %1822 = vmatpush1.msra.mxu0 0.0
      %1823 = vmatprep.subr.mxu0 0.0
      %1824 = vmatpush1.msra.mxu0 0.0
      %1825 = vmatprep.subr.mxu0 0.0
      %1826 = vmatpush1.msra.mxu0 0.0
      %1827 = vmatprep.subr.mxu0 0.0
      %1828 = vmatpush1.msra.mxu0 0.0
      %1829 = vmatprep.subr.mxu0 0.0
      %1830 = vmatpush1.msra.mxu0 0.0
      %1831 = vmatprep.subr.mxu0 0.0
      %1832 = vmatpush1.msra.mxu0 0.0
      %1833 = vmatprep.subr.mxu0 0.0
      %1834 = vmatpush1.msra.mxu0 0.0
      %1835 = vmatprep.subr.mxu0 0.0
      %1836 = vmatpush1.msra.mxu0 0.0
      %1837 = vmatprep.subr.mxu0 0.0
      %1838 = vmatpush1.msra.mxu0 0.0
      %1839 = vmatprep.subr.mxu0 0.0
      %1840 = vmatpush1.msra.mxu0 0.0
      %1841 = vmatprep.mubr.f32.mxu0 0.0
      %1842 = vmatmul.mubr.f32.gmra.mrb[0].mxu0 %v1682
      %v1843 = vpop.f32.mrb[0].mxu0
      %v1844 = vadd.f32 %v1679, %v1843
      %v1845 = vpop.f32.mrb[0].mxu0
      %1846 = vmatprep.mubr.f32.mxu0 0.0
      %1847 = vmatmul.mubr.f32.gmra.mrb[0].mxu0 %v1685
      %v1848 = vpop.f32.mrb[0].mxu0
      %v1849 = vadd.f32 %v1679, %v1848
      %v1850 = vpop.f32.mrb[0].mxu0
      %1851 = vmatprep.mubr.f32.mxu0 0.0
      %1852 = vmatmul.mubr.f32.gmra.mrb[0].mxu0 %v1688
      %v1853 = vpop.f32.mrb[0].mxu0
      %v1854 = vadd.f32 %v1679, %v1853
      %v1855 = vpop.f32.mrb[0].mxu0
      %1856 = vmatprep.mubr.f32.mxu0 0.0
      %1857 = vmatmul.mubr.f32.gmra.mrb[0].mxu0 %v1691
      %v1858 = vpop.f32.mrb[0].mxu0
      %v1859 = vadd.f32 %v1679, %v1858
      %v1860 = vpop.f32.mrb[0].mxu0
      %1861 = vmatprep.mubr.f32.mxu0 0.0
      %1862 = vmatmul.mubr.f32.gmra.mrb[0].mxu0 %v1694
      %v1863 = vpop.f32.mrb[0].mxu0
      %v1864 = vadd.f32 %v1679, %v1863
      %v1865 = vpop.f32.mrb[0].mxu0
      %1866 = vmatprep.mubr.f32.mxu0 0.0
      %1867 = vmatmul.mubr.f32.gmra.mrb[0].mxu0 %v1697
      %v1868 = vpop.f32.mrb[0].mxu0
      %v1869 = vadd.f32 %v1679, %v1868
      %v1870 = vpop.f32.mrb[0].mxu0
      %1871 = vmatprep.mubr.f32.mxu0 0.0
      %1872 = vmatmul.mubr.f32.gmra.mrb[0].mxu0 %v1700
      %v1873 = vpop.f32.mrb[0].mxu0
      %v1874 = vadd.f32 %v1679, %v1873
      %v1875 = vpop.f32.mrb[0].mxu0
      %1876 = vmatprep.mubr.f32.mxu0 0.0
      %1877 = vmatmul.mubr.f32.gmra.mrb[0].mxu0 %v1703
      %v1878 = vpop.f32.mrb[0].mxu0
      %v1879 = vadd.f32 %v1679, %v1878
      %v1880 = vpop.f32.mrb[0].mxu0
      %1881 = vmatprep.mubr.f32.mxu0 0.0
      %1882 = vmatmul.mubr.f32.gmra.mrb[0].mxu0 %v1706
      %v1883 = vpop.f32.mrb[0].mxu0
      %v1884 = vadd.f32 %v1679, %v1883
      %v1885 = vpop.f32.mrb[0].mxu0
      %1886 = vmatprep.mubr.f32.mxu0 0.0
      %1887 = vmatmul.mubr.f32.gmra.mrb[0].mxu0 %v1709
      %v1888 = vpop.f32.mrb[0].mxu0
      %v1889 = vadd.f32 %v1679, %v1888
      %v1890 = vpop.f32.mrb[0].mxu0
      %1891 = vmatprep.mubr.f32.mxu0 0.0
      %1892 = vmatmul.mubr.f32.gmra.mrb[0].mxu0 %v1712
      %v1893 = vpop.f32.mrb[0].mxu0
      %v1894 = vadd.f32 %v1679, %v1893
      %v1895 = vpop.f32.mrb[0].mxu0
      %1896 = vmatprep.mubr.f32.mxu0 0.0
      %1897 = vmatmul.mubr.f32.gmra.mrb[0].mxu0 %v1715
      %v1898 = vpop.f32.mrb[0].mxu0
      %v1899 = vadd.f32 %v1679, %v1898
      %v1900 = vpop.f32.mrb[0].mxu0
      %1901 = vmatprep.mubr.f32.mxu0 0.0
      %1902 = vmatmul.mubr.f32.gmra.mrb[0].mxu0 %v1718
      %v1903 = vpop.f32.mrb[0].mxu0
      %v1904 = vadd.f32 %v1679, %v1903
      %v1905 = vpop.f32.mrb[0].mxu0
      %1906 = vmatprep.mubr.f32.mxu0 0.0
      %1907 = vmatmul.mubr.f32.gmra.mrb[0].mxu0 %v1721
      %v1908 = vpop.f32.mrb[0].mxu0
      %v1909 = vadd.f32 %v1679, %v1908
      %v1910 = vpop.f32.mrb[0].mxu0
      %1911 = vmatprep.mubr.f32.mxu0 0.0
      %1912 = vmatmul.mubr.f32.gmra.mrb[0].mxu0 %v1724
      %v1913 = vpop.f32.mrb[0].mxu0
      %v1914 = vadd.f32 %v1679, %v1913
      %v1915 = vpop.f32.mrb[0].mxu0
      %1916 = vmatprep.mubr.f32.mxu0 0.0
      %1917 = vmatmul.mubr.f32.gmra.mrb[0].mxu0 %v1727
      %v1918 = vpop.f32.mrb[0].mxu0
      %v1919 = vadd.f32 %v1679, %v1918
      %v1920 = vpop.f32.mrb[0].mxu0
      %1921 = vmatprep.mubr.f32.mxu0 0.0
      %1922 = vmatmul.mubr.f32.gmra.mrb[0].mxu0 %v1730
      %v1923 = vpop.f32.mrb[0].mxu0
      %v1924 = vadd.f32 %v1679, %v1923
      %v1925 = vpop.f32.mrb[0].mxu0
      %1926 = vmatprep.mubr.f32.mxu0 0.0
      %1927 = vmatmul.mubr.f32.gmra.mrb[0].mxu0 %v1733
      %v1928 = vpop.f32.mrb[0].mxu0
      %v1929 = vadd.f32 %v1679, %v1928
      %v1930 = vpop.f32.mrb[0].mxu0
      %1931 = vmatprep.mubr.f32.mxu0 0.0
      %1932 = vmatmul.mubr.f32.gmra.mrb[0].mxu0 %v1736
      %v1933 = vpop.f32.mrb[0].mxu0
      %v1934 = vadd.f32 %v1679, %v1933
      %v1935 = vpop.f32.mrb[0].mxu0
      %1936 = vmatprep.mubr.f32.mxu0 0.0
      %1937 = vmatmul.mubr.f32.gmra.mrb[0].mxu0 %v1739
      %v1938 = vpop.f32.mrb[0].mxu0
      %v1939 = vadd.f32 %v1679, %v1938
      %v1940 = vpop.f32.mrb[0].mxu0
      %1941 = vmatprep.mubr.f32.mxu0 0.0
      %1942 = vmatmul.mubr.f32.gmra.mrb[0].mxu0 %v1742
      %v1943 = vpop.f32.mrb[0].mxu0
      %v1944 = vadd.f32 %v1679, %v1943
      %v1945 = vpop.f32.mrb[0].mxu0
      %1946 = vmatprep.mubr.f32.mxu0 0.0
      %1947 = vmatmul.mubr.f32.gmra.mrb[0].mxu0 %v1745
      %v1948 = vpop.f32.mrb[0].mxu0
      %v1949 = vadd.f32 %v1679, %v1948
      %v1950 = vpop.f32.mrb[0].mxu0
      %1951 = vmatprep.mubr.f32.mxu0 0.0
      %1952 = vmatmul.mubr.f32.gmra.mrb[0].mxu0 %v1748
      %v1953 = vpop.f32.mrb[0].mxu0
      %v1954 = vadd.f32 %v1679, %v1953
      %v1955 = vpop.f32.mrb[0].mxu0
      %1956 = vmatprep.mubr.f32.mxu0 0.0
      %1957 = vmatmul.mubr.f32.gmra.mrb[0].mxu0 %v1751
      %v1958 = vpop.f32.mrb[0].mxu0
      %v1959 = vadd.f32 %v1679, %v1958
      %v1960 = vpop.f32.mrb[0].mxu0
      %1961 = vmatprep.mubr.f32.mxu0 0.0
      %1962 = vmatmul.mubr.f32.gmra.mrb[0].mxu0 %v1754
      %v1963 = vpop.f32.mrb[0].mxu0
      %v1964 = vadd.f32 %v1679, %v1963
      %v1965 = vpop.f32.mrb[0].mxu0
      %1966 = vmatprep.mubr.f32.mxu0 0.0
      %1967 = vmatmul.mubr.f32.gmra.mrb[0].mxu0 %v1757
      %v1968 = vpop.f32.mrb[0].mxu0
      %v1969 = vadd.f32 %v1679, %v1968
      %v1970 = vpop.f32.mrb[0].mxu0
      %1971 = vmatprep.mubr.f32.mxu0 0.0
      %1972 = vmatmul.mubr.f32.gmra.mrb[0].mxu0 %v1760
      %v1973 = vpop.f32.mrb[0].mxu0
      %v1974 = vadd.f32 %v1679, %v1973
      %v1975 = vpop.f32.mrb[0].mxu0
      %1976 = vmatprep.mubr.f32.mxu0 0.0
      %1977 = vmatmul.mubr.f32.gmra.mrb[0].mxu0 %v1763
      %v1978 = vpop.f32.mrb[0].mxu0
      %v1979 = vadd.f32 %v1679, %v1978
      %v1980 = vpop.f32.mrb[0].mxu0
      %1981 = vmatprep.mubr.f32.mxu0 0.0
      %1982 = vmatmul.mubr.f32.gmra.mrb[0].mxu0 %v1766
      %v1983 = vpop.f32.mrb[0].mxu0
      %v1984 = vadd.f32 %v1679, %v1983
      %v1985 = vpop.f32.mrb[0].mxu0
      %1986 = vmatprep.mubr.f32.mxu0 0.0
      %1987 = vmatmul.mubr.f32.gmra.mrb[0].mxu0 %v1769
      %v1988 = vpop.f32.mrb[0].mxu0
      %v1989 = vadd.f32 %v1679, %v1988
      %v1990 = vpop.f32.mrb[0].mxu0
      %1991 = vmatprep.mubr.f32.mxu0 0.0
      %1992 = vmatmul.mubr.f32.gmra.mrb[0].mxu0 %v1772
      %v1993 = vpop.f32.mrb[0].mxu0
      %v1994 = vadd.f32 %v1679, %v1993
      %v1995 = vpop.f32.mrb[0].mxu0
      %1996 = vmatprep.mubr.f32.mxu0 0.0
      %1997 = vmatmul.mubr.f32.gmra.mrb[0].mxu0 %v1775
      %v1998 = vpop.f32.mrb[0].mxu0
      %v1999 = vadd.f32 %v1679, %v1998
      %v2000 = vpop.f32.mrb[0].mxu0
      %2001 = vdwg.mxu0
      %v2002 = vadd.f32 %v522, %v1844
      %v2003 = vadd.f32 %v523, %v1849
      %v2004 = vadd.f32 %v524, %v1854
      %v2005 = vadd.f32 %v525, %v1859
      %v2006 = vadd.f32 %v526, %v1864
      %v2007 = vadd.f32 %v527, %v1869
      %v2008 = vadd.f32 %v528, %v1874
      %v2009 = vadd.f32 %v529, %v1879
      %v2010 = vadd.f32 %v530, %v1884
      %v2011 = vadd.f32 %v531, %v1889
      %v2012 = vadd.f32 %v532, %v1894
      %v2013 = vadd.f32 %v533, %v1899
      %v2014 = vadd.f32 %v534, %v1904
      %v2015 = vadd.f32 %v535, %v1909
      %v2016 = vadd.f32 %v536, %v1914
      %v2017 = vadd.f32 %v537, %v1919
      %v2018 = vadd.f32 %v538, %v1924
      %v2019 = vadd.f32 %v539, %v1929
      %v2020 = vadd.f32 %v540, %v1934
      %v2021 = vadd.f32 %v541, %v1939
      %v2022 = vadd.f32 %v542, %v1944
      %v2023 = vadd.f32 %v543, %v1949
      %v2024 = vadd.f32 %v544, %v1954
      %v2025 = vadd.f32 %v545, %v1959
      %v2026 = vadd.f32 %v546, %v1964
      %v2027 = vadd.f32 %v547, %v1969
      %v2028 = vadd.f32 %v548, %v1974
      %v2029 = vadd.f32 %v549, %v1979
      %v2030 = vadd.f32 %v550, %v1984
      %v2031 = vadd.f32 %v551, %v1989
      %v2032 = vadd.f32 %v552, %v1994
      %v2033 = vadd.f32 %v553, %v1999
      %v2034 = vld [vmem:[%s7] sm:$0x1]
      %v2035 = vld [vmem:[%s8] sm:$0x1]
      %v2036 = vsel %vm556, %v2002, 0.0
      %2037 = vadd.xlane.f32.xlu0 %v2036
      %v2038 = vpop.xlane.xlu0 %2037
      %v2039 = vsel %vm556, %v2003, 0.0
      %2040 = vadd.xlane.f32.xlu0 %v2039
      %v2041 = vpop.xlane.xlu0 %2040
      %v2042 = vsel %vm556, %v2004, 0.0
      %2043 = vadd.xlane.f32.xlu0 %v2042
      %v2044 = vpop.xlane.xlu0 %2043
      %v2045 = vsel %vm556, %v2005, 0.0
      %2046 = vadd.xlane.f32.xlu0 %v2045
      %v2047 = vpop.xlane.xlu0 %2046
      %v2048 = vsel %vm556, %v2006, 0.0
      %2049 = vadd.xlane.f32.xlu0 %v2048
      %v2050 = vpop.xlane.xlu0 %2049
      %v2051 = vsel %vm556, %v2007, 0.0
      %2052 = vadd.xlane.f32.xlu0 %v2051
      %v2053 = vpop.xlane.xlu0 %2052
      %v2054 = vsel %vm556, %v2008, 0.0
      %2055 = vadd.xlane.f32.xlu0 %v2054
      %v2056 = vpop.xlane.xlu0 %2055
      %v2057 = vsel %vm556, %v2009, 0.0
      %2058 = vadd.xlane.f32.xlu0 %v2057
      %v2059 = vpop.xlane.xlu0 %2058
      %v2060 = vsel %vm556, %v2010, 0.0
      %2061 = vadd.xlane.f32.xlu0 %v2060
      %v2062 = vpop.xlane.xlu0 %2061
      %v2063 = vsel %vm556, %v2011, 0.0
      %2064 = vadd.xlane.f32.xlu0 %v2063
      %v2065 = vpop.xlane.xlu0 %2064
      %v2066 = vsel %vm556, %v2012, 0.0
      %2067 = vadd.xlane.f32.xlu0 %v2066
      %v2068 = vpop.xlane.xlu0 %2067
      %v2069 = vsel %vm556, %v2013, 0.0
      %2070 = vadd.xlane.f32.xlu0 %v2069
      %v2071 = vpop.xlane.xlu0 %2070
      %v2072 = vsel %vm556, %v2014, 0.0
      %2073 = vadd.xlane.f32.xlu0 %v2072
      %v2074 = vpop.xlane.xlu0 %2073
      %v2075 = vsel %vm556, %v2015, 0.0
      %2076 = vadd.xlane.f32.xlu0 %v2075
      %v2077 = vpop.xlane.xlu0 %2076
      %v2078 = vsel %vm556, %v2016, 0.0
      %2079 = vadd.xlane.f32.xlu0 %v2078
      %v2080 = vpop.xlane.xlu0 %2079
      %v2081 = vsel %vm556, %v2017, 0.0
      %2082 = vadd.xlane.f32.xlu0 %v2081
      %v2083 = vpop.xlane.xlu0 %2082
      %v2084 = vsel %vm556, %v2018, 0.0
      %2085 = vadd.xlane.f32.xlu0 %v2084
      %v2086 = vpop.xlane.xlu0 %2085
      %v2087 = vsel %vm556, %v2019, 0.0
      %2088 = vadd.xlane.f32.xlu0 %v2087
      %v2089 = vpop.xlane.xlu0 %2088
      %v2090 = vsel %vm556, %v2020, 0.0
      %2091 = vadd.xlane.f32.xlu0 %v2090
      %v2092 = vpop.xlane.xlu0 %2091
      %v2093 = vsel %vm556, %v2021, 0.0
      %2094 = vadd.xlane.f32.xlu0 %v2093
      %v2095 = vpop.xlane.xlu0 %2094
      %v2096 = vsel %vm556, %v2022, 0.0
      %2097 = vadd.xlane.f32.xlu0 %v2096
      %v2098 = vpop.xlane.xlu0 %2097
      %v2099 = vsel %vm556, %v2023, 0.0
      %2100 = vadd.xlane.f32.xlu0 %v2099
      %v2101 = vpop.xlane.xlu0 %2100
      %v2102 = vsel %vm556, %v2024, 0.0
      %2103 = vadd.xlane.f32.xlu0 %v2102
      %v2104 = vpop.xlane.xlu0 %2103
      %v2105 = vsel %vm556, %v2025, 0.0
      %2106 = vadd.xlane.f32.xlu0 %v2105
      %v2107 = vpop.xlane.xlu0 %2106
      %v2108 = vsel %vm556, %v2026, 0.0
      %2109 = vadd.xlane.f32.xlu0 %v2108
      %v2110 = vpop.xlane.xlu0 %2109
      %v2111 = vsel %vm556, %v2027, 0.0
      %2112 = vadd.xlane.f32.xlu0 %v2111
      %v2113 = vpop.xlane.xlu0 %2112
      %v2114 = vsel %vm556, %v2028, 0.0
      %2115 = vadd.xlane.f32.xlu0 %v2114
      %v2116 = vpop.xlane.xlu0 %2115
      %v2117 = vsel %vm556, %v2029, 0.0
      %2118 = vadd.xlane.f32.xlu0 %v2117
      %v2119 = vpop.xlane.xlu0 %2118
      %v2120 = vsel %vm556, %v2030, 0.0
      %2121 = vadd.xlane.f32.xlu0 %v2120
      %v2122 = vpop.xlane.xlu0 %2121
      %v2123 = vsel %vm556, %v2031, 0.0
      %2124 = vadd.xlane.f32.xlu0 %v2123
      %v2125 = vpop.xlane.xlu0 %2124
      %v2126 = vsel %vm556, %v2032, 0.0
      %2127 = vadd.xlane.f32.xlu0 %v2126
      %v2128 = vpop.xlane.xlu0 %2127
      %v2129 = vsel %vm556, %v2033, 0.0
      %2130 = vadd.xlane.f32.xlu0 %v2129
      %v2131 = vpop.xlane.xlu0 %2130
      %v2132 = vmul.f32 %v2038, %v653
      %v2133 = vmul.f32 %v2041, %v653
      %v2134 = vmul.f32 %v2044, %v653
      %v2135 = vmul.f32 %v2047, %v653
      %v2136 = vmul.f32 %v2050, %v653
      %v2137 = vmul.f32 %v2053, %v653
      %v2138 = vmul.f32 %v2056, %v653
      %v2139 = vmul.f32 %v2059, %v653
      %v2140 = vmul.f32 %v2062, %v653
      %v2141 = vmul.f32 %v2065, %v653
      %v2142 = vmul.f32 %v2068, %v653
      %v2143 = vmul.f32 %v2071, %v653
      %v2144 = vmul.f32 %v2074, %v653
      %v2145 = vmul.f32 %v2077, %v653
      %v2146 = vmul.f32 %v2080, %v653
      %v2147 = vmul.f32 %v2083, %v653
      %v2148 = vmul.f32 %v2086, %v653
      %v2149 = vmul.f32 %v2089, %v653
      %v2150 = vmul.f32 %v2092, %v653
      %v2151 = vmul.f32 %v2095, %v653
      %v2152 = vmul.f32 %v2098, %v653
      %v2153 = vmul.f32 %v2101, %v653
      %v2154 = vmul.f32 %v2104, %v653
      %v2155 = vmul.f32 %v2107, %v653
      %v2156 = vmul.f32 %v2110, %v653
      %v2157 = vmul.f32 %v2113, %v653
      %v2158 = vmul.f32 %v2116, %v653
      %v2159 = vmul.f32 %v2119, %v653
      %v2160 = vmul.f32 %v2122, %v653
      %v2161 = vmul.f32 %v2125, %v653
      %v2162 = vmul.f32 %v2128, %v653
      %v2163 = vmul.f32 %v2131, %v653
      %v2164 = vsub.f32 %v2002, %v2132
      %v2165 = vsub.f32 %v2003, %v2133
      %v2166 = vsub.f32 %v2004, %v2134
      %v2167 = vsub.f32 %v2005, %v2135
      %v2168 = vsub.f32 %v2006, %v2136
      %v2169 = vsub.f32 %v2007, %v2137
      %v2170 = vsub.f32 %v2008, %v2138
      %v2171 = vsub.f32 %v2009, %v2139
      %v2172 = vsub.f32 %v2010, %v2140
      %v2173 = vsub.f32 %v2011, %v2141
      %v2174 = vsub.f32 %v2012, %v2142
      %v2175 = vsub.f32 %v2013, %v2143
      %v2176 = vsub.f32 %v2014, %v2144
      %v2177 = vsub.f32 %v2015, %v2145
      %v2178 = vsub.f32 %v2016, %v2146
      %v2179 = vsub.f32 %v2017, %v2147
      %v2180 = vsub.f32 %v2018, %v2148
      %v2181 = vsub.f32 %v2019, %v2149
      %v2182 = vsub.f32 %v2020, %v2150
      %v2183 = vsub.f32 %v2021, %v2151
      %v2184 = vsub.f32 %v2022, %v2152
      %v2185 = vsub.f32 %v2023, %v2153
      %v2186 = vsub.f32 %v2024, %v2154
      %v2187 = vsub.f32 %v2025, %v2155
      %v2188 = vsub.f32 %v2026, %v2156
      %v2189 = vsub.f32 %v2027, %v2157
      %v2190 = vsub.f32 %v2028, %v2158
      %v2191 = vsub.f32 %v2029, %v2159
      %v2192 = vsub.f32 %v2030, %v2160
      %v2193 = vsub.f32 %v2031, %v2161
      %v2194 = vsub.f32 %v2032, %v2162
      %v2195 = vsub.f32 %v2033, %v2163
      %v2196 = vmul.f32 %v2164, %v2164
      %v2197 = vmul.f32 %v2165, %v2165
      %v2198 = vmul.f32 %v2166, %v2166
      %v2199 = vmul.f32 %v2167, %v2167
      %v2200 = vmul.f32 %v2168, %v2168
      %v2201 = vmul.f32 %v2169, %v2169
      %v2202 = vmul.f32 %v2170, %v2170
      %v2203 = vmul.f32 %v2171, %v2171
      %v2204 = vmul.f32 %v2172, %v2172
      %v2205 = vmul.f32 %v2173, %v2173
      %v2206 = vmul.f32 %v2174, %v2174
      %v2207 = vmul.f32 %v2175, %v2175
      %v2208 = vmul.f32 %v2176, %v2176
      %v2209 = vmul.f32 %v2177, %v2177
      %v2210 = vmul.f32 %v2178, %v2178
      %v2211 = vmul.f32 %v2179, %v2179
      %v2212 = vmul.f32 %v2180, %v2180
      %v2213 = vmul.f32 %v2181, %v2181
      %v2214 = vmul.f32 %v2182, %v2182
      %v2215 = vmul.f32 %v2183, %v2183
      %v2216 = vmul.f32 %v2184, %v2184
      %v2217 = vmul.f32 %v2185, %v2185
      %v2218 = vmul.f32 %v2186, %v2186
      %v2219 = vmul.f32 %v2187, %v2187
      %v2220 = vmul.f32 %v2188, %v2188
      %v2221 = vmul.f32 %v2189, %v2189
      %v2222 = vmul.f32 %v2190, %v2190
      %v2223 = vmul.f32 %v2191, %v2191
      %v2224 = vmul.f32 %v2192, %v2192
      %v2225 = vmul.f32 %v2193, %v2193
      %v2226 = vmul.f32 %v2194, %v2194
      %v2227 = vmul.f32 %v2195, %v2195
      %v2228 = vsel %vm556, %v2196, 0.0
      %2229 = vadd.xlane.f32.xlu0 %v2228
      %v2230 = vpop.xlane.xlu0 %2229
      %v2231 = vsel %vm556, %v2197, 0.0
      %2232 = vadd.xlane.f32.xlu0 %v2231
      %v2233 = vpop.xlane.xlu0 %2232
      %v2234 = vsel %vm556, %v2198, 0.0
      %2235 = vadd.xlane.f32.xlu0 %v2234
      %v2236 = vpop.xlane.xlu0 %2235
      %v2237 = vsel %vm556, %v2199, 0.0
      %2238 = vadd.xlane.f32.xlu0 %v2237
      %v2239 = vpop.xlane.xlu0 %2238
      %v2240 = vsel %vm556, %v2200, 0.0
      %2241 = vadd.xlane.f32.xlu0 %v2240
      %v2242 = vpop.xlane.xlu0 %2241
      %v2243 = vsel %vm556, %v2201, 0.0
      %2244 = vadd.xlane.f32.xlu0 %v2243
      %v2245 = vpop.xlane.xlu0 %2244
      %v2246 = vsel %vm556, %v2202, 0.0
      %2247 = vadd.xlane.f32.xlu0 %v2246
      %v2248 = vpop.xlane.xlu0 %2247
      %v2249 = vsel %vm556, %v2203, 0.0
      %2250 = vadd.xlane.f32.xlu0 %v2249
      %v2251 = vpop.xlane.xlu0 %2250
      %v2252 = vsel %vm556, %v2204, 0.0
      %2253 = vadd.xlane.f32.xlu0 %v2252
      %v2254 = vpop.xlane.xlu0 %2253
      %v2255 = vsel %vm556, %v2205, 0.0
      %2256 = vadd.xlane.f32.xlu0 %v2255
      %v2257 = vpop.xlane.xlu0 %2256
      %v2258 = vsel %vm556, %v2206, 0.0
      %2259 = vadd.xlane.f32.xlu0 %v2258
      %v2260 = vpop.xlane.xlu0 %2259
      %v2261 = vsel %vm556, %v2207, 0.0
      %2262 = vadd.xlane.f32.xlu0 %v2261
      %v2263 = vpop.xlane.xlu0 %2262
      %v2264 = vsel %vm556, %v2208, 0.0
      %2265 = vadd.xlane.f32.xlu0 %v2264
      %v2266 = vpop.xlane.xlu0 %2265
      %v2267 = vsel %vm556, %v2209, 0.0
      %2268 = vadd.xlane.f32.xlu0 %v2267
      %v2269 = vpop.xlane.xlu0 %2268
      %v2270 = vsel %vm556, %v2210, 0.0
      %2271 = vadd.xlane.f32.xlu0 %v2270
      %v2272 = vpop.xlane.xlu0 %2271
      %v2273 = vsel %vm556, %v2211, 0.0
      %2274 = vadd.xlane.f32.xlu0 %v2273
      %v2275 = vpop.xlane.xlu0 %2274
      %v2276 = vsel %vm556, %v2212, 0.0
      %2277 = vadd.xlane.f32.xlu0 %v2276
      %v2278 = vpop.xlane.xlu0 %2277
      %v2279 = vsel %vm556, %v2213, 0.0
      %2280 = vadd.xlane.f32.xlu0 %v2279
      %v2281 = vpop.xlane.xlu0 %2280
      %v2282 = vsel %vm556, %v2214, 0.0
      %2283 = vadd.xlane.f32.xlu0 %v2282
      %v2284 = vpop.xlane.xlu0 %2283
      %v2285 = vsel %vm556, %v2215, 0.0
      %2286 = vadd.xlane.f32.xlu0 %v2285
      %v2287 = vpop.xlane.xlu0 %2286
      %v2288 = vsel %vm556, %v2216, 0.0
      %2289 = vadd.xlane.f32.xlu0 %v2288
      %v2290 = vpop.xlane.xlu0 %2289
      %v2291 = vsel %vm556, %v2217, 0.0
      %2292 = vadd.xlane.f32.xlu0 %v2291
      %v2293 = vpop.xlane.xlu0 %2292
      %v2294 = vsel %vm556, %v2218, 0.0
      %2295 = vadd.xlane.f32.xlu0 %v2294
      %v2296 = vpop.xlane.xlu0 %2295
      %v2297 = vsel %vm556, %v2219, 0.0
      %2298 = vadd.xlane.f32.xlu0 %v2297
      %v2299 = vpop.xlane.xlu0 %2298
      %v2300 = vsel %vm556, %v2220, 0.0
      %2301 = vadd.xlane.f32.xlu0 %v2300
      %v2302 = vpop.xlane.xlu0 %2301
      %v2303 = vsel %vm556, %v2221, 0.0
      %2304 = vadd.xlane.f32.xlu0 %v2303
      %v2305 = vpop.xlane.xlu0 %2304
      %v2306 = vsel %vm556, %v2222, 0.0
      %2307 = vadd.xlane.f32.xlu0 %v2306
      %v2308 = vpop.xlane.xlu0 %2307
      %v2309 = vsel %vm556, %v2223, 0.0
      %2310 = vadd.xlane.f32.xlu0 %v2309
      %v2311 = vpop.xlane.xlu0 %2310
      %v2312 = vsel %vm556, %v2224, 0.0
      %2313 = vadd.xlane.f32.xlu0 %v2312
      %v2314 = vpop.xlane.xlu0 %2313
      %v2315 = vsel %vm556, %v2225, 0.0
      %2316 = vadd.xlane.f32.xlu0 %v2315
      %v2317 = vpop.xlane.xlu0 %2316
      %v2318 = vsel %vm556, %v2226, 0.0
      %2319 = vadd.xlane.f32.xlu0 %v2318
      %v2320 = vpop.xlane.xlu0 %2319
      %v2321 = vsel %vm556, %v2227, 0.0
      %2322 = vadd.xlane.f32.xlu0 %v2321
      %v2323 = vpop.xlane.xlu0 %2322
      %v2324 = vmul.f32 %v2230, %v653
      %v2325 = vmul.f32 %v2233, %v653
      %v2326 = vmul.f32 %v2236, %v653
      %v2327 = vmul.f32 %v2239, %v653
      %v2328 = vmul.f32 %v2242, %v653
      %v2329 = vmul.f32 %v2245, %v653
      %v2330 = vmul.f32 %v2248, %v653
      %v2331 = vmul.f32 %v2251, %v653
      %v2332 = vmul.f32 %v2254, %v653
      %v2333 = vmul.f32 %v2257, %v653
      %v2334 = vmul.f32 %v2260, %v653
      %v2335 = vmul.f32 %v2263, %v653
      %v2336 = vmul.f32 %v2266, %v653
      %v2337 = vmul.f32 %v2269, %v653
      %v2338 = vmul.f32 %v2272, %v653
      %v2339 = vmul.f32 %v2275, %v653
      %v2340 = vmul.f32 %v2278, %v653
      %v2341 = vmul.f32 %v2281, %v653
      %v2342 = vmul.f32 %v2284, %v653
      %v2343 = vmul.f32 %v2287, %v653
      %v2344 = vmul.f32 %v2290, %v653
      %v2345 = vmul.f32 %v2293, %v653
      %v2346 = vmul.f32 %v2296, %v653
      %v2347 = vmul.f32 %v2299, %v653
      %v2348 = vmul.f32 %v2302, %v653
      %v2349 = vmul.f32 %v2305, %v653
      %v2350 = vmul.f32 %v2308, %v653
      %v2351 = vmul.f32 %v2311, %v653
      %v2352 = vmul.f32 %v2314, %v653
      %v2353 = vmul.f32 %v2317, %v653
      %v2354 = vmul.f32 %v2320, %v653
      %v2355 = vmul.f32 %v2323, %v653
      %v2356 = vadd.f32 %v2324, 1e-05
      %v2357 = vadd.f32 %v2325, 1e-05
      %v2358 = vadd.f32 %v2326, 1e-05
      %v2359 = vadd.f32 %v2327, 1e-05
      %v2360 = vadd.f32 %v2328, 1e-05
      %v2361 = vadd.f32 %v2329, 1e-05
      %v2362 = vadd.f32 %v2330, 1e-05
      %v2363 = vadd.f32 %v2331, 1e-05
      %v2364 = vadd.f32 %v2332, 1e-05
      %v2365 = vadd.f32 %v2333, 1e-05
      %v2366 = vadd.f32 %v2334, 1e-05
      %v2367 = vadd.f32 %v2335, 1e-05
      %v2368 = vadd.f32 %v2336, 1e-05
      %v2369 = vadd.f32 %v2337, 1e-05
      %v2370 = vadd.f32 %v2338, 1e-05
      %v2371 = vadd.f32 %v2339, 1e-05
      %v2372 = vadd.f32 %v2340, 1e-05
      %v2373 = vadd.f32 %v2341, 1e-05
      %v2374 = vadd.f32 %v2342, 1e-05
      %v2375 = vadd.f32 %v2343, 1e-05
      %v2376 = vadd.f32 %v2344, 1e-05
      %v2377 = vadd.f32 %v2345, 1e-05
      %v2378 = vadd.f32 %v2346, 1e-05
      %v2379 = vadd.f32 %v2347, 1e-05
      %v2380 = vadd.f32 %v2348, 1e-05
      %v2381 = vadd.f32 %v2349, 1e-05
      %v2382 = vadd.f32 %v2350, 1e-05
      %v2383 = vadd.f32 %v2351, 1e-05
      %v2384 = vadd.f32 %v2352, 1e-05
      %v2385 = vadd.f32 %v2353, 1e-05
      %v2386 = vadd.f32 %v2354, 1e-05
      %v2387 = vadd.f32 %v2355, 1e-05
      %v2388 = vrsqrt.pop %v2356
      %v2389 = vrsqrt.pop %v2357
      %v2390 = vrsqrt.pop %v2358
      %v2391 = vrsqrt.pop %v2359
      %v2392 = vrsqrt.pop %v2360
      %v2393 = vrsqrt.pop %v2361
      %v2394 = vrsqrt.pop %v2362
      %v2395 = vrsqrt.pop %v2363
      %v2396 = vrsqrt.pop %v2364
      %v2397 = vrsqrt.pop %v2365
      %v2398 = vrsqrt.pop %v2366
      %v2399 = vrsqrt.pop %v2367
      %v2400 = vrsqrt.pop %v2368
      %v2401 = vrsqrt.pop %v2369
      %v2402 = vrsqrt.pop %v2370
      %v2403 = vrsqrt.pop %v2371
      %v2404 = vrsqrt.pop %v2372
      %v2405 = vrsqrt.pop %v2373
      %v2406 = vrsqrt.pop %v2374
      %v2407 = vrsqrt.pop %v2375
      %v2408 = vrsqrt.pop %v2376
      %v2409 = vrsqrt.pop %v2377
      %v2410 = vrsqrt.pop %v2378
      %v2411 = vrsqrt.pop %v2379
      %v2412 = vrsqrt.pop %v2380
      %v2413 = vrsqrt.pop %v2381
      %v2414 = vrsqrt.pop %v2382
      %v2415 = vrsqrt.pop %v2383
      %v2416 = vrsqrt.pop %v2384
      %v2417 = vrsqrt.pop %v2385
      %v2418 = vrsqrt.pop %v2386
      %v2419 = vrsqrt.pop %v2387
      %v2420 = vmul.f32 %v2164, %v2388
      %v2421 = vmul.f32 %v2165, %v2389
      %v2422 = vmul.f32 %v2166, %v2390
      %v2423 = vmul.f32 %v2167, %v2391
      %v2424 = vmul.f32 %v2168, %v2392
      %v2425 = vmul.f32 %v2169, %v2393
      %v2426 = vmul.f32 %v2170, %v2394
      %v2427 = vmul.f32 %v2171, %v2395
      %v2428 = vmul.f32 %v2172, %v2396
      %v2429 = vmul.f32 %v2173, %v2397
      %v2430 = vmul.f32 %v2174, %v2398
      %v2431 = vmul.f32 %v2175, %v2399
      %v2432 = vmul.f32 %v2176, %v2400
      %v2433 = vmul.f32 %v2177, %v2401
      %v2434 = vmul.f32 %v2178, %v2402
      %v2435 = vmul.f32 %v2179, %v2403
      %v2436 = vmul.f32 %v2180, %v2404
      %v2437 = vmul.f32 %v2181, %v2405
      %v2438 = vmul.f32 %v2182, %v2406
      %v2439 = vmul.f32 %v2183, %v2407
      %v2440 = vmul.f32 %v2184, %v2408
      %v2441 = vmul.f32 %v2185, %v2409
      %v2442 = vmul.f32 %v2186, %v2410
      %v2443 = vmul.f32 %v2187, %v2411
      %v2444 = vmul.f32 %v2188, %v2412
      %v2445 = vmul.f32 %v2189, %v2413
      %v2446 = vmul.f32 %v2190, %v2414
      %v2447 = vmul.f32 %v2191, %v2415
      %v2448 = vmul.f32 %v2192, %v2416
      %v2449 = vmul.f32 %v2193, %v2417
      %v2450 = vmul.f32 %v2194, %v2418
      %v2451 = vmul.f32 %v2195, %v2419
      %v2453 = vlaneseq
      %v2454 = vshrl.u32 %v2453, 7
      %v2455 = vsub.s32 0, %v2454
      %v2456 = vrot.slane %v2034, %v2455
      %v2458 = vmul.f32 %v2420, %v2456
      %v2459 = vmul.f32 %v2421, %v2456
      %v2460 = vmul.f32 %v2422, %v2456
      %v2461 = vmul.f32 %v2423, %v2456
      %v2462 = vmul.f32 %v2424, %v2456
      %v2463 = vmul.f32 %v2425, %v2456
      %v2464 = vmul.f32 %v2426, %v2456
      %v2465 = vmul.f32 %v2427, %v2456
      %v2466 = vmul.f32 %v2428, %v2456
      %v2467 = vmul.f32 %v2429, %v2456
      %v2468 = vmul.f32 %v2430, %v2456
      %v2469 = vmul.f32 %v2431, %v2456
      %v2470 = vmul.f32 %v2432, %v2456
      %v2471 = vmul.f32 %v2433, %v2456
      %v2472 = vmul.f32 %v2434, %v2456
      %v2473 = vmul.f32 %v2435, %v2456
      %v2474 = vmul.f32 %v2436, %v2456
      %v2475 = vmul.f32 %v2437, %v2456
      %v2476 = vmul.f32 %v2438, %v2456
      %v2477 = vmul.f32 %v2439, %v2456
      %v2478 = vmul.f32 %v2440, %v2456
      %v2479 = vmul.f32 %v2441, %v2456
      %v2480 = vmul.f32 %v2442, %v2456
      %v2481 = vmul.f32 %v2443, %v2456
      %v2482 = vmul.f32 %v2444, %v2456
      %v2483 = vmul.f32 %v2445, %v2456
      %v2484 = vmul.f32 %v2446, %v2456
      %v2485 = vmul.f32 %v2447, %v2456
      %v2486 = vmul.f32 %v2448, %v2456
      %v2487 = vmul.f32 %v2449, %v2456
      %v2488 = vmul.f32 %v2450, %v2456
      %v2489 = vmul.f32 %v2451, %v2456
      %v2491 = vlaneseq
      %v2492 = vshrl.u32 %v2491, 7
      %v2493 = vsub.s32 0, %v2492
      %v2494 = vrot.slane %v2035, %v2493
      %v2496 = vadd.f32 %v2458, %v2494
      %v2497 = vadd.f32 %v2459, %v2494
      %v2498 = vadd.f32 %v2460, %v2494
      %v2499 = vadd.f32 %v2461, %v2494
      %v2500 = vadd.f32 %v2462, %v2494
      %v2501 = vadd.f32 %v2463, %v2494
      %v2502 = vadd.f32 %v2464, %v2494
      %v2503 = vadd.f32 %v2465, %v2494
      %v2504 = vadd.f32 %v2466, %v2494
      %v2505 = vadd.f32 %v2467, %v2494
      %v2506 = vadd.f32 %v2468, %v2494
      %v2507 = vadd.f32 %v2469, %v2494
      %v2508 = vadd.f32 %v2470, %v2494
      %v2509 = vadd.f32 %v2471, %v2494
      %v2510 = vadd.f32 %v2472, %v2494
      %v2511 = vadd.f32 %v2473, %v2494
      %v2512 = vadd.f32 %v2474, %v2494
      %v2513 = vadd.f32 %v2475, %v2494
      %v2514 = vadd.f32 %v2476, %v2494
      %v2515 = vadd.f32 %v2477, %v2494
      %v2516 = vadd.f32 %v2478, %v2494
      %v2517 = vadd.f32 %v2479, %v2494
      %v2518 = vadd.f32 %v2480, %v2494
      %v2519 = vadd.f32 %v2481, %v2494
      %v2520 = vadd.f32 %v2482, %v2494
      %v2521 = vadd.f32 %v2483, %v2494
      %v2522 = vadd.f32 %v2484, %v2494
      %v2523 = vadd.f32 %v2485, %v2494
      %v2524 = vadd.f32 %v2486, %v2494
      %v2525 = vadd.f32 %v2487, %v2494
      %v2526 = vadd.f32 %v2488, %v2494
      %v2527 = vadd.f32 %v2489, %v2494
      %2528 = vst.msk [vmem:[#allocation2] sm:$0xff] %vm556, 0.0
      %2529 = vst.msk [vmem:[#allocation2 + $0x8] sm:$0xff] %vm556, 0.0
      %vm2530 = vcmask 254976
      %2531 = vst.msk [vmem:[#allocation2 + $0x10] sm:$0x3] %vm2530, 0.0
      %s2532 = scalar_lea.vmem [#allocation2], 408
      %2533 = vst.msk [vmem:[%s2532] sm:$0xff] %vm556, 0.0
      %2534 = vst.msk [vmem:[%s2532 + $0x8] sm:$0xff] %vm556, 0.0
      %2535 = vst.msk [vmem:[%s2532 + $0x10] sm:$0x3] %vm2530, 0.0
      %s2536 = scalar_lea.vmem [#allocation2], 24
      %vm2537 = vcmask 253952
      %2538 = vst.msk [vmem:[%s2536] sm:$0x1] %vm2537, 0.0
      %2539 = vst.msk [vmem:[%s2536 + $0x18] sm:$0x1] %vm2537, 0.0
      %2540 = vst.msk [vmem:[%s2536 + $0x30] sm:$0x1] %vm2537, 0.0
      %2541 = vst.msk [vmem:[%s2536 + $0x48] sm:$0x1] %vm2537, 0.0
      %2542 = vst.msk [vmem:[%s2536 + $0x60] sm:$0x1] %vm2537, 0.0
      %2543 = vst.msk [vmem:[%s2536 + $0x78] sm:$0x1] %vm2537, 0.0
      %2544 = vst.msk [vmem:[%s2536 + $0x90] sm:$0x1] %vm2537, 0.0
      %2545 = vst.msk [vmem:[%s2536 + $0xa8] sm:$0x1] %vm2537, 0.0
      %2546 = vst.msk [vmem:[%s2536 + $0xc0] sm:$0x1] %vm2537, 0.0
      %2547 = vst.msk [vmem:[%s2536 + $0xd8] sm:$0x1] %vm2537, 0.0
      %2548 = vst.msk [vmem:[%s2536 + $0xf0] sm:$0x1] %vm2537, 0.0
      %2549 = vst.msk [vmem:[%s2536 + $0x108] sm:$0x1] %vm2537, 0.0
      %2550 = vst.msk [vmem:[%s2536 + $0x120] sm:$0x1] %vm2537, 0.0
      %2551 = vst.msk [vmem:[%s2536 + $0x138] sm:$0x1] %vm2537, 0.0
      %2552 = vst.msk [vmem:[%s2536 + $0x150] sm:$0x1] %vm2537, 0.0
      %2553 = vst.msk [vmem:[%s2536 + $0x168] sm:$0x1] %vm2537, 0.0
      %2554 = vst.msk [vmem:[%s2536 + $0x11] sm:$0x1] %vm2537, 0.0
      %2555 = vst.msk [vmem:[%s2536 + $0x29] sm:$0x1] %vm2537, 0.0
      %2556 = vst.msk [vmem:[%s2536 + $0x41] sm:$0x1] %vm2537, 0.0
      %2557 = vst.msk [vmem:[%s2536 + $0x59] sm:$0x1] %vm2537, 0.0
      %2558 = vst.msk [vmem:[%s2536 + $0x71] sm:$0x1] %vm2537, 0.0
      %2559 = vst.msk [vmem:[%s2536 + $0x89] sm:$0x1] %vm2537, 0.0
      %2560 = vst.msk [vmem:[%s2536 + $0xa1] sm:$0x1] %vm2537, 0.0
      %2561 = vst.msk [vmem:[%s2536 + $0xb9] sm:$0x1] %vm2537, 0.0
      %2562 = vst.msk [vmem:[%s2536 + $0xd1] sm:$0x1] %vm2537, 0.0
      %2563 = vst.msk [vmem:[%s2536 + $0xe9] sm:$0x1] %vm2537, 0.0
      %2564 = vst.msk [vmem:[%s2536 + $0x101] sm:$0x1] %vm2537, 0.0
      %2565 = vst.msk [vmem:[%s2536 + $0x119] sm:$0x1] %vm2537, 0.0
      %2566 = vst.msk [vmem:[%s2536 + $0x131] sm:$0x1] %vm2537, 0.0
      %2567 = vst.msk [vmem:[%s2536 + $0x149] sm:$0x1] %vm2537, 0.0
      %2568 = vst.msk [vmem:[%s2536 + $0x161] sm:$0x1] %vm2537, 0.0
      %2569 = vst.msk [vmem:[%s2536 + $0x179] sm:$0x1] %vm2537, 0.0
      %2570 = vst.msk [vmem:[%s2536 + $0x1] sm:$0xff] %vm556, %v2496
      %2571 = vst.msk [vmem:[%s2536 + $0x9] sm:$0xff] %vm556, %v2497
      %2572 = vst.msk [vmem:[%s2536 + $0x19] sm:$0xff] %vm556, %v2498
      %2573 = vst.msk [vmem:[%s2536 + $0x21] sm:$0xff] %vm556, %v2499
      %2574 = vst.msk [vmem:[%s2536 + $0x31] sm:$0xff] %vm556, %v2500
      %2575 = vst.msk [vmem:[%s2536 + $0x39] sm:$0xff] %vm556, %v2501
      %2576 = vst.msk [vmem:[%s2536 + $0x49] sm:$0xff] %vm556, %v2502
      %2577 = vst.msk [vmem:[%s2536 + $0x51] sm:$0xff] %vm556, %v2503
      %2578 = vst.msk [vmem:[%s2536 + $0x61] sm:$0xff] %vm556, %v2504
      %2579 = vst.msk [vmem:[%s2536 + $0x69] sm:$0xff] %vm556, %v2505
      %2580 = vst.msk [vmem:[%s2536 + $0x79] sm:$0xff] %vm556, %v2506
      %2581 = vst.msk [vmem:[%s2536 + $0x81] sm:$0xff] %vm556, %v2507
      %2582 = vst.msk [vmem:[%s2536 + $0x91] sm:$0xff] %vm556, %v2508
      %2583 = vst.msk [vmem:[%s2536 + $0x99] sm:$0xff] %vm556, %v2509
      %2584 = vst.msk [vmem:[%s2536 + $0xa9] sm:$0xff] %vm556, %v2510
      %2585 = vst.msk [vmem:[%s2536 + $0xb1] sm:$0xff] %vm556, %v2511
      %2586 = vst.msk [vmem:[%s2536 + $0xc1] sm:$0xff] %vm556, %v2512
      %2587 = vst.msk [vmem:[%s2536 + $0xc9] sm:$0xff] %vm556, %v2513
      %2588 = vst.msk [vmem:[%s2536 + $0xd9] sm:$0xff] %vm556, %v2514
      %2589 = vst.msk [vmem:[%s2536 + $0xe1] sm:$0xff] %vm556, %v2515
      %2590 = vst.msk [vmem:[%s2536 + $0xf1] sm:$0xff] %vm556, %v2516
      %2591 = vst.msk [vmem:[%s2536 + $0xf9] sm:$0xff] %vm556, %v2517
      %2592 = vst.msk [vmem:[%s2536 + $0x109] sm:$0xff] %vm556, %v2518
      %2593 = vst.msk [vmem:[%s2536 + $0x111] sm:$0xff] %vm556, %v2519
      %2594 = vst.msk [vmem:[%s2536 + $0x121] sm:$0xff] %vm556, %v2520
      %2595 = vst.msk [vmem:[%s2536 + $0x129] sm:$0xff] %vm556, %v2521
      %2596 = vst.msk [vmem:[%s2536 + $0x139] sm:$0xff] %vm556, %v2522
      %2597 = vst.msk [vmem:[%s2536 + $0x141] sm:$0xff] %vm556, %v2523
      %2598 = vst.msk [vmem:[%s2536 + $0x151] sm:$0xff] %vm556, %v2524
      %2599 = vst.msk [vmem:[%s2536 + $0x159] sm:$0xff] %vm556, %v2525
      %2600 = vst.msk [vmem:[%s2536 + $0x169] sm:$0xff] %vm556, %v2526
      %2601 = vst.msk [vmem:[%s2536 + $0x171] sm:$0xff] %vm556, %v2527
      %v2602 = vld [vmem:[#allocation2] sm:$0xff]
      %v2603 = vld [vmem:[#allocation2 + $0x8] sm:$0xff]
      %v2604 = vld [vmem:[#allocation2 + $0x10] sm:$0x3]
      %v2605 = vld [vmem:[#allocation2 + $0x18] sm:$0xff]
      %v2606 = vld [vmem:[#allocation2 + $0x20] sm:$0xff]
      %v2607 = vld [vmem:[#allocation2 + $0x28] sm:$0x3]
      %v2608 = vld [vmem:[#allocation2 + $0x30] sm:$0xff]
      %v2609 = vld [vmem:[#allocation2 + $0x38] sm:$0xff]
      %v2610 = vld [vmem:[#allocation2 + $0x40] sm:$0x3]
      %v2611 = vld [vmem:[#allocation2 + $0x48] sm:$0xff]
      %v2612 = vld [vmem:[#allocation2 + $0x50] sm:$0xff]
      %v2613 = vld [vmem:[#allocation2 + $0x58] sm:$0x3]
      %v2614 = vld [vmem:[#allocation2 + $0x60] sm:$0xff]
      %v2615 = vld [vmem:[#allocation2 + $0x68] sm:$0xff]
      %v2616 = vld [vmem:[#allocation2 + $0x70] sm:$0x3]
      %v2617 = vld [vmem:[#allocation2 + $0x78] sm:$0xff]
      %v2618 = vld [vmem:[#allocation2 + $0x80] sm:$0xff]
      %v2619 = vld [vmem:[#allocation2 + $0x88] sm:$0x3]
      %v2620 = vld [vmem:[#allocation2 + $0x90] sm:$0xff]
      %v2621 = vld [vmem:[#allocation2 + $0x98] sm:$0xff]
      %v2622 = vld [vmem:[#allocation2 + $0xa0] sm:$0x3]
      %v2623 = vld [vmem:[#allocation2 + $0xa8] sm:$0xff]
      %v2624 = vld [vmem:[#allocation2 + $0xb0] sm:$0xff]
      %v2625 = vld [vmem:[#allocation2 + $0xb8] sm:$0x3]
      %v2626 = vld [vmem:[#allocation2 + $0xc0] sm:$0xff]
      %v2627 = vld [vmem:[#allocation2 + $0xc8] sm:$0xff]
      %v2628 = vld [vmem:[#allocation2 + $0xd0] sm:$0x3]
      %v2629 = vld [vmem:[#allocation2 + $0xd8] sm:$0xff]
      %v2630 = vld [vmem:[#allocation2 + $0xe0] sm:$0xff]
      %v2631 = vld [vmem:[#allocation2 + $0xe8] sm:$0x3]
      %v2632 = vld [vmem:[#allocation2 + $0xf0] sm:$0xff]
      %v2633 = vld [vmem:[#allocation2 + $0xf8] sm:$0xff]
      %v2634 = vld [vmem:[#allocation2 + $0x100] sm:$0x3]
      %v2635 = vld [vmem:[#allocation2 + $0x108] sm:$0xff]
      %v2636 = vld [vmem:[#allocation2 + $0x110] sm:$0xff]
      %v2637 = vld [vmem:[#allocation2 + $0x118] sm:$0x3]
      %v2638 = vld [vmem:[#allocation2 + $0x120] sm:$0xff]
      %v2639 = vld [vmem:[#allocation2 + $0x128] sm:$0xff]
      %v2640 = vld [vmem:[#allocation2 + $0x130] sm:$0x3]
      %v2641 = vld [vmem:[#allocation2 + $0x138] sm:$0xff]
      %v2642 = vld [vmem:[#allocation2 + $0x140] sm:$0xff]
      %v2643 = vld [vmem:[#allocation2 + $0x148] sm:$0x3]
      %v2644 = vld [vmem:[#allocation2 + $0x150] sm:$0xff]
      %v2645 = vld [vmem:[#allocation2 + $0x158] sm:$0xff]
      %v2646 = vld [vmem:[#allocation2 + $0x160] sm:$0x3]
      %v2647 = vld [vmem:[#allocation2 + $0x168] sm:$0xff]
      %v2648 = vld [vmem:[#allocation2 + $0x170] sm:$0xff]
      %v2649 = vld [vmem:[#allocation2 + $0x178] sm:$0x3]
      %v2650 = vld [vmem:[%s9] sm:$0x1]
      %v2651 = vlaneseq
      %v2652 = vshrl.u32 %v2651, 7
      %v2653 = vsub.s32 0, %v2652
      %v2654 = vrot.slane %v2650, %v2653
      %v2655 = vmul.f32 %v2602, %v2654
      %v2656 = vmul.f32 %v2603, %v2654
      %v2657 = vmul.f32 %v2605, %v2654
      %v2658 = vmul.f32 %v2606, %v2654
      %v2659 = vmul.f32 %v2608, %v2654
      %v2660 = vmul.f32 %v2609, %v2654
      %v2661 = vmul.f32 %v2611, %v2654
      %v2662 = vmul.f32 %v2612, %v2654
      %v2663 = vmul.f32 %v2614, %v2654
      %v2664 = vmul.f32 %v2615, %v2654
      %v2665 = vmul.f32 %v2617, %v2654
      %v2666 = vmul.f32 %v2618, %v2654
      %v2667 = vmul.f32 %v2620, %v2654
      %v2668 = vmul.f32 %v2621, %v2654
      %v2669 = vmul.f32 %v2623, %v2654
      %v2670 = vmul.f32 %v2624, %v2654
      %v2671 = vmul.f32 %v2626, %v2654
      %v2672 = vmul.f32 %v2627, %v2654
      %v2673 = vmul.f32 %v2629, %v2654
      %v2674 = vmul.f32 %v2630, %v2654
      %v2675 = vmul.f32 %v2632, %v2654
      %v2676 = vmul.f32 %v2633, %v2654
      %v2677 = vmul.f32 %v2635, %v2654
      %v2678 = vmul.f32 %v2636, %v2654
      %v2679 = vmul.f32 %v2638, %v2654
      %v2680 = vmul.f32 %v2639, %v2654
      %v2681 = vmul.f32 %v2641, %v2654
      %v2682 = vmul.f32 %v2642, %v2654
      %v2683 = vmul.f32 %v2644, %v2654
      %v2684 = vmul.f32 %v2645, %v2654
      %v2685 = vmul.f32 %v2647, %v2654
      %v2686 = vmul.f32 %v2648, %v2654
      %v2687 = vadd.f32 %v2655, 0.0
      %v2688 = vadd.f32 %v2656, 0.0
      %v2689 = vadd.f32 %v2657, 0.0
      %v2690 = vadd.f32 %v2658, 0.0
      %v2691 = vadd.f32 %v2659, 0.0
      %v2692 = vadd.f32 %v2660, 0.0
      %v2693 = vadd.f32 %v2661, 0.0
      %v2694 = vadd.f32 %v2662, 0.0
      %v2695 = vadd.f32 %v2663, 0.0
      %v2696 = vadd.f32 %v2664, 0.0
      %v2697 = vadd.f32 %v2665, 0.0
      %v2698 = vadd.f32 %v2666, 0.0
      %v2699 = vadd.f32 %v2667, 0.0
      %v2700 = vadd.f32 %v2668, 0.0
      %v2701 = vadd.f32 %v2669, 0.0
      %v2702 = vadd.f32 %v2670, 0.0
      %v2703 = vadd.f32 %v2671, 0.0
      %v2704 = vadd.f32 %v2672, 0.0
      %v2705 = vadd.f32 %v2673, 0.0
      %v2706 = vadd.f32 %v2674, 0.0
      %v2707 = vadd.f32 %v2675, 0.0
      %v2708 = vadd.f32 %v2676, 0.0
      %v2709 = vadd.f32 %v2677, 0.0
      %v2710 = vadd.f32 %v2678, 0.0
      %v2711 = vadd.f32 %v2679, 0.0
      %v2712 = vadd.f32 %v2680, 0.0
      %v2713 = vadd.f32 %v2681, 0.0
      %v2714 = vadd.f32 %v2682, 0.0
      %v2715 = vadd.f32 %v2683, 0.0
      %v2716 = vadd.f32 %v2684, 0.0
      %v2717 = vadd.f32 %v2685, 0.0
      %v2718 = vadd.f32 %v2686, 0.0
      %v2719 = vld [vmem:[%s9 + $0x1] sm:$0x1]
      %v2720 = vlaneseq
      %v2721 = vshrl.u32 %v2720, 7
      %v2722 = vsub.s32 0, %v2721
      %v2723 = vrot.slane %v2719, %v2722
      %v2724 = vmul.f32 %v2602, %v2723
      %v2725 = vmul.f32 %v2603, %v2723
      %v2726 = vmul.f32 %v2604, %v2723
      %v2727 = vmul.f32 %v2605, %v2723
      %v2728 = vmul.f32 %v2606, %v2723
      %v2729 = vmul.f32 %v2607, %v2723
      %v2730 = vmul.f32 %v2608, %v2723
      %v2731 = vmul.f32 %v2609, %v2723
      %v2732 = vmul.f32 %v2610, %v2723
      %v2733 = vmul.f32 %v2611, %v2723
      %v2734 = vmul.f32 %v2612, %v2723
      %v2735 = vmul.f32 %v2613, %v2723
      %v2736 = vmul.f32 %v2614, %v2723
      %v2737 = vmul.f32 %v2615, %v2723
      %v2738 = vmul.f32 %v2616, %v2723
      %v2739 = vmul.f32 %v2617, %v2723
      %v2740 = vmul.f32 %v2618, %v2723
      %v2741 = vmul.f32 %v2619, %v2723
      %v2742 = vmul.f32 %v2620, %v2723
      %v2743 = vmul.f32 %v2621, %v2723
      %v2744 = vmul.f32 %v2622, %v2723
      %v2745 = vmul.f32 %v2623, %v2723
      %v2746 = vmul.f32 %v2624, %v2723
      %v2747 = vmul.f32 %v2625, %v2723
      %v2748 = vmul.f32 %v2626, %v2723
      %v2749 = vmul.f32 %v2627, %v2723
      %v2750 = vmul.f32 %v2628, %v2723
      %v2751 = vmul.f32 %v2629, %v2723
      %v2752 = vmul.f32 %v2630, %v2723
      %v2753 = vmul.f32 %v2631, %v2723
      %v2754 = vmul.f32 %v2632, %v2723
      %v2755 = vmul.f32 %v2633, %v2723
      %v2756 = vmul.f32 %v2634, %v2723
      %v2757 = vmul.f32 %v2635, %v2723
      %v2758 = vmul.f32 %v2636, %v2723
      %v2759 = vmul.f32 %v2637, %v2723
      %v2760 = vmul.f32 %v2638, %v2723
      %v2761 = vmul.f32 %v2639, %v2723
      %v2762 = vmul.f32 %v2640, %v2723
      %v2763 = vmul.f32 %v2641, %v2723
      %v2764 = vmul.f32 %v2642, %v2723
      %v2765 = vmul.f32 %v2643, %v2723
      %v2766 = vmul.f32 %v2644, %v2723
      %v2767 = vmul.f32 %v2645, %v2723
      %v2768 = vmul.f32 %v2646, %v2723
      %v2769 = vmul.f32 %v2647, %v2723
      %v2770 = vmul.f32 %v2648, %v2723
      %v2771 = vmul.f32 %v2649, %v2723
      %vm2820 = vcmask 1046528
      %v2821 = vrot.slane %v2724, 1
      %v2822 = vrot.slane %v2725, 1
      %v2823 = vsel %vm2820, %v2821, %v2822
      %v2824 = vrot.slane %v2726, 1
      %v2825 = vsel %vm2820, %v2822, %v2824
      %v2826 = vrot.slane %v2727, 1
      %v2827 = vrot.slane %v2728, 1
      %v2828 = vsel %vm2820, %v2826, %v2827
      %v2829 = vrot.slane %v2729, 1
      %v2830 = vsel %vm2820, %v2827, %v2829
      %v2831 = vrot.slane %v2730, 1
      %v2832 = vrot.slane %v2731, 1
      %v2833 = vsel %vm2820, %v2831, %v2832
      %v2834 = vrot.slane %v2732, 1
      %v2835 = vsel %vm2820, %v2832, %v2834
      %v2836 = vrot.slane %v2733, 1
      %v2837 = vrot.slane %v2734, 1
      %v2838 = vsel %vm2820, %v2836, %v2837
      %v2839 = vrot.slane %v2735, 1
      %v2840 = vsel %vm2820, %v2837, %v2839
      %v2841 = vrot.slane %v2736, 1
      %v2842 = vrot.slane %v2737, 1
      %v2843 = vsel %vm2820, %v2841, %v2842
      %v2844 = vrot.slane %v2738, 1
      %v2845 = vsel %vm2820, %v2842, %v2844
      %v2846 = vrot.slane %v2739, 1
      %v2847 = vrot.slane %v2740, 1
      %v2848 = vsel %vm2820, %v2846, %v2847
      %v2849 = vrot.slane %v2741, 1
      %v2850 = vsel %vm2820, %v2847, %v2849
      %v2851 = vrot.slane %v2742, 1
      %v2852 = vrot.slane %v2743, 1
      %v2853 = vsel %vm2820, %v2851, %v2852
      %v2854 = vrot.slane %v2744, 1
      %v2855 = vsel %vm2820, %v2852, %v2854
      %v2856 = vrot.slane %v2745, 1
      %v2857 = vrot.slane %v2746, 1
      %v2858 = vsel %vm2820, %v2856, %v2857
      %v2859 = vrot.slane %v2747, 1
      %v2860 = vsel %vm2820, %v2857, %v2859
      %v2861 = vrot.slane %v2748, 1
      %v2862 = vrot.slane %v2749, 1
      %v2863 = vsel %vm2820, %v2861, %v2862
      %v2864 = vrot.slane %v2750, 1
      %v2865 = vsel %vm2820, %v2862, %v2864
      %v2866 = vrot.slane %v2751, 1
      %v2867 = vrot.slane %v2752, 1
      %v2868 = vsel %vm2820, %v2866, %v2867
      %v2869 = vrot.slane %v2753, 1
      %v2870 = vsel %vm2820, %v2867, %v2869
      %v2871 = vrot.slane %v2754, 1
      %v2872 = vrot.slane %v2755, 1
      %v2873 = vsel %vm2820, %v2871, %v2872
      %v2874 = vrot.slane %v2756, 1
      %v2875 = vsel %vm2820, %v2872, %v2874
      %v2876 = vrot.slane %v2757, 1
      %v2877 = vrot.slane %v2758, 1
      %v2878 = vsel %vm2820, %v2876, %v2877
      %v2879 = vrot.slane %v2759, 1
      %v2880 = vsel %vm2820, %v2877, %v2879
      %v2881 = vrot.slane %v2760, 1
      %v2882 = vrot.slane %v2761, 1
      %v2883 = vsel %vm2820, %v2881, %v2882
      %v2884 = vrot.slane %v2762, 1
      %v2885 = vsel %vm2820, %v2882, %v2884
      %v2886 = vrot.slane %v2763, 1
      %v2887 = vrot.slane %v2764, 1
      %v2888 = vsel %vm2820, %v2886, %v2887
      %v2889 = vrot.slane %v2765, 1
      %v2890 = vsel %vm2820, %v2887, %v2889
      %v2891 = vrot.slane %v2766, 1
      %v2892 = vrot.slane %v2767, 1
      %v2893 = vsel %vm2820, %v2891, %v2892
      %v2894 = vrot.slane %v2768, 1
      %v2895 = vsel %vm2820, %v2892, %v2894
      %v2896 = vrot.slane %v2769, 1
      %v2897 = vrot.slane %v2770, 1
      %v2898 = vsel %vm2820, %v2896, %v2897
      %v2899 = vrot.slane %v2771, 1
      %v2900 = vsel %vm2820, %v2897, %v2899
      %v2933 = vadd.f32 %v2687, %v2823
      %v2934 = vadd.f32 %v2688, %v2825
      %v2935 = vadd.f32 %v2689, %v2828
      %v2936 = vadd.f32 %v2690, %v2830
      %v2937 = vadd.f32 %v2691, %v2833
      %v2938 = vadd.f32 %v2692, %v2835
      %v2939 = vadd.f32 %v2693, %v2838
      %v2940 = vadd.f32 %v2694, %v2840
      %v2941 = vadd.f32 %v2695, %v2843
      %v2942 = vadd.f32 %v2696, %v2845
      %v2943 = vadd.f32 %v2697, %v2848
      %v2944 = vadd.f32 %v2698, %v2850
      %v2945 = vadd.f32 %v2699, %v2853
      %v2946 = vadd.f32 %v2700, %v2855
      %v2947 = vadd.f32 %v2701, %v2858
      %v2948 = vadd.f32 %v2702, %v2860
      %v2949 = vadd.f32 %v2703, %v2863
      %v2950 = vadd.f32 %v2704, %v2865
      %v2951 = vadd.f32 %v2705, %v2868
      %v2952 = vadd.f32 %v2706, %v2870
      %v2953 = vadd.f32 %v2707, %v2873
      %v2954 = vadd.f32 %v2708, %v2875
      %v2955 = vadd.f32 %v2709, %v2878
      %v2956 = vadd.f32 %v2710, %v2880
      %v2957 = vadd.f32 %v2711, %v2883
      %v2958 = vadd.f32 %v2712, %v2885
      %v2959 = vadd.f32 %v2713, %v2888
      %v2960 = vadd.f32 %v2714, %v2890
      %v2961 = vadd.f32 %v2715, %v2893
      %v2962 = vadd.f32 %v2716, %v2895
      %v2963 = vadd.f32 %v2717, %v2898
      %v2964 = vadd.f32 %v2718, %v2900
      %v2965 = vld [vmem:[%s9 + $0x2] sm:$0x1]
      %v2966 = vlaneseq
      %v2967 = vshrl.u32 %v2966, 7
      %v2968 = vsub.s32 0, %v2967
      %v2969 = vrot.slane %v2965, %v2968
      %v2970 = vmul.f32 %v2602, %v2969
      %v2971 = vmul.f32 %v2603, %v2969
      %v2972 = vmul.f32 %v2604, %v2969
      %v2973 = vmul.f32 %v2605, %v2969
      %v2974 = vmul.f32 %v2606, %v2969
      %v2975 = vmul.f32 %v2607, %v2969
      %v2976 = vmul.f32 %v2608, %v2969
      %v2977 = vmul.f32 %v2609, %v2969
      %v2978 = vmul.f32 %v2610, %v2969
      %v2979 = vmul.f32 %v2611, %v2969
      %v2980 = vmul.f32 %v2612, %v2969
      %v2981 = vmul.f32 %v2613, %v2969
      %v2982 = vmul.f32 %v2614, %v2969
      %v2983 = vmul.f32 %v2615, %v2969
      %v2984 = vmul.f32 %v2616, %v2969
      %v2985 = vmul.f32 %v2617, %v2969
      %v2986 = vmul.f32 %v2618, %v2969
      %v2987 = vmul.f32 %v2619, %v2969
      %v2988 = vmul.f32 %v2620, %v2969
      %v2989 = vmul.f32 %v2621, %v2969
      %v2990 = vmul.f32 %v2622, %v2969
      %v2991 = vmul.f32 %v2623, %v2969
      %v2992 = vmul.f32 %v2624, %v2969
      %v2993 = vmul.f32 %v2625, %v2969
      %v2994 = vmul.f32 %v2626, %v2969
      %v2995 = vmul.f32 %v2627, %v2969
      %v2996 = vmul.f32 %v2628, %v2969
      %v2997 = vmul.f32 %v2629, %v2969
      %v2998 = vmul.f32 %v2630, %v2969
      %v2999 = vmul.f32 %v2631, %v2969
      %v3000 = vmul.f32 %v2632, %v2969
      %v3001 = vmul.f32 %v2633, %v2969
      %v3002 = vmul.f32 %v2634, %v2969
      %v3003 = vmul.f32 %v2635, %v2969
      %v3004 = vmul.f32 %v2636, %v2969
      %v3005 = vmul.f32 %v2637, %v2969
      %v3006 = vmul.f32 %v2638, %v2969
      %v3007 = vmul.f32 %v2639, %v2969
      %v3008 = vmul.f32 %v2640, %v2969
      %v3009 = vmul.f32 %v2641, %v2969
      %v3010 = vmul.f32 %v2642, %v2969
      %v3011 = vmul.f32 %v2643, %v2969
      %v3012 = vmul.f32 %v2644, %v2969
      %v3013 = vmul.f32 %v2645, %v2969
      %v3014 = vmul.f32 %v2646, %v2969
      %v3015 = vmul.f32 %v2647, %v2969
      %v3016 = vmul.f32 %v2648, %v2969
      %v3017 = vmul.f32 %v2649, %v2969
      %vm3066 = vcmask 1045504
      %v3067 = vrot.slane %v2970, 2
      %v3068 = vrot.slane %v2971, 2
      %v3069 = vsel %vm3066, %v3067, %v3068
      %v3070 = vrot.slane %v2972, 2
      %v3071 = vsel %vm3066, %v3068, %v3070
      %v3072 = vrot.slane %v2973, 2
      %v3073 = vrot.slane %v2974, 2
      %v3074 = vsel %vm3066, %v3072, %v3073
      %v3075 = vrot.slane %v2975, 2
      %v3076 = vsel %vm3066, %v3073, %v3075
      %v3077 = vrot.slane %v2976, 2
      %v3078 = vrot.slane %v2977, 2
      %v3079 = vsel %vm3066, %v3077, %v3078
      %v3080 = vrot.slane %v2978, 2
      %v3081 = vsel %vm3066, %v3078, %v3080
      %v3082 = vrot.slane %v2979, 2
      %v3083 = vrot.slane %v2980, 2
      %v3084 = vsel %vm3066, %v3082, %v3083
      %v3085 = vrot.slane %v2981, 2
      %v3086 = vsel %vm3066, %v3083, %v3085
      %v3087 = vrot.slane %v2982, 2
      %v3088 = vrot.slane %v2983, 2
      %v3089 = vsel %vm3066, %v3087, %v3088
      %v3090 = vrot.slane %v2984, 2
      %v3091 = vsel %vm3066, %v3088, %v3090
      %v3092 = vrot.slane %v2985, 2
      %v3093 = vrot.slane %v2986, 2
      %v3094 = vsel %vm3066, %v3092, %v3093
      %v3095 = vrot.slane %v2987, 2
      %v3096 = vsel %vm3066, %v3093, %v3095
      %v3097 = vrot.slane %v2988, 2
      %v3098 = vrot.slane %v2989, 2
      %v3099 = vsel %vm3066, %v3097, %v3098
      %v3100 = vrot.slane %v2990, 2
      %v3101 = vsel %vm3066, %v3098, %v3100
      %v3102 = vrot.slane %v2991, 2
      %v3103 = vrot.slane %v2992, 2
      %v3104 = vsel %vm3066, %v3102, %v3103
      %v3105 = vrot.slane %v2993, 2
      %v3106 = vsel %vm3066, %v3103, %v3105
      %v3107 = vrot.slane %v2994, 2
      %v3108 = vrot.slane %v2995, 2
      %v3109 = vsel %vm3066, %v3107, %v3108
      %v3110 = vrot.slane %v2996, 2
      %v3111 = vsel %vm3066, %v3108, %v3110
      %v3112 = vrot.slane %v2997, 2
      %v3113 = vrot.slane %v2998, 2
      %v3114 = vsel %vm3066, %v3112, %v3113
      %v3115 = vrot.slane %v2999, 2
      %v3116 = vsel %vm3066, %v3113, %v3115
      %v3117 = vrot.slane %v3000, 2
      %v3118 = vrot.slane %v3001, 2
      %v3119 = vsel %vm3066, %v3117, %v3118
      %v3120 = vrot.slane %v3002, 2
      %v3121 = vsel %vm3066, %v3118, %v3120
      %v3122 = vrot.slane %v3003, 2
      %v3123 = vrot.slane %v3004, 2
      %v3124 = vsel %vm3066, %v3122, %v3123
      %v3125 = vrot.slane %v3005, 2
      %v3126 = vsel %vm3066, %v3123, %v3125
      %v3127 = vrot.slane %v3006, 2
      %v3128 = vrot.slane %v3007, 2
      %v3129 = vsel %vm3066, %v3127, %v3128
      %v3130 = vrot.slane %v3008, 2
      %v3131 = vsel %vm3066, %v3128, %v3130
      %v3132 = vrot.slane %v3009, 2
      %v3133 = vrot.slane %v3010, 2
      %v3134 = vsel %vm3066, %v3132, %v3133
      %v3135 = vrot.slane %v3011, 2
      %v3136 = vsel %vm3066, %v3133, %v3135
      %v3137 = vrot.slane %v3012, 2
      %v3138 = vrot.slane %v3013, 2
      %v3139 = vsel %vm3066, %v3137, %v3138
      %v3140 = vrot.slane %v3014, 2
      %v3141 = vsel %vm3066, %v3138, %v3140
      %v3142 = vrot.slane %v3015, 2
      %v3143 = vrot.slane %v3016, 2
      %v3144 = vsel %vm3066, %v3142, %v3143
      %v3145 = vrot.slane %v3017, 2
      %v3146 = vsel %vm3066, %v3143, %v3145
      %v3179 = vadd.f32 %v2933, %v3069
      %v3180 = vadd.f32 %v2934, %v3071
      %v3181 = vadd.f32 %v2935, %v3074
      %v3182 = vadd.f32 %v2936, %v3076
      %v3183 = vadd.f32 %v2937, %v3079
      %v3184 = vadd.f32 %v2938, %v3081
      %v3185 = vadd.f32 %v2939, %v3084
      %v3186 = vadd.f32 %v2940, %v3086
      %v3187 = vadd.f32 %v2941, %v3089
      %v3188 = vadd.f32 %v2942, %v3091
      %v3189 = vadd.f32 %v2943, %v3094
      %v3190 = vadd.f32 %v2944, %v3096
      %v3191 = vadd.f32 %v2945, %v3099
      %v3192 = vadd.f32 %v2946, %v3101
      %v3193 = vadd.f32 %v2947, %v3104
      %v3194 = vadd.f32 %v2948, %v3106
      %v3195 = vadd.f32 %v2949, %v3109
      %v3196 = vadd.f32 %v2950, %v3111
      %v3197 = vadd.f32 %v2951, %v3114
      %v3198 = vadd.f32 %v2952, %v3116
      %v3199 = vadd.f32 %v2953, %v3119
      %v3200 = vadd.f32 %v2954, %v3121
      %v3201 = vadd.f32 %v2955, %v3124
      %v3202 = vadd.f32 %v2956, %v3126
      %v3203 = vadd.f32 %v2957, %v3129
      %v3204 = vadd.f32 %v2958, %v3131
      %v3205 = vadd.f32 %v2959, %v3134
      %v3206 = vadd.f32 %v2960, %v3136
      %v3207 = vadd.f32 %v2961, %v3139
      %v3208 = vadd.f32 %v2962, %v3141
      %v3209 = vadd.f32 %v2963, %v3144
      %v3210 = vadd.f32 %v2964, %v3146
      %v3211 = vld [vmem:[%s2536] sm:$0xff]
      %v3212 = vld [vmem:[%s2536 + $0x8] sm:$0xff]
      %v3213 = vld [vmem:[%s2536 + $0x10] sm:$0x3]
      %v3214 = vld [vmem:[%s2536 + $0x18] sm:$0xff]
      %v3215 = vld [vmem:[%s2536 + $0x20] sm:$0xff]
      %v3216 = vld [vmem:[%s2536 + $0x28] sm:$0x3]
      %v3217 = vld [vmem:[%s2536 + $0x30] sm:$0xff]
      %v3218 = vld [vmem:[%s2536 + $0x38] sm:$0xff]
      %v3219 = vld [vmem:[%s2536 + $0x40] sm:$0x3]
      %v3220 = vld [vmem:[%s2536 + $0x48] sm:$0xff]
      %v3221 = vld [vmem:[%s2536 + $0x50] sm:$0xff]
      %v3222 = vld [vmem:[%s2536 + $0x58] sm:$0x3]
      %v3223 = vld [vmem:[%s2536 + $0x60] sm:$0xff]
      %v3224 = vld [vmem:[%s2536 + $0x68] sm:$0xff]
      %v3225 = vld [vmem:[%s2536 + $0x70] sm:$0x3]
      %v3226 = vld [vmem:[%s2536 + $0x78] sm:$0xff]
      %v3227 = vld [vmem:[%s2536 + $0x80] sm:$0xff]
      %v3228 = vld [vmem:[%s2536 + $0x88] sm:$0x3]
      %v3229 = vld [vmem:[%s2536 + $0x90] sm:$0xff]
      %v3230 = vld [vmem:[%s2536 + $0x98] sm:$0xff]
      %v3231 = vld [vmem:[%s2536 + $0xa0] sm:$0x3]
      %v3232 = vld [vmem:[%s2536 + $0xa8] sm:$0xff]
      %v3233 = vld [vmem:[%s2536 + $0xb0] sm:$0xff]
      %v3234 = vld [vmem:[%s2536 + $0xb8] sm:$0x3]
      %v3235 = vld [vmem:[%s2536 + $0xc0] sm:$0xff]
      %v3236 = vld [vmem:[%s2536 + $0xc8] sm:$0xff]
      %v3237 = vld [vmem:[%s2536 + $0xd0] sm:$0x3]
      %v3238 = vld [vmem:[%s2536 + $0xd8] sm:$0xff]
      %v3239 = vld [vmem:[%s2536 + $0xe0] sm:$0xff]
      %v3240 = vld [vmem:[%s2536 + $0xe8] sm:$0x3]
      %v3241 = vld [vmem:[%s2536 + $0xf0] sm:$0xff]
      %v3242 = vld [vmem:[%s2536 + $0xf8] sm:$0xff]
      %v3243 = vld [vmem:[%s2536 + $0x100] sm:$0x3]
      %v3244 = vld [vmem:[%s2536 + $0x108] sm:$0xff]
      %v3245 = vld [vmem:[%s2536 + $0x110] sm:$0xff]
      %v3246 = vld [vmem:[%s2536 + $0x118] sm:$0x3]
      %v3247 = vld [vmem:[%s2536 + $0x120] sm:$0xff]
      %v3248 = vld [vmem:[%s2536 + $0x128] sm:$0xff]
      %v3249 = vld [vmem:[%s2536 + $0x130] sm:$0x3]
      %v3250 = vld [vmem:[%s2536 + $0x138] sm:$0xff]
      %v3251 = vld [vmem:[%s2536 + $0x140] sm:$0xff]
      %v3252 = vld [vmem:[%s2536 + $0x148] sm:$0x3]
      %v3253 = vld [vmem:[%s2536 + $0x150] sm:$0xff]
      %v3254 = vld [vmem:[%s2536 + $0x158] sm:$0xff]
      %v3255 = vld [vmem:[%s2536 + $0x160] sm:$0x3]
      %v3256 = vld [vmem:[%s2536 + $0x168] sm:$0xff]
      %v3257 = vld [vmem:[%s2536 + $0x170] sm:$0xff]
      %v3258 = vld [vmem:[%s2536 + $0x178] sm:$0x3]
      %v3259 = vld [vmem:[%s9 + $0x3] sm:$0x1]
      %v3260 = vlaneseq
      %v3261 = vshrl.u32 %v3260, 7
      %v3262 = vsub.s32 0, %v3261
      %v3263 = vrot.slane %v3259, %v3262
      %v3264 = vmul.f32 %v3211, %v3263
      %v3265 = vmul.f32 %v3212, %v3263
      %v3266 = vmul.f32 %v3214, %v3263
      %v3267 = vmul.f32 %v3215, %v3263
      %v3268 = vmul.f32 %v3217, %v3263
      %v3269 = vmul.f32 %v3218, %v3263
      %v3270 = vmul.f32 %v3220, %v3263
      %v3271 = vmul.f32 %v3221, %v3263
      %v3272 = vmul.f32 %v3223, %v3263
      %v3273 = vmul.f32 %v3224, %v3263
      %v3274 = vmul.f32 %v3226, %v3263
      %v3275 = vmul.f32 %v3227, %v3263
      %v3276 = vmul.f32 %v3229, %v3263
      %v3277 = vmul.f32 %v3230, %v3263
      %v3278 = vmul.f32 %v3232, %v3263
      %v3279 = vmul.f32 %v3233, %v3263
      %v3280 = vmul.f32 %v3235, %v3263
      %v3281 = vmul.f32 %v3236, %v3263
      %v3282 = vmul.f32 %v3238, %v3263
      %v3283 = vmul.f32 %v3239, %v3263
      %v3284 = vmul.f32 %v3241, %v3263
      %v3285 = vmul.f32 %v3242, %v3263
      %v3286 = vmul.f32 %v3244, %v3263
      %v3287 = vmul.f32 %v3245, %v3263
      %v3288 = vmul.f32 %v3247, %v3263
      %v3289 = vmul.f32 %v3248, %v3263
      %v3290 = vmul.f32 %v3250, %v3263
      %v3291 = vmul.f32 %v3251, %v3263
      %v3292 = vmul.f32 %v3253, %v3263
      %v3293 = vmul.f32 %v3254, %v3263
      %v3294 = vmul.f32 %v3256, %v3263
      %v3295 = vmul.f32 %v3257, %v3263
      %v3296 = vadd.f32 %v3179, %v3264
      %v3297 = vadd.f32 %v3180, %v3265
      %v3298 = vadd.f32 %v3181, %v3266
      %v3299 = vadd.f32 %v3182, %v3267
      %v3300 = vadd.f32 %v3183, %v3268
      %v3301 = vadd.f32 %v3184, %v3269
      %v3302 = vadd.f32 %v3185, %v3270
      %v3303 = vadd.f32 %v3186, %v3271
      %v3304 = vadd.f32 %v3187, %v3272
      %v3305 = vadd.f32 %v3188, %v3273
      %v3306 = vadd.f32 %v3189, %v3274
      %v3307 = vadd.f32 %v3190, %v3275
      %v3308 = vadd.f32 %v3191, %v3276
      %v3309 = vadd.f32 %v3192, %v3277
      %v3310 = vadd.f32 %v3193, %v3278
      %v3311 = vadd.f32 %v3194, %v3279
      %v3312 = vadd.f32 %v3195, %v3280
      %v3313 = vadd.f32 %v3196, %v3281
      %v3314 = vadd.f32 %v3197, %v3282
      %v3315 = vadd.f32 %v3198, %v3283
      %v3316 = vadd.f32 %v3199, %v3284
      %v3317 = vadd.f32 %v3200, %v3285
      %v3318 = vadd.f32 %v3201, %v3286
      %v3319 = vadd.f32 %v3202, %v3287
      %v3320 = vadd.f32 %v3203, %v3288
      %v3321 = vadd.f32 %v3204, %v3289
      %v3322 = vadd.f32 %v3205, %v3290
      %v3323 = vadd.f32 %v3206, %v3291
      %v3324 = vadd.f32 %v3207, %v3292
      %v3325 = vadd.f32 %v3208, %v3293
      %v3326 = vadd.f32 %v3209, %v3294
      %v3327 = vadd.f32 %v3210, %v3295
      %v3328 = vld [vmem:[%s9 + $0x4] sm:$0x1]
      %v3329 = vlaneseq
      %v3330 = vshrl.u32 %v3329, 7
      %v3331 = vsub.s32 0, %v3330
      %v3332 = vrot.slane %v3328, %v3331
      %v3333 = vmul.f32 %v3211, %v3332
      %v3334 = vmul.f32 %v3212, %v3332
      %v3335 = vmul.f32 %v3213, %v3332
      %v3336 = vmul.f32 %v3214, %v3332
      %v3337 = vmul.f32 %v3215, %v3332
      %v3338 = vmul.f32 %v3216, %v3332
      %v3339 = vmul.f32 %v3217, %v3332
      %v3340 = vmul.f32 %v3218, %v3332
      %v3341 = vmul.f32 %v3219, %v3332
      %v3342 = vmul.f32 %v3220, %v3332
      %v3343 = vmul.f32 %v3221, %v3332
      %v3344 = vmul.f32 %v3222, %v3332
      %v3345 = vmul.f32 %v3223, %v3332
      %v3346 = vmul.f32 %v3224, %v3332
      %v3347 = vmul.f32 %v3225, %v3332
      %v3348 = vmul.f32 %v3226, %v3332
      %v3349 = vmul.f32 %v3227, %v3332
      %v3350 = vmul.f32 %v3228, %v3332
      %v3351 = vmul.f32 %v3229, %v3332
      %v3352 = vmul.f32 %v3230, %v3332
      %v3353 = vmul.f32 %v3231, %v3332
      %v3354 = vmul.f32 %v3232, %v3332
      %v3355 = vmul.f32 %v3233, %v3332
      %v3356 = vmul.f32 %v3234, %v3332
      %v3357 = vmul.f32 %v3235, %v3332
      %v3358 = vmul.f32 %v3236, %v3332
      %v3359 = vmul.f32 %v3237, %v3332
      %v3360 = vmul.f32 %v3238, %v3332
      %v3361 = vmul.f32 %v3239, %v3332
      %v3362 = vmul.f32 %v3240, %v3332
      %v3363 = vmul.f32 %v3241, %v3332
      %v3364 = vmul.f32 %v3242, %v3332
      %v3365 = vmul.f32 %v3243, %v3332
      %v3366 = vmul.f32 %v3244, %v3332
      %v3367 = vmul.f32 %v3245, %v3332
      %v3368 = vmul.f32 %v3246, %v3332
      %v3369 = vmul.f32 %v3247, %v3332
      %v3370 = vmul.f32 %v3248, %v3332
      %v3371 = vmul.f32 %v3249, %v3332
      %v3372 = vmul.f32 %v3250, %v3332
      %v3373 = vmul.f32 %v3251, %v3332
      %v3374 = vmul.f32 %v3252, %v3332
      %v3375 = vmul.f32 %v3253, %v3332
      %v3376 = vmul.f32 %v3254, %v3332
      %v3377 = vmul.f32 %v3255, %v3332
      %v3378 = vmul.f32 %v3256, %v3332
      %v3379 = vmul.f32 %v3257, %v3332
      %v3380 = vmul.f32 %v3258, %v3332
      %v3429 = vrot.slane %v3333, 1
      %v3430 = vrot.slane %v3334, 1
      %v3431 = vsel %vm2820, %v3429, %v3430
      %v3432 = vrot.slane %v3335, 1
      %v3433 = vsel %vm2820, %v3430, %v3432
      %v3434 = vrot.slane %v3336, 1
      %v3435 = vrot.slane %v3337, 1
      %v3436 = vsel %vm2820, %v3434, %v3435
      %v3437 = vrot.slane %v3338, 1
      %v3438 = vsel %vm2820, %v3435, %v3437
      %v3439 = vrot.slane %v3339, 1
      %v3440 = vrot.slane %v3340, 1
      %v3441 = vsel %vm2820, %v3439, %v3440
      %v3442 = vrot.slane %v3341, 1
      %v3443 = vsel %vm2820, %v3440, %v3442
      %v3444 = vrot.slane %v3342, 1
      %v3445 = vrot.slane %v3343, 1
      %v3446 = vsel %vm2820, %v3444, %v3445
      %v3447 = vrot.slane %v3344, 1
      %v3448 = vsel %vm2820, %v3445, %v3447
      %v3449 = vrot.slane %v3345, 1
      %v3450 = vrot.slane %v3346, 1
      %v3451 = vsel %vm2820, %v3449, %v3450
      %v3452 = vrot.slane %v3347, 1
      %v3453 = vsel %vm2820, %v3450, %v3452
      %v3454 = vrot.slane %v3348, 1
      %v3455 = vrot.slane %v3349, 1
      %v3456 = vsel %vm2820, %v3454, %v3455
      %v3457 = vrot.slane %v3350, 1
      %v3458 = vsel %vm2820, %v3455, %v3457
      %v3459 = vrot.slane %v3351, 1
      %v3460 = vrot.slane %v3352, 1
      %v3461 = vsel %vm2820, %v3459, %v3460
      %v3462 = vrot.slane %v3353, 1
      %v3463 = vsel %vm2820, %v3460, %v3462
      %v3464 = vrot.slane %v3354, 1
      %v3465 = vrot.slane %v3355, 1
      %v3466 = vsel %vm2820, %v3464, %v3465
      %v3467 = vrot.slane %v3356, 1
      %v3468 = vsel %vm2820, %v3465, %v3467
      %v3469 = vrot.slane %v3357, 1
      %v3470 = vrot.slane %v3358, 1
      %v3471 = vsel %vm2820, %v3469, %v3470
      %v3472 = vrot.slane %v3359, 1
      %v3473 = vsel %vm2820, %v3470, %v3472
      %v3474 = vrot.slane %v3360, 1
      %v3475 = vrot.slane %v3361, 1
      %v3476 = vsel %vm2820, %v3474, %v3475
      %v3477 = vrot.slane %v3362, 1
      %v3478 = vsel %vm2820, %v3475, %v3477
      %v3479 = vrot.slane %v3363, 1
      %v3480 = vrot.slane %v3364, 1
      %v3481 = vsel %vm2820, %v3479, %v3480
      %v3482 = vrot.slane %v3365, 1
      %v3483 = vsel %vm2820, %v3480, %v3482
      %v3484 = vrot.slane %v3366, 1
      %v3485 = vrot.slane %v3367, 1
      %v3486 = vsel %vm2820, %v3484, %v3485
      %v3487 = vrot.slane %v3368, 1
      %v3488 = vsel %vm2820, %v3485, %v3487
      %v3489 = vrot.slane %v3369, 1
      %v3490 = vrot.slane %v3370, 1
      %v3491 = vsel %vm2820, %v3489, %v3490
      %v3492 = vrot.slane %v3371, 1
      %v3493 = vsel %vm2820, %v3490, %v3492
      %v3494 = vrot.slane %v3372, 1
      %v3495 = vrot.slane %v3373, 1
      %v3496 = vsel %vm2820, %v3494, %v3495
      %v3497 = vrot.slane %v3374, 1
      %v3498 = vsel %vm2820, %v3495, %v3497
      %v3499 = vrot.slane %v3375, 1
      %v3500 = vrot.slane %v3376, 1
      %v3501 = vsel %vm2820, %v3499, %v3500
      %v3502 = vrot.slane %v3377, 1
      %v3503 = vsel %vm2820, %v3500, %v3502
      %v3504 = vrot.slane %v3378, 1
      %v3505 = vrot.slane %v3379, 1
      %v3506 = vsel %vm2820, %v3504, %v3505
      %v3507 = vrot.slane %v3380, 1
      %v3508 = vsel %vm2820, %v3505, %v3507
      %v3541 = vadd.f32 %v3296, %v3431
      %v3542 = vadd.f32 %v3297, %v3433
      %v3543 = vadd.f32 %v3298, %v3436
      %v3544 = vadd.f32 %v3299, %v3438
      %v3545 = vadd.f32 %v3300, %v3441
      %v3546 = vadd.f32 %v3301, %v3443
      %v3547 = vadd.f32 %v3302, %v3446
      %v3548 = vadd.f32 %v3303, %v3448
      %v3549 = vadd.f32 %v3304, %v3451
      %v3550 = vadd.f32 %v3305, %v3453
      %v3551 = vadd.f32 %v3306, %v3456
      %v3552 = vadd.f32 %v3307, %v3458
      %v3553 = vadd.f32 %v3308, %v3461
      %v3554 = vadd.f32 %v3309, %v3463
      %v3555 = vadd.f32 %v3310, %v3466
      %v3556 = vadd.f32 %v3311, %v3468
      %v3557 = vadd.f32 %v3312, %v3471
      %v3558 = vadd.f32 %v3313, %v3473
      %v3559 = vadd.f32 %v3314, %v3476
      %v3560 = vadd.f32 %v3315, %v3478
      %v3561 = vadd.f32 %v3316, %v3481
      %v3562 = vadd.f32 %v3317, %v3483
      %v3563 = vadd.f32 %v3318, %v3486
      %v3564 = vadd.f32 %v3319, %v3488
      %v3565 = vadd.f32 %v3320, %v3491
      %v3566 = vadd.f32 %v3321, %v3493
      %v3567 = vadd.f32 %v3322, %v3496
      %v3568 = vadd.f32 %v3323, %v3498
      %v3569 = vadd.f32 %v3324, %v3501
      %v3570 = vadd.f32 %v3325, %v3503
      %v3571 = vadd.f32 %v3326, %v3506
      %v3572 = vadd.f32 %v3327, %v3508
      %v3573 = vld [vmem:[%s9 + $0x5] sm:$0x1]
      %v3574 = vlaneseq
      %v3575 = vshrl.u32 %v3574, 7
      %v3576 = vsub.s32 0, %v3575
      %v3577 = vrot.slane %v3573, %v3576
      %v3578 = vmul.f32 %v3211, %v3577
      %v3579 = vmul.f32 %v3212, %v3577
      %v3580 = vmul.f32 %v3213, %v3577
      %v3581 = vmul.f32 %v3214, %v3577
      %v3582 = vmul.f32 %v3215, %v3577
      %v3583 = vmul.f32 %v3216, %v3577
      %v3584 = vmul.f32 %v3217, %v3577
      %v3585 = vmul.f32 %v3218, %v3577
      %v3586 = vmul.f32 %v3219, %v3577
      %v3587 = vmul.f32 %v3220, %v3577
      %v3588 = vmul.f32 %v3221, %v3577
      %v3589 = vmul.f32 %v3222, %v3577
      %v3590 = vmul.f32 %v3223, %v3577
      %v3591 = vmul.f32 %v3224, %v3577
      %v3592 = vmul.f32 %v3225, %v3577
      %v3593 = vmul.f32 %v3226, %v3577
      %v3594 = vmul.f32 %v3227, %v3577
      %v3595 = vmul.f32 %v3228, %v3577
      %v3596 = vmul.f32 %v3229, %v3577
      %v3597 = vmul.f32 %v3230, %v3577
      %v3598 = vmul.f32 %v3231, %v3577
      %v3599 = vmul.f32 %v3232, %v3577
      %v3600 = vmul.f32 %v3233, %v3577
      %v3601 = vmul.f32 %v3234, %v3577
      %v3602 = vmul.f32 %v3235, %v3577
      %v3603 = vmul.f32 %v3236, %v3577
      %v3604 = vmul.f32 %v3237, %v3577
      %v3605 = vmul.f32 %v3238, %v3577
      %v3606 = vmul.f32 %v3239, %v3577
      %v3607 = vmul.f32 %v3240, %v3577
      %v3608 = vmul.f32 %v3241, %v3577
      %v3609 = vmul.f32 %v3242, %v3577
      %v3610 = vmul.f32 %v3243, %v3577
      %v3611 = vmul.f32 %v3244, %v3577
      %v3612 = vmul.f32 %v3245, %v3577
      %v3613 = vmul.f32 %v3246, %v3577
      %v3614 = vmul.f32 %v3247, %v3577
      %v3615 = vmul.f32 %v3248, %v3577
      %v3616 = vmul.f32 %v3249, %v3577
      %v3617 = vmul.f32 %v3250, %v3577
      %v3618 = vmul.f32 %v3251, %v3577
      %v3619 = vmul.f32 %v3252, %v3577
      %v3620 = vmul.f32 %v3253, %v3577
      %v3621 = vmul.f32 %v3254, %v3577
      %v3622 = vmul.f32 %v3255, %v3577
      %v3623 = vmul.f32 %v3256, %v3577
      %v3624 = vmul.f32 %v3257, %v3577
      %v3625 = vmul.f32 %v3258, %v3577
      %v3674 = vrot.slane %v3578, 2
      %v3675 = vrot.slane %v3579, 2
      %v3676 = vsel %vm3066, %v3674, %v3675
      %v3677 = vrot.slane %v3580, 2
      %v3678 = vsel %vm3066, %v3675, %v3677
      %v3679 = vrot.slane %v3581, 2
      %v3680 = vrot.slane %v3582, 2
      %v3681 = vsel %vm3066, %v3679, %v3680
      %v3682 = vrot.slane %v3583, 2
      %v3683 = vsel %vm3066, %v3680, %v3682
      %v3684 = vrot.slane %v3584, 2
      %v3685 = vrot.slane %v3585, 2
      %v3686 = vsel %vm3066, %v3684, %v3685
      %v3687 = vrot.slane %v3586, 2
      %v3688 = vsel %vm3066, %v3685, %v3687
      %v3689 = vrot.slane %v3587, 2
      %v3690 = vrot.slane %v3588, 2
      %v3691 = vsel %vm3066, %v3689, %v3690
      %v3692 = vrot.slane %v3589, 2
      %v3693 = vsel %vm3066, %v3690, %v3692
      %v3694 = vrot.slane %v3590, 2
      %v3695 = vrot.slane %v3591, 2
      %v3696 = vsel %vm3066, %v3694, %v3695
      %v3697 = vrot.slane %v3592, 2
      %v3698 = vsel %vm3066, %v3695, %v3697
      %v3699 = vrot.slane %v3593, 2
      %v3700 = vrot.slane %v3594, 2
      %v3701 = vsel %vm3066, %v3699, %v3700
      %v3702 = vrot.slane %v3595, 2
      %v3703 = vsel %vm3066, %v3700, %v3702
      %v3704 = vrot.slane %v3596, 2
      %v3705 = vrot.slane %v3597, 2
      %v3706 = vsel %vm3066, %v3704, %v3705
      %v3707 = vrot.slane %v3598, 2
      %v3708 = vsel %vm3066, %v3705, %v3707
      %v3709 = vrot.slane %v3599, 2
      %v3710 = vrot.slane %v3600, 2
      %v3711 = vsel %vm3066, %v3709, %v3710
      %v3712 = vrot.slane %v3601, 2
      %v3713 = vsel %vm3066, %v3710, %v3712
      %v3714 = vrot.slane %v3602, 2
      %v3715 = vrot.slane %v3603, 2
      %v3716 = vsel %vm3066, %v3714, %v3715
      %v3717 = vrot.slane %v3604, 2
      %v3718 = vsel %vm3066, %v3715, %v3717
      %v3719 = vrot.slane %v3605, 2
      %v3720 = vrot.slane %v3606, 2
      %v3721 = vsel %vm3066, %v3719, %v3720
      %v3722 = vrot.slane %v3607, 2
      %v3723 = vsel %vm3066, %v3720, %v3722
      %v3724 = vrot.slane %v3608, 2
      %v3725 = vrot.slane %v3609, 2
      %v3726 = vsel %vm3066, %v3724, %v3725
      %v3727 = vrot.slane %v3610, 2
      %v3728 = vsel %vm3066, %v3725, %v3727
      %v3729 = vrot.slane %v3611, 2
      %v3730 = vrot.slane %v3612, 2
      %v3731 = vsel %vm3066, %v3729, %v3730
      %v3732 = vrot.slane %v3613, 2
      %v3733 = vsel %vm3066, %v3730, %v3732
      %v3734 = vrot.slane %v3614, 2
      %v3735 = vrot.slane %v3615, 2
      %v3736 = vsel %vm3066, %v3734, %v3735
      %v3737 = vrot.slane %v3616, 2
      %v3738 = vsel %vm3066, %v3735, %v3737
      %v3739 = vrot.slane %v3617, 2
      %v3740 = vrot.slane %v3618, 2
      %v3741 = vsel %vm3066, %v3739, %v3740
      %v3742 = vrot.slane %v3619, 2
      %v3743 = vsel %vm3066, %v3740, %v3742
      %v3744 = vrot.slane %v3620, 2
      %v3745 = vrot.slane %v3621, 2
      %v3746 = vsel %vm3066, %v3744, %v3745
      %v3747 = vrot.slane %v3622, 2
      %v3748 = vsel %vm3066, %v3745, %v3747
      %v3749 = vrot.slane %v3623, 2
      %v3750 = vrot.slane %v3624, 2
      %v3751 = vsel %vm3066, %v3749, %v3750
      %v3752 = vrot.slane %v3625, 2
      %v3753 = vsel %vm3066, %v3750, %v3752
      %v3786 = vadd.f32 %v3541, %v3676
      %v3787 = vadd.f32 %v3542, %v3678
      %v3788 = vadd.f32 %v3543, %v3681
      %v3789 = vadd.f32 %v3544, %v3683
      %v3790 = vadd.f32 %v3545, %v3686
      %v3791 = vadd.f32 %v3546, %v3688
      %v3792 = vadd.f32 %v3547, %v3691
      %v3793 = vadd.f32 %v3548, %v3693
      %v3794 = vadd.f32 %v3549, %v3696
      %v3795 = vadd.f32 %v3550, %v3698
      %v3796 = vadd.f32 %v3551, %v3701
      %v3797 = vadd.f32 %v3552, %v3703
      %v3798 = vadd.f32 %v3553, %v3706
      %v3799 = vadd.f32 %v3554, %v3708
      %v3800 = vadd.f32 %v3555, %v3711
      %v3801 = vadd.f32 %v3556, %v3713
      %v3802 = vadd.f32 %v3557, %v3716
      %v3803 = vadd.f32 %v3558, %v3718
      %v3804 = vadd.f32 %v3559, %v3721
      %v3805 = vadd.f32 %v3560, %v3723
      %v3806 = vadd.f32 %v3561, %v3726
      %v3807 = vadd.f32 %v3562, %v3728
      %v3808 = vadd.f32 %v3563, %v3731
      %v3809 = vadd.f32 %v3564, %v3733
      %v3810 = vadd.f32 %v3565, %v3736
      %v3811 = vadd.f32 %v3566, %v3738
      %v3812 = vadd.f32 %v3567, %v3741
      %v3813 = vadd.f32 %v3568, %v3743
      %v3814 = vadd.f32 %v3569, %v3746
      %v3815 = vadd.f32 %v3570, %v3748
      %v3816 = vadd.f32 %v3571, %v3751
      %v3817 = vadd.f32 %v3572, %v3753
      %s3818 = scalar_lea.vmem [#allocation2], 48
      %v3819 = vld [vmem:[%s3818] sm:$0xff]
      %v3820 = vld [vmem:[%s3818 + $0x8] sm:$0xff]
      %v3821 = vld [vmem:[%s3818 + $0x10] sm:$0x3]
      %v3822 = vld [vmem:[%s3818 + $0x18] sm:$0xff]
      %v3823 = vld [vmem:[%s3818 + $0x20] sm:$0xff]
      %v3824 = vld [vmem:[%s3818 + $0x28] sm:$0x3]
      %v3825 = vld [vmem:[%s3818 + $0x30] sm:$0xff]
      %v3826 = vld [vmem:[%s3818 + $0x38] sm:$0xff]
      %v3827 = vld [vmem:[%s3818 + $0x40] sm:$0x3]
      %v3828 = vld [vmem:[%s3818 + $0x48] sm:$0xff]
      %v3829 = vld [vmem:[%s3818 + $0x50] sm:$0xff]
      %v3830 = vld [vmem:[%s3818 + $0x58] sm:$0x3]
      %v3831 = vld [vmem:[%s3818 + $0x60] sm:$0xff]
      %v3832 = vld [vmem:[%s3818 + $0x68] sm:$0xff]
      %v3833 = vld [vmem:[%s3818 + $0x70] sm:$0x3]
      %v3834 = vld [vmem:[%s3818 + $0x78] sm:$0xff]
      %v3835 = vld [vmem:[%s3818 + $0x80] sm:$0xff]
      %v3836 = vld [vmem:[%s3818 + $0x88] sm:$0x3]
      %v3837 = vld [vmem:[%s3818 + $0x90] sm:$0xff]
      %v3838 = vld [vmem:[%s3818 + $0x98] sm:$0xff]
      %v3839 = vld [vmem:[%s3818 + $0xa0] sm:$0x3]
      %v3840 = vld [vmem:[%s3818 + $0xa8] sm:$0xff]
      %v3841 = vld [vmem:[%s3818 + $0xb0] sm:$0xff]
      %v3842 = vld [vmem:[%s3818 + $0xb8] sm:$0x3]
      %v3843 = vld [vmem:[%s3818 + $0xc0] sm:$0xff]
      %v3844 = vld [vmem:[%s3818 + $0xc8] sm:$0xff]
      %v3845 = vld [vmem:[%s3818 + $0xd0] sm:$0x3]
      %v3846 = vld [vmem:[%s3818 + $0xd8] sm:$0xff]
      %v3847 = vld [vmem:[%s3818 + $0xe0] sm:$0xff]
      %v3848 = vld [vmem:[%s3818 + $0xe8] sm:$0x3]
      %v3849 = vld [vmem:[%s3818 + $0xf0] sm:$0xff]
      %v3850 = vld [vmem:[%s3818 + $0xf8] sm:$0xff]
      %v3851 = vld [vmem:[%s3818 + $0x100] sm:$0x3]
      %v3852 = vld [vmem:[%s3818 + $0x108] sm:$0xff]
      %v3853 = vld [vmem:[%s3818 + $0x110] sm:$0xff]
      %v3854 = vld [vmem:[%s3818 + $0x118] sm:$0x3]
      %v3855 = vld [vmem:[%s3818 + $0x120] sm:$0xff]
      %v3856 = vld [vmem:[%s3818 + $0x128] sm:$0xff]
      %v3857 = vld [vmem:[%s3818 + $0x130] sm:$0x3]
      %v3858 = vld [vmem:[%s3818 + $0x138] sm:$0xff]
      %v3859 = vld [vmem:[%s3818 + $0x140] sm:$0xff]
      %v3860 = vld [vmem:[%s3818 + $0x148] sm:$0x3]
      %v3861 = vld [vmem:[%s3818 + $0x150] sm:$0xff]
      %v3862 = vld [vmem:[%s3818 + $0x158] sm:$0xff]
      %v3863 = vld [vmem:[%s3818 + $0x160] sm:$0x3]
      %v3864 = vld [vmem:[%s3818 + $0x168] sm:$0xff]
      %v3865 = vld [vmem:[%s3818 + $0x170] sm:$0xff]
      %v3866 = vld [vmem:[%s3818 + $0x178] sm:$0x3]
      %v3867 = vld [vmem:[%s9 + $0x6] sm:$0x1]
      %v3868 = vlaneseq
      %v3869 = vshrl.u32 %v3868, 7
      %v3870 = vsub.s32 0, %v3869
      %v3871 = vrot.slane %v3867, %v3870
      %v3872 = vmul.f32 %v3819, %v3871
      %v3873 = vmul.f32 %v3820, %v3871
      %v3874 = vmul.f32 %v3822, %v3871
      %v3875 = vmul.f32 %v3823, %v3871
      %v3876 = vmul.f32 %v3825, %v3871
      %v3877 = vmul.f32 %v3826, %v3871
      %v3878 = vmul.f32 %v3828, %v3871
      %v3879 = vmul.f32 %v3829, %v3871
      %v3880 = vmul.f32 %v3831, %v3871
      %v3881 = vmul.f32 %v3832, %v3871
      %v3882 = vmul.f32 %v3834, %v3871
      %v3883 = vmul.f32 %v3835, %v3871
      %v3884 = vmul.f32 %v3837, %v3871
      %v3885 = vmul.f32 %v3838, %v3871
      %v3886 = vmul.f32 %v3840, %v3871
      %v3887 = vmul.f32 %v3841, %v3871
      %v3888 = vmul.f32 %v3843, %v3871
      %v3889 = vmul.f32 %v3844, %v3871
      %v3890 = vmul.f32 %v3846, %v3871
      %v3891 = vmul.f32 %v3847, %v3871
      %v3892 = vmul.f32 %v3849, %v3871
      %v3893 = vmul.f32 %v3850, %v3871
      %v3894 = vmul.f32 %v3852, %v3871
      %v3895 = vmul.f32 %v3853, %v3871
      %v3896 = vmul.f32 %v3855, %v3871
      %v3897 = vmul.f32 %v3856, %v3871
      %v3898 = vmul.f32 %v3858, %v3871
      %v3899 = vmul.f32 %v3859, %v3871
      %v3900 = vmul.f32 %v3861, %v3871
      %v3901 = vmul.f32 %v3862, %v3871
      %v3902 = vmul.f32 %v3864, %v3871
      %v3903 = vmul.f32 %v3865, %v3871
      %v3904 = vadd.f32 %v3786, %v3872
      %v3905 = vadd.f32 %v3787, %v3873
      %v3906 = vadd.f32 %v3788, %v3874
      %v3907 = vadd.f32 %v3789, %v3875
      %v3908 = vadd.f32 %v3790, %v3876
      %v3909 = vadd.f32 %v3791, %v3877
      %v3910 = vadd.f32 %v3792, %v3878
      %v3911 = vadd.f32 %v3793, %v3879
      %v3912 = vadd.f32 %v3794, %v3880
      %v3913 = vadd.f32 %v3795, %v3881
      %v3914 = vadd.f32 %v3796, %v3882
      %v3915 = vadd.f32 %v3797, %v3883
      %v3916 = vadd.f32 %v3798, %v3884
      %v3917 = vadd.f32 %v3799, %v3885
      %v3918 = vadd.f32 %v3800, %v3886
      %v3919 = vadd.f32 %v3801, %v3887
      %v3920 = vadd.f32 %v3802, %v3888
      %v3921 = vadd.f32 %v3803, %v3889
      %v3922 = vadd.f32 %v3804, %v3890
      %v3923 = vadd.f32 %v3805, %v3891
      %v3924 = vadd.f32 %v3806, %v3892
      %v3925 = vadd.f32 %v3807, %v3893
      %v3926 = vadd.f32 %v3808, %v3894
      %v3927 = vadd.f32 %v3809, %v3895
      %v3928 = vadd.f32 %v3810, %v3896
      %v3929 = vadd.f32 %v3811, %v3897
      %v3930 = vadd.f32 %v3812, %v3898
      %v3931 = vadd.f32 %v3813, %v3899
      %v3932 = vadd.f32 %v3814, %v3900
      %v3933 = vadd.f32 %v3815, %v3901
      %v3934 = vadd.f32 %v3816, %v3902
      %v3935 = vadd.f32 %v3817, %v3903
      %v3936 = vld [vmem:[%s9 + $0x7] sm:$0x1]
      %v3937 = vlaneseq
      %v3938 = vshrl.u32 %v3937, 7
      %v3939 = vsub.s32 0, %v3938
      %v3940 = vrot.slane %v3936, %v3939
      %v3941 = vmul.f32 %v3819, %v3940
      %v3942 = vmul.f32 %v3820, %v3940
      %v3943 = vmul.f32 %v3821, %v3940
      %v3944 = vmul.f32 %v3822, %v3940
      %v3945 = vmul.f32 %v3823, %v3940
      %v3946 = vmul.f32 %v3824, %v3940
      %v3947 = vmul.f32 %v3825, %v3940
      %v3948 = vmul.f32 %v3826, %v3940
      %v3949 = vmul.f32 %v3827, %v3940
      %v3950 = vmul.f32 %v3828, %v3940
      %v3951 = vmul.f32 %v3829, %v3940
      %v3952 = vmul.f32 %v3830, %v3940
      %v3953 = vmul.f32 %v3831, %v3940
      %v3954 = vmul.f32 %v3832, %v3940
      %v3955 = vmul.f32 %v3833, %v3940
      %v3956 = vmul.f32 %v3834, %v3940
      %v3957 = vmul.f32 %v3835, %v3940
      %v3958 = vmul.f32 %v3836, %v3940
      %v3959 = vmul.f32 %v3837, %v3940
      %v3960 = vmul.f32 %v3838, %v3940
      %v3961 = vmul.f32 %v3839, %v3940
      %v3962 = vmul.f32 %v3840, %v3940
      %v3963 = vmul.f32 %v3841, %v3940
      %v3964 = vmul.f32 %v3842, %v3940
      %v3965 = vmul.f32 %v3843, %v3940
      %v3966 = vmul.f32 %v3844, %v3940
      %v3967 = vmul.f32 %v3845, %v3940
      %v3968 = vmul.f32 %v3846, %v3940
      %v3969 = vmul.f32 %v3847, %v3940
      %v3970 = vmul.f32 %v3848, %v3940
      %v3971 = vmul.f32 %v3849, %v3940
      %v3972 = vmul.f32 %v3850, %v3940
      %v3973 = vmul.f32 %v3851, %v3940
      %v3974 = vmul.f32 %v3852, %v3940
      %v3975 = vmul.f32 %v3853, %v3940
      %v3976 = vmul.f32 %v3854, %v3940
      %v3977 = vmul.f32 %v3855, %v3940
      %v3978 = vmul.f32 %v3856, %v3940
      %v3979 = vmul.f32 %v3857, %v3940
      %v3980 = vmul.f32 %v3858, %v3940
      %v3981 = vmul.f32 %v3859, %v3940
      %v3982 = vmul.f32 %v3860, %v3940
      %v3983 = vmul.f32 %v3861, %v3940
      %v3984 = vmul.f32 %v3862, %v3940
      %v3985 = vmul.f32 %v3863, %v3940
      %v3986 = vmul.f32 %v3864, %v3940
      %v3987 = vmul.f32 %v3865, %v3940
      %v3988 = vmul.f32 %v3866, %v3940
      %v4037 = vrot.slane %v3941, 1
      %v4038 = vrot.slane %v3942, 1
      %v4039 = vsel %vm2820, %v4037, %v4038
      %v4040 = vrot.slane %v3943, 1
      %v4041 = vsel %vm2820, %v4038, %v4040
      %v4042 = vrot.slane %v3944, 1
      %v4043 = vrot.slane %v3945, 1
      %v4044 = vsel %vm2820, %v4042, %v4043
      %v4045 = vrot.slane %v3946, 1
      %v4046 = vsel %vm2820, %v4043, %v4045
      %v4047 = vrot.slane %v3947, 1
      %v4048 = vrot.slane %v3948, 1
      %v4049 = vsel %vm2820, %v4047, %v4048
      %v4050 = vrot.slane %v3949, 1
      %v4051 = vsel %vm2820, %v4048, %v4050
      %v4052 = vrot.slane %v3950, 1
      %v4053 = vrot.slane %v3951, 1
      %v4054 = vsel %vm2820, %v4052, %v4053
      %v4055 = vrot.slane %v3952, 1
      %v4056 = vsel %vm2820, %v4053, %v4055
      %v4057 = vrot.slane %v3953, 1
      %v4058 = vrot.slane %v3954, 1
      %v4059 = vsel %vm2820, %v4057, %v4058
      %v4060 = vrot.slane %v3955, 1
      %v4061 = vsel %vm2820, %v4058, %v4060
      %v4062 = vrot.slane %v3956, 1
      %v4063 = vrot.slane %v3957, 1
      %v4064 = vsel %vm2820, %v4062, %v4063
      %v4065 = vrot.slane %v3958, 1
      %v4066 = vsel %vm2820, %v4063, %v4065
      %v4067 = vrot.slane %v3959, 1
      %v4068 = vrot.slane %v3960, 1
      %v4069 = vsel %vm2820, %v4067, %v4068
      %v4070 = vrot.slane %v3961, 1
      %v4071 = vsel %vm2820, %v4068, %v4070
      %v4072 = vrot.slane %v3962, 1
      %v4073 = vrot.slane %v3963, 1
      %v4074 = vsel %vm2820, %v4072, %v4073
      %v4075 = vrot.slane %v3964, 1
      %v4076 = vsel %vm2820, %v4073, %v4075
      %v4077 = vrot.slane %v3965, 1
      %v4078 = vrot.slane %v3966, 1
      %v4079 = vsel %vm2820, %v4077, %v4078
      %v4080 = vrot.slane %v3967, 1
      %v4081 = vsel %vm2820, %v4078, %v4080
      %v4082 = vrot.slane %v3968, 1
      %v4083 = vrot.slane %v3969, 1
      %v4084 = vsel %vm2820, %v4082, %v4083
      %v4085 = vrot.slane %v3970, 1
      %v4086 = vsel %vm2820, %v4083, %v4085
      %v4087 = vrot.slane %v3971, 1
      %v4088 = vrot.slane %v3972, 1
      %v4089 = vsel %vm2820, %v4087, %v4088
      %v4090 = vrot.slane %v3973, 1
      %v4091 = vsel %vm2820, %v4088, %v4090
      %v4092 = vrot.slane %v3974, 1
      %v4093 = vrot.slane %v3975, 1
      %v4094 = vsel %vm2820, %v4092, %v4093
      %v4095 = vrot.slane %v3976, 1
      %v4096 = vsel %vm2820, %v4093, %v4095
      %v4097 = vrot.slane %v3977, 1
      %v4098 = vrot.slane %v3978, 1
      %v4099 = vsel %vm2820, %v4097, %v4098
      %v4100 = vrot.slane %v3979, 1
      %v4101 = vsel %vm2820, %v4098, %v4100
      %v4102 = vrot.slane %v3980, 1
      %v4103 = vrot.slane %v3981, 1
      %v4104 = vsel %vm2820, %v4102, %v4103
      %v4105 = vrot.slane %v3982, 1
      %v4106 = vsel %vm2820, %v4103, %v4105
      %v4107 = vrot.slane %v3983, 1
      %v4108 = vrot.slane %v3984, 1
      %v4109 = vsel %vm2820, %v4107, %v4108
      %v4110 = vrot.slane %v3985, 1
      %v4111 = vsel %vm2820, %v4108, %v4110
      %v4112 = vrot.slane %v3986, 1
      %v4113 = vrot.slane %v3987, 1
      %v4114 = vsel %vm2820, %v4112, %v4113
      %v4115 = vrot.slane %v3988, 1
      %v4116 = vsel %vm2820, %v4113, %v4115
      %v4149 = vadd.f32 %v3904, %v4039
      %v4150 = vadd.f32 %v3905, %v4041
      %v4151 = vadd.f32 %v3906, %v4044
      %v4152 = vadd.f32 %v3907, %v4046
      %v4153 = vadd.f32 %v3908, %v4049
      %v4154 = vadd.f32 %v3909, %v4051
      %v4155 = vadd.f32 %v3910, %v4054
      %v4156 = vadd.f32 %v3911, %v4056
      %v4157 = vadd.f32 %v3912, %v4059
      %v4158 = vadd.f32 %v3913, %v4061
      %v4159 = vadd.f32 %v3914, %v4064
      %v4160 = vadd.f32 %v3915, %v4066
      %v4161 = vadd.f32 %v3916, %v4069
      %v4162 = vadd.f32 %v3917, %v4071
      %v4163 = vadd.f32 %v3918, %v4074
      %v4164 = vadd.f32 %v3919, %v4076
      %v4165 = vadd.f32 %v3920, %v4079
      %v4166 = vadd.f32 %v3921, %v4081
      %v4167 = vadd.f32 %v3922, %v4084
      %v4168 = vadd.f32 %v3923, %v4086
      %v4169 = vadd.f32 %v3924, %v4089
      %v4170 = vadd.f32 %v3925, %v4091
      %v4171 = vadd.f32 %v3926, %v4094
      %v4172 = vadd.f32 %v3927, %v4096
      %v4173 = vadd.f32 %v3928, %v4099
      %v4174 = vadd.f32 %v3929, %v4101
      %v4175 = vadd.f32 %v3930, %v4104
      %v4176 = vadd.f32 %v3931, %v4106
      %v4177 = vadd.f32 %v3932, %v4109
      %v4178 = vadd.f32 %v3933, %v4111
      %v4179 = vadd.f32 %v3934, %v4114
      %v4180 = vadd.f32 %v3935, %v4116
      %v4181 = vld [vmem:[%s9 + $0x8] sm:$0x1]
      %v4182 = vlaneseq
      %v4183 = vshrl.u32 %v4182, 7
      %v4184 = vsub.s32 0, %v4183
      %v4185 = vrot.slane %v4181, %v4184
      %v4186 = vmul.f32 %v3819, %v4185
      %v4187 = vmul.f32 %v3820, %v4185
      %v4188 = vmul.f32 %v3821, %v4185
      %v4189 = vmul.f32 %v3822, %v4185
      %v4190 = vmul.f32 %v3823, %v4185
      %v4191 = vmul.f32 %v3824, %v4185
      %v4192 = vmul.f32 %v3825, %v4185
      %v4193 = vmul.f32 %v3826, %v4185
      %v4194 = vmul.f32 %v3827, %v4185
      %v4195 = vmul.f32 %v3828, %v4185
      %v4196 = vmul.f32 %v3829, %v4185
      %v4197 = vmul.f32 %v3830, %v4185
      %v4198 = vmul.f32 %v3831, %v4185
      %v4199 = vmul.f32 %v3832, %v4185
      %v4200 = vmul.f32 %v3833, %v4185
      %v4201 = vmul.f32 %v3834, %v4185
      %v4202 = vmul.f32 %v3835, %v4185
      %v4203 = vmul.f32 %v3836, %v4185
      %v4204 = vmul.f32 %v3837, %v4185
      %v4205 = vmul.f32 %v3838, %v4185
      %v4206 = vmul.f32 %v3839, %v4185
      %v4207 = vmul.f32 %v3840, %v4185
      %v4208 = vmul.f32 %v3841, %v4185
      %v4209 = vmul.f32 %v3842, %v4185
      %v4210 = vmul.f32 %v3843, %v4185
      %v4211 = vmul.f32 %v3844, %v4185
      %v4212 = vmul.f32 %v3845, %v4185
      %v4213 = vmul.f32 %v3846, %v4185
      %v4214 = vmul.f32 %v3847, %v4185
      %v4215 = vmul.f32 %v3848, %v4185
      %v4216 = vmul.f32 %v3849, %v4185
      %v4217 = vmul.f32 %v3850, %v4185
      %v4218 = vmul.f32 %v3851, %v4185
      %v4219 = vmul.f32 %v3852, %v4185
      %v4220 = vmul.f32 %v3853, %v4185
      %v4221 = vmul.f32 %v3854, %v4185
      %v4222 = vmul.f32 %v3855, %v4185
      %v4223 = vmul.f32 %v3856, %v4185
      %v4224 = vmul.f32 %v3857, %v4185
      %v4225 = vmul.f32 %v3858, %v4185
      %v4226 = vmul.f32 %v3859, %v4185
      %v4227 = vmul.f32 %v3860, %v4185
      %v4228 = vmul.f32 %v3861, %v4185
      %v4229 = vmul.f32 %v3862, %v4185
      %v4230 = vmul.f32 %v3863, %v4185
      %v4231 = vmul.f32 %v3864, %v4185
      %v4232 = vmul.f32 %v3865, %v4185
      %v4233 = vmul.f32 %v3866, %v4185
      %v4282 = vrot.slane %v4186, 2
      %v4283 = vrot.slane %v4187, 2
      %v4284 = vsel %vm3066, %v4282, %v4283
      %v4285 = vrot.slane %v4188, 2
      %v4286 = vsel %vm3066, %v4283, %v4285
      %v4287 = vrot.slane %v4189, 2
      %v4288 = vrot.slane %v4190, 2
      %v4289 = vsel %vm3066, %v4287, %v4288
      %v4290 = vrot.slane %v4191, 2
      %v4291 = vsel %vm3066, %v4288, %v4290
      %v4292 = vrot.slane %v4192, 2
      %v4293 = vrot.slane %v4193, 2
      %v4294 = vsel %vm3066, %v4292, %v4293
      %v4295 = vrot.slane %v4194, 2
      %v4296 = vsel %vm3066, %v4293, %v4295
      %v4297 = vrot.slane %v4195, 2
      %v4298 = vrot.slane %v4196, 2
      %v4299 = vsel %vm3066, %v4297, %v4298
      %v4300 = vrot.slane %v4197, 2
      %v4301 = vsel %vm3066, %v4298, %v4300
      %v4302 = vrot.slane %v4198, 2
      %v4303 = vrot.slane %v4199, 2
      %v4304 = vsel %vm3066, %v4302, %v4303
      %v4305 = vrot.slane %v4200, 2
      %v4306 = vsel %vm3066, %v4303, %v4305
      %v4307 = vrot.slane %v4201, 2
      %v4308 = vrot.slane %v4202, 2
      %v4309 = vsel %vm3066, %v4307, %v4308
      %v4310 = vrot.slane %v4203, 2
      %v4311 = vsel %vm3066, %v4308, %v4310
      %v4312 = vrot.slane %v4204, 2
      %v4313 = vrot.slane %v4205, 2
      %v4314 = vsel %vm3066, %v4312, %v4313
      %v4315 = vrot.slane %v4206, 2
      %v4316 = vsel %vm3066, %v4313, %v4315
      %v4317 = vrot.slane %v4207, 2
      %v4318 = vrot.slane %v4208, 2
      %v4319 = vsel %vm3066, %v4317, %v4318
      %v4320 = vrot.slane %v4209, 2
      %v4321 = vsel %vm3066, %v4318, %v4320
      %v4322 = vrot.slane %v4210, 2
      %v4323 = vrot.slane %v4211, 2
      %v4324 = vsel %vm3066, %v4322, %v4323
      %v4325 = vrot.slane %v4212, 2
      %v4326 = vsel %vm3066, %v4323, %v4325
      %v4327 = vrot.slane %v4213, 2
      %v4328 = vrot.slane %v4214, 2
      %v4329 = vsel %vm3066, %v4327, %v4328
      %v4330 = vrot.slane %v4215, 2
      %v4331 = vsel %vm3066, %v4328, %v4330
      %v4332 = vrot.slane %v4216, 2
      %v4333 = vrot.slane %v4217, 2
      %v4334 = vsel %vm3066, %v4332, %v4333
      %v4335 = vrot.slane %v4218, 2
      %v4336 = vsel %vm3066, %v4333, %v4335
      %v4337 = vrot.slane %v4219, 2
      %v4338 = vrot.slane %v4220, 2
      %v4339 = vsel %vm3066, %v4337, %v4338
      %v4340 = vrot.slane %v4221, 2
      %v4341 = vsel %vm3066, %v4338, %v4340
      %v4342 = vrot.slane %v4222, 2
      %v4343 = vrot.slane %v4223, 2
      %v4344 = vsel %vm3066, %v4342, %v4343
      %v4345 = vrot.slane %v4224, 2
      %v4346 = vsel %vm3066, %v4343, %v4345
      %v4347 = vrot.slane %v4225, 2
      %v4348 = vrot.slane %v4226, 2
      %v4349 = vsel %vm3066, %v4347, %v4348
      %v4350 = vrot.slane %v4227, 2
      %v4351 = vsel %vm3066, %v4348, %v4350
      %v4352 = vrot.slane %v4228, 2
      %v4353 = vrot.slane %v4229, 2
      %v4354 = vsel %vm3066, %v4352, %v4353
      %v4355 = vrot.slane %v4230, 2
      %v4356 = vsel %vm3066, %v4353, %v4355
      %v4357 = vrot.slane %v4231, 2
      %v4358 = vrot.slane %v4232, 2
      %v4359 = vsel %vm3066, %v4357, %v4358
      %v4360 = vrot.slane %v4233, 2
      %v4361 = vsel %vm3066, %v4358, %v4360
      %v4394 = vadd.f32 %v4149, %v4284
      %v4395 = vadd.f32 %v4150, %v4286
      %v4396 = vadd.f32 %v4151, %v4289
      %v4397 = vadd.f32 %v4152, %v4291
      %v4398 = vadd.f32 %v4153, %v4294
      %v4399 = vadd.f32 %v4154, %v4296
      %v4400 = vadd.f32 %v4155, %v4299
      %v4401 = vadd.f32 %v4156, %v4301
      %v4402 = vadd.f32 %v4157, %v4304
      %v4403 = vadd.f32 %v4158, %v4306
      %v4404 = vadd.f32 %v4159, %v4309
      %v4405 = vadd.f32 %v4160, %v4311
      %v4406 = vadd.f32 %v4161, %v4314
      %v4407 = vadd.f32 %v4162, %v4316
      %v4408 = vadd.f32 %v4163, %v4319
      %v4409 = vadd.f32 %v4164, %v4321
      %v4410 = vadd.f32 %v4165, %v4324
      %v4411 = vadd.f32 %v4166, %v4326
      %v4412 = vadd.f32 %v4167, %v4329
      %v4413 = vadd.f32 %v4168, %v4331
      %v4414 = vadd.f32 %v4169, %v4334
      %v4415 = vadd.f32 %v4170, %v4336
      %v4416 = vadd.f32 %v4171, %v4339
      %v4417 = vadd.f32 %v4172, %v4341
      %v4418 = vadd.f32 %v4173, %v4344
      %v4419 = vadd.f32 %v4174, %v4346
      %v4420 = vadd.f32 %v4175, %v4349
      %v4421 = vadd.f32 %v4176, %v4351
      %v4422 = vadd.f32 %v4177, %v4354
      %v4423 = vadd.f32 %v4178, %v4356
      %v4424 = vadd.f32 %v4179, %v4359
      %v4425 = vadd.f32 %v4180, %v4361
      %v4426 = vld [vmem:[%s10] sm:$0x1]
      %v4427 = vld [vmem:[%s11] sm:$0x1]
      %v4428 = vsel %vm556, %v4394, 0.0
      %4429 = vadd.xlane.f32.xlu0 %v4428
      %v4430 = vpop.xlane.xlu0 %4429
      %v4431 = vsel %vm556, %v4395, 0.0
      %4432 = vadd.xlane.f32.xlu0 %v4431
      %v4433 = vpop.xlane.xlu0 %4432
      %v4434 = vsel %vm556, %v4396, 0.0
      %4435 = vadd.xlane.f32.xlu0 %v4434
      %v4436 = vpop.xlane.xlu0 %4435
      %v4437 = vsel %vm556, %v4397, 0.0
      %4438 = vadd.xlane.f32.xlu0 %v4437
      %v4439 = vpop.xlane.xlu0 %4438
      %v4440 = vsel %vm556, %v4398, 0.0
      %4441 = vadd.xlane.f32.xlu0 %v4440
      %v4442 = vpop.xlane.xlu0 %4441
      %v4443 = vsel %vm556, %v4399, 0.0
      %4444 = vadd.xlane.f32.xlu0 %v4443
      %v4445 = vpop.xlane.xlu0 %4444
      %v4446 = vsel %vm556, %v4400, 0.0
      %4447 = vadd.xlane.f32.xlu0 %v4446
      %v4448 = vpop.xlane.xlu0 %4447
      %v4449 = vsel %vm556, %v4401, 0.0
      %4450 = vadd.xlane.f32.xlu0 %v4449
      %v4451 = vpop.xlane.xlu0 %4450
      %v4452 = vsel %vm556, %v4402, 0.0
      %4453 = vadd.xlane.f32.xlu0 %v4452
      %v4454 = vpop.xlane.xlu0 %4453
      %v4455 = vsel %vm556, %v4403, 0.0
      %4456 = vadd.xlane.f32.xlu0 %v4455
      %v4457 = vpop.xlane.xlu0 %4456
      %v4458 = vsel %vm556, %v4404, 0.0
      %4459 = vadd.xlane.f32.xlu0 %v4458
      %v4460 = vpop.xlane.xlu0 %4459
      %v4461 = vsel %vm556, %v4405, 0.0
      %4462 = vadd.xlane.f32.xlu0 %v4461
      %v4463 = vpop.xlane.xlu0 %4462
      %v4464 = vsel %vm556, %v4406, 0.0
      %4465 = vadd.xlane.f32.xlu0 %v4464
      %v4466 = vpop.xlane.xlu0 %4465
      %v4467 = vsel %vm556, %v4407, 0.0
      %4468 = vadd.xlane.f32.xlu0 %v4467
      %v4469 = vpop.xlane.xlu0 %4468
      %v4470 = vsel %vm556, %v4408, 0.0
      %4471 = vadd.xlane.f32.xlu0 %v4470
      %v4472 = vpop.xlane.xlu0 %4471
      %v4473 = vsel %vm556, %v4409, 0.0
      %4474 = vadd.xlane.f32.xlu0 %v4473
      %v4475 = vpop.xlane.xlu0 %4474
      %v4476 = vsel %vm556, %v4410, 0.0
      %4477 = vadd.xlane.f32.xlu0 %v4476
      %v4478 = vpop.xlane.xlu0 %4477
      %v4479 = vsel %vm556, %v4411, 0.0
      %4480 = vadd.xlane.f32.xlu0 %v4479
      %v4481 = vpop.xlane.xlu0 %4480
      %v4482 = vsel %vm556, %v4412, 0.0
      %4483 = vadd.xlane.f32.xlu0 %v4482
      %v4484 = vpop.xlane.xlu0 %4483
      %v4485 = vsel %vm556, %v4413, 0.0
      %4486 = vadd.xlane.f32.xlu0 %v4485
      %v4487 = vpop.xlane.xlu0 %4486
      %v4488 = vsel %vm556, %v4414, 0.0
      %4489 = vadd.xlane.f32.xlu0 %v4488
      %v4490 = vpop.xlane.xlu0 %4489
      %v4491 = vsel %vm556, %v4415, 0.0
      %4492 = vadd.xlane.f32.xlu0 %v4491
      %v4493 = vpop.xlane.xlu0 %4492
      %v4494 = vsel %vm556, %v4416, 0.0
      %4495 = vadd.xlane.f32.xlu0 %v4494
      %v4496 = vpop.xlane.xlu0 %4495
      %v4497 = vsel %vm556, %v4417, 0.0
      %4498 = vadd.xlane.f32.xlu0 %v4497
      %v4499 = vpop.xlane.xlu0 %4498
      %v4500 = vsel %vm556, %v4418, 0.0
      %4501 = vadd.xlane.f32.xlu0 %v4500
      %v4502 = vpop.xlane.xlu0 %4501
      %v4503 = vsel %vm556, %v4419, 0.0
      %4504 = vadd.xlane.f32.xlu0 %v4503
      %v4505 = vpop.xlane.xlu0 %4504
      %v4506 = vsel %vm556, %v4420, 0.0
      %4507 = vadd.xlane.f32.xlu0 %v4506
      %v4508 = vpop.xlane.xlu0 %4507
      %v4509 = vsel %vm556, %v4421, 0.0
      %4510 = vadd.xlane.f32.xlu0 %v4509
      %v4511 = vpop.xlane.xlu0 %4510
      %v4512 = vsel %vm556, %v4422, 0.0
      %4513 = vadd.xlane.f32.xlu0 %v4512
      %v4514 = vpop.xlane.xlu0 %4513
      %v4515 = vsel %vm556, %v4423, 0.0
      %4516 = vadd.xlane.f32.xlu0 %v4515
      %v4517 = vpop.xlane.xlu0 %4516
      %v4518 = vsel %vm556, %v4424, 0.0
      %4519 = vadd.xlane.f32.xlu0 %v4518
      %v4520 = vpop.xlane.xlu0 %4519
      %v4521 = vsel %vm556, %v4425, 0.0
      %4522 = vadd.xlane.f32.xlu0 %v4521
      %v4523 = vpop.xlane.xlu0 %4522
      %v4524 = vmul.f32 %v4430, %v653
      %v4525 = vmul.f32 %v4433, %v653
      %v4526 = vmul.f32 %v4436, %v653
      %v4527 = vmul.f32 %v4439, %v653
      %v4528 = vmul.f32 %v4442, %v653
      %v4529 = vmul.f32 %v4445, %v653
      %v4530 = vmul.f32 %v4448, %v653
      %v4531 = vmul.f32 %v4451, %v653
      %v4532 = vmul.f32 %v4454, %v653
      %v4533 = vmul.f32 %v4457, %v653
      %v4534 = vmul.f32 %v4460, %v653
      %v4535 = vmul.f32 %v4463, %v653
      %v4536 = vmul.f32 %v4466, %v653
      %v4537 = vmul.f32 %v4469, %v653
      %v4538 = vmul.f32 %v4472, %v653
      %v4539 = vmul.f32 %v4475, %v653
      %v4540 = vmul.f32 %v4478, %v653
      %v4541 = vmul.f32 %v4481, %v653
      %v4542 = vmul.f32 %v4484, %v653
      %v4543 = vmul.f32 %v4487, %v653
      %v4544 = vmul.f32 %v4490, %v653
      %v4545 = vmul.f32 %v4493, %v653
      %v4546 = vmul.f32 %v4496, %v653
      %v4547 = vmul.f32 %v4499, %v653
      %v4548 = vmul.f32 %v4502, %v653
      %v4549 = vmul.f32 %v4505, %v653
      %v4550 = vmul.f32 %v4508, %v653
      %v4551 = vmul.f32 %v4511, %v653
      %v4552 = vmul.f32 %v4514, %v653
      %v4553 = vmul.f32 %v4517, %v653
      %v4554 = vmul.f32 %v4520, %v653
      %v4555 = vmul.f32 %v4523, %v653
      %v4556 = vsub.f32 %v4394, %v4524
      %v4557 = vsub.f32 %v4395, %v4525
      %v4558 = vsub.f32 %v4396, %v4526
      %v4559 = vsub.f32 %v4397, %v4527
      %v4560 = vsub.f32 %v4398, %v4528
      %v4561 = vsub.f32 %v4399, %v4529
      %v4562 = vsub.f32 %v4400, %v4530
      %v4563 = vsub.f32 %v4401, %v4531
      %v4564 = vsub.f32 %v4402, %v4532
      %v4565 = vsub.f32 %v4403, %v4533
      %v4566 = vsub.f32 %v4404, %v4534
      %v4567 = vsub.f32 %v4405, %v4535
      %v4568 = vsub.f32 %v4406, %v4536
      %v4569 = vsub.f32 %v4407, %v4537
      %v4570 = vsub.f32 %v4408, %v4538
      %v4571 = vsub.f32 %v4409, %v4539
      %v4572 = vsub.f32 %v4410, %v4540
      %v4573 = vsub.f32 %v4411, %v4541
      %v4574 = vsub.f32 %v4412, %v4542
      %v4575 = vsub.f32 %v4413, %v4543
      %v4576 = vsub.f32 %v4414, %v4544
      %v4577 = vsub.f32 %v4415, %v4545
      %v4578 = vsub.f32 %v4416, %v4546
      %v4579 = vsub.f32 %v4417, %v4547
      %v4580 = vsub.f32 %v4418, %v4548
      %v4581 = vsub.f32 %v4419, %v4549
      %v4582 = vsub.f32 %v4420, %v4550
      %v4583 = vsub.f32 %v4421, %v4551
      %v4584 = vsub.f32 %v4422, %v4552
      %v4585 = vsub.f32 %v4423, %v4553
      %v4586 = vsub.f32 %v4424, %v4554
      %v4587 = vsub.f32 %v4425, %v4555
      %v4588 = vmul.f32 %v4556, %v4556
      %v4589 = vmul.f32 %v4557, %v4557
      %v4590 = vmul.f32 %v4558, %v4558
      %v4591 = vmul.f32 %v4559, %v4559
      %v4592 = vmul.f32 %v4560, %v4560
      %v4593 = vmul.f32 %v4561, %v4561
      %v4594 = vmul.f32 %v4562, %v4562
      %v4595 = vmul.f32 %v4563, %v4563
      %v4596 = vmul.f32 %v4564, %v4564
      %v4597 = vmul.f32 %v4565, %v4565
      %v4598 = vmul.f32 %v4566, %v4566
      %v4599 = vmul.f32 %v4567, %v4567
      %v4600 = vmul.f32 %v4568, %v4568
      %v4601 = vmul.f32 %v4569, %v4569
      %v4602 = vmul.f32 %v4570, %v4570
      %v4603 = vmul.f32 %v4571, %v4571
      %v4604 = vmul.f32 %v4572, %v4572
      %v4605 = vmul.f32 %v4573, %v4573
      %v4606 = vmul.f32 %v4574, %v4574
      %v4607 = vmul.f32 %v4575, %v4575
      %v4608 = vmul.f32 %v4576, %v4576
      %v4609 = vmul.f32 %v4577, %v4577
      %v4610 = vmul.f32 %v4578, %v4578
      %v4611 = vmul.f32 %v4579, %v4579
      %v4612 = vmul.f32 %v4580, %v4580
      %v4613 = vmul.f32 %v4581, %v4581
      %v4614 = vmul.f32 %v4582, %v4582
      %v4615 = vmul.f32 %v4583, %v4583
      %v4616 = vmul.f32 %v4584, %v4584
      %v4617 = vmul.f32 %v4585, %v4585
      %v4618 = vmul.f32 %v4586, %v4586
      %v4619 = vmul.f32 %v4587, %v4587
      %v4620 = vsel %vm556, %v4588, 0.0
      %4621 = vadd.xlane.f32.xlu0 %v4620
      %v4622 = vpop.xlane.xlu0 %4621
      %v4623 = vsel %vm556, %v4589, 0.0
      %4624 = vadd.xlane.f32.xlu0 %v4623
      %v4625 = vpop.xlane.xlu0 %4624
      %v4626 = vsel %vm556, %v4590, 0.0
      %4627 = vadd.xlane.f32.xlu0 %v4626
      %v4628 = vpop.xlane.xlu0 %4627
      %v4629 = vsel %vm556, %v4591, 0.0
      %4630 = vadd.xlane.f32.xlu0 %v4629
      %v4631 = vpop.xlane.xlu0 %4630
      %v4632 = vsel %vm556, %v4592, 0.0
      %4633 = vadd.xlane.f32.xlu0 %v4632
      %v4634 = vpop.xlane.xlu0 %4633
      %v4635 = vsel %vm556, %v4593, 0.0
      %4636 = vadd.xlane.f32.xlu0 %v4635
      %v4637 = vpop.xlane.xlu0 %4636
      %v4638 = vsel %vm556, %v4594, 0.0
      %4639 = vadd.xlane.f32.xlu0 %v4638
      %v4640 = vpop.xlane.xlu0 %4639
      %v4641 = vsel %vm556, %v4595, 0.0
      %4642 = vadd.xlane.f32.xlu0 %v4641
      %v4643 = vpop.xlane.xlu0 %4642
      %v4644 = vsel %vm556, %v4596, 0.0
      %4645 = vadd.xlane.f32.xlu0 %v4644
      %v4646 = vpop.xlane.xlu0 %4645
      %v4647 = vsel %vm556, %v4597, 0.0
      %4648 = vadd.xlane.f32.xlu0 %v4647
      %v4649 = vpop.xlane.xlu0 %4648
      %v4650 = vsel %vm556, %v4598, 0.0
      %4651 = vadd.xlane.f32.xlu0 %v4650
      %v4652 = vpop.xlane.xlu0 %4651
      %v4653 = vsel %vm556, %v4599, 0.0
      %4654 = vadd.xlane.f32.xlu0 %v4653
      %v4655 = vpop.xlane.xlu0 %4654
      %v4656 = vsel %vm556, %v4600, 0.0
      %4657 = vadd.xlane.f32.xlu0 %v4656
      %v4658 = vpop.xlane.xlu0 %4657
      %v4659 = vsel %vm556, %v4601, 0.0
      %4660 = vadd.xlane.f32.xlu0 %v4659
      %v4661 = vpop.xlane.xlu0 %4660
      %v4662 = vsel %vm556, %v4602, 0.0
      %4663 = vadd.xlane.f32.xlu0 %v4662
      %v4664 = vpop.xlane.xlu0 %4663
      %v4665 = vsel %vm556, %v4603, 0.0
      %4666 = vadd.xlane.f32.xlu0 %v4665
      %v4667 = vpop.xlane.xlu0 %4666
      %v4668 = vsel %vm556, %v4604, 0.0
      %4669 = vadd.xlane.f32.xlu0 %v4668
      %v4670 = vpop.xlane.xlu0 %4669
      %v4671 = vsel %vm556, %v4605, 0.0
      %4672 = vadd.xlane.f32.xlu0 %v4671
      %v4673 = vpop.xlane.xlu0 %4672
      %v4674 = vsel %vm556, %v4606, 0.0
      %4675 = vadd.xlane.f32.xlu0 %v4674
      %v4676 = vpop.xlane.xlu0 %4675
      %v4677 = vsel %vm556, %v4607, 0.0
      %4678 = vadd.xlane.f32.xlu0 %v4677
      %v4679 = vpop.xlane.xlu0 %4678
      %v4680 = vsel %vm556, %v4608, 0.0
      %4681 = vadd.xlane.f32.xlu0 %v4680
      %v4682 = vpop.xlane.xlu0 %4681
      %v4683 = vsel %vm556, %v4609, 0.0
      %4684 = vadd.xlane.f32.xlu0 %v4683
      %v4685 = vpop.xlane.xlu0 %4684
      %v4686 = vsel %vm556, %v4610, 0.0
      %4687 = vadd.xlane.f32.xlu0 %v4686
      %v4688 = vpop.xlane.xlu0 %4687
      %v4689 = vsel %vm556, %v4611, 0.0
      %4690 = vadd.xlane.f32.xlu0 %v4689
      %v4691 = vpop.xlane.xlu0 %4690
      %v4692 = vsel %vm556, %v4612, 0.0
      %4693 = vadd.xlane.f32.xlu0 %v4692
      %v4694 = vpop.xlane.xlu0 %4693
      %v4695 = vsel %vm556, %v4613, 0.0
      %4696 = vadd.xlane.f32.xlu0 %v4695
      %v4697 = vpop.xlane.xlu0 %4696
      %v4698 = vsel %vm556, %v4614, 0.0
      %4699 = vadd.xlane.f32.xlu0 %v4698
      %v4700 = vpop.xlane.xlu0 %4699
      %v4701 = vsel %vm556, %v4615, 0.0
      %4702 = vadd.xlane.f32.xlu0 %v4701
      %v4703 = vpop.xlane.xlu0 %4702
      %v4704 = vsel %vm556, %v4616, 0.0
      %4705 = vadd.xlane.f32.xlu0 %v4704
      %v4706 = vpop.xlane.xlu0 %4705
      %v4707 = vsel %vm556, %v4617, 0.0
      %4708 = vadd.xlane.f32.xlu0 %v4707
      %v4709 = vpop.xlane.xlu0 %4708
      %v4710 = vsel %vm556, %v4618, 0.0
      %4711 = vadd.xlane.f32.xlu0 %v4710
      %v4712 = vpop.xlane.xlu0 %4711
      %v4713 = vsel %vm556, %v4619, 0.0
      %4714 = vadd.xlane.f32.xlu0 %v4713
      %v4715 = vpop.xlane.xlu0 %4714
      %v4716 = vmul.f32 %v4622, %v653
      %v4717 = vmul.f32 %v4625, %v653
      %v4718 = vmul.f32 %v4628, %v653
      %v4719 = vmul.f32 %v4631, %v653
      %v4720 = vmul.f32 %v4634, %v653
      %v4721 = vmul.f32 %v4637, %v653
      %v4722 = vmul.f32 %v4640, %v653
      %v4723 = vmul.f32 %v4643, %v653
      %v4724 = vmul.f32 %v4646, %v653
      %v4725 = vmul.f32 %v4649, %v653
      %v4726 = vmul.f32 %v4652, %v653
      %v4727 = vmul.f32 %v4655, %v653
      %v4728 = vmul.f32 %v4658, %v653
      %v4729 = vmul.f32 %v4661, %v653
      %v4730 = vmul.f32 %v4664, %v653
      %v4731 = vmul.f32 %v4667, %v653
      %v4732 = vmul.f32 %v4670, %v653
      %v4733 = vmul.f32 %v4673, %v653
      %v4734 = vmul.f32 %v4676, %v653
      %v4735 = vmul.f32 %v4679, %v653
      %v4736 = vmul.f32 %v4682, %v653
      %v4737 = vmul.f32 %v4685, %v653
      %v4738 = vmul.f32 %v4688, %v653
      %v4739 = vmul.f32 %v4691, %v653
      %v4740 = vmul.f32 %v4694, %v653
      %v4741 = vmul.f32 %v4697, %v653
      %v4742 = vmul.f32 %v4700, %v653
      %v4743 = vmul.f32 %v4703, %v653
      %v4744 = vmul.f32 %v4706, %v653
      %v4745 = vmul.f32 %v4709, %v653
      %v4746 = vmul.f32 %v4712, %v653
      %v4747 = vmul.f32 %v4715, %v653
      %v4748 = vadd.f32 %v4716, 1e-05
      %v4749 = vadd.f32 %v4717, 1e-05
      %v4750 = vadd.f32 %v4718, 1e-05
      %v4751 = vadd.f32 %v4719, 1e-05
      %v4752 = vadd.f32 %v4720, 1e-05
      %v4753 = vadd.f32 %v4721, 1e-05
      %v4754 = vadd.f32 %v4722, 1e-05
      %v4755 = vadd.f32 %v4723, 1e-05
      %v4756 = vadd.f32 %v4724, 1e-05
      %v4757 = vadd.f32 %v4725, 1e-05
      %v4758 = vadd.f32 %v4726, 1e-05
      %v4759 = vadd.f32 %v4727, 1e-05
      %v4760 = vadd.f32 %v4728, 1e-05
      %v4761 = vadd.f32 %v4729, 1e-05
      %v4762 = vadd.f32 %v4730, 1e-05
      %v4763 = vadd.f32 %v4731, 1e-05
      %v4764 = vadd.f32 %v4732, 1e-05
      %v4765 = vadd.f32 %v4733, 1e-05
      %v4766 = vadd.f32 %v4734, 1e-05
      %v4767 = vadd.f32 %v4735, 1e-05
      %v4768 = vadd.f32 %v4736, 1e-05
      %v4769 = vadd.f32 %v4737, 1e-05
      %v4770 = vadd.f32 %v4738, 1e-05
      %v4771 = vadd.f32 %v4739, 1e-05
      %v4772 = vadd.f32 %v4740, 1e-05
      %v4773 = vadd.f32 %v4741, 1e-05
      %v4774 = vadd.f32 %v4742, 1e-05
      %v4775 = vadd.f32 %v4743, 1e-05
      %v4776 = vadd.f32 %v4744, 1e-05
      %v4777 = vadd.f32 %v4745, 1e-05
      %v4778 = vadd.f32 %v4746, 1e-05
      %v4779 = vadd.f32 %v4747, 1e-05
      %v4780 = vrsqrt.pop %v4748
      %v4781 = vrsqrt.pop %v4749
      %v4782 = vrsqrt.pop %v4750
      %v4783 = vrsqrt.pop %v4751
      %v4784 = vrsqrt.pop %v4752
      %v4785 = vrsqrt.pop %v4753
      %v4786 = vrsqrt.pop %v4754
      %v4787 = vrsqrt.pop %v4755
      %v4788 = vrsqrt.pop %v4756
      %v4789 = vrsqrt.pop %v4757
      %v4790 = vrsqrt.pop %v4758
      %v4791 = vrsqrt.pop %v4759
      %v4792 = vrsqrt.pop %v4760
      %v4793 = vrsqrt.pop %v4761
      %v4794 = vrsqrt.pop %v4762
      %v4795 = vrsqrt.pop %v4763
      %v4796 = vrsqrt.pop %v4764
      %v4797 = vrsqrt.pop %v4765
      %v4798 = vrsqrt.pop %v4766
      %v4799 = vrsqrt.pop %v4767
      %v4800 = vrsqrt.pop %v4768
      %v4801 = vrsqrt.pop %v4769
      %v4802 = vrsqrt.pop %v4770
      %v4803 = vrsqrt.pop %v4771
      %v4804 = vrsqrt.pop %v4772
      %v4805 = vrsqrt.pop %v4773
      %v4806 = vrsqrt.pop %v4774
      %v4807 = vrsqrt.pop %v4775
      %v4808 = vrsqrt.pop %v4776
      %v4809 = vrsqrt.pop %v4777
      %v4810 = vrsqrt.pop %v4778
      %v4811 = vrsqrt.pop %v4779
      %v4812 = vmul.f32 %v4556, %v4780
      %v4813 = vmul.f32 %v4557, %v4781
      %v4814 = vmul.f32 %v4558, %v4782
      %v4815 = vmul.f32 %v4559, %v4783
      %v4816 = vmul.f32 %v4560, %v4784
      %v4817 = vmul.f32 %v4561, %v4785
      %v4818 = vmul.f32 %v4562, %v4786
      %v4819 = vmul.f32 %v4563, %v4787
      %v4820 = vmul.f32 %v4564, %v4788
      %v4821 = vmul.f32 %v4565, %v4789
      %v4822 = vmul.f32 %v4566, %v4790
      %v4823 = vmul.f32 %v4567, %v4791
      %v4824 = vmul.f32 %v4568, %v4792
      %v4825 = vmul.f32 %v4569, %v4793
      %v4826 = vmul.f32 %v4570, %v4794
      %v4827 = vmul.f32 %v4571, %v4795
      %v4828 = vmul.f32 %v4572, %v4796
      %v4829 = vmul.f32 %v4573, %v4797
      %v4830 = vmul.f32 %v4574, %v4798
      %v4831 = vmul.f32 %v4575, %v4799
      %v4832 = vmul.f32 %v4576, %v4800
      %v4833 = vmul.f32 %v4577, %v4801
      %v4834 = vmul.f32 %v4578, %v4802
      %v4835 = vmul.f32 %v4579, %v4803
      %v4836 = vmul.f32 %v4580, %v4804
      %v4837 = vmul.f32 %v4581, %v4805
      %v4838 = vmul.f32 %v4582, %v4806
      %v4839 = vmul.f32 %v4583, %v4807
      %v4840 = vmul.f32 %v4584, %v4808
      %v4841 = vmul.f32 %v4585, %v4809
      %v4842 = vmul.f32 %v4586, %v4810
      %v4843 = vmul.f32 %v4587, %v4811
      %v4845 = vlaneseq
      %v4846 = vshrl.u32 %v4845, 7
      %v4847 = vsub.s32 0, %v4846
      %v4848 = vrot.slane %v4426, %v4847
      %v4850 = vmul.f32 %v4812, %v4848
      %v4851 = vmul.f32 %v4813, %v4848
      %v4852 = vmul.f32 %v4814, %v4848
      %v4853 = vmul.f32 %v4815, %v4848
      %v4854 = vmul.f32 %v4816, %v4848
      %v4855 = vmul.f32 %v4817, %v4848
      %v4856 = vmul.f32 %v4818, %v4848
      %v4857 = vmul.f32 %v4819, %v4848
      %v4858 = vmul.f32 %v4820, %v4848
      %v4859 = vmul.f32 %v4821, %v4848
      %v4860 = vmul.f32 %v4822, %v4848
      %v4861 = vmul.f32 %v4823, %v4848
      %v4862 = vmul.f32 %v4824, %v4848
      %v4863 = vmul.f32 %v4825, %v4848
      %v4864 = vmul.f32 %v4826, %v4848
      %v4865 = vmul.f32 %v4827, %v4848
      %v4866 = vmul.f32 %v4828, %v4848
      %v4867 = vmul.f32 %v4829, %v4848
      %v4868 = vmul.f32 %v4830, %v4848
      %v4869 = vmul.f32 %v4831, %v4848
      %v4870 = vmul.f32 %v4832, %v4848
      %v4871 = vmul.f32 %v4833, %v4848
      %v4872 = vmul.f32 %v4834, %v4848
      %v4873 = vmul.f32 %v4835, %v4848
      %v4874 = vmul.f32 %v4836, %v4848
      %v4875 = vmul.f32 %v4837, %v4848
      %v4876 = vmul.f32 %v4838, %v4848
      %v4877 = vmul.f32 %v4839, %v4848
      %v4878 = vmul.f32 %v4840, %v4848
      %v4879 = vmul.f32 %v4841, %v4848
      %v4880 = vmul.f32 %v4842, %v4848
      %v4881 = vmul.f32 %v4843, %v4848
      %v4883 = vlaneseq
      %v4884 = vshrl.u32 %v4883, 7
      %v4885 = vsub.s32 0, %v4884
      %v4886 = vrot.slane %v4427, %v4885
      %v4888 = vadd.f32 %v4850, %v4886
      %v4889 = vadd.f32 %v4851, %v4886
      %v4890 = vadd.f32 %v4852, %v4886
      %v4891 = vadd.f32 %v4853, %v4886
      %v4892 = vadd.f32 %v4854, %v4886
      %v4893 = vadd.f32 %v4855, %v4886
      %v4894 = vadd.f32 %v4856, %v4886
      %v4895 = vadd.f32 %v4857, %v4886
      %v4896 = vadd.f32 %v4858, %v4886
      %v4897 = vadd.f32 %v4859, %v4886
      %v4898 = vadd.f32 %v4860, %v4886
      %v4899 = vadd.f32 %v4861, %v4886
      %v4900 = vadd.f32 %v4862, %v4886
      %v4901 = vadd.f32 %v4863, %v4886
      %v4902 = vadd.f32 %v4864, %v4886
      %v4903 = vadd.f32 %v4865, %v4886
      %v4904 = vadd.f32 %v4866, %v4886
      %v4905 = vadd.f32 %v4867, %v4886
      %v4906 = vadd.f32 %v4868, %v4886
      %v4907 = vadd.f32 %v4869, %v4886
      %v4908 = vadd.f32 %v4870, %v4886
      %v4909 = vadd.f32 %v4871, %v4886
      %v4910 = vadd.f32 %v4872, %v4886
      %v4911 = vadd.f32 %v4873, %v4886
      %v4912 = vadd.f32 %v4874, %v4886
      %v4913 = vadd.f32 %v4875, %v4886
      %v4914 = vadd.f32 %v4876, %v4886
      %v4915 = vadd.f32 %v4877, %v4886
      %v4916 = vadd.f32 %v4878, %v4886
      %v4917 = vadd.f32 %v4879, %v4886
      %v4918 = vadd.f32 %v4880, %v4886
      %v4919 = vadd.f32 %v4881, %v4886
      %v4920 = vld [vmem:[%s12] sm:$0xff]
      %v4921 = vld [vmem:[%s12 + $0x8] sm:$0xff]
      %v4922 = vld [vmem:[%s12 + $0x10] sm:$0xff]
      %v4923 = vld [vmem:[%s12 + $0x18] sm:$0xff]
      %v4924 = vld [vmem:[%s13] sm:$0x1]
      %v4926 = vlaneseq
      %v4927 = vshrl.u32 %v4926, 7
      %v4928 = vsub.s32 0, %v4927
      %v4929 = vrot.slane %v4924, %v4928
      %v4932 = vsel %vm556, %v4888, 0
      %v4935 = vsel %vm556, %v4889, 0
      %v4938 = vsel %vm556, %v4890, 0
      %v4941 = vsel %vm556, %v4891, 0
      %v4944 = vsel %vm556, %v4892, 0
      %v4947 = vsel %vm556, %v4893, 0
      %v4950 = vsel %vm556, %v4894, 0
      %v4953 = vsel %vm556, %v4895, 0
      %v4956 = vsel %vm556, %v4896, 0
      %v4959 = vsel %vm556, %v4897, 0
      %v4962 = vsel %vm556, %v4898, 0
      %v4965 = vsel %vm556, %v4899, 0
      %v4968 = vsel %vm556, %v4900, 0
      %v4971 = vsel %vm556, %v4901, 0
      %v4974 = vsel %vm556, %v4902, 0
      %v4977 = vsel %vm556, %v4903, 0
      %v4980 = vsel %vm556, %v4904, 0
      %v4983 = vsel %vm556, %v4905, 0
      %v4986 = vsel %vm556, %v4906, 0
      %v4989 = vsel %vm556, %v4907, 0
      %v4992 = vsel %vm556, %v4908, 0
      %v4995 = vsel %vm556, %v4909, 0
      %v4998 = vsel %vm556, %v4910, 0
      %v5001 = vsel %vm556, %v4911, 0
      %v5004 = vsel %vm556, %v4912, 0
      %v5007 = vsel %vm556, %v4913, 0
      %v5010 = vsel %vm556, %v4914, 0
      %v5013 = vsel %vm556, %v4915, 0
      %v5016 = vsel %vm556, %v4916, 0
      %v5019 = vsel %vm556, %v4917, 0
      %v5022 = vsel %vm556, %v4918, 0
      %v5025 = vsel %vm556, %v4919, 0
      %5027 = vmatprep.subr.mxu0 0.0
      %5028 = vmatpush1.msra.mxu0 %v4920
      %5029 = vmatprep.subr.mxu0 0.0
      %5030 = vmatpush1.msra.mxu0 %v4921
      %5031 = vmatprep.subr.mxu0 0.0
      %5032 = vmatpush1.msra.mxu0 %v4922
      %5033 = vmatprep.subr.mxu0 0.0
      %5034 = vmatpush1.msra.mxu0 %v4923
      %5035 = vmatprep.subr.mxu0 0.0
      %5036 = vmatpush1.msra.mxu0 0.0
      %5037 = vmatprep.subr.mxu0 0.0
      %5038 = vmatpush1.msra.mxu0 0.0
      %5039 = vmatprep.subr.mxu0 0.0
      %5040 = vmatpush1.msra.mxu0 0.0
      %5041 = vmatprep.subr.mxu0 0.0
      %5042 = vmatpush1.msra.mxu0 0.0
      %5043 = vmatprep.subr.mxu0 0.0
      %5044 = vmatpush1.msra.mxu0 0.0
      %5045 = vmatprep.subr.mxu0 0.0
      %5046 = vmatpush1.msra.mxu0 0.0
      %5047 = vmatprep.subr.mxu0 0.0
      %5048 = vmatpush1.msra.mxu0 0.0
      %5049 = vmatprep.subr.mxu0 0.0
      %5050 = vmatpush1.msra.mxu0 0.0
      %5051 = vmatprep.subr.mxu0 0.0
      %5052 = vmatpush1.msra.mxu0 0.0
      %5053 = vmatprep.subr.mxu0 0.0
      %5054 = vmatpush1.msra.mxu0 0.0
      %5055 = vmatprep.subr.mxu0 0.0
      %5056 = vmatpush1.msra.mxu0 0.0
      %5057 = vmatprep.subr.mxu0 0.0
      %5058 = vmatpush1.msra.mxu0 0.0
      %5059 = vmatprep.subr.mxu0 0.0
      %5060 = vmatpush1.msra.mxu0 0.0
      %5061 = vmatprep.subr.mxu0 0.0
      %5062 = vmatpush1.msra.mxu0 0.0
      %5063 = vmatprep.subr.mxu0 0.0
      %5064 = vmatpush1.msra.mxu0 0.0
      %5065 = vmatprep.subr.mxu0 0.0
      %5066 = vmatpush1.msra.mxu0 0.0
      %5067 = vmatprep.subr.mxu0 0.0
      %5068 = vmatpush1.msra.mxu0 0.0
      %5069 = vmatprep.subr.mxu0 0.0
      %5070 = vmatpush1.msra.mxu0 0.0
      %5071 = vmatprep.subr.mxu0 0.0
      %5072 = vmatpush1.msra.mxu0 0.0
      %5073 = vmatprep.subr.mxu0 0.0
      %5074 = vmatpush1.msra.mxu0 0.0
      %5075 = vmatprep.subr.mxu0 0.0
      %5076 = vmatpush1.msra.mxu0 0.0
      %5077 = vmatprep.subr.mxu0 0.0
      %5078 = vmatpush1.msra.mxu0 0.0
      %5079 = vmatprep.subr.mxu0 0.0
      %5080 = vmatpush1.msra.mxu0 0.0
      %5081 = vmatprep.subr.mxu0 0.0
      %5082 = vmatpush1.msra.mxu0 0.0
      %5083 = vmatprep.subr.mxu0 0.0
      %5084 = vmatpush1.msra.mxu0 0.0
      %5085 = vmatprep.subr.mxu0 0.0
      %5086 = vmatpush1.msra.mxu0 0.0
      %5087 = vmatprep.subr.mxu0 0.0
      %5088 = vmatpush1.msra.mxu0 0.0
      %5089 = vmatprep.subr.mxu0 0.0
      %5090 = vmatpush1.msra.mxu0 0.0
      %5091 = vmatprep.mubr.f32.mxu0 0.0
      %5092 = vmatmul.mubr.f32.gmra.mrb[0].mxu0 %v4932
      %v5093 = vpop.f32.mrb[0].mxu0
      %v5094 = vadd.f32 %v4929, %v5093
      %v5095 = vpop.f32.mrb[0].mxu0
      %5096 = vmatprep.mubr.f32.mxu0 0.0
      %5097 = vmatmul.mubr.f32.gmra.mrb[0].mxu0 %v4935
      %v5098 = vpop.f32.mrb[0].mxu0
      %v5099 = vadd.f32 %v4929, %v5098
      %v5100 = vpop.f32.mrb[0].mxu0
      %5101 = vmatprep.mubr.f32.mxu0 0.0
      %5102 = vmatmul.mubr.f32.gmra.mrb[0].mxu0 %v4938
      %v5103 = vpop.f32.mrb[0].mxu0
      %v5104 = vadd.f32 %v4929, %v5103
      %v5105 = vpop.f32.mrb[0].mxu0
      %5106 = vmatprep.mubr.f32.mxu0 0.0
      %5107 = vmatmul.mubr.f32.gmra.mrb[0].mxu0 %v4941
      %v5108 = vpop.f32.mrb[0].mxu0
      %v5109 = vadd.f32 %v4929, %v5108
      %v5110 = vpop.f32.mrb[0].mxu0
      %5111 = vmatprep.mubr.f32.mxu0 0.0
      %5112 = vmatmul.mubr.f32.gmra.mrb[0].mxu0 %v4944
      %v5113 = vpop.f32.mrb[0].mxu0
      %v5114 = vadd.f32 %v4929, %v5113
      %v5115 = vpop.f32.mrb[0].mxu0
      %5116 = vmatprep.mubr.f32.mxu0 0.0
      %5117 = vmatmul.mubr.f32.gmra.mrb[0].mxu0 %v4947
      %v5118 = vpop.f32.mrb[0].mxu0
      %v5119 = vadd.f32 %v4929, %v5118
      %v5120 = vpop.f32.mrb[0].mxu0
      %5121 = vmatprep.mubr.f32.mxu0 0.0
      %5122 = vmatmul.mubr.f32.gmra.mrb[0].mxu0 %v4950
      %v5123 = vpop.f32.mrb[0].mxu0
      %v5124 = vadd.f32 %v4929, %v5123
      %v5125 = vpop.f32.mrb[0].mxu0
      %5126 = vmatprep.mubr.f32.mxu0 0.0
      %5127 = vmatmul.mubr.f32.gmra.mrb[0].mxu0 %v4953
      %v5128 = vpop.f32.mrb[0].mxu0
      %v5129 = vadd.f32 %v4929, %v5128
      %v5130 = vpop.f32.mrb[0].mxu0
      %5131 = vmatprep.mubr.f32.mxu0 0.0
      %5132 = vmatmul.mubr.f32.gmra.mrb[0].mxu0 %v4956
      %v5133 = vpop.f32.mrb[0].mxu0
      %v5134 = vadd.f32 %v4929, %v5133
      %v5135 = vpop.f32.mrb[0].mxu0
      %5136 = vmatprep.mubr.f32.mxu0 0.0
      %5137 = vmatmul.mubr.f32.gmra.mrb[0].mxu0 %v4959
      %v5138 = vpop.f32.mrb[0].mxu0
      %v5139 = vadd.f32 %v4929, %v5138
      %v5140 = vpop.f32.mrb[0].mxu0
      %5141 = vmatprep.mubr.f32.mxu0 0.0
      %5142 = vmatmul.mubr.f32.gmra.mrb[0].mxu0 %v4962
      %v5143 = vpop.f32.mrb[0].mxu0
      %v5144 = vadd.f32 %v4929, %v5143
      %v5145 = vpop.f32.mrb[0].mxu0
      %5146 = vmatprep.mubr.f32.mxu0 0.0
      %5147 = vmatmul.mubr.f32.gmra.mrb[0].mxu0 %v4965
      %v5148 = vpop.f32.mrb[0].mxu0
      %v5149 = vadd.f32 %v4929, %v5148
      %v5150 = vpop.f32.mrb[0].mxu0
      %5151 = vmatprep.mubr.f32.mxu0 0.0
      %5152 = vmatmul.mubr.f32.gmra.mrb[0].mxu0 %v4968
      %v5153 = vpop.f32.mrb[0].mxu0
      %v5154 = vadd.f32 %v4929, %v5153
      %v5155 = vpop.f32.mrb[0].mxu0
      %5156 = vmatprep.mubr.f32.mxu0 0.0
      %5157 = vmatmul.mubr.f32.gmra.mrb[0].mxu0 %v4971
      %v5158 = vpop.f32.mrb[0].mxu0
      %v5159 = vadd.f32 %v4929, %v5158
      %v5160 = vpop.f32.mrb[0].mxu0
      %5161 = vmatprep.mubr.f32.mxu0 0.0
      %5162 = vmatmul.mubr.f32.gmra.mrb[0].mxu0 %v4974
      %v5163 = vpop.f32.mrb[0].mxu0
      %v5164 = vadd.f32 %v4929, %v5163
      %v5165 = vpop.f32.mrb[0].mxu0
      %5166 = vmatprep.mubr.f32.mxu0 0.0
      %5167 = vmatmul.mubr.f32.gmra.mrb[0].mxu0 %v4977
      %v5168 = vpop.f32.mrb[0].mxu0
      %v5169 = vadd.f32 %v4929, %v5168
      %v5170 = vpop.f32.mrb[0].mxu0
      %5171 = vmatprep.mubr.f32.mxu0 0.0
      %5172 = vmatmul.mubr.f32.gmra.mrb[0].mxu0 %v4980
      %v5173 = vpop.f32.mrb[0].mxu0
      %v5174 = vadd.f32 %v4929, %v5173
      %v5175 = vpop.f32.mrb[0].mxu0
      %5176 = vmatprep.mubr.f32.mxu0 0.0
      %5177 = vmatmul.mubr.f32.gmra.mrb[0].mxu0 %v4983
      %v5178 = vpop.f32.mrb[0].mxu0
      %v5179 = vadd.f32 %v4929, %v5178
      %v5180 = vpop.f32.mrb[0].mxu0
      %5181 = vmatprep.mubr.f32.mxu0 0.0
      %5182 = vmatmul.mubr.f32.gmra.mrb[0].mxu0 %v4986
      %v5183 = vpop.f32.mrb[0].mxu0
      %v5184 = vadd.f32 %v4929, %v5183
      %v5185 = vpop.f32.mrb[0].mxu0
      %5186 = vmatprep.mubr.f32.mxu0 0.0
      %5187 = vmatmul.mubr.f32.gmra.mrb[0].mxu0 %v4989
      %v5188 = vpop.f32.mrb[0].mxu0
      %v5189 = vadd.f32 %v4929, %v5188
      %v5190 = vpop.f32.mrb[0].mxu0
      %5191 = vmatprep.mubr.f32.mxu0 0.0
      %5192 = vmatmul.mubr.f32.gmra.mrb[0].mxu0 %v4992
      %v5193 = vpop.f32.mrb[0].mxu0
      %v5194 = vadd.f32 %v4929, %v5193
      %v5195 = vpop.f32.mrb[0].mxu0
      %5196 = vmatprep.mubr.f32.mxu0 0.0
      %5197 = vmatmul.mubr.f32.gmra.mrb[0].mxu0 %v4995
      %v5198 = vpop.f32.mrb[0].mxu0
      %v5199 = vadd.f32 %v4929, %v5198
      %v5200 = vpop.f32.mrb[0].mxu0
      %5201 = vmatprep.mubr.f32.mxu0 0.0
      %5202 = vmatmul.mubr.f32.gmra.mrb[0].mxu0 %v4998
      %v5203 = vpop.f32.mrb[0].mxu0
      %v5204 = vadd.f32 %v4929, %v5203
      %v5205 = vpop.f32.mrb[0].mxu0
      %5206 = vmatprep.mubr.f32.mxu0 0.0
      %5207 = vmatmul.mubr.f32.gmra.mrb[0].mxu0 %v5001
      %v5208 = vpop.f32.mrb[0].mxu0
      %v5209 = vadd.f32 %v4929, %v5208
      %v5210 = vpop.f32.mrb[0].mxu0
      %5211 = vmatprep.mubr.f32.mxu0 0.0
      %5212 = vmatmul.mubr.f32.gmra.mrb[0].mxu0 %v5004
      %v5213 = vpop.f32.mrb[0].mxu0
      %v5214 = vadd.f32 %v4929, %v5213
      %v5215 = vpop.f32.mrb[0].mxu0
      %5216 = vmatprep.mubr.f32.mxu0 0.0
      %5217 = vmatmul.mubr.f32.gmra.mrb[0].mxu0 %v5007
      %v5218 = vpop.f32.mrb[0].mxu0
      %v5219 = vadd.f32 %v4929, %v5218
      %v5220 = vpop.f32.mrb[0].mxu0
      %5221 = vmatprep.mubr.f32.mxu0 0.0
      %5222 = vmatmul.mubr.f32.gmra.mrb[0].mxu0 %v5010
      %v5223 = vpop.f32.mrb[0].mxu0
      %v5224 = vadd.f32 %v4929, %v5223
      %v5225 = vpop.f32.mrb[0].mxu0
      %5226 = vmatprep.mubr.f32.mxu0 0.0
      %5227 = vmatmul.mubr.f32.gmra.mrb[0].mxu0 %v5013
      %v5228 = vpop.f32.mrb[0].mxu0
      %v5229 = vadd.f32 %v4929, %v5228
      %v5230 = vpop.f32.mrb[0].mxu0
      %5231 = vmatprep.mubr.f32.mxu0 0.0
      %5232 = vmatmul.mubr.f32.gmra.mrb[0].mxu0 %v5016
      %v5233 = vpop.f32.mrb[0].mxu0
      %v5234 = vadd.f32 %v4929, %v5233
      %v5235 = vpop.f32.mrb[0].mxu0
      %5236 = vmatprep.mubr.f32.mxu0 0.0
      %5237 = vmatmul.mubr.f32.gmra.mrb[0].mxu0 %v5019
      %v5238 = vpop.f32.mrb[0].mxu0
      %v5239 = vadd.f32 %v4929, %v5238
      %v5240 = vpop.f32.mrb[0].mxu0
      %5241 = vmatprep.mubr.f32.mxu0 0.0
      %5242 = vmatmul.mubr.f32.gmra.mrb[0].mxu0 %v5022
      %v5243 = vpop.f32.mrb[0].mxu0
      %v5244 = vadd.f32 %v4929, %v5243
      %v5245 = vpop.f32.mrb[0].mxu0
      %5246 = vmatprep.mubr.f32.mxu0 0.0
      %5247 = vmatmul.mubr.f32.gmra.mrb[0].mxu0 %v5025
      %v5248 = vpop.f32.mrb[0].mxu0
      %v5249 = vadd.f32 %v4929, %v5248
      %v5250 = vpop.f32.mrb[0].mxu0
      %5251 = vdwg.mxu0
      %v5252 = vmul.f32 %v5094, 0.5
      %v5253 = vmul.f32 %v5099, 0.5
      %v5254 = vmul.f32 %v5104, 0.5
      %v5255 = vmul.f32 %v5109, 0.5
      %v5256 = vmul.f32 %v5114, 0.5
      %v5257 = vmul.f32 %v5119, 0.5
      %v5258 = vmul.f32 %v5124, 0.5
      %v5259 = vmul.f32 %v5129, 0.5
      %v5260 = vmul.f32 %v5134, 0.5
      %v5261 = vmul.f32 %v5139, 0.5
      %v5262 = vmul.f32 %v5144, 0.5
      %v5263 = vmul.f32 %v5149, 0.5
      %v5264 = vmul.f32 %v5154, 0.5
      %v5265 = vmul.f32 %v5159, 0.5
      %v5266 = vmul.f32 %v5164, 0.5
      %v5267 = vmul.f32 %v5169, 0.5
      %v5268 = vmul.f32 %v5174, 0.5
      %v5269 = vmul.f32 %v5179, 0.5
      %v5270 = vmul.f32 %v5184, 0.5
      %v5271 = vmul.f32 %v5189, 0.5
      %v5272 = vmul.f32 %v5194, 0.5
      %v5273 = vmul.f32 %v5199, 0.5
      %v5274 = vmul.f32 %v5204, 0.5
      %v5275 = vmul.f32 %v5209, 0.5
      %v5276 = vmul.f32 %v5214, 0.5
      %v5277 = vmul.f32 %v5219, 0.5
      %v5278 = vmul.f32 %v5224, 0.5
      %v5279 = vmul.f32 %v5229, 0.5
      %v5280 = vmul.f32 %v5234, 0.5
      %v5281 = vmul.f32 %v5239, 0.5
      %v5282 = vmul.f32 %v5244, 0.5
      %v5283 = vmul.f32 %v5249, 0.5
      %v5284 = vmul.f32 %v5094, %v5094
      %v5285 = vmul.f32 %v5099, %v5099
      %v5286 = vmul.f32 %v5104, %v5104
      %v5287 = vmul.f32 %v5109, %v5109
      %v5288 = vmul.f32 %v5114, %v5114
      %v5289 = vmul.f32 %v5119, %v5119
      %v5290 = vmul.f32 %v5124, %v5124
      %v5291 = vmul.f32 %v5129, %v5129
      %v5292 = vmul.f32 %v5134, %v5134
      %v5293 = vmul.f32 %v5139, %v5139
      %v5294 = vmul.f32 %v5144, %v5144
      %v5295 = vmul.f32 %v5149, %v5149
      %v5296 = vmul.f32 %v5154, %v5154
      %v5297 = vmul.f32 %v5159, %v5159
      %v5298 = vmul.f32 %v5164, %v5164
      %v5299 = vmul.f32 %v5169, %v5169
      %v5300 = vmul.f32 %v5174, %v5174
      %v5301 = vmul.f32 %v5179, %v5179
      %v5302 = vmul.f32 %v5184, %v5184
      %v5303 = vmul.f32 %v5189, %v5189
      %v5304 = vmul.f32 %v5194, %v5194
      %v5305 = vmul.f32 %v5199, %v5199
      %v5306 = vmul.f32 %v5204, %v5204
      %v5307 = vmul.f32 %v5209, %v5209
      %v5308 = vmul.f32 %v5214, %v5214
      %v5309 = vmul.f32 %v5219, %v5219
      %v5310 = vmul.f32 %v5224, %v5224
      %v5311 = vmul.f32 %v5229, %v5229
      %v5312 = vmul.f32 %v5234, %v5234
      %v5313 = vmul.f32 %v5239, %v5239
      %v5314 = vmul.f32 %v5244, %v5244
      %v5315 = vmul.f32 %v5249, %v5249
      %v5316 = vmul.f32 %v5284, %v5094
      %v5317 = vmul.f32 %v5285, %v5099
      %v5318 = vmul.f32 %v5286, %v5104
      %v5319 = vmul.f32 %v5287, %v5109
      %v5320 = vmul.f32 %v5288, %v5114
      %v5321 = vmul.f32 %v5289, %v5119
      %v5322 = vmul.f32 %v5290, %v5124
      %v5323 = vmul.f32 %v5291, %v5129
      %v5324 = vmul.f32 %v5292, %v5134
      %v5325 = vmul.f32 %v5293, %v5139
      %v5326 = vmul.f32 %v5294, %v5144
      %v5327 = vmul.f32 %v5295, %v5149
      %v5328 = vmul.f32 %v5296, %v5154
      %v5329 = vmul.f32 %v5297, %v5159
      %v5330 = vmul.f32 %v5298, %v5164
      %v5331 = vmul.f32 %v5299, %v5169
      %v5332 = vmul.f32 %v5300, %v5174
      %v5333 = vmul.f32 %v5301, %v5179
      %v5334 = vmul.f32 %v5302, %v5184
      %v5335 = vmul.f32 %v5303, %v5189
      %v5336 = vmul.f32 %v5304, %v5194
      %v5337 = vmul.f32 %v5305, %v5199
      %v5338 = vmul.f32 %v5306, %v5204
      %v5339 = vmul.f32 %v5307, %v5209
      %v5340 = vmul.f32 %v5308, %v5214
      %v5341 = vmul.f32 %v5309, %v5219
      %v5342 = vmul.f32 %v5310, %v5224
      %v5343 = vmul.f32 %v5311, %v5229
      %v5344 = vmul.f32 %v5312, %v5234
      %v5345 = vmul.f32 %v5313, %v5239
      %v5346 = vmul.f32 %v5314, %v5244
      %v5347 = vmul.f32 %v5315, %v5249
      %v5348 = vmul.f32 %v5316, 0.044715
      %v5349 = vmul.f32 %v5317, 0.044715
      %v5350 = vmul.f32 %v5318, 0.044715
      %v5351 = vmul.f32 %v5319, 0.044715
      %v5352 = vmul.f32 %v5320, 0.044715
      %v5353 = vmul.f32 %v5321, 0.044715
      %v5354 = vmul.f32 %v5322, 0.044715
      %v5355 = vmul.f32 %v5323, 0.044715
      %v5356 = vmul.f32 %v5324, 0.044715
      %v5357 = vmul.f32 %v5325, 0.044715
      %v5358 = vmul.f32 %v5326, 0.044715
      %v5359 = vmul.f32 %v5327, 0.044715
      %v5360 = vmul.f32 %v5328, 0.044715
      %v5361 = vmul.f32 %v5329, 0.044715
      %v5362 = vmul.f32 %v5330, 0.044715
      %v5363 = vmul.f32 %v5331, 0.044715
      %v5364 = vmul.f32 %v5332, 0.044715
      %v5365 = vmul.f32 %v5333, 0.044715
      %v5366 = vmul.f32 %v5334, 0.044715
      %v5367 = vmul.f32 %v5335, 0.044715
      %v5368 = vmul.f32 %v5336, 0.044715
      %v5369 = vmul.f32 %v5337, 0.044715
      %v5370 = vmul.f32 %v5338, 0.044715
      %v5371 = vmul.f32 %v5339, 0.044715
      %v5372 = vmul.f32 %v5340, 0.044715
      %v5373 = vmul.f32 %v5341, 0.044715
      %v5374 = vmul.f32 %v5342, 0.044715
      %v5375 = vmul.f32 %v5343, 0.044715
      %v5376 = vmul.f32 %v5344, 0.044715
      %v5377 = vmul.f32 %v5345, 0.044715
      %v5378 = vmul.f32 %v5346, 0.044715
      %v5379 = vmul.f32 %v5347, 0.044715
      %v5380 = vadd.f32 %v5094, %v5348
      %v5381 = vadd.f32 %v5099, %v5349
      %v5382 = vadd.f32 %v5104, %v5350
      %v5383 = vadd.f32 %v5109, %v5351
      %v5384 = vadd.f32 %v5114, %v5352
      %v5385 = vadd.f32 %v5119, %v5353
      %v5386 = vadd.f32 %v5124, %v5354
      %v5387 = vadd.f32 %v5129, %v5355
      %v5388 = vadd.f32 %v5134, %v5356
      %v5389 = vadd.f32 %v5139, %v5357
      %v5390 = vadd.f32 %v5144, %v5358
      %v5391 = vadd.f32 %v5149, %v5359
      %v5392 = vadd.f32 %v5154, %v5360
      %v5393 = vadd.f32 %v5159, %v5361
      %v5394 = vadd.f32 %v5164, %v5362
      %v5395 = vadd.f32 %v5169, %v5363
      %v5396 = vadd.f32 %v5174, %v5364
      %v5397 = vadd.f32 %v5179, %v5365
      %v5398 = vadd.f32 %v5184, %v5366
      %v5399 = vadd.f32 %v5189, %v5367
      %v5400 = vadd.f32 %v5194, %v5368
      %v5401 = vadd.f32 %v5199, %v5369
      %v5402 = vadd.f32 %v5204, %v5370
      %v5403 = vadd.f32 %v5209, %v5371
      %v5404 = vadd.f32 %v5214, %v5372
      %v5405 = vadd.f32 %v5219, %v5373
      %v5406 = vadd.f32 %v5224, %v5374
      %v5407 = vadd.f32 %v5229, %v5375
      %v5408 = vadd.f32 %v5234, %v5376
      %v5409 = vadd.f32 %v5239, %v5377
      %v5410 = vadd.f32 %v5244, %v5378
      %v5411 = vadd.f32 %v5249, %v5379
      %v5412 = vmul.f32 %v5380, 0.7978846
      %v5413 = vmul.f32 %v5381, 0.7978846
      %v5414 = vmul.f32 %v5382, 0.7978846
      %v5415 = vmul.f32 %v5383, 0.7978846
      %v5416 = vmul.f32 %v5384, 0.7978846
      %v5417 = vmul.f32 %v5385, 0.7978846
      %v5418 = vmul.f32 %v5386, 0.7978846
      %v5419 = vmul.f32 %v5387, 0.7978846
      %v5420 = vmul.f32 %v5388, 0.7978846
      %v5421 = vmul.f32 %v5389, 0.7978846
      %v5422 = vmul.f32 %v5390, 0.7978846
      %v5423 = vmul.f32 %v5391, 0.7978846
      %v5424 = vmul.f32 %v5392, 0.7978846
      %v5425 = vmul.f32 %v5393, 0.7978846
      %v5426 = vmul.f32 %v5394, 0.7978846
      %v5427 = vmul.f32 %v5395, 0.7978846
      %v5428 = vmul.f32 %v5396, 0.7978846
      %v5429 = vmul.f32 %v5397, 0.7978846
      %v5430 = vmul.f32 %v5398, 0.7978846
      %v5431 = vmul.f32 %v5399, 0.7978846
      %v5432 = vmul.f32 %v5400, 0.7978846
      %v5433 = vmul.f32 %v5401, 0.7978846
      %v5434 = vmul.f32 %v5402, 0.7978846
      %v5435 = vmul.f32 %v5403, 0.7978846
      %v5436 = vmul.f32 %v5404, 0.7978846
      %v5437 = vmul.f32 %v5405, 0.7978846
      %v5438 = vmul.f32 %v5406, 0.7978846
      %v5439 = vmul.f32 %v5407, 0.7978846
      %v5440 = vmul.f32 %v5408, 0.7978846
      %v5441 = vmul.f32 %v5409, 0.7978846
      %v5442 = vmul.f32 %v5410, 0.7978846
      %v5443 = vmul.f32 %v5411, 0.7978846
      %v5444 = vtanh.pop %v5412
      %v5445 = vtanh.pop %v5413
      %v5446 = vtanh.pop %v5414
      %v5447 = vtanh.pop %v5415
      %v5448 = vtanh.pop %v5416
      %v5449 = vtanh.pop %v5417
      %v5450 = vtanh.pop %v5418
      %v5451 = vtanh.pop %v5419
      %v5452 = vtanh.pop %v5420
      %v5453 = vtanh.pop %v5421
      %v5454 = vtanh.pop %v5422
      %v5455 = vtanh.pop %v5423
      %v5456 = vtanh.pop %v5424
      %v5457 = vtanh.pop %v5425
      %v5458 = vtanh.pop %v5426
      %v5459 = vtanh.pop %v5427
      %v5460 = vtanh.pop %v5428
      %v5461 = vtanh.pop %v5429
      %v5462 = vtanh.pop %v5430
      %v5463 = vtanh.pop %v5431
      %v5464 = vtanh.pop %v5432
      %v5465 = vtanh.pop %v5433
      %v5466 = vtanh.pop %v5434
      %v5467 = vtanh.pop %v5435
      %v5468 = vtanh.pop %v5436
      %v5469 = vtanh.pop %v5437
      %v5470 = vtanh.pop %v5438
      %v5471 = vtanh.pop %v5439
      %v5472 = vtanh.pop %v5440
      %v5473 = vtanh.pop %v5441
      %v5474 = vtanh.pop %v5442
      %v5475 = vtanh.pop %v5443
      %v5476 = vadd.f32 %v5444, 1.0
      %v5477 = vadd.f32 %v5445, 1.0
      %v5478 = vadd.f32 %v5446, 1.0
      %v5479 = vadd.f32 %v5447, 1.0
      %v5480 = vadd.f32 %v5448, 1.0
      %v5481 = vadd.f32 %v5449, 1.0
      %v5482 = vadd.f32 %v5450, 1.0
      %v5483 = vadd.f32 %v5451, 1.0
      %v5484 = vadd.f32 %v5452, 1.0
      %v5485 = vadd.f32 %v5453, 1.0
      %v5486 = vadd.f32 %v5454, 1.0
      %v5487 = vadd.f32 %v5455, 1.0
      %v5488 = vadd.f32 %v5456, 1.0
      %v5489 = vadd.f32 %v5457, 1.0
      %v5490 = vadd.f32 %v5458, 1.0
      %v5491 = vadd.f32 %v5459, 1.0
      %v5492 = vadd.f32 %v5460, 1.0
      %v5493 = vadd.f32 %v5461, 1.0
      %v5494 = vadd.f32 %v5462, 1.0
      %v5495 = vadd.f32 %v5463, 1.0
      %v5496 = vadd.f32 %v5464, 1.0
      %v5497 = vadd.f32 %v5465, 1.0
      %v5498 = vadd.f32 %v5466, 1.0
      %v5499 = vadd.f32 %v5467, 1.0
      %v5500 = vadd.f32 %v5468, 1.0
      %v5501 = vadd.f32 %v5469, 1.0
      %v5502 = vadd.f32 %v5470, 1.0
      %v5503 = vadd.f32 %v5471, 1.0
      %v5504 = vadd.f32 %v5472, 1.0
      %v5505 = vadd.f32 %v5473, 1.0
      %v5506 = vadd.f32 %v5474, 1.0
      %v5507 = vadd.f32 %v5475, 1.0
      %v5508 = vmul.f32 %v5252, %v5476
      %v5509 = vmul.f32 %v5253, %v5477
      %v5510 = vmul.f32 %v5254, %v5478
      %v5511 = vmul.f32 %v5255, %v5479
      %v5512 = vmul.f32 %v5256, %v5480
      %v5513 = vmul.f32 %v5257, %v5481
      %v5514 = vmul.f32 %v5258, %v5482
      %v5515 = vmul.f32 %v5259, %v5483
      %v5516 = vmul.f32 %v5260, %v5484
      %v5517 = vmul.f32 %v5261, %v5485
      %v5518 = vmul.f32 %v5262, %v5486
      %v5519 = vmul.f32 %v5263, %v5487
      %v5520 = vmul.f32 %v5264, %v5488
      %v5521 = vmul.f32 %v5265, %v5489
      %v5522 = vmul.f32 %v5266, %v5490
      %v5523 = vmul.f32 %v5267, %v5491
      %v5524 = vmul.f32 %v5268, %v5492
      %v5525 = vmul.f32 %v5269, %v5493
      %v5526 = vmul.f32 %v5270, %v5494
      %v5527 = vmul.f32 %v5271, %v5495
      %v5528 = vmul.f32 %v5272, %v5496
      %v5529 = vmul.f32 %v5273, %v5497
      %v5530 = vmul.f32 %v5274, %v5498
      %v5531 = vmul.f32 %v5275, %v5499
      %v5532 = vmul.f32 %v5276, %v5500
      %v5533 = vmul.f32 %v5277, %v5501
      %v5534 = vmul.f32 %v5278, %v5502
      %v5535 = vmul.f32 %v5279, %v5503
      %v5536 = vmul.f32 %v5280, %v5504
      %v5537 = vmul.f32 %v5281, %v5505
      %v5538 = vmul.f32 %v5282, %v5506
      %v5539 = vmul.f32 %v5283, %v5507
      %v5540 = vld [vmem:[%s14] sm:$0xff]
      %v5541 = vld [vmem:[%s14 + $0x8] sm:$0xff]
      %v5542 = vld [vmem:[%s14 + $0x10] sm:$0xff]
      %v5543 = vld [vmem:[%s14 + $0x18] sm:$0xff]
      %v5544 = vld [vmem:[%s15] sm:$0x1]
      %v5546 = vlaneseq
      %v5547 = vshrl.u32 %v5546, 7
      %v5548 = vsub.s32 0, %v5547
      %v5549 = vrot.slane %v5544, %v5548
      %v5552 = vsel %vm556, %v5508, 0
      %v5555 = vsel %vm556, %v5509, 0
      %v5558 = vsel %vm556, %v5510, 0
      %v5561 = vsel %vm556, %v5511, 0
      %v5564 = vsel %vm556, %v5512, 0
      %v5567 = vsel %vm556, %v5513, 0
      %v5570 = vsel %vm556, %v5514, 0
      %v5573 = vsel %vm556, %v5515, 0
      %v5576 = vsel %vm556, %v5516, 0
      %v5579 = vsel %vm556, %v5517, 0
      %v5582 = vsel %vm556, %v5518, 0
      %v5585 = vsel %vm556, %v5519, 0
      %v5588 = vsel %vm556, %v5520, 0
      %v5591 = vsel %vm556, %v5521, 0
      %v5594 = vsel %vm556, %v5522, 0
      %v5597 = vsel %vm556, %v5523, 0
      %v5600 = vsel %vm556, %v5524, 0
      %v5603 = vsel %vm556, %v5525, 0
      %v5606 = vsel %vm556, %v5526, 0
      %v5609 = vsel %vm556, %v5527, 0
      %v5612 = vsel %vm556, %v5528, 0
      %v5615 = vsel %vm556, %v5529, 0
      %v5618 = vsel %vm556, %v5530, 0
      %v5621 = vsel %vm556, %v5531, 0
      %v5624 = vsel %vm556, %v5532, 0
      %v5627 = vsel %vm556, %v5533, 0
      %v5630 = vsel %vm556, %v5534, 0
      %v5633 = vsel %vm556, %v5535, 0
      %v5636 = vsel %vm556, %v5536, 0
      %v5639 = vsel %vm556, %v5537, 0
      %v5642 = vsel %vm556, %v5538, 0
      %v5645 = vsel %vm556, %v5539, 0
      %5647 = vmatprep.subr.mxu0 0.0
      %5648 = vmatpush1.msra.mxu0 %v5540
      %5649 = vmatprep.subr.mxu0 0.0
      %5650 = vmatpush1.msra.mxu0 %v5541
      %5651 = vmatprep.subr.mxu0 0.0
      %5652 = vmatpush1.msra.mxu0 %v5542
      %5653 = vmatprep.subr.mxu0 0.0
      %5654 = vmatpush1.msra.mxu0 %v5543
      %5655 = vmatprep.subr.mxu0 0.0
      %5656 = vmatpush1.msra.mxu0 0.0
      %5657 = vmatprep.subr.mxu0 0.0
      %5658 = vmatpush1.msra.mxu0 0.0
      %5659 = vmatprep.subr.mxu0 0.0
      %5660 = vmatpush1.msra.mxu0 0.0
      %5661 = vmatprep.subr.mxu0 0.0
      %5662 = vmatpush1.msra.mxu0 0.0
      %5663 = vmatprep.subr.mxu0 0.0
      %5664 = vmatpush1.msra.mxu0 0.0
      %5665 = vmatprep.subr.mxu0 0.0
      %5666 = vmatpush1.msra.mxu0 0.0
      %5667 = vmatprep.subr.mxu0 0.0
      %5668 = vmatpush1.msra.mxu0 0.0
      %5669 = vmatprep.subr.mxu0 0.0
      %5670 = vmatpush1.msra.mxu0 0.0
      %5671 = vmatprep.subr.mxu0 0.0
      %5672 = vmatpush1.msra.mxu0 0.0
      %5673 = vmatprep.subr.mxu0 0.0
      %5674 = vmatpush1.msra.mxu0 0.0
      %5675 = vmatprep.subr.mxu0 0.0
      %5676 = vmatpush1.msra.mxu0 0.0
      %5677 = vmatprep.subr.mxu0 0.0
      %5678 = vmatpush1.msra.mxu0 0.0
      %5679 = vmatprep.subr.mxu0 0.0
      %5680 = vmatpush1.msra.mxu0 0.0
      %5681 = vmatprep.subr.mxu0 0.0
      %5682 = vmatpush1.msra.mxu0 0.0
      %5683 = vmatprep.subr.mxu0 0.0
      %5684 = vmatpush1.msra.mxu0 0.0
      %5685 = vmatprep.subr.mxu0 0.0
      %5686 = vmatpush1.msra.mxu0 0.0
      %5687 = vmatprep.subr.mxu0 0.0
      %5688 = vmatpush1.msra.mxu0 0.0
      %5689 = vmatprep.subr.mxu0 0.0
      %5690 = vmatpush1.msra.mxu0 0.0
      %5691 = vmatprep.subr.mxu0 0.0
      %5692 = vmatpush1.msra.mxu0 0.0
      %5693 = vmatprep.subr.mxu0 0.0
      %5694 = vmatpush1.msra.mxu0 0.0
      %5695 = vmatprep.subr.mxu0 0.0
      %5696 = vmatpush1.msra.mxu0 0.0
      %5697 = vmatprep.subr.mxu0 0.0
      %5698 = vmatpush1.msra.mxu0 0.0
      %5699 = vmatprep.subr.mxu0 0.0
      %5700 = vmatpush1.msra.mxu0 0.0
      %5701 = vmatprep.subr.mxu0 0.0
      %5702 = vmatpush1.msra.mxu0 0.0
      %5703 = vmatprep.subr.mxu0 0.0
      %5704 = vmatpush1.msra.mxu0 0.0
      %5705 = vmatprep.subr.mxu0 0.0
      %5706 = vmatpush1.msra.mxu0 0.0
      %5707 = vmatprep.subr.mxu0 0.0
      %5708 = vmatpush1.msra.mxu0 0.0
      %5709 = vmatprep.subr.mxu0 0.0
      %5710 = vmatpush1.msra.mxu0 0.0
      %5711 = vmatprep.mubr.f32.mxu0 0.0
      %5712 = vmatmul.mubr.f32.gmra.mrb[0].mxu0 %v5552
      %v5713 = vpop.f32.mrb[0].mxu0
      %v5714 = vadd.f32 %v5549, %v5713
      %v5715 = vpop.f32.mrb[0].mxu0
      %5716 = vmatprep.mubr.f32.mxu0 0.0
      %5717 = vmatmul.mubr.f32.gmra.mrb[0].mxu0 %v5555
      %v5718 = vpop.f32.mrb[0].mxu0
      %v5719 = vadd.f32 %v5549, %v5718
      %v5720 = vpop.f32.mrb[0].mxu0
      %5721 = vmatprep.mubr.f32.mxu0 0.0
      %5722 = vmatmul.mubr.f32.gmra.mrb[0].mxu0 %v5558
      %v5723 = vpop.f32.mrb[0].mxu0
      %v5724 = vadd.f32 %v5549, %v5723
      %v5725 = vpop.f32.mrb[0].mxu0
      %5726 = vmatprep.mubr.f32.mxu0 0.0
      %5727 = vmatmul.mubr.f32.gmra.mrb[0].mxu0 %v5561
      %v5728 = vpop.f32.mrb[0].mxu0
      %v5729 = vadd.f32 %v5549, %v5728
      %v5730 = vpop.f32.mrb[0].mxu0
      %5731 = vmatprep.mubr.f32.mxu0 0.0
      %5732 = vmatmul.mubr.f32.gmra.mrb[0].mxu0 %v5564
      %v5733 = vpop.f32.mrb[0].mxu0
      %v5734 = vadd.f32 %v5549, %v5733
      %v5735 = vpop.f32.mrb[0].mxu0
      %5736 = vmatprep.mubr.f32.mxu0 0.0
      %5737 = vmatmul.mubr.f32.gmra.mrb[0].mxu0 %v5567
      %v5738 = vpop.f32.mrb[0].mxu0
      %v5739 = vadd.f32 %v5549, %v5738
      %v5740 = vpop.f32.mrb[0].mxu0
      %5741 = vmatprep.mubr.f32.mxu0 0.0
      %5742 = vmatmul.mubr.f32.gmra.mrb[0].mxu0 %v5570
      %v5743 = vpop.f32.mrb[0].mxu0
      %v5744 = vadd.f32 %v5549, %v5743
      %v5745 = vpop.f32.mrb[0].mxu0
      %5746 = vmatprep.mubr.f32.mxu0 0.0
      %5747 = vmatmul.mubr.f32.gmra.mrb[0].mxu0 %v5573
      %v5748 = vpop.f32.mrb[0].mxu0
      %v5749 = vadd.f32 %v5549, %v5748
      %v5750 = vpop.f32.mrb[0].mxu0
      %5751 = vmatprep.mubr.f32.mxu0 0.0
      %5752 = vmatmul.mubr.f32.gmra.mrb[0].mxu0 %v5576
      %v5753 = vpop.f32.mrb[0].mxu0
      %v5754 = vadd.f32 %v5549, %v5753
      %v5755 = vpop.f32.mrb[0].mxu0
      %5756 = vmatprep.mubr.f32.mxu0 0.0
      %5757 = vmatmul.mubr.f32.gmra.mrb[0].mxu0 %v5579
      %v5758 = vpop.f32.mrb[0].mxu0
      %v5759 = vadd.f32 %v5549, %v5758
      %v5760 = vpop.f32.mrb[0].mxu0
      %5761 = vmatprep.mubr.f32.mxu0 0.0
      %5762 = vmatmul.mubr.f32.gmra.mrb[0].mxu0 %v5582
      %v5763 = vpop.f32.mrb[0].mxu0
      %v5764 = vadd.f32 %v5549, %v5763
      %v5765 = vpop.f32.mrb[0].mxu0
      %5766 = vmatprep.mubr.f32.mxu0 0.0
      %5767 = vmatmul.mubr.f32.gmra.mrb[0].mxu0 %v5585
      %v5768 = vpop.f32.mrb[0].mxu0
      %v5769 = vadd.f32 %v5549, %v5768
      %v5770 = vpop.f32.mrb[0].mxu0
      %5771 = vmatprep.mubr.f32.mxu0 0.0
      %5772 = vmatmul.mubr.f32.gmra.mrb[0].mxu0 %v5588
      %v5773 = vpop.f32.mrb[0].mxu0
      %v5774 = vadd.f32 %v5549, %v5773
      %v5775 = vpop.f32.mrb[0].mxu0
      %5776 = vmatprep.mubr.f32.mxu0 0.0
      %5777 = vmatmul.mubr.f32.gmra.mrb[0].mxu0 %v5591
      %v5778 = vpop.f32.mrb[0].mxu0
      %v5779 = vadd.f32 %v5549, %v5778
      %v5780 = vpop.f32.mrb[0].mxu0
      %5781 = vmatprep.mubr.f32.mxu0 0.0
      %5782 = vmatmul.mubr.f32.gmra.mrb[0].mxu0 %v5594
      %v5783 = vpop.f32.mrb[0].mxu0
      %v5784 = vadd.f32 %v5549, %v5783
      %v5785 = vpop.f32.mrb[0].mxu0
      %5786 = vmatprep.mubr.f32.mxu0 0.0
      %5787 = vmatmul.mubr.f32.gmra.mrb[0].mxu0 %v5597
      %v5788 = vpop.f32.mrb[0].mxu0
      %v5789 = vadd.f32 %v5549, %v5788
      %v5790 = vpop.f32.mrb[0].mxu0
      %5791 = vmatprep.mubr.f32.mxu0 0.0
      %5792 = vmatmul.mubr.f32.gmra.mrb[0].mxu0 %v5600
      %v5793 = vpop.f32.mrb[0].mxu0
      %v5794 = vadd.f32 %v5549, %v5793
      %v5795 = vpop.f32.mrb[0].mxu0
      %5796 = vmatprep.mubr.f32.mxu0 0.0
      %5797 = vmatmul.mubr.f32.gmra.mrb[0].mxu0 %v5603
      %v5798 = vpop.f32.mrb[0].mxu0
      %v5799 = vadd.f32 %v5549, %v5798
      %v5800 = vpop.f32.mrb[0].mxu0
      %5801 = vmatprep.mubr.f32.mxu0 0.0
      %5802 = vmatmul.mubr.f32.gmra.mrb[0].mxu0 %v5606
      %v5803 = vpop.f32.mrb[0].mxu0
      %v5804 = vadd.f32 %v5549, %v5803
      %v5805 = vpop.f32.mrb[0].mxu0
      %5806 = vmatprep.mubr.f32.mxu0 0.0
      %5807 = vmatmul.mubr.f32.gmra.mrb[0].mxu0 %v5609
      %v5808 = vpop.f32.mrb[0].mxu0
      %v5809 = vadd.f32 %v5549, %v5808
      %v5810 = vpop.f32.mrb[0].mxu0
      %5811 = vmatprep.mubr.f32.mxu0 0.0
      %5812 = vmatmul.mubr.f32.gmra.mrb[0].mxu0 %v5612
      %v5813 = vpop.f32.mrb[0].mxu0
      %v5814 = vadd.f32 %v5549, %v5813
      %v5815 = vpop.f32.mrb[0].mxu0
      %5816 = vmatprep.mubr.f32.mxu0 0.0
      %5817 = vmatmul.mubr.f32.gmra.mrb[0].mxu0 %v5615
      %v5818 = vpop.f32.mrb[0].mxu0
      %v5819 = vadd.f32 %v5549, %v5818
      %v5820 = vpop.f32.mrb[0].mxu0
      %5821 = vmatprep.mubr.f32.mxu0 0.0
      %5822 = vmatmul.mubr.f32.gmra.mrb[0].mxu0 %v5618
      %v5823 = vpop.f32.mrb[0].mxu0
      %v5824 = vadd.f32 %v5549, %v5823
      %v5825 = vpop.f32.mrb[0].mxu0
      %5826 = vmatprep.mubr.f32.mxu0 0.0
      %5827 = vmatmul.mubr.f32.gmra.mrb[0].mxu0 %v5621
      %v5828 = vpop.f32.mrb[0].mxu0
      %v5829 = vadd.f32 %v5549, %v5828
      %v5830 = vpop.f32.mrb[0].mxu0
      %5831 = vmatprep.mubr.f32.mxu0 0.0
      %5832 = vmatmul.mubr.f32.gmra.mrb[0].mxu0 %v5624
      %v5833 = vpop.f32.mrb[0].mxu0
      %v5834 = vadd.f32 %v5549, %v5833
      %v5835 = vpop.f32.mrb[0].mxu0
      %5836 = vmatprep.mubr.f32.mxu0 0.0
      %5837 = vmatmul.mubr.f32.gmra.mrb[0].mxu0 %v5627
      %v5838 = vpop.f32.mrb[0].mxu0
      %v5839 = vadd.f32 %v5549, %v5838
      %v5840 = vpop.f32.mrb[0].mxu0
      %5841 = vmatprep.mubr.f32.mxu0 0.0
      %5842 = vmatmul.mubr.f32.gmra.mrb[0].mxu0 %v5630
      %v5843 = vpop.f32.mrb[0].mxu0
      %v5844 = vadd.f32 %v5549, %v5843
      %v5845 = vpop.f32.mrb[0].mxu0
      %5846 = vmatprep.mubr.f32.mxu0 0.0
      %5847 = vmatmul.mubr.f32.gmra.mrb[0].mxu0 %v5633
      %v5848 = vpop.f32.mrb[0].mxu0
      %v5849 = vadd.f32 %v5549, %v5848
      %v5850 = vpop.f32.mrb[0].mxu0
      %5851 = vmatprep.mubr.f32.mxu0 0.0
      %5852 = vmatmul.mubr.f32.gmra.mrb[0].mxu0 %v5636
      %v5853 = vpop.f32.mrb[0].mxu0
      %v5854 = vadd.f32 %v5549, %v5853
      %v5855 = vpop.f32.mrb[0].mxu0
      %5856 = vmatprep.mubr.f32.mxu0 0.0
      %5857 = vmatmul.mubr.f32.gmra.mrb[0].mxu0 %v5639
      %v5858 = vpop.f32.mrb[0].mxu0
      %v5859 = vadd.f32 %v5549, %v5858
      %v5860 = vpop.f32.mrb[0].mxu0
      %5861 = vmatprep.mubr.f32.mxu0 0.0
      %5862 = vmatmul.mubr.f32.gmra.mrb[0].mxu0 %v5642
      %v5863 = vpop.f32.mrb[0].mxu0
      %v5864 = vadd.f32 %v5549, %v5863
      %v5865 = vpop.f32.mrb[0].mxu0
      %5866 = vmatprep.mubr.f32.mxu0 0.0
      %5867 = vmatmul.mubr.f32.gmra.mrb[0].mxu0 %v5645
      %v5868 = vpop.f32.mrb[0].mxu0
      %v5869 = vadd.f32 %v5549, %v5868
      %v5870 = vpop.f32.mrb[0].mxu0
      %5871 = vdwg.mxu0
      %v5872 = vadd.f32 %v4394, %v5714
      %v5873 = vadd.f32 %v4395, %v5719
      %v5874 = vadd.f32 %v4396, %v5724
      %v5875 = vadd.f32 %v4397, %v5729
      %v5876 = vadd.f32 %v4398, %v5734
      %v5877 = vadd.f32 %v4399, %v5739
      %v5878 = vadd.f32 %v4400, %v5744
      %v5879 = vadd.f32 %v4401, %v5749
      %v5880 = vadd.f32 %v4402, %v5754
      %v5881 = vadd.f32 %v4403, %v5759
      %v5882 = vadd.f32 %v4404, %v5764
      %v5883 = vadd.f32 %v4405, %v5769
      %v5884 = vadd.f32 %v4406, %v5774
      %v5885 = vadd.f32 %v4407, %v5779
      %v5886 = vadd.f32 %v4408, %v5784
      %v5887 = vadd.f32 %v4409, %v5789
      %v5888 = vadd.f32 %v4410, %v5794
      %v5889 = vadd.f32 %v4411, %v5799
      %v5890 = vadd.f32 %v4412, %v5804
      %v5891 = vadd.f32 %v4413, %v5809
      %v5892 = vadd.f32 %v4414, %v5814
      %v5893 = vadd.f32 %v4415, %v5819
      %v5894 = vadd.f32 %v4416, %v5824
      %v5895 = vadd.f32 %v4417, %v5829
      %v5896 = vadd.f32 %v4418, %v5834
      %v5897 = vadd.f32 %v4419, %v5839
      %v5898 = vadd.f32 %v4420, %v5844
      %v5899 = vadd.f32 %v4421, %v5849
      %v5900 = vadd.f32 %v4422, %v5854
      %v5901 = vadd.f32 %v4423, %v5859
      %v5902 = vadd.f32 %v4424, %v5864
      %v5903 = vadd.f32 %v4425, %v5869
      %5904 = vst.msk [vmem:[%s521] sm:$0xff] %vm556, %v5872
      %5905 = vst.msk [vmem:[%s521 + $0x8] sm:$0xff] %vm556, %v5873
      %5906 = vst.msk [vmem:[%s521 + $0x10] sm:$0xff] %vm556, %v5874
      %5907 = vst.msk [vmem:[%s521 + $0x18] sm:$0xff] %vm556, %v5875
      %5908 = vst.msk [vmem:[%s521 + $0x20] sm:$0xff] %vm556, %v5876
      %5909 = vst.msk [vmem:[%s521 + $0x28] sm:$0xff] %vm556, %v5877
      %5910 = vst.msk [vmem:[%s521 + $0x30] sm:$0xff] %vm556, %v5878
      %5911 = vst.msk [vmem:[%s521 + $0x38] sm:$0xff] %vm556, %v5879
      %5912 = vst.msk [vmem:[%s521 + $0x40] sm:$0xff] %vm556, %v5880
      %5913 = vst.msk [vmem:[%s521 + $0x48] sm:$0xff] %vm556, %v5881
      %5914 = vst.msk [vmem:[%s521 + $0x50] sm:$0xff] %vm556, %v5882
      %5915 = vst.msk [vmem:[%s521 + $0x58] sm:$0xff] %vm556, %v5883
      %5916 = vst.msk [vmem:[%s521 + $0x60] sm:$0xff] %vm556, %v5884
      %5917 = vst.msk [vmem:[%s521 + $0x68] sm:$0xff] %vm556, %v5885
      %5918 = vst.msk [vmem:[%s521 + $0x70] sm:$0xff] %vm556, %v5886
      %5919 = vst.msk [vmem:[%s521 + $0x78] sm:$0xff] %vm556, %v5887
      %5920 = vst.msk [vmem:[%s521 + $0x80] sm:$0xff] %vm556, %v5888
      %5921 = vst.msk [vmem:[%s521 + $0x88] sm:$0xff] %vm556, %v5889
      %5922 = vst.msk [vmem:[%s521 + $0x90] sm:$0xff] %vm556, %v5890
      %5923 = vst.msk [vmem:[%s521 + $0x98] sm:$0xff] %vm556, %v5891
      %5924 = vst.msk [vmem:[%s521 + $0xa0] sm:$0xff] %vm556, %v5892
      %5925 = vst.msk [vmem:[%s521 + $0xa8] sm:$0xff] %vm556, %v5893
      %5926 = vst.msk [vmem:[%s521 + $0xb0] sm:$0xff] %vm556, %v5894
      %5927 = vst.msk [vmem:[%s521 + $0xb8] sm:$0xff] %vm556, %v5895
      %5928 = vst.msk [vmem:[%s521 + $0xc0] sm:$0xff] %vm556, %v5896
      %5929 = vst.msk [vmem:[%s521 + $0xc8] sm:$0xff] %vm556, %v5897
      %5930 = vst.msk [vmem:[%s521 + $0xd0] sm:$0xff] %vm556, %v5898
      %5931 = vst.msk [vmem:[%s521 + $0xd8] sm:$0xff] %vm556, %v5899
      %5932 = vst.msk [vmem:[%s521 + $0xe0] sm:$0xff] %vm556, %v5900
      %5933 = vst.msk [vmem:[%s521 + $0xe8] sm:$0xff] %vm556, %v5901
      %5934 = vst.msk [vmem:[%s521 + $0xf0] sm:$0xff] %vm556, %v5902
      %5935 = vst.msk [vmem:[%s521 + $0xf8] sm:$0xff] %vm556, %v5903
      %p5936 = scmp.lt.s32.totalorder %s27, 1
      %s5937 = scalar_select %p5936, %s27, 1
      %s5938 = smul.addr %s5937, 32
      %s5939 = smul.addr %s5938, 8
      %s5940 = scalar_lea.vmem %s16, %s5939
      // Predicated region
      $region85: #{basic_stage_forward.3} parent=83 // pred_check
        %p5941 = pneg %p386
      $region86: #{basic_stage_forward.3} parent=83 // pred_check_branch
        %5943 = sbr.rel (%p5941) target = $region88
      $region87: #{basic_stage_forward.3} parent=83 // pred_region
        _
      $region88: #{basic_stage_forward.3} parent=83 // pred_fallthru
        _
    $region84: #{basic_stage_forward.3} parent=5 // pred_fallthru
      _
    %p5944 = scmp.le.s32.totalorder 2, %s22
    // Predicated region
    $region89: #{basic_stage_forward.3} parent=5 // pred_check
      %p5945 = pneg %p5944
    $region90: #{basic_stage_forward.3} parent=5 // pred_check_branch
      %5947 = sbr.rel (%p5945) target = $region92
    $region91: #{basic_stage_forward.3} parent=5 // pred_region
      %s5948 = ssub.s32 %s22, 2
      // Predicated region
      $region93: #{basic_stage_forward.3} parent=91 // pred_check
        %p5949 = pneg %p392
      $region94: #{basic_stage_forward.3} parent=91 // pred_check_branch
        %5951 = sbr.rel (%p5949) target = $region96
      $region95: #{basic_stage_forward.3} parent=91 // pred_region
        %p5952 = scmp.lt.s32.totalorder %s28, 1
        %s5953 = scalar_select %p5952, %s28, 1
        %s5954 = smul.addr %s5953, 32
        %s5955 = smul.addr %s5954, 8
        %s5956 = scalar_lea.vmem %s16, %s5955
      $region96: #{basic_stage_forward.3} parent=91 // pred_fallthru
        _
    $region92: #{basic_stage_forward.3} parent=5 // pred_fallthru
      _
  $region6: #{basic_stage_forward.3} parent=0 // loop_footer
    %s26 = sadd.s32 1, %s22
  $region7: #{basic_stage_forward.3} parent=0 // loop_footer_branch
    %21 = sbr.rel target = $region3
  $region8: #{basic_stage_forward.3} parent=0 // loop_exit
    _

</llo_original>
